<compile_context>
chip_gen: v5e
topology: v5e:2x2
jax: 0.10.0
libtpu: 0.0.40
codegen_flags: <defaults>
</compile_context>

<pallas_src>
import functools

import jax
import jax.numpy as jnp
import numpy as np
from jax.experimental import pallas as pl
from jax.experimental.pallas import tpu as pltpu

HP = 128          # per-gate lane padding: each gate gets one 128-lane group
SUBLANES = 8      # batch padded up to a multiple of 8 sublanes


# ----------------------------------------------------------------------------
# Fused kernel: 3 wavefronted LSTM layers + ReLU + FC, fully VMEM-resident.
# ----------------------------------------------------------------------------
def _cell_update(g, c):
    """Gate layout [i, f, o, g]: one sigmoid over 3 gate groups, one tanh."""
    sig = jax.nn.sigmoid(g[:, :3 * HP])          # (BP, 3*HP)  i|f|o
    g_g = jnp.tanh(g[:, 3 * HP:4 * HP])          # (BP, HP)
    i_g = sig[:, 0 * HP:1 * HP]
    f_g = sig[:, 1 * HP:2 * HP]
    o_g = sig[:, 2 * HP:3 * HP]
    c_new = f_g * c + i_g * g_g
    h_new = o_g * jnp.tanh(c_new)
    return h_new, c_new


def _fused_lstm_kernel(x_ref,
                       w1i_ref, w1h_ref, b1_ref,
                       w2_ref, b2_ref,
                       w3_ref, b3_ref,
                       wfc_ref, bfc_ref,
                       out_ref, proj_ref, *, T, BP):
    # Hoisted layer-1 input projection for ALL T timesteps: one MXU pass,
    # parked in VMEM scratch so only one (8,512) slice is live per step.
    proj_ref[...] = (jnp.dot(x_ref[...], w1i_ref[...],
                             preferred_element_type=jnp.float32)
                     + b1_ref[...])                                  # (T*BP, 4*HP)

    zeros = jnp.zeros((BP, HP), jnp.float32)
    h1, c1 = zeros, zeros
    h2, c2 = zeros, zeros
    h3, c3 = zeros, zeros

    # Wavefront: step s does layer1@t=s, layer2@t=s-1, layer3@t=s-2.
    # The three matmuls inside one step only depend on previous-step values,
    # so the MXU always has independent work in flight.
    for s in range(T + 2):                       # static, fully unrolled (T small)
        h1_below = h1                            # == h1[s-1] (layer-2 input)
        h2_below = h2                            # == h2[s-2] (layer-3 input)

        if s < T:                                # layer 1 @ t = s
            g1 = proj_ref[s * BP:(s + 1) * BP, :] + jnp.dot(
                h1, w1h_ref[...], preferred_element_type=jnp.float32)
            h1, c1 = _cell_update(g1, c1)

        if 1 <= s <= T:                          # layer 2 @ t = s-1
            xin = jnp.concatenate([h1_below, h2], axis=1)            # (BP, 2*HP)
            g2 = jnp.dot(xin, w2_ref[...],
                         preferred_element_type=jnp.float32) + b2_ref[...]
            h2, c2 = _cell_update(g2, c2)

        if 2 <= s:                               # layer 3 @ t = s-2
            xin = jnp.concatenate([h2_below, h3], axis=1)            # (BP, 2*HP)
            g3 = jnp.dot(xin, w3_ref[...],
                         preferred_element_type=jnp.float32) + b3_ref[...]
            h3, c3 = _cell_update(g3, c3)

    # ReLU(last timestep of layer 3) + FC head; padded lanes stay exactly 0.
    h_last = jnp.maximum(h3, 0.0)
    out_ref[...] = (jnp.dot(h_last, wfc_ref[...],
                            preferred_element_type=jnp.float32)
                    + bfc_ref[...]).astype(out_ref.dtype)


# ----------------------------------------------------------------------------
# One-time wrapper-side weight packing (numpy): transpose + zero-pad to a
# gate-aligned [i, f, o, g] layout, fold b_ih+b_hh, and for layers 2/3 stack
# [W_ih; W_hh] so the recurrence does a single (8,256)x(256,512) matmul.
# Zero padding keeps the padded lanes of h/c exactly zero through the
# recurrence (sigmoid(0)=0.5 only ever multiplies zeros), so the math is
# identical to the unpadded model.
# ----------------------------------------------------------------------------
def _pack_layer(w_ih, w_hh, bias, in_rows):
    """w_ih: (4H, In), w_hh: (4H, H), bias: (4H,) with b_ih+b_hh folded."""
    H = w_hh.shape[1]
    in_dim = w_ih.shape[1]
    w_ih = np.asarray(w_ih, np.float32)
    w_hh = np.asarray(w_hh, np.float32)
    bias = np.asarray(bias, np.float32)
    # PyTorch row order is [i, f, g, o]; repack lanes as [i, f, o, g].
    src_order = (0, 1, 3, 2)
    wi = np.zeros((in_rows, 4 * HP), np.float32)
    wh = np.zeros((HP, 4 * HP), np.float32)
    b = np.zeros((1, 4 * HP), np.float32)
    for dst, src in enumerate(src_order):
        wi[:in_dim, dst * HP:dst * HP + H] = w_ih[src * H:(src + 1) * H, :].T
        wh[:H, dst * HP:dst * HP + H] = w_hh[src * H:(src + 1) * H, :].T
        b[0, dst * HP:dst * HP + H] = bias[src * H:(src + 1) * H]
    return wi, wh, b


def pack_params(params, input_size):
    """Call once at init and cache the result (per performance review)."""
    w1i, w1h, b1 = _pack_layer(*params["lstm1"], in_rows=input_size)
    w2i, w2h, b2 = _pack_layer(*params["lstm2"], in_rows=HP)
    w3i, w3h, b3 = _pack_layer(*params["lstm3"], in_rows=HP)
    # Fold input + recurrent weights: [h_below | h_prev] @ [[W_ih],[W_hh]].
    w2 = np.concatenate([w2i, w2h], axis=0)                  # (2*HP, 4*HP)
    w3 = np.concatenate([w3i, w3h], axis=0)                  # (2*HP, 4*HP)
    fc_w = np.asarray(params["fc_w"], np.float32)            # (O, 20)
    fc_b = np.asarray(params["fc_b"], np.float32)            # (O,)
    o_dim, h3 = fc_w.shape
    wfc = np.zeros((HP, HP), np.float32)
    wfc[:h3, :o_dim] = fc_w.T
    bfc = np.zeros((1, HP), np.float32)
    bfc[0, :o_dim] = fc_b
    packed = dict(w1i=w1i, w1h=w1h, b1=b1, w2=w2, b2=b2, w3=w3, b3=b3,
                  wfc=wfc, bfc=bfc)
    return {k: jnp.asarray(v) for k, v in packed.items()}


# ----------------------------------------------------------------------------
# Full model forward (matches LSTMModel.forward, batch_first=True)
# ----------------------------------------------------------------------------
def lstm_model_forward(x_bt, packed, out_size):
    """x_bt: (B, T, input_size) batch-first; `packed` from pack_params()."""
    B, T, in_size = x_bt.shape
    BP = ((B + SUBLANES - 1) // SUBLANES) * SUBLANES
    x_tm = jnp.transpose(x_bt, (1, 0, 2)).astype(jnp.float32)        # (T, B, In)
    x_pad = jnp.zeros((T, BP, in_size), jnp.float32).at[:, :B, :].set(x_tm)
    x2d = x_pad.reshape(T * BP, in_size)                             # (T*BP, In)

    kernel = functools.partial(_fused_lstm_kernel, T=T, BP=BP)
    vmem = pl.BlockSpec(memory_space=pltpu.MemorySpace.VMEM)
    out = pl.pallas_call(
        kernel,
        out_shape=jax.ShapeDtypeStruct((BP, HP), jnp.float32),
        in_specs=[vmem] * 10,
        out_specs=vmem,
        scratch_shapes=[pltpu.VMEM((T * BP, 4 * HP), jnp.float32)],
    )(x2d,
      packed["w1i"], packed["w1h"], packed["b1"],
      packed["w2"], packed["b2"],
      packed["w3"], packed["b3"],
      packed["wfc"], packed["bfc"])
    return out[:B, :out_size]                                        # (B, 1)


# ----------------------------------------------------------------------------
# Deterministic parameter init (PyTorch-style uniform(-1/sqrt(H), 1/sqrt(H)))
# ----------------------------------------------------------------------------
def init_params(key, input_size, hidden_size, hidden3, output_size):
    def lstm_params(key, in_dim, h_dim):
        stdv = 1.0 / np.sqrt(h_dim)
        k = jax.random.split(key, 4)
        w_ih = jax.random.uniform(k[0], (4 * h_dim, in_dim), jnp.float32, -stdv, stdv)
        w_hh = jax.random.uniform(k[1], (4 * h_dim, h_dim), jnp.float32, -stdv, stdv)
        b_ih = jax.random.uniform(k[2], (4 * h_dim,), jnp.float32, -stdv, stdv)
        b_hh = jax.random.uniform(k[3], (4 * h_dim,), jnp.float32, -stdv, stdv)
        return (w_ih, w_hh, b_ih + b_hh)

    k1, k2, k3, k4, k5 = jax.random.split(key, 5)
    stdv_fc = 1.0 / np.sqrt(hidden3)
    return {
        "lstm1": lstm_params(k1, input_size, hidden_size),
        "lstm2": lstm_params(k2, hidden_size, hidden_size),
        "lstm3": lstm_params(k3, hidden_size, hidden3),
        "fc_w": jax.random.uniform(k4, (output_size, hidden3), jnp.float32,
                                   -stdv_fc, stdv_fc),
        "fc_b": jax.random.uniform(k5, (output_size,), jnp.float32,
                                   -stdv_fc, stdv_fc),
    }


# ----------------------------------------------------------------------------
# Pure-JAX reference (lax.scan) for numerical sanity check.
# ----------------------------------------------------------------------------
def _lstm_ref(x_tm, w_ih, w_hh, bias):
    H = w_hh.shape[1]
    B = x_tm.shape[1]

    def step(carry, x_t):
        h, c = carry
        g = x_t @ w_ih.T + h @ w_hh.T + bias
        i = jax.nn.sigmoid(g[:, :H])
        f = jax.nn.sigmoid(g[:, H:2 * H])
        gg = jnp.tanh(g[:, 2 * H:3 * H])
        o = jax.nn.sigmoid(g[:, 3 * H:])
        c = f * c + i * gg
        h = o * jnp.tanh(c)
        return (h, c), h

    init = (jnp.zeros((B, H), jnp.float32), jnp.zeros((B, H), jnp.float32))
    _, hs = jax.lax.scan(step, init, x_tm)
    return hs


def _ref_forward(x_bt, params):
    x_tm = jnp.transpose(x_bt, (1, 0, 2))
    h = _lstm_ref(x_tm, *params["lstm1"])
    h = _lstm_ref(h, *params["lstm2"])
    h = _lstm_ref(h, *params["lstm3"])
    h_last = jnp.maximum(h[-1], 0.0)
    return h_last @ params["fc_w"].T + params["fc_b"]


if __name__ == "__main__":
    # Small shapes consistent with the module: (batch, seq, input_size)
    B, T, INPUT_SIZE = 2, 8, 8
    HIDDEN, HIDDEN3, OUTPUT = 40, 20, 1

    key = jax.random.PRNGKey(0)
    k_x, k_p = jax.random.split(key)
    x = jax.random.normal(k_x, (B, T, INPUT_SIZE), dtype=jnp.float32)
    params = init_params(k_p, INPUT_SIZE, HIDDEN, HIDDEN3, OUTPUT)

    # Pack + pad weights ONCE; per-call work is only the kernel + x padding.
    packed = pack_params(params, INPUT_SIZE)
    fwd = jax.jit(lstm_model_forward, static_argnums=(2,))

    out = fwd(x, packed, OUTPUT)
    out = jax.block_until_ready(out)
    assert out.shape == (B, OUTPUT), out.shape

    ref = jax.block_until_ready(_ref_forward(x, params))
    np.testing.assert_allclose(np.asarray(out), np.asarray(ref),
                               rtol=1e-4, atol=1e-4)

    print("KERNEL_OK")
</pallas_src>

<mosaic_0001>
module attributes {stable_mosaic.version = 11 : i64} {
  func.func @_fused_lstm_kernel(%arg0: memref<64x8xf32, #tpu.memory_space<vmem>>, %arg1: memref<8x512xf32, #tpu.memory_space<vmem>>, %arg2: memref<128x512xf32, #tpu.memory_space<vmem>>, %arg3: memref<1x512xf32, #tpu.memory_space<vmem>>, %arg4: memref<256x512xf32, #tpu.memory_space<vmem>>, %arg5: memref<1x512xf32, #tpu.memory_space<vmem>>, %arg6: memref<256x512xf32, #tpu.memory_space<vmem>>, %arg7: memref<1x512xf32, #tpu.memory_space<vmem>>, %arg8: memref<128x128xf32, #tpu.memory_space<vmem>>, %arg9: memref<1x128xf32, #tpu.memory_space<vmem>>, %arg10: memref<8x128xf32, #tpu.memory_space<vmem>>, %arg11: memref<64x512xf32, #tpu.memory_space<vmem>>) attributes {dimension_semantics = [], scalar_prefetch = 0 : i64, scratch_operands = 1 : i64, tpu.core_type = #tpu.core_type<tc>} {
    %c0 = arith.constant 0 : index
    %c0_0 = arith.constant 0 : index
    %0 = vector.load %arg0[%c0, %c0_0] : memref<64x8xf32, #tpu.memory_space<vmem>>, vector<64x8xf32>
    %c0_1 = arith.constant 0 : index
    %c0_2 = arith.constant 0 : index
    %1 = vector.load %arg1[%c0_1, %c0_2] : memref<8x512xf32, #tpu.memory_space<vmem>>, vector<8x512xf32>
    %cst = arith.constant dense<0.000000e+00> : vector<64x512xf32>
    %2 = tpu.matmul %0, %1, %cst {dimension_numbers = #tpu.dot_dimension_numbers<[1], [0], [0], [1], [0, 0, 1, 1], [], []>} : vector<64x8xf32>, vector<8x512xf32>, vector<64x512xf32> -> vector<64x512xf32>
    %c0_3 = arith.constant 0 : index
    %c0_4 = arith.constant 0 : index
    %3 = vector.load %arg3[%c0_3, %c0_4] : memref<1x512xf32, #tpu.memory_space<vmem>>, vector<1x512xf32>
    %4 = vector.broadcast %3 : vector<1x512xf32> to vector<64x512xf32>
    %5 = arith.addf %2, %4 : vector<64x512xf32>
    %c0_5 = arith.constant 0 : index
    %c0_6 = arith.constant 0 : index
    %6 = vector.load %arg11[%c0_5, %c0_6] : memref<64x512xf32, #tpu.memory_space<vmem>>, vector<64x512xf32>
    tpu.vector_store %arg11[%c0_5, %c0_6], %5 {strides = array<i32>} : memref<64x512xf32, #tpu.memory_space<vmem>>, vector<64x512xf32>,
    %cst_7 = arith.constant 0.000000e+00 : f32
    %7 = vector.broadcast %cst_7 : f32 to vector<8x128xf32>
    %c0_8 = arith.constant 0 : index
    %c0_9 = arith.constant 0 : index
    %8 = vector.load %arg11[%c0_8, %c0_9] : memref<64x512xf32, #tpu.memory_space<vmem>>, vector<8x512xf32>
    %c0_10 = arith.constant 0 : index
    %c0_11 = arith.constant 0 : index
    %9 = vector.load %arg2[%c0_10, %c0_11] : memref<128x512xf32, #tpu.memory_space<vmem>>, vector<128x512xf32>
    %cst_12 = arith.constant dense<0.000000e+00> : vector<8x512xf32>
    %10 = tpu.matmul %7, %9, %cst_12 {dimension_numbers = #tpu.dot_dimension_numbers<[1], [0], [0], [1], [0, 0, 1, 1], [], []>} : vector<8x128xf32>, vector<128x512xf32>, vector<8x512xf32> -> vector<8x512xf32>
    %11 = arith.addf %8, %10 : vector<8x512xf32>
    %12 = vector.extract_strided_slice %11 {offsets = [0, 0], sizes = [8, 384], strides = [1, 1]} : vector<8x512xf32> to vector<8x384xf32>
    %13 = arith.negf %12 : vector<8x384xf32>
    %14 = math.exp %13 : vector<8x384xf32>
    %cst_13 = arith.constant 1.000000e+00 : f32
    %15 = vector.broadcast %cst_13 : f32 to vector<8x384xf32>
    %16 = arith.addf %15, %14 : vector<8x384xf32>
    %17 = arith.divf %15, %16 : vector<8x384xf32>
    %18 = vector.extract_strided_slice %11 {offsets = [0, 384], sizes = [8, 128], strides = [1, 1]} : vector<8x512xf32> to vector<8x128xf32>
    %19 = math.tanh %18 : vector<8x128xf32>
    %20 = vector.extract_strided_slice %17 {offsets = [0, 0], sizes = [8, 128], strides = [1, 1]} : vector<8x384xf32> to vector<8x128xf32>
    %21 = vector.extract_strided_slice %17 {offsets = [0, 128], sizes = [8, 128], strides = [1, 1]} : vector<8x384xf32> to vector<8x128xf32>
    %22 = vector.extract_strided_slice %17 {offsets = [0, 256], sizes = [8, 128], strides = [1, 1]} : vector<8x384xf32> to vector<8x128xf32>
    %23 = arith.mulf %21, %7 : vector<8x128xf32>
    %24 = arith.mulf %20, %19 : vector<8x128xf32>
    %25 = arith.addf %23, %24 : vector<8x128xf32>
    %26 = math.tanh %25 : vector<8x128xf32>
    %27 = arith.mulf %22, %26 : vector<8x128xf32>
    %c8 = arith.constant 8 : index
    %c0_14 = arith.constant 0 : index
    %28 = vector.load %arg11[%c8, %c0_14] : memref<64x512xf32, #tpu.memory_space<vmem>>, vector<8x512xf32>
    %c0_15 = arith.constant 0 : index
    %c0_16 = arith.constant 0 : index
    %29 = vector.load %arg2[%c0_15, %c0_16] : memref<128x512xf32, #tpu.memory_space<vmem>>, vector<128x512xf32>
    %cst_17 = arith.constant dense<0.000000e+00> : vector<8x512xf32>
    %30 = tpu.matmul %27, %29, %cst_17 {dimension_numbers = #tpu.dot_dimension_numbers<[1], [0], [0], [1], [0, 0, 1, 1], [], []>} : vector<8x128xf32>, vector<128x512xf32>, vector<8x512xf32> -> vector<8x512xf32>
    %31 = arith.addf %28, %30 : vector<8x512xf32>
    %32 = vector.extract_strided_slice %31 {offsets = [0, 0], sizes = [8, 384], strides = [1, 1]} : vector<8x512xf32> to vector<8x384xf32>
    %33 = arith.negf %32 : vector<8x384xf32>
    %34 = math.exp %33 : vector<8x384xf32>
    %cst_18 = arith.constant 1.000000e+00 : f32
    %35 = vector.broadcast %cst_18 : f32 to vector<8x384xf32>
    %36 = arith.addf %35, %34 : vector<8x384xf32>
    %37 = arith.divf %35, %36 : vector<8x384xf32>
    %38 = vector.extract_strided_slice %31 {offsets = [0, 384], sizes = [8, 128], strides = [1, 1]} : vector<8x512xf32> to vector<8x128xf32>
    %39 = math.tanh %38 : vector<8x128xf32>
    %40 = vector.extract_strided_slice %37 {offsets = [0, 0], sizes = [8, 128], strides = [1, 1]} : vector<8x384xf32> to vector<8x128xf32>
    %41 = vector.extract_strided_slice %37 {offsets = [0, 128], sizes = [8, 128], strides = [1, 1]} : vector<8x384xf32> to vector<8x128xf32>
    %42 = vector.extract_strided_slice %37 {offsets = [0, 256], sizes = [8, 128], strides = [1, 1]} : vector<8x384xf32> to vector<8x128xf32>
    %43 = arith.mulf %41, %25 : vector<8x128xf32>
    %44 = arith.mulf %40, %39 : vector<8x128xf32>
    %45 = arith.addf %43, %44 : vector<8x128xf32>
    %46 = math.tanh %45 : vector<8x128xf32>
    %47 = arith.mulf %42, %46 : vector<8x128xf32>
    %48 = tpu.concatenate %27, %7 in 1 : vector<8x128xf32>, vector<8x128xf32> -> vector<8x256xf32>
    %c0_19 = arith.constant 0 : index
    %c0_20 = arith.constant 0 : index
    %49 = vector.load %arg4[%c0_19, %c0_20] : memref<256x512xf32, #tpu.memory_space<vmem>>, vector<256x512xf32>
    %cst_21 = arith.constant dense<0.000000e+00> : vector<8x512xf32>
    %50 = tpu.matmul %48, %49, %cst_21 {dimension_numbers = #tpu.dot_dimension_numbers<[1], [0], [0], [1], [0, 0, 1, 1], [], []>} : vector<8x256xf32>, vector<256x512xf32>, vector<8x512xf32> -> vector<8x512xf32>
    %c0_22 = arith.constant 0 : index
    %c0_23 = arith.constant 0 : index
    %51 = vector.load %arg5[%c0_22, %c0_23] : memref<1x512xf32, #tpu.memory_space<vmem>>, vector<1x512xf32>
    %52 = vector.broadcast %51 : vector<1x512xf32> to vector<8x512xf32>
    %53 = arith.addf %50, %52 : vector<8x512xf32>
    %54 = vector.extract_strided_slice %53 {offsets = [0, 0], sizes = [8, 384], strides = [1, 1]} : vector<8x512xf32> to vector<8x384xf32>
    %55 = arith.negf %54 : vector<8x384xf32>
    %56 = math.exp %55 : vector<8x384xf32>
    %cst_24 = arith.constant 1.000000e+00 : f32
    %57 = vector.broadcast %cst_24 : f32 to vector<8x384xf32>
    %58 = arith.addf %57, %56 : vector<8x384xf32>
    %59 = arith.divf %57, %58 : vector<8x384xf32>
    %60 = vector.extract_strided_slice %53 {offsets = [0, 384], sizes = [8, 128], strides = [1, 1]} : vector<8x512xf32> to vector<8x128xf32>
    %61 = math.tanh %60 : vector<8x128xf32>
    %62 = vector.extract_strided_slice %59 {offsets = [0, 0], sizes = [8, 128], strides = [1, 1]} : vector<8x384xf32> to vector<8x128xf32>
    %63 = vector.extract_strided_slice %59 {offsets = [0, 128], sizes = [8, 128], strides = [1, 1]} : vector<8x384xf32> to vector<8x128xf32>
    %64 = vector.extract_strided_slice %59 {offsets = [0, 256], sizes = [8, 128], strides = [1, 1]} : vector<8x384xf32> to vector<8x128xf32>
    %65 = arith.mulf %63, %7 : vector<8x128xf32>
    %66 = arith.mulf %62, %61 : vector<8x128xf32>
    %67 = arith.addf %65, %66 : vector<8x128xf32>
    %68 = math.tanh %67 : vector<8x128xf32>
    %69 = arith.mulf %64, %68 : vector<8x128xf32>
    %c16 = arith.constant 16 : index
    %c0_25 = arith.constant 0 : index
    %70 = vector.load %arg11[%c16, %c0_25] : memref<64x512xf32, #tpu.memory_space<vmem>>, vector<8x512xf32>
    %c0_26 = arith.constant 0 : index
    %c0_27 = arith.constant 0 : index
    %71 = vector.load %arg2[%c0_26, %c0_27] : memref<128x512xf32, #tpu.memory_space<vmem>>, vector<128x512xf32>
    %cst_28 = arith.constant dense<0.000000e+00> : vector<8x512xf32>
    %72 = tpu.matmul %47, %71, %cst_28 {dimension_numbers = #tpu.dot_dimension_numbers<[1], [0], [0], [1], [0, 0, 1, 1], [], []>} : vector<8x128xf32>, vector<128x512xf32>, vector<8x512xf32> -> vector<8x512xf32>
    %73 = arith.addf %70, %72 : vector<8x512xf32>
    %74 = vector.extract_strided_slice %73 {offsets = [0, 0], sizes = [8, 384], strides = [1, 1]} : vector<8x512xf32> to vector<8x384xf32>
    %75 = arith.negf %74 : vector<8x384xf32>
    %76 = math.exp %75 : vector<8x384xf32>
    %cst_29 = arith.constant 1.000000e+00 : f32
    %77 = vector.broadcast %cst_29 : f32 to vector<8x384xf32>
    %78 = arith.addf %77, %76 : vector<8x384xf32>
    %79 = arith.divf %77, %78 : vector<8x384xf32>
    %80 = vector.extract_strided_slice %73 {offsets = [0, 384], sizes = [8, 128], strides = [1, 1]} : vector<8x512xf32> to vector<8x128xf32>
    %81 = math.tanh %80 : vector<8x128xf32>
    %82 = vector.extract_strided_slice %79 {offsets = [0, 0], sizes = [8, 128], strides = [1, 1]} : vector<8x384xf32> to vector<8x128xf32>
    %83 = vector.extract_strided_slice %79 {offsets = [0, 128], sizes = [8, 128], strides = [1, 1]} : vector<8x384xf32> to vector<8x128xf32>
    %84 = vector.extract_strided_slice %79 {offsets = [0, 256], sizes = [8, 128], strides = [1, 1]} : vector<8x384xf32> to vector<8x128xf32>
    %85 = arith.mulf %83, %45 : vector<8x128xf32>
    %86 = arith.mulf %82, %81 : vector<8x128xf32>
    %87 = arith.addf %85, %86 : vector<8x128xf32>
    %88 = math.tanh %87 : vector<8x128xf32>
    %89 = arith.mulf %84, %88 : vector<8x128xf32>
    %90 = tpu.concatenate %47, %69 in 1 : vector<8x128xf32>, vector<8x128xf32> -> vector<8x256xf32>
    %c0_30 = arith.constant 0 : index
    %c0_31 = arith.constant 0 : index
    %91 = vector.load %arg4[%c0_30, %c0_31] : memref<256x512xf32, #tpu.memory_space<vmem>>, vector<256x512xf32>
    %cst_32 = arith.constant dense<0.000000e+00> : vector<8x512xf32>
    %92 = tpu.matmul %90, %91, %cst_32 {dimension_numbers = #tpu.dot_dimension_numbers<[1], [0], [0], [1], [0, 0, 1, 1], [], []>} : vector<8x256xf32>, vector<256x512xf32>, vector<8x512xf32> -> vector<8x512xf32>
    %c0_33 = arith.constant 0 : index
    %c0_34 = arith.constant 0 : index
    %93 = vector.load %arg5[%c0_33, %c0_34] : memref<1x512xf32, #tpu.memory_space<vmem>>, vector<1x512xf32>
    %94 = vector.broadcast %93 : vector<1x512xf32> to vector<8x512xf32>
    %95 = arith.addf %92, %94 : vector<8x512xf32>
    %96 = vector.extract_strided_slice %95 {offsets = [0, 0], sizes = [8, 384], strides = [1, 1]} : vector<8x512xf32> to vector<8x384xf32>
    %97 = arith.negf %96 : vector<8x384xf32>
    %98 = math.exp %97 : vector<8x384xf32>
    %cst_35 = arith.constant 1.000000e+00 : f32
    %99 = vector.broadcast %cst_35 : f32 to vector<8x384xf32>
    %100 = arith.addf %99, %98 : vector<8x384xf32>
    %101 = arith.divf %99, %100 : vector<8x384xf32>
    %102 = vector.extract_strided_slice %95 {offsets = [0, 384], sizes = [8, 128], strides = [1, 1]} : vector<8x512xf32> to vector<8x128xf32>
    %103 = math.tanh %102 : vector<8x128xf32>
    %104 = vector.extract_strided_slice %101 {offsets = [0, 0], sizes = [8, 128], strides = [1, 1]} : vector<8x384xf32> to vector<8x128xf32>
    %105 = vector.extract_strided_slice %101 {offsets = [0, 128], sizes = [8, 128], strides = [1, 1]} : vector<8x384xf32> to vector<8x128xf32>
    %106 = vector.extract_strided_slice %101 {offsets = [0, 256], sizes = [8, 128], strides = [1, 1]} : vector<8x384xf32> to vector<8x128xf32>
    %107 = arith.mulf %105, %67 : vector<8x128xf32>
    %108 = arith.mulf %104, %103 : vector<8x128xf32>
    %109 = arith.addf %107, %108 : vector<8x128xf32>
    %110 = math.tanh %109 : vector<8x128xf32>
    %111 = arith.mulf %106, %110 : vector<8x128xf32>
    %112 = tpu.concatenate %69, %7 in 1 : vector<8x128xf32>, vector<8x128xf32> -> vector<8x256xf32>
    %c0_36 = arith.constant 0 : index
    %c0_37 = arith.constant 0 : index
    %113 = vector.load %arg6[%c0_36, %c0_37] : memref<256x512xf32, #tpu.memory_space<vmem>>, vector<256x512xf32>
    %cst_38 = arith.constant dense<0.000000e+00> : vector<8x512xf32>
    %114 = tpu.matmul %112, %113, %cst_38 {dimension_numbers = #tpu.dot_dimension_numbers<[1], [0], [0], [1], [0, 0, 1, 1], [], []>} : vector<8x256xf32>, vector<256x512xf32>, vector<8x512xf32> -> vector<8x512xf32>
    %c0_39 = arith.constant 0 : index
    %c0_40 = arith.constant 0 : index
    %115 = vector.load %arg7[%c0_39, %c0_40] : memref<1x512xf32, #tpu.memory_space<vmem>>, vector<1x512xf32>
    %116 = vector.broadcast %115 : vector<1x512xf32> to vector<8x512xf32>
    %117 = arith.addf %114, %116 : vector<8x512xf32>
    %118 = vector.extract_strided_slice %117 {offsets = [0, 0], sizes = [8, 384], strides = [1, 1]} : vector<8x512xf32> to vector<8x384xf32>
    %119 = arith.negf %118 : vector<8x384xf32>
    %120 = math.exp %119 : vector<8x384xf32>
    %cst_41 = arith.constant 1.000000e+00 : f32
    %121 = vector.broadcast %cst_41 : f32 to vector<8x384xf32>
    %122 = arith.addf %121, %120 : vector<8x384xf32>
    %123 = arith.divf %121, %122 : vector<8x384xf32>
    %124 = vector.extract_strided_slice %117 {offsets = [0, 384], sizes = [8, 128], strides = [1, 1]} : vector<8x512xf32> to vector<8x128xf32>
    %125 = math.tanh %124 : vector<8x128xf32>
    %126 = vector.extract_strided_slice %123 {offsets = [0, 0], sizes = [8, 128], strides = [1, 1]} : vector<8x384xf32> to vector<8x128xf32>
    %127 = vector.extract_strided_slice %123 {offsets = [0, 128], sizes = [8, 128], strides = [1, 1]} : vector<8x384xf32> to vector<8x128xf32>
    %128 = vector.extract_strided_slice %123 {offsets = [0, 256], sizes = [8, 128], strides = [1, 1]} : vector<8x384xf32> to vector<8x128xf32>
    %129 = arith.mulf %127, %7 : vector<8x128xf32>
    %130 = arith.mulf %126, %125 : vector<8x128xf32>
    %131 = arith.addf %129, %130 : vector<8x128xf32>
    %132 = math.tanh %131 : vector<8x128xf32>
    %133 = arith.mulf %128, %132 : vector<8x128xf32>
    %c24 = arith.constant 24 : index
    %c0_42 = arith.constant 0 : index
    %134 = vector.load %arg11[%c24, %c0_42] : memref<64x512xf32, #tpu.memory_space<vmem>>, vector<8x512xf32>
    %c0_43 = arith.constant 0 : index
    %c0_44 = arith.constant 0 : index
    %135 = vector.load %arg2[%c0_43, %c0_44] : memref<128x512xf32, #tpu.memory_space<vmem>>, vector<128x512xf32>
    %cst_45 = arith.constant dense<0.000000e+00> : vector<8x512xf32>
    %136 = tpu.matmul %89, %135, %cst_45 {dimension_numbers = #tpu.dot_dimension_numbers<[1], [0], [0], [1], [0, 0, 1, 1], [], []>} : vector<8x128xf32>, vector<128x512xf32>, vector<8x512xf32> -> vector<8x512xf32>
    %137 = arith.addf %134, %136 : vector<8x512xf32>
    %138 = vector.extract_strided_slice %137 {offsets = [0, 0], sizes = [8, 384], strides = [1, 1]} : vector<8x512xf32> to vector<8x384xf32>
    %139 = arith.negf %138 : vector<8x384xf32>
    %140 = math.exp %139 : vector<8x384xf32>
    %cst_46 = arith.constant 1.000000e+00 : f32
    %141 = vector.broadcast %cst_46 : f32 to vector<8x384xf32>
    %142 = arith.addf %141, %140 : vector<8x384xf32>
    %143 = arith.divf %141, %142 : vector<8x384xf32>
    %144 = vector.extract_strided_slice %137 {offsets = [0, 384], sizes = [8, 128], strides = [1, 1]} : vector<8x512xf32> to vector<8x128xf32>
    %145 = math.tanh %144 : vector<8x128xf32>
    %146 = vector.extract_strided_slice %143 {offsets = [0, 0], sizes = [8, 128], strides = [1, 1]} : vector<8x384xf32> to vector<8x128xf32>
    %147 = vector.extract_strided_slice %143 {offsets = [0, 128], sizes = [8, 128], strides = [1, 1]} : vector<8x384xf32> to vector<8x128xf32>
    %148 = vector.extract_strided_slice %143 {offsets = [0, 256], sizes = [8, 128], strides = [1, 1]} : vector<8x384xf32> to vector<8x128xf32>
    %149 = arith.mulf %147, %87 : vector<8x128xf32>
    %150 = arith.mulf %146, %145 : vector<8x128xf32>
    %151 = arith.addf %149, %150 : vector<8x128xf32>
    %152 = math.tanh %151 : vector<8x128xf32>
    %153 = arith.mulf %148, %152 : vector<8x128xf32>
    %154 = tpu.concatenate %89, %111 in 1 : vector<8x128xf32>, vector<8x128xf32> -> vector<8x256xf32>
    %c0_47 = arith.constant 0 : index
    %c0_48 = arith.constant 0 : index
    %155 = vector.load %arg4[%c0_47, %c0_48] : memref<256x512xf32, #tpu.memory_space<vmem>>, vector<256x512xf32>
    %cst_49 = arith.constant dense<0.000000e+00> : vector<8x512xf32>
    %156 = tpu.matmul %154, %155, %cst_49 {dimension_numbers = #tpu.dot_dimension_numbers<[1], [0], [0], [1], [0, 0, 1, 1], [], []>} : vector<8x256xf32>, vector<256x512xf32>, vector<8x512xf32> -> vector<8x512xf32>
    %c0_50 = arith.constant 0 : index
    %c0_51 = arith.constant 0 : index
    %157 = vector.load %arg5[%c0_50, %c0_51] : memref<1x512xf32, #tpu.memory_space<vmem>>, vector<1x512xf32>
    %158 = vector.broadcast %157 : vector<1x512xf32> to vector<8x512xf32>
    %159 = arith.addf %156, %158 : vector<8x512xf32>
    %160 = vector.extract_strided_slice %159 {offsets = [0, 0], sizes = [8, 384], strides = [1, 1]} : vector<8x512xf32> to vector<8x384xf32>
    %161 = arith.negf %160 : vector<8x384xf32>
    %162 = math.exp %161 : vector<8x384xf32>
    %cst_52 = arith.constant 1.000000e+00 : f32
    %163 = vector.broadcast %cst_52 : f32 to vector<8x384xf32>
    %164 = arith.addf %163, %162 : vector<8x384xf32>
    %165 = arith.divf %163, %164 : vector<8x384xf32>
    %166 = vector.extract_strided_slice %159 {offsets = [0, 384], sizes = [8, 128], strides = [1, 1]} : vector<8x512xf32> to vector<8x128xf32>
    %167 = math.tanh %166 : vector<8x128xf32>
    %168 = vector.extract_strided_slice %165 {offsets = [0, 0], sizes = [8, 128], strides = [1, 1]} : vector<8x384xf32> to vector<8x128xf32>
    %169 = vector.extract_strided_slice %165 {offsets = [0, 128], sizes = [8, 128], strides = [1, 1]} : vector<8x384xf32> to vector<8x128xf32>
    %170 = vector.extract_strided_slice %165 {offsets = [0, 256], sizes = [8, 128], strides = [1, 1]} : vector<8x384xf32> to vector<8x128xf32>
    %171 = arith.mulf %169, %109 : vector<8x128xf32>
    %172 = arith.mulf %168, %167 : vector<8x128xf32>
    %173 = arith.addf %171, %172 : vector<8x128xf32>
    %174 = math.tanh %173 : vector<8x128xf32>
    %175 = arith.mulf %170, %174 : vector<8x128xf32>
    %176 = tpu.concatenate %111, %133 in 1 : vector<8x128xf32>, vector<8x128xf32> -> vector<8x256xf32>
    %c0_53 = arith.constant 0 : index
    %c0_54 = arith.constant 0 : index
    %177 = vector.load %arg6[%c0_53, %c0_54] : memref<256x512xf32, #tpu.memory_space<vmem>>, vector<256x512xf32>
    %cst_55 = arith.constant dense<0.000000e+00> : vector<8x512xf32>
    %178 = tpu.matmul %176, %177, %cst_55 {dimension_numbers = #tpu.dot_dimension_numbers<[1], [0], [0], [1], [0, 0, 1, 1], [], []>} : vector<8x256xf32>, vector<256x512xf32>, vector<8x512xf32> -> vector<8x512xf32>
    %c0_56 = arith.constant 0 : index
    %c0_57 = arith.constant 0 : index
    %179 = vector.load %arg7[%c0_56, %c0_57] : memref<1x512xf32, #tpu.memory_space<vmem>>, vector<1x512xf32>
    %180 = vector.broadcast %179 : vector<1x512xf32> to vector<8x512xf32>
    %181 = arith.addf %178, %180 : vector<8x512xf32>
    %182 = vector.extract_strided_slice %181 {offsets = [0, 0], sizes = [8, 384], strides = [1, 1]} : vector<8x512xf32> to vector<8x384xf32>
    %183 = arith.negf %182 : vector<8x384xf32>
    %184 = math.exp %183 : vector<8x384xf32>
    %cst_58 = arith.constant 1.000000e+00 : f32
    %185 = vector.broadcast %cst_58 : f32 to vector<8x384xf32>
    %186 = arith.addf %185, %184 : vector<8x384xf32>
    %187 = arith.divf %185, %186 : vector<8x384xf32>
    %188 = vector.extract_strided_slice %181 {offsets = [0, 384], sizes = [8, 128], strides = [1, 1]} : vector<8x512xf32> to vector<8x128xf32>
    %189 = math.tanh %188 : vector<8x128xf32>
    %190 = vector.extract_strided_slice %187 {offsets = [0, 0], sizes = [8, 128], strides = [1, 1]} : vector<8x384xf32> to vector<8x128xf32>
    %191 = vector.extract_strided_slice %187 {offsets = [0, 128], sizes = [8, 128], strides = [1, 1]} : vector<8x384xf32> to vector<8x128xf32>
    %192 = vector.extract_strided_slice %187 {offsets = [0, 256], sizes = [8, 128], strides = [1, 1]} : vector<8x384xf32> to vector<8x128xf32>
    %193 = arith.mulf %191, %131 : vector<8x128xf32>
    %194 = arith.mulf %190, %189 : vector<8x128xf32>
    %195 = arith.addf %193, %194 : vector<8x128xf32>
    %196 = math.tanh %195 : vector<8x128xf32>
    %197 = arith.mulf %192, %196 : vector<8x128xf32>
    %c32 = arith.constant 32 : index
    %c0_59 = arith.constant 0 : index
    %198 = vector.load %arg11[%c32, %c0_59] : memref<64x512xf32, #tpu.memory_space<vmem>>, vector<8x512xf32>
    %c0_60 = arith.constant 0 : index
    %c0_61 = arith.constant 0 : index
    %199 = vector.load %arg2[%c0_60, %c0_61] : memref<128x512xf32, #tpu.memory_space<vmem>>, vector<128x512xf32>
    %cst_62 = arith.constant dense<0.000000e+00> : vector<8x512xf32>
    %200 = tpu.matmul %153, %199, %cst_62 {dimension_numbers = #tpu.dot_dimension_numbers<[1], [0], [0], [1], [0, 0, 1, 1], [], []>} : vector<8x128xf32>, vector<128x512xf32>, vector<8x512xf32> -> vector<8x512xf32>
    %201 = arith.addf %198, %200 : vector<8x512xf32>
    %202 = vector.extract_strided_slice %201 {offsets = [0, 0], sizes = [8, 384], strides = [1, 1]} : vector<8x512xf32> to vector<8x384xf32>
    %203 = arith.negf %202 : vector<8x384xf32>
    %204 = math.exp %203 : vector<8x384xf32>
    %cst_63 = arith.constant 1.000000e+00 : f32
    %205 = vector.broadcast %cst_63 : f32 to vector<8x384xf32>
    %206 = arith.addf %205, %204 : vector<8x384xf32>
    %207 = arith.divf %205, %206 : vector<8x384xf32>
    %208 = vector.extract_strided_slice %201 {offsets = [0, 384], sizes = [8, 128], strides = [1, 1]} : vector<8x512xf32> to vector<8x128xf32>
    %209 = math.tanh %208 : vector<8x128xf32>
    %210 = vector.extract_strided_slice %207 {offsets = [0, 0], sizes = [8, 128], strides = [1, 1]} : vector<8x384xf32> to vector<8x128xf32>
    %211 = vector.extract_strided_slice %207 {offsets = [0, 128], sizes = [8, 128], strides = [1, 1]} : vector<8x384xf32> to vector<8x128xf32>
    %212 = vector.extract_strided_slice %207 {offsets = [0, 256], sizes = [8, 128], strides = [1, 1]} : vector<8x384xf32> to vector<8x128xf32>
    %213 = arith.mulf %211, %151 : vector<8x128xf32>
    %214 = arith.mulf %210, %209 : vector<8x128xf32>
    %215 = arith.addf %213, %214 : vector<8x128xf32>
    %216 = math.tanh %215 : vector<8x128xf32>
    %217 = arith.mulf %212, %216 : vector<8x128xf32>
    %218 = tpu.concatenate %153, %175 in 1 : vector<8x128xf32>, vector<8x128xf32> -> vector<8x256xf32>
    %c0_64 = arith.constant 0 : index
    %c0_65 = arith.constant 0 : index
    %219 = vector.load %arg4[%c0_64, %c0_65] : memref<256x512xf32, #tpu.memory_space<vmem>>, vector<256x512xf32>
    %cst_66 = arith.constant dense<0.000000e+00> : vector<8x512xf32>
    %220 = tpu.matmul %218, %219, %cst_66 {dimension_numbers = #tpu.dot_dimension_numbers<[1], [0], [0], [1], [0, 0, 1, 1], [], []>} : vector<8x256xf32>, vector<256x512xf32>, vector<8x512xf32> -> vector<8x512xf32>
    %c0_67 = arith.constant 0 : index
    %c0_68 = arith.constant 0 : index
    %221 = vector.load %arg5[%c0_67, %c0_68] : memref<1x512xf32, #tpu.memory_space<vmem>>, vector<1x512xf32>
    %222 = vector.broadcast %221 : vector<1x512xf32> to vector<8x512xf32>
    %223 = arith.addf %220, %222 : vector<8x512xf32>
    %224 = vector.extract_strided_slice %223 {offsets = [0, 0], sizes = [8, 384], strides = [1, 1]} : vector<8x512xf32> to vector<8x384xf32>
    %225 = arith.negf %224 : vector<8x384xf32>
    %226 = math.exp %225 : vector<8x384xf32>
    %cst_69 = arith.constant 1.000000e+00 : f32
    %227 = vector.broadcast %cst_69 : f32 to vector<8x384xf32>
    %228 = arith.addf %227, %226 : vector<8x384xf32>
    %229 = arith.divf %227, %228 : vector<8x384xf32>
    %230 = vector.extract_strided_slice %223 {offsets = [0, 384], sizes = [8, 128], strides = [1, 1]} : vector<8x512xf32> to vector<8x128xf32>
    %231 = math.tanh %230 : vector<8x128xf32>
    %232 = vector.extract_strided_slice %229 {offsets = [0, 0], sizes = [8, 128], strides = [1, 1]} : vector<8x384xf32> to vector<8x128xf32>
    %233 = vector.extract_strided_slice %229 {offsets = [0, 128], sizes = [8, 128], strides = [1, 1]} : vector<8x384xf32> to vector<8x128xf32>
    %234 = vector.extract_strided_slice %229 {offsets = [0, 256], sizes = [8, 128], strides = [1, 1]} : vector<8x384xf32> to vector<8x128xf32>
    %235 = arith.mulf %233, %173 : vector<8x128xf32>
    %236 = arith.mulf %232, %231 : vector<8x128xf32>
    %237 = arith.addf %235, %236 : vector<8x128xf32>
    %238 = math.tanh %237 : vector<8x128xf32>
    %239 = arith.mulf %234, %238 : vector<8x128xf32>
    %240 = tpu.concatenate %175, %197 in 1 : vector<8x128xf32>, vector<8x128xf32> -> vector<8x256xf32>
    %c0_70 = arith.constant 0 : index
    %c0_71 = arith.constant 0 : index
    %241 = vector.load %arg6[%c0_70, %c0_71] : memref<256x512xf32, #tpu.memory_space<vmem>>, vector<256x512xf32>
    %cst_72 = arith.constant dense<0.000000e+00> : vector<8x512xf32>
    %242 = tpu.matmul %240, %241, %cst_72 {dimension_numbers = #tpu.dot_dimension_numbers<[1], [0], [0], [1], [0, 0, 1, 1], [], []>} : vector<8x256xf32>, vector<256x512xf32>, vector<8x512xf32> -> vector<8x512xf32>
    %c0_73 = arith.constant 0 : index
    %c0_74 = arith.constant 0 : index
    %243 = vector.load %arg7[%c0_73, %c0_74] : memref<1x512xf32, #tpu.memory_space<vmem>>, vector<1x512xf32>
    %244 = vector.broadcast %243 : vector<1x512xf32> to vector<8x512xf32>
    %245 = arith.addf %242, %244 : vector<8x512xf32>
    %246 = vector.extract_strided_slice %245 {offsets = [0, 0], sizes = [8, 384], strides = [1, 1]} : vector<8x512xf32> to vector<8x384xf32>
    %247 = arith.negf %246 : vector<8x384xf32>
    %248 = math.exp %247 : vector<8x384xf32>
    %cst_75 = arith.constant 1.000000e+00 : f32
    %249 = vector.broadcast %cst_75 : f32 to vector<8x384xf32>
    %250 = arith.addf %249, %248 : vector<8x384xf32>
    %251 = arith.divf %249, %250 : vector<8x384xf32>
    %252 = vector.extract_strided_slice %245 {offsets = [0, 384], sizes = [8, 128], strides = [1, 1]} : vector<8x512xf32> to vector<8x128xf32>
    %253 = math.tanh %252 : vector<8x128xf32>
    %254 = vector.extract_strided_slice %251 {offsets = [0, 0], sizes = [8, 128], strides = [1, 1]} : vector<8x384xf32> to vector<8x128xf32>
    %255 = vector.extract_strided_slice %251 {offsets = [0, 128], sizes = [8, 128], strides = [1, 1]} : vector<8x384xf32> to vector<8x128xf32>
    %256 = vector.extract_strided_slice %251 {offsets = [0, 256], sizes = [8, 128], strides = [1, 1]} : vector<8x384xf32> to vector<8x128xf32>
    %257 = arith.mulf %255, %195 : vector<8x128xf32>
    %258 = arith.mulf %254, %253 : vector<8x128xf32>
    %259 = arith.addf %257, %258 : vector<8x128xf32>
    %260 = math.tanh %259 : vector<8x128xf32>
    %261 = arith.mulf %256, %260 : vector<8x128xf32>
    %c40 = arith.constant 40 : index
    %c0_76 = arith.constant 0 : index
    %262 = vector.load %arg11[%c40, %c0_76] : memref<64x512xf32, #tpu.memory_space<vmem>>, vector<8x512xf32>
    %c0_77 = arith.constant 0 : index
    %c0_78 = arith.constant 0 : index
    %263 = vector.load %arg2[%c0_77, %c0_78] : memref<128x512xf32, #tpu.memory_space<vmem>>, vector<128x512xf32>
    %cst_79 = arith.constant dense<0.000000e+00> : vector<8x512xf32>
    %264 = tpu.matmul %217, %263, %cst_79 {dimension_numbers = #tpu.dot_dimension_numbers<[1], [0], [0], [1], [0, 0, 1, 1], [], []>} : vector<8x128xf32>, vector<128x512xf32>, vector<8x512xf32> -> vector<8x512xf32>
    %265 = arith.addf %262, %264 : vector<8x512xf32>
    %266 = vector.extract_strided_slice %265 {offsets = [0, 0], sizes = [8, 384], strides = [1, 1]} : vector<8x512xf32> to vector<8x384xf32>
    %267 = arith.negf %266 : vector<8x384xf32>
    %268 = math.exp %267 : vector<8x384xf32>
    %cst_80 = arith.constant 1.000000e+00 : f32
    %269 = vector.broadcast %cst_80 : f32 to vector<8x384xf32>
    %270 = arith.addf %269, %268 : vector<8x384xf32>
    %271 = arith.divf %269, %270 : vector<8x384xf32>
    %272 = vector.extract_strided_slice %265 {offsets = [0, 384], sizes = [8, 128], strides = [1, 1]} : vector<8x512xf32> to vector<8x128xf32>
    %273 = math.tanh %272 : vector<8x128xf32>
    %274 = vector.extract_strided_slice %271 {offsets = [0, 0], sizes = [8, 128], strides = [1, 1]} : vector<8x384xf32> to vector<8x128xf32>
    %275 = vector.extract_strided_slice %271 {offsets = [0, 128], sizes = [8, 128], strides = [1, 1]} : vector<8x384xf32> to vector<8x128xf32>
    %276 = vector.extract_strided_slice %271 {offsets = [0, 256], sizes = [8, 128], strides = [1, 1]} : vector<8x384xf32> to vector<8x128xf32>
    %277 = arith.mulf %275, %215 : vector<8x128xf32>
    %278 = arith.mulf %274, %273 : vector<8x128xf32>
    %279 = arith.addf %277, %278 : vector<8x128xf32>
    %280 = math.tanh %279 : vector<8x128xf32>
    %281 = arith.mulf %276, %280 : vector<8x128xf32>
    %282 = tpu.concatenate %217, %239 in 1 : vector<8x128xf32>, vector<8x128xf32> -> vector<8x256xf32>
    %c0_81 = arith.constant 0 : index
    %c0_82 = arith.constant 0 : index
    %283 = vector.load %arg4[%c0_81, %c0_82] : memref<256x512xf32, #tpu.memory_space<vmem>>, vector<256x512xf32>
    %cst_83 = arith.constant dense<0.000000e+00> : vector<8x512xf32>
    %284 = tpu.matmul %282, %283, %cst_83 {dimension_numbers = #tpu.dot_dimension_numbers<[1], [0], [0], [1], [0, 0, 1, 1], [], []>} : vector<8x256xf32>, vector<256x512xf32>, vector<8x512xf32> -> vector<8x512xf32>
    %c0_84 = arith.constant 0 : index
    %c0_85 = arith.constant 0 : index
    %285 = vector.load %arg5[%c0_84, %c0_85] : memref<1x512xf32, #tpu.memory_space<vmem>>, vector<1x512xf32>
    %286 = vector.broadcast %285 : vector<1x512xf32> to vector<8x512xf32>
    %287 = arith.addf %284, %286 : vector<8x512xf32>
    %288 = vector.extract_strided_slice %287 {offsets = [0, 0], sizes = [8, 384], strides = [1, 1]} : vector<8x512xf32> to vector<8x384xf32>
    %289 = arith.negf %288 : vector<8x384xf32>
    %290 = math.exp %289 : vector<8x384xf32>
    %cst_86 = arith.constant 1.000000e+00 : f32
    %291 = vector.broadcast %cst_86 : f32 to vector<8x384xf32>
    %292 = arith.addf %291, %290 : vector<8x384xf32>
    %293 = arith.divf %291, %292 : vector<8x384xf32>
    %294 = vector.extract_strided_slice %287 {offsets = [0, 384], sizes = [8, 128], strides = [1, 1]} : vector<8x512xf32> to vector<8x128xf32>
    %295 = math.tanh %294 : vector<8x128xf32>
    %296 = vector.extract_strided_slice %293 {offsets = [0, 0], sizes = [8, 128], strides = [1, 1]} : vector<8x384xf32> to vector<8x128xf32>
    %297 = vector.extract_strided_slice %293 {offsets = [0, 128], sizes = [8, 128], strides = [1, 1]} : vector<8x384xf32> to vector<8x128xf32>
    %298 = vector.extract_strided_slice %293 {offsets = [0, 256], sizes = [8, 128], strides = [1, 1]} : vector<8x384xf32> to vector<8x128xf32>
    %299 = arith.mulf %297, %237 : vector<8x128xf32>
    %300 = arith.mulf %296, %295 : vector<8x128xf32>
    %301 = arith.addf %299, %300 : vector<8x128xf32>
    %302 = math.tanh %301 : vector<8x128xf32>
    %303 = arith.mulf %298, %302 : vector<8x128xf32>
    %304 = tpu.concatenate %239, %261 in 1 : vector<8x128xf32>, vector<8x128xf32> -> vector<8x256xf32>
    %c0_87 = arith.constant 0 : index
    %c0_88 = arith.constant 0 : index
    %305 = vector.load %arg6[%c0_87, %c0_88] : memref<256x512xf32, #tpu.memory_space<vmem>>, vector<256x512xf32>
    %cst_89 = arith.constant dense<0.000000e+00> : vector<8x512xf32>
    %306 = tpu.matmul %304, %305, %cst_89 {dimension_numbers = #tpu.dot_dimension_numbers<[1], [0], [0], [1], [0, 0, 1, 1], [], []>} : vector<8x256xf32>, vector<256x512xf32>, vector<8x512xf32> -> vector<8x512xf32>
    %c0_90 = arith.constant 0 : index
    %c0_91 = arith.constant 0 : index
    %307 = vector.load %arg7[%c0_90, %c0_91] : memref<1x512xf32, #tpu.memory_space<vmem>>, vector<1x512xf32>
    %308 = vector.broadcast %307 : vector<1x512xf32> to vector<8x512xf32>
    %309 = arith.addf %306, %308 : vector<8x512xf32>
    %310 = vector.extract_strided_slice %309 {offsets = [0, 0], sizes = [8, 384], strides = [1, 1]} : vector<8x512xf32> to vector<8x384xf32>
    %311 = arith.negf %310 : vector<8x384xf32>
    %312 = math.exp %311 : vector<8x384xf32>
    %cst_92 = arith.constant 1.000000e+00 : f32
    %313 = vector.broadcast %cst_92 : f32 to vector<8x384xf32>
    %314 = arith.addf %313, %312 : vector<8x384xf32>
    %315 = arith.divf %313, %314 : vector<8x384xf32>
    %316 = vector.extract_strided_slice %309 {offsets = [0, 384], sizes = [8, 128], strides = [1, 1]} : vector<8x512xf32> to vector<8x128xf32>
    %317 = math.tanh %316 : vector<8x128xf32>
    %318 = vector.extract_strided_slice %315 {offsets = [0, 0], sizes = [8, 128], strides = [1, 1]} : vector<8x384xf32> to vector<8x128xf32>
    %319 = vector.extract_strided_slice %315 {offsets = [0, 128], sizes = [8, 128], strides = [1, 1]} : vector<8x384xf32> to vector<8x128xf32>
    %320 = vector.extract_strided_slice %315 {offsets = [0, 256], sizes = [8, 128], strides = [1, 1]} : vector<8x384xf32> to vector<8x128xf32>
    %321 = arith.mulf %319, %259 : vector<8x128xf32>
    %322 = arith.mulf %318, %317 : vector<8x128xf32>
    %323 = arith.addf %321, %322 : vector<8x128xf32>
    %324 = math.tanh %323 : vector<8x128xf32>
    %325 = arith.mulf %320, %324 : vector<8x128xf32>
    %c48 = arith.constant 48 : index
    %c0_93 = arith.constant 0 : index
    %326 = vector.load %arg11[%c48, %c0_93] : memref<64x512xf32, #tpu.memory_space<vmem>>, vector<8x512xf32>
    %c0_94 = arith.constant 0 : index
    %c0_95 = arith.constant 0 : index
    %327 = vector.load %arg2[%c0_94, %c0_95] : memref<128x512xf32, #tpu.memory_space<vmem>>, vector<128x512xf32>
    %cst_96 = arith.constant dense<0.000000e+00> : vector<8x512xf32>
    %328 = tpu.matmul %281, %327, %cst_96 {dimension_numbers = #tpu.dot_dimension_numbers<[1], [0], [0], [1], [0, 0, 1, 1], [], []>} : vector<8x128xf32>, vector<128x512xf32>, vector<8x512xf32> -> vector<8x512xf32>
    %329 = arith.addf %326, %328 : vector<8x512xf32>
    %330 = vector.extract_strided_slice %329 {offsets = [0, 0], sizes = [8, 384], strides = [1, 1]} : vector<8x512xf32> to vector<8x384xf32>
    %331 = arith.negf %330 : vector<8x384xf32>
    %332 = math.exp %331 : vector<8x384xf32>
    %cst_97 = arith.constant 1.000000e+00 : f32
    %333 = vector.broadcast %cst_97 : f32 to vector<8x384xf32>
    %334 = arith.addf %333, %332 : vector<8x384xf32>
    %335 = arith.divf %333, %334 : vector<8x384xf32>
    %336 = vector.extract_strided_slice %329 {offsets = [0, 384], sizes = [8, 128], strides = [1, 1]} : vector<8x512xf32> to vector<8x128xf32>
    %337 = math.tanh %336 : vector<8x128xf32>
    %338 = vector.extract_strided_slice %335 {offsets = [0, 0], sizes = [8, 128], strides = [1, 1]} : vector<8x384xf32> to vector<8x128xf32>
    %339 = vector.extract_strided_slice %335 {offsets = [0, 128], sizes = [8, 128], strides = [1, 1]} : vector<8x384xf32> to vector<8x128xf32>
    %340 = vector.extract_strided_slice %335 {offsets = [0, 256], sizes = [8, 128], strides = [1, 1]} : vector<8x384xf32> to vector<8x128xf32>
    %341 = arith.mulf %339, %279 : vector<8x128xf32>
    %342 = arith.mulf %338, %337 : vector<8x128xf32>
    %343 = arith.addf %341, %342 : vector<8x128xf32>
    %344 = math.tanh %343 : vector<8x128xf32>
    %345 = arith.mulf %340, %344 : vector<8x128xf32>
    %346 = tpu.concatenate %281, %303 in 1 : vector<8x128xf32>, vector<8x128xf32> -> vector<8x256xf32>
    %c0_98 = arith.constant 0 : index
    %c0_99 = arith.constant 0 : index
    %347 = vector.load %arg4[%c0_98, %c0_99] : memref<256x512xf32, #tpu.memory_space<vmem>>, vector<256x512xf32>
    %cst_100 = arith.constant dense<0.000000e+00> : vector<8x512xf32>
    %348 = tpu.matmul %346, %347, %cst_100 {dimension_numbers = #tpu.dot_dimension_numbers<[1], [0], [0], [1], [0, 0, 1, 1], [], []>} : vector<8x256xf32>, vector<256x512xf32>, vector<8x512xf32> -> vector<8x512xf32>
    %c0_101 = arith.constant 0 : index
    %c0_102 = arith.constant 0 : index
    %349 = vector.load %arg5[%c0_101, %c0_102] : memref<1x512xf32, #tpu.memory_space<vmem>>, vector<1x512xf32>
    %350 = vector.broadcast %349 : vector<1x512xf32> to vector<8x512xf32>
    %351 = arith.addf %348, %350 : vector<8x512xf32>
    %352 = vector.extract_strided_slice %351 {offsets = [0, 0], sizes = [8, 384], strides = [1, 1]} : vector<8x512xf32> to vector<8x384xf32>
    %353 = arith.negf %352 : vector<8x384xf32>
    %354 = math.exp %353 : vector<8x384xf32>
    %cst_103 = arith.constant 1.000000e+00 : f32
    %355 = vector.broadcast %cst_103 : f32 to vector<8x384xf32>
    %356 = arith.addf %355, %354 : vector<8x384xf32>
    %357 = arith.divf %355, %356 : vector<8x384xf32>
    %358 = vector.extract_strided_slice %351 {offsets = [0, 384], sizes = [8, 128], strides = [1, 1]} : vector<8x512xf32> to vector<8x128xf32>
    %359 = math.tanh %358 : vector<8x128xf32>
    %360 = vector.extract_strided_slice %357 {offsets = [0, 0], sizes = [8, 128], strides = [1, 1]} : vector<8x384xf32> to vector<8x128xf32>
    %361 = vector.extract_strided_slice %357 {offsets = [0, 128], sizes = [8, 128], strides = [1, 1]} : vector<8x384xf32> to vector<8x128xf32>
    %362 = vector.extract_strided_slice %357 {offsets = [0, 256], sizes = [8, 128], strides = [1, 1]} : vector<8x384xf32> to vector<8x128xf32>
    %363 = arith.mulf %361, %301 : vector<8x128xf32>
    %364 = arith.mulf %360, %359 : vector<8x128xf32>
    %365 = arith.addf %363, %364 : vector<8x128xf32>
    %366 = math.tanh %365 : vector<8x128xf32>
    %367 = arith.mulf %362, %366 : vector<8x128xf32>
    %368 = tpu.concatenate %303, %325 in 1 : vector<8x128xf32>, vector<8x128xf32> -> vector<8x256xf32>
    %c0_104 = arith.constant 0 : index
    %c0_105 = arith.constant 0 : index
    %369 = vector.load %arg6[%c0_104, %c0_105] : memref<256x512xf32, #tpu.memory_space<vmem>>, vector<256x512xf32>
    %cst_106 = arith.constant dense<0.000000e+00> : vector<8x512xf32>
    %370 = tpu.matmul %368, %369, %cst_106 {dimension_numbers = #tpu.dot_dimension_numbers<[1], [0], [0], [1], [0, 0, 1, 1], [], []>} : vector<8x256xf32>, vector<256x512xf32>, vector<8x512xf32> -> vector<8x512xf32>
    %c0_107 = arith.constant 0 : index
    %c0_108 = arith.constant 0 : index
    %371 = vector.load %arg7[%c0_107, %c0_108] : memref<1x512xf32, #tpu.memory_space<vmem>>, vector<1x512xf32>
    %372 = vector.broadcast %371 : vector<1x512xf32> to vector<8x512xf32>
    %373 = arith.addf %370, %372 : vector<8x512xf32>
    %374 = vector.extract_strided_slice %373 {offsets = [0, 0], sizes = [8, 384], strides = [1, 1]} : vector<8x512xf32> to vector<8x384xf32>
    %375 = arith.negf %374 : vector<8x384xf32>
    %376 = math.exp %375 : vector<8x384xf32>
    %cst_109 = arith.constant 1.000000e+00 : f32
    %377 = vector.broadcast %cst_109 : f32 to vector<8x384xf32>
    %378 = arith.addf %377, %376 : vector<8x384xf32>
    %379 = arith.divf %377, %378 : vector<8x384xf32>
    %380 = vector.extract_strided_slice %373 {offsets = [0, 384], sizes = [8, 128], strides = [1, 1]} : vector<8x512xf32> to vector<8x128xf32>
    %381 = math.tanh %380 : vector<8x128xf32>
    %382 = vector.extract_strided_slice %379 {offsets = [0, 0], sizes = [8, 128], strides = [1, 1]} : vector<8x384xf32> to vector<8x128xf32>
    %383 = vector.extract_strided_slice %379 {offsets = [0, 128], sizes = [8, 128], strides = [1, 1]} : vector<8x384xf32> to vector<8x128xf32>
    %384 = vector.extract_strided_slice %379 {offsets = [0, 256], sizes = [8, 128], strides = [1, 1]} : vector<8x384xf32> to vector<8x128xf32>
    %385 = arith.mulf %383, %323 : vector<8x128xf32>
    %386 = arith.mulf %382, %381 : vector<8x128xf32>
    %387 = arith.addf %385, %386 : vector<8x128xf32>
    %388 = math.tanh %387 : vector<8x128xf32>
    %389 = arith.mulf %384, %388 : vector<8x128xf32>
    %c56 = arith.constant 56 : index
    %c0_110 = arith.constant 0 : index
    %390 = vector.load %arg11[%c56, %c0_110] : memref<64x512xf32, #tpu.memory_space<vmem>>, vector<8x512xf32>
    %c0_111 = arith.constant 0 : index
    %c0_112 = arith.constant 0 : index
    %391 = vector.load %arg2[%c0_111, %c0_112] : memref<128x512xf32, #tpu.memory_space<vmem>>, vector<128x512xf32>
    %cst_113 = arith.constant dense<0.000000e+00> : vector<8x512xf32>
    %392 = tpu.matmul %345, %391, %cst_113 {dimension_numbers = #tpu.dot_dimension_numbers<[1], [0], [0], [1], [0, 0, 1, 1], [], []>} : vector<8x128xf32>, vector<128x512xf32>, vector<8x512xf32> -> vector<8x512xf32>
    %393 = arith.addf %390, %392 : vector<8x512xf32>
    %394 = vector.extract_strided_slice %393 {offsets = [0, 0], sizes = [8, 384], strides = [1, 1]} : vector<8x512xf32> to vector<8x384xf32>
    %395 = arith.negf %394 : vector<8x384xf32>
    %396 = math.exp %395 : vector<8x384xf32>
    %cst_114 = arith.constant 1.000000e+00 : f32
    %397 = vector.broadcast %cst_114 : f32 to vector<8x384xf32>
    %398 = arith.addf %397, %396 : vector<8x384xf32>
    %399 = arith.divf %397, %398 : vector<8x384xf32>
    %400 = vector.extract_strided_slice %393 {offsets = [0, 384], sizes = [8, 128], strides = [1, 1]} : vector<8x512xf32> to vector<8x128xf32>
    %401 = math.tanh %400 : vector<8x128xf32>
    %402 = vector.extract_strided_slice %399 {offsets = [0, 0], sizes = [8, 128], strides = [1, 1]} : vector<8x384xf32> to vector<8x128xf32>
    %403 = vector.extract_strided_slice %399 {offsets = [0, 128], sizes = [8, 128], strides = [1, 1]} : vector<8x384xf32> to vector<8x128xf32>
    %404 = vector.extract_strided_slice %399 {offsets = [0, 256], sizes = [8, 128], strides = [1, 1]} : vector<8x384xf32> to vector<8x128xf32>
    %405 = arith.mulf %403, %343 : vector<8x128xf32>
    %406 = arith.mulf %402, %401 : vector<8x128xf32>
    %407 = arith.addf %405, %406 : vector<8x128xf32>
    %408 = math.tanh %407 : vector<8x128xf32>
    %409 = arith.mulf %404, %408 : vector<8x128xf32>
    %410 = tpu.concatenate %345, %367 in 1 : vector<8x128xf32>, vector<8x128xf32> -> vector<8x256xf32>
    %c0_115 = arith.constant 0 : index
    %c0_116 = arith.constant 0 : index
    %411 = vector.load %arg4[%c0_115, %c0_116] : memref<256x512xf32, #tpu.memory_space<vmem>>, vector<256x512xf32>
    %cst_117 = arith.constant dense<0.000000e+00> : vector<8x512xf32>
    %412 = tpu.matmul %410, %411, %cst_117 {dimension_numbers = #tpu.dot_dimension_numbers<[1], [0], [0], [1], [0, 0, 1, 1], [], []>} : vector<8x256xf32>, vector<256x512xf32>, vector<8x512xf32> -> vector<8x512xf32>
    %c0_118 = arith.constant 0 : index
    %c0_119 = arith.constant 0 : index
    %413 = vector.load %arg5[%c0_118, %c0_119] : memref<1x512xf32, #tpu.memory_space<vmem>>, vector<1x512xf32>
    %414 = vector.broadcast %413 : vector<1x512xf32> to vector<8x512xf32>
    %415 = arith.addf %412, %414 : vector<8x512xf32>
    %416 = vector.extract_strided_slice %415 {offsets = [0, 0], sizes = [8, 384], strides = [1, 1]} : vector<8x512xf32> to vector<8x384xf32>
    %417 = arith.negf %416 : vector<8x384xf32>
    %418 = math.exp %417 : vector<8x384xf32>
    %cst_120 = arith.constant 1.000000e+00 : f32
    %419 = vector.broadcast %cst_120 : f32 to vector<8x384xf32>
    %420 = arith.addf %419, %418 : vector<8x384xf32>
    %421 = arith.divf %419, %420 : vector<8x384xf32>
    %422 = vector.extract_strided_slice %415 {offsets = [0, 384], sizes = [8, 128], strides = [1, 1]} : vector<8x512xf32> to vector<8x128xf32>
    %423 = math.tanh %422 : vector<8x128xf32>
    %424 = vector.extract_strided_slice %421 {offsets = [0, 0], sizes = [8, 128], strides = [1, 1]} : vector<8x384xf32> to vector<8x128xf32>
    %425 = vector.extract_strided_slice %421 {offsets = [0, 128], sizes = [8, 128], strides = [1, 1]} : vector<8x384xf32> to vector<8x128xf32>
    %426 = vector.extract_strided_slice %421 {offsets = [0, 256], sizes = [8, 128], strides = [1, 1]} : vector<8x384xf32> to vector<8x128xf32>
    %427 = arith.mulf %425, %365 : vector<8x128xf32>
    %428 = arith.mulf %424, %423 : vector<8x128xf32>
    %429 = arith.addf %427, %428 : vector<8x128xf32>
    %430 = math.tanh %429 : vector<8x128xf32>
    %431 = arith.mulf %426, %430 : vector<8x128xf32>
    %432 = tpu.concatenate %367, %389 in 1 : vector<8x128xf32>, vector<8x128xf32> -> vector<8x256xf32>
    %c0_121 = arith.constant 0 : index
    %c0_122 = arith.constant 0 : index
    %433 = vector.load %arg6[%c0_121, %c0_122] : memref<256x512xf32, #tpu.memory_space<vmem>>, vector<256x512xf32>
    %cst_123 = arith.constant dense<0.000000e+00> : vector<8x512xf32>
    %434 = tpu.matmul %432, %433, %cst_123 {dimension_numbers = #tpu.dot_dimension_numbers<[1], [0], [0], [1], [0, 0, 1, 1], [], []>} : vector<8x256xf32>, vector<256x512xf32>, vector<8x512xf32> -> vector<8x512xf32>
    %c0_124 = arith.constant 0 : index
    %c0_125 = arith.constant 0 : index
    %435 = vector.load %arg7[%c0_124, %c0_125] : memref<1x512xf32, #tpu.memory_space<vmem>>, vector<1x512xf32>
    %436 = vector.broadcast %435 : vector<1x512xf32> to vector<8x512xf32>
    %437 = arith.addf %434, %436 : vector<8x512xf32>
    %438 = vector.extract_strided_slice %437 {offsets = [0, 0], sizes = [8, 384], strides = [1, 1]} : vector<8x512xf32> to vector<8x384xf32>
    %439 = arith.negf %438 : vector<8x384xf32>
    %440 = math.exp %439 : vector<8x384xf32>
    %cst_126 = arith.constant 1.000000e+00 : f32
    %441 = vector.broadcast %cst_126 : f32 to vector<8x384xf32>
    %442 = arith.addf %441, %440 : vector<8x384xf32>
    %443 = arith.divf %441, %442 : vector<8x384xf32>
    %444 = vector.extract_strided_slice %437 {offsets = [0, 384], sizes = [8, 128], strides = [1, 1]} : vector<8x512xf32> to vector<8x128xf32>
    %445 = math.tanh %444 : vector<8x128xf32>
    %446 = vector.extract_strided_slice %443 {offsets = [0, 0], sizes = [8, 128], strides = [1, 1]} : vector<8x384xf32> to vector<8x128xf32>
    %447 = vector.extract_strided_slice %443 {offsets = [0, 128], sizes = [8, 128], strides = [1, 1]} : vector<8x384xf32> to vector<8x128xf32>
    %448 = vector.extract_strided_slice %443 {offsets = [0, 256], sizes = [8, 128], strides = [1, 1]} : vector<8x384xf32> to vector<8x128xf32>
    %449 = arith.mulf %447, %387 : vector<8x128xf32>
    %450 = arith.mulf %446, %445 : vector<8x128xf32>
    %451 = arith.addf %449, %450 : vector<8x128xf32>
    %452 = math.tanh %451 : vector<8x128xf32>
    %453 = arith.mulf %448, %452 : vector<8x128xf32>
    %454 = tpu.concatenate %409, %431 in 1 : vector<8x128xf32>, vector<8x128xf32> -> vector<8x256xf32>
    %c0_127 = arith.constant 0 : index
    %c0_128 = arith.constant 0 : index
    %455 = vector.load %arg4[%c0_127, %c0_128] : memref<256x512xf32, #tpu.memory_space<vmem>>, vector<256x512xf32>
    %cst_129 = arith.constant dense<0.000000e+00> : vector<8x512xf32>
    %456 = tpu.matmul %454, %455, %cst_129 {dimension_numbers = #tpu.dot_dimension_numbers<[1], [0], [0], [1], [0, 0, 1, 1], [], []>} : vector<8x256xf32>, vector<256x512xf32>, vector<8x512xf32> -> vector<8x512xf32>
    %c0_130 = arith.constant 0 : index
    %c0_131 = arith.constant 0 : index
    %457 = vector.load %arg5[%c0_130, %c0_131] : memref<1x512xf32, #tpu.memory_space<vmem>>, vector<1x512xf32>
    %458 = vector.broadcast %457 : vector<1x512xf32> to vector<8x512xf32>
    %459 = arith.addf %456, %458 : vector<8x512xf32>
    %460 = vector.extract_strided_slice %459 {offsets = [0, 0], sizes = [8, 384], strides = [1, 1]} : vector<8x512xf32> to vector<8x384xf32>
    %461 = arith.negf %460 : vector<8x384xf32>
    %462 = math.exp %461 : vector<8x384xf32>
    %cst_132 = arith.constant 1.000000e+00 : f32
    %463 = vector.broadcast %cst_132 : f32 to vector<8x384xf32>
    %464 = arith.addf %463, %462 : vector<8x384xf32>
    %465 = arith.divf %463, %464 : vector<8x384xf32>
    %466 = vector.extract_strided_slice %459 {offsets = [0, 384], sizes = [8, 128], strides = [1, 1]} : vector<8x512xf32> to vector<8x128xf32>
    %467 = math.tanh %466 : vector<8x128xf32>
    %468 = vector.extract_strided_slice %465 {offsets = [0, 0], sizes = [8, 128], strides = [1, 1]} : vector<8x384xf32> to vector<8x128xf32>
    %469 = vector.extract_strided_slice %465 {offsets = [0, 128], sizes = [8, 128], strides = [1, 1]} : vector<8x384xf32> to vector<8x128xf32>
    %470 = vector.extract_strided_slice %465 {offsets = [0, 256], sizes = [8, 128], strides = [1, 1]} : vector<8x384xf32> to vector<8x128xf32>
    %471 = arith.mulf %469, %429 : vector<8x128xf32>
    %472 = arith.mulf %468, %467 : vector<8x128xf32>
    %473 = arith.addf %471, %472 : vector<8x128xf32>
    %474 = math.tanh %473 : vector<8x128xf32>
    %475 = arith.mulf %470, %474 : vector<8x128xf32>
    %476 = tpu.concatenate %431, %453 in 1 : vector<8x128xf32>, vector<8x128xf32> -> vector<8x256xf32>
    %c0_133 = arith.constant 0 : index
    %c0_134 = arith.constant 0 : index
    %477 = vector.load %arg6[%c0_133, %c0_134] : memref<256x512xf32, #tpu.memory_space<vmem>>, vector<256x512xf32>
    %cst_135 = arith.constant dense<0.000000e+00> : vector<8x512xf32>
    %478 = tpu.matmul %476, %477, %cst_135 {dimension_numbers = #tpu.dot_dimension_numbers<[1], [0], [0], [1], [0, 0, 1, 1], [], []>} : vector<8x256xf32>, vector<256x512xf32>, vector<8x512xf32> -> vector<8x512xf32>
    %c0_136 = arith.constant 0 : index
    %c0_137 = arith.constant 0 : index
    %479 = vector.load %arg7[%c0_136, %c0_137] : memref<1x512xf32, #tpu.memory_space<vmem>>, vector<1x512xf32>
    %480 = vector.broadcast %479 : vector<1x512xf32> to vector<8x512xf32>
    %481 = arith.addf %478, %480 : vector<8x512xf32>
    %482 = vector.extract_strided_slice %481 {offsets = [0, 0], sizes = [8, 384], strides = [1, 1]} : vector<8x512xf32> to vector<8x384xf32>
    %483 = arith.negf %482 : vector<8x384xf32>
    %484 = math.exp %483 : vector<8x384xf32>
    %cst_138 = arith.constant 1.000000e+00 : f32
    %485 = vector.broadcast %cst_138 : f32 to vector<8x384xf32>
    %486 = arith.addf %485, %484 : vector<8x384xf32>
    %487 = arith.divf %485, %486 : vector<8x384xf32>
    %488 = vector.extract_strided_slice %481 {offsets = [0, 384], sizes = [8, 128], strides = [1, 1]} : vector<8x512xf32> to vector<8x128xf32>
    %489 = math.tanh %488 : vector<8x128xf32>
    %490 = vector.extract_strided_slice %487 {offsets = [0, 0], sizes = [8, 128], strides = [1, 1]} : vector<8x384xf32> to vector<8x128xf32>
    %491 = vector.extract_strided_slice %487 {offsets = [0, 128], sizes = [8, 128], strides = [1, 1]} : vector<8x384xf32> to vector<8x128xf32>
    %492 = vector.extract_strided_slice %487 {offsets = [0, 256], sizes = [8, 128], strides = [1, 1]} : vector<8x384xf32> to vector<8x128xf32>
    %493 = arith.mulf %491, %451 : vector<8x128xf32>
    %494 = arith.mulf %490, %489 : vector<8x128xf32>
    %495 = arith.addf %493, %494 : vector<8x128xf32>
    %496 = math.tanh %495 : vector<8x128xf32>
    %497 = arith.mulf %492, %496 : vector<8x128xf32>
    %498 = tpu.concatenate %475, %497 in 1 : vector<8x128xf32>, vector<8x128xf32> -> vector<8x256xf32>
    %c0_139 = arith.constant 0 : index
    %c0_140 = arith.constant 0 : index
    %499 = vector.load %arg6[%c0_139, %c0_140] : memref<256x512xf32, #tpu.memory_space<vmem>>, vector<256x512xf32>
    %cst_141 = arith.constant dense<0.000000e+00> : vector<8x512xf32>
    %500 = tpu.matmul %498, %499, %cst_141 {dimension_numbers = #tpu.dot_dimension_numbers<[1], [0], [0], [1], [0, 0, 1, 1], [], []>} : vector<8x256xf32>, vector<256x512xf32>, vector<8x512xf32> -> vector<8x512xf32>
    %c0_142 = arith.constant 0 : index
    %c0_143 = arith.constant 0 : index
    %501 = vector.load %arg7[%c0_142, %c0_143] : memref<1x512xf32, #tpu.memory_space<vmem>>, vector<1x512xf32>
    %502 = vector.broadcast %501 : vector<1x512xf32> to vector<8x512xf32>
    %503 = arith.addf %500, %502 : vector<8x512xf32>
    %504 = vector.extract_strided_slice %503 {offsets = [0, 0], sizes = [8, 384], strides = [1, 1]} : vector<8x512xf32> to vector<8x384xf32>
    %505 = arith.negf %504 : vector<8x384xf32>
    %506 = math.exp %505 : vector<8x384xf32>
    %cst_144 = arith.constant 1.000000e+00 : f32
    %507 = vector.broadcast %cst_144 : f32 to vector<8x384xf32>
    %508 = arith.addf %507, %506 : vector<8x384xf32>
    %509 = arith.divf %507, %508 : vector<8x384xf32>
    %510 = vector.extract_strided_slice %503 {offsets = [0, 384], sizes = [8, 128], strides = [1, 1]} : vector<8x512xf32> to vector<8x128xf32>
    %511 = math.tanh %510 : vector<8x128xf32>
    %512 = vector.extract_strided_slice %509 {offsets = [0, 0], sizes = [8, 128], strides = [1, 1]} : vector<8x384xf32> to vector<8x128xf32>
    %513 = vector.extract_strided_slice %509 {offsets = [0, 128], sizes = [8, 128], strides = [1, 1]} : vector<8x384xf32> to vector<8x128xf32>
    %514 = vector.extract_strided_slice %509 {offsets = [0, 256], sizes = [8, 128], strides = [1, 1]} : vector<8x384xf32> to vector<8x128xf32>
    %515 = arith.mulf %513, %495 : vector<8x128xf32>
    %516 = arith.mulf %512, %511 : vector<8x128xf32>
    %517 = arith.addf %515, %516 : vector<8x128xf32>
    %518 = math.tanh %517 : vector<8x128xf32>
    %519 = arith.mulf %514, %518 : vector<8x128xf32>
    %cst_145 = arith.constant 0.000000e+00 : f32
    %520 = vector.broadcast %cst_145 : f32 to vector<8x128xf32>
    %521 = arith.maximumf %519, %520 : vector<8x128xf32>
    %c0_146 = arith.constant 0 : index
    %c0_147 = arith.constant 0 : index
    %522 = vector.load %arg8[%c0_146, %c0_147] : memref<128x128xf32, #tpu.memory_space<vmem>>, vector<128x128xf32>
    %cst_148 = arith.constant dense<0.000000e+00> : vector<8x128xf32>
    %523 = tpu.matmul %521, %522, %cst_148 {dimension_numbers = #tpu.dot_dimension_numbers<[1], [0], [0], [1], [0, 0, 1, 1], [], []>} : vector<8x128xf32>, vector<128x128xf32>, vector<8x128xf32> -> vector<8x128xf32>
    %c0_149 = arith.constant 0 : index
    %c0_150 = arith.constant 0 : index
    %524 = vector.load %arg9[%c0_149, %c0_150] : memref<1x128xf32, #tpu.memory_space<vmem>>, vector<1x128xf32>
    %525 = vector.broadcast %524 : vector<1x128xf32> to vector<8x128xf32>
    %526 = arith.addf %523, %525 : vector<8x128xf32>
    %c0_151 = arith.constant 0 : index
    %c0_152 = arith.constant 0 : index
    %527 = vector.load %arg10[%c0_151, %c0_152] : memref<8x128xf32, #tpu.memory_space<vmem>>, vector<8x128xf32>
    tpu.vector_store %arg10[%c0_151, %c0_152], %526 {strides = array<i32>} : memref<8x128xf32, #tpu.memory_space<vmem>>, vector<8x128xf32>,
    return
  }
}

</mosaic_0001>

<llo_original>
// kernel: lstm_model_forward.1
$region0: #{lstm_model_forward.1}
  #allocation0 [shape = 'u32[]', space=smem, size = 0x4, offset = 0x4, fixed_abs, tag = 'smem constant byte address 0x4 - core index']
  #allocation1 [shape = 'u32[72,128]{1,0:T(1,128)}', space=vmem, size = 0x9000, scoped, tag = 'internal scratch']
  #allocation2 [shape = 'f32[64,512]{1,0:T(8,128)}', space=vmem, size = 0x20000, scoped, tag = 'scratch operand']
  %s0 = inlined_call_operand.vmem [shape: f32[64,8], index: 0, kind: input, shape index: {}]
  %s1 = inlined_call_operand.vmem [shape: f32[8,512], index: 1, kind: input, shape index: {}]
  %s2 = inlined_call_operand.hbm [shape: f32[128,512], index: 2, kind: input, shape index: {}]
  %s3 = inlined_call_operand.vmem [shape: f32[1,512], index: 3, kind: input, shape index: {}]
  %s4 = inlined_call_operand.hbm [shape: f32[256,512], index: 4, kind: input, shape index: {}]
  %s5 = inlined_call_operand.vmem [shape: f32[1,512], index: 5, kind: input, shape index: {}]
  %s6 = inlined_call_operand.hbm [shape: f32[256,512], index: 6, kind: input, shape index: {}]
  %s7 = inlined_call_operand.vmem [shape: f32[1,512], index: 7, kind: input, shape index: {}]
  %s8 = inlined_call_operand.hbm [shape: f32[128,128], index: 8, kind: input, shape index: {}]
  %s9 = inlined_call_operand.vmem [shape: f32[1,128], index: 9, kind: input, shape index: {}]
  %s10 = inlined_call_operand.vmem [shape: f32[8,128], index: 10, kind: output, shape index: {}]
  %s11 = sld [smem:[#allocation0]]
  $region66: #{lstm_model_forward.1} parent=0
    _
  %s13 = ssub.s32 1, %s11
  %s14 = scalar_select 0, %s13, %s11
  $region1: #{lstm_model_forward.1} parent=0
    #allocation3 [shape = 'u8[262144]{0}', space=vmem, size = 0x40000, scoped, tag = 'input window, operand 2, single buffered']
    #allocation4 [shape = 's32[1]{0}', space=sflag, size = 0x4, scoped, tag = 'scoped memory for lstm_model_forward.1']
    #allocation5 [shape = 'u8[524288]{0}', space=vmem, size = 0x80000, scoped, tag = 'input window, operand 4, single buffered']
    #allocation6 [shape = 's32[1]{0}', space=sflag, size = 0x4, scoped, tag = 'scoped memory for lstm_model_forward.1']
    #allocation7 [shape = 'u8[524288]{0}', space=vmem, size = 0x80000, scoped, tag = 'input window, operand 6, single buffered']
    #allocation8 [shape = 'u8[65536]{0}', space=vmem, size = 0x10000, scoped, tag = 'input window, operand 8, single buffered']
    #allocation9 [shape = 's32[1]{0}', space=sflag, size = 0x4, scoped, tag = 'scoped memory for lstm_model_forward.1']
    %15 = vsyncpa [#allocation4], 0
    %16 = vsyncpa [#allocation6], 0
    %17 = vsyncpa [#allocation9], 0
    // Predicated region
    $region2: #{lstm_model_forward.1} parent=1 // pred_check
      _
    $region3: #{lstm_model_forward.1} parent=1 // pred_check_branch
      %19 = sbr.rel (0) target = $region5
    $region4: #{lstm_model_forward.1} parent=1 // pred_region
      _
    $region5: #{lstm_model_forward.1} parent=1 // pred_fallthru
      _
    // Predicated region
    $region6: #{lstm_model_forward.1} parent=1 // pred_check
      _
    $region7: #{lstm_model_forward.1} parent=1 // pred_check_branch
      %21 = sbr.rel (0) target = $region9
    $region8: #{lstm_model_forward.1} parent=1 // pred_region
      _
    $region9: #{lstm_model_forward.1} parent=1 // pred_fallthru
      _
    // Predicated region
    $region10: #{lstm_model_forward.1} parent=1 // pred_check
      _
    $region11: #{lstm_model_forward.1} parent=1 // pred_check_branch
      %23 = sbr.rel (0) target = $region13
    $region12: #{lstm_model_forward.1} parent=1 // pred_region
      %25 = vsyncadd [#allocation4], 0
      %s26 = sshll.u32 %s2, 4
      %s27 = int_to_ptr.hbm [resolvable:$true] %s26
      %s28 = sshll.u32 [#allocation3], 4
      %s29 = int_to_ptr.vmem [resolvable:$true] %s28
      %34 = dma.hbm_to_vmem [thread:$0]  %s27, 8192, %s29, [#allocation4], 512, 512, 32
    $region13: #{lstm_model_forward.1} parent=1 // pred_fallthru
      _
    // Predicated region
    $region14: #{lstm_model_forward.1} parent=1 // pred_check
      _
    $region15: #{lstm_model_forward.1} parent=1 // pred_check_branch
      %36 = sbr.rel (0) target = $region17
    $region16: #{lstm_model_forward.1} parent=1 // pred_region
      _
    $region17: #{lstm_model_forward.1} parent=1 // pred_fallthru
      _
    // Predicated region
    $region18: #{lstm_model_forward.1} parent=1 // pred_check
      _
    $region19: #{lstm_model_forward.1} parent=1 // pred_check_branch
      %38 = sbr.rel (0) target = $region21
    $region20: #{lstm_model_forward.1} parent=1 // pred_region
      %40 = vsyncadd [#allocation6], 0
      %s41 = sshll.u32 %s4, 4
      %s42 = int_to_ptr.hbm [resolvable:$true] %s41
      %s43 = sshll.u32 [#allocation5], 4
      %s44 = int_to_ptr.vmem [resolvable:$true] %s43
      %49 = dma.hbm_to_vmem [thread:$0]  %s42, 16384, %s44, [#allocation6], 512, 512, 32
    $region21: #{lstm_model_forward.1} parent=1 // pred_fallthru
      _
    // Predicated region
    $region22: #{lstm_model_forward.1} parent=1 // pred_check
      _
    $region23: #{lstm_model_forward.1} parent=1 // pred_check_branch
      %51 = sbr.rel (0) target = $region25
    $region24: #{lstm_model_forward.1} parent=1 // pred_region
      _
    $region25: #{lstm_model_forward.1} parent=1 // pred_fallthru
      _
    // Predicated region
    $region26: #{lstm_model_forward.1} parent=1 // pred_check
      _
    $region27: #{lstm_model_forward.1} parent=1 // pred_check_branch
      %53 = sbr.rel (0) target = $region29
    $region28: #{lstm_model_forward.1} parent=1 // pred_region
      %55 = vsyncadd [#allocation6], 0
      %s56 = sshll.u32 %s6, 4
      %s57 = int_to_ptr.hbm [resolvable:$true] %s56
      %s58 = sshll.u32 [#allocation7], 4
      %s59 = int_to_ptr.vmem [resolvable:$true] %s58
      %64 = dma.hbm_to_vmem [thread:$0]  %s57, 16384, %s59, [#allocation6], 512, 512, 32
    $region29: #{lstm_model_forward.1} parent=1 // pred_fallthru
      _
    // Predicated region
    $region30: #{lstm_model_forward.1} parent=1 // pred_check
      _
    $region31: #{lstm_model_forward.1} parent=1 // pred_check_branch
      %66 = sbr.rel (0) target = $region33
    $region32: #{lstm_model_forward.1} parent=1 // pred_region
      _
    $region33: #{lstm_model_forward.1} parent=1 // pred_fallthru
      _
    // Predicated region
    $region34: #{lstm_model_forward.1} parent=1 // pred_check
      _
    $region35: #{lstm_model_forward.1} parent=1 // pred_check_branch
      %68 = sbr.rel (0) target = $region37
    $region36: #{lstm_model_forward.1} parent=1 // pred_region
      %70 = vsyncadd [#allocation9], 0
      %s71 = sshll.u32 %s8, 4
      %s72 = int_to_ptr.hbm [resolvable:$true] %s71
      %s73 = sshll.u32 [#allocation8], 4
      %s74 = int_to_ptr.vmem [resolvable:$true] %s73
      %79 = dma.hbm_to_vmem [thread:$0]  %s72, 2048, %s74, [#allocation9], 128, 128, 8
    $region37: #{lstm_model_forward.1} parent=1 // pred_fallthru
      _
    // Predicated region
    $region38: #{lstm_model_forward.1} parent=1 // pred_check
      _
    $region39: #{lstm_model_forward.1} parent=1 // pred_check_branch
      %81 = sbr.rel (0) target = $region41
    $region40: #{lstm_model_forward.1} parent=1 // pred_region
      _
    $region41: #{lstm_model_forward.1} parent=1 // pred_fallthru
      _
    // Predicated region
    $region42: #{lstm_model_forward.1} parent=1 // pred_check
      _
    $region43: #{lstm_model_forward.1} parent=1 // pred_check_branch
      %83 = sbr.rel (0) target = $region45
    $region44: #{lstm_model_forward.1} parent=1 // pred_region
      %85 = dma.done [#allocation4], 8192
    $region45: #{lstm_model_forward.1} parent=1 // pred_fallthru
      _
    // Predicated region
    $region46: #{lstm_model_forward.1} parent=1 // pred_check
      _
    $region47: #{lstm_model_forward.1} parent=1 // pred_check_branch
      %87 = sbr.rel (0) target = $region49
    $region48: #{lstm_model_forward.1} parent=1 // pred_region
      %89 = dma.done [#allocation6], 16384
    $region49: #{lstm_model_forward.1} parent=1 // pred_fallthru
      _
    // Predicated region
    $region50: #{lstm_model_forward.1} parent=1 // pred_check
      _
    $region51: #{lstm_model_forward.1} parent=1 // pred_check_branch
      %91 = sbr.rel (0) target = $region53
    $region52: #{lstm_model_forward.1} parent=1 // pred_region
      %93 = dma.done [#allocation6], 16384
    $region53: #{lstm_model_forward.1} parent=1 // pred_fallthru
      _
    // Predicated region
    $region54: #{lstm_model_forward.1} parent=1 // pred_check
      _
    $region55: #{lstm_model_forward.1} parent=1 // pred_check_branch
      %95 = sbr.rel (0) target = $region57
    $region56: #{lstm_model_forward.1} parent=1 // pred_region
      %97 = dma.done [#allocation9], 2048
    $region57: #{lstm_model_forward.1} parent=1 // pred_fallthru
      _
    %v98 = vld [vmem:[%s0] sm:$0xff]
    %v99 = vld [vmem:[%s0 + $0x8] sm:$0xff]
    %v100 = vld [vmem:[%s0 + $0x10] sm:$0xff]
    %v101 = vld [vmem:[%s0 + $0x18] sm:$0xff]
    %v102 = vld [vmem:[%s0 + $0x20] sm:$0xff]
    %v103 = vld [vmem:[%s0 + $0x28] sm:$0xff]
    %v104 = vld [vmem:[%s0 + $0x30] sm:$0xff]
    %v105 = vld [vmem:[%s0 + $0x38] sm:$0xff]
    %v106 = vld [vmem:[%s1] sm:$0xff]
    %v107 = vld [vmem:[%s1 + $0x8] sm:$0xff]
    %v108 = vld [vmem:[%s1 + $0x10] sm:$0xff]
    %v109 = vld [vmem:[%s1 + $0x18] sm:$0xff]
    %v110 = vld [vmem:[%s3] sm:$0xf]
    %v112 = vperm.slane %v110, 0
    %v113 = vperm.slane %v110, 1
    %v114 = vperm.slane %v110, 2
    %v115 = vperm.slane %v110, 3
    %vm120 = vcmask 64512
    %v122 = vsel %vm120, %v98, 0
    %v125 = vsel %vm120, %v99, 0
    %v128 = vsel %vm120, %v100, 0
    %v131 = vsel %vm120, %v101, 0
    %v134 = vsel %vm120, %v102, 0
    %v137 = vsel %vm120, %v103, 0
    %v140 = vsel %vm120, %v104, 0
    %v143 = vsel %vm120, %v105, 0
    %145 = vmatpush.msra.mxu0 0.0
    %146 = vmatpush.msra.mxu0 0.0
    %147 = vmatpush.msra.mxu0 0.0
    %148 = vmatpush.msra.mxu0 0.0
    %149 = vmatpush.msra.mxu0 0.0
    %150 = vmatpush.msra.mxu0 0.0
    %151 = vmatpush.msra.mxu0 0.0
    %152 = vmatpush.msra.mxu0 0.0
    %153 = vmatpush.msra.mxu0 0.0
    %154 = vmatpush.msra.mxu0 0.0
    %155 = vmatpush.msra.mxu0 0.0
    %156 = vmatpush.msra.mxu0 0.0
    %157 = vmatpush.msra.mxu0 0.0
    %158 = vmatpush.msra.mxu0 0.0
    %159 = vmatpush.msra.mxu0 0.0
    %160 = vmatpush.msra.mxu0 %v106
    %161 = vmatmul.f32.gmra.mxu0 %v122
    %v162 = vpop.f32.mrf.mxu0
    %v163 = vadd.f32 %v112, %v162
    %164 = vmatmul.f32.gmra.mxu0 %v125
    %v165 = vpop.f32.mrf.mxu0
    %v166 = vadd.f32 %v112, %v165
    %167 = vmatmul.f32.gmra.mxu0 %v128
    %v168 = vpop.f32.mrf.mxu0
    %v169 = vadd.f32 %v112, %v168
    %170 = vmatmul.f32.gmra.mxu0 %v131
    %v171 = vpop.f32.mrf.mxu0
    %v172 = vadd.f32 %v112, %v171
    %173 = vmatmul.f32.gmra.mxu0 %v134
    %v174 = vpop.f32.mrf.mxu0
    %v175 = vadd.f32 %v112, %v174
    %176 = vmatmul.f32.gmra.mxu0 %v137
    %v177 = vpop.f32.mrf.mxu0
    %v178 = vadd.f32 %v112, %v177
    %179 = vmatmul.f32.gmra.mxu0 %v140
    %v180 = vpop.f32.mrf.mxu0
    %v181 = vadd.f32 %v112, %v180
    %182 = vmatmul.f32.gmra.mxu0 %v143
    %v183 = vpop.f32.mrf.mxu0
    %v184 = vadd.f32 %v112, %v183
    %185 = vdwg.mxu0
    %186 = vmatpush.msra.mxu0 0.0
    %187 = vmatpush.msra.mxu0 0.0
    %188 = vmatpush.msra.mxu0 0.0
    %189 = vmatpush.msra.mxu0 0.0
    %190 = vmatpush.msra.mxu0 0.0
    %191 = vmatpush.msra.mxu0 0.0
    %192 = vmatpush.msra.mxu0 0.0
    %193 = vmatpush.msra.mxu0 0.0
    %194 = vmatpush.msra.mxu0 0.0
    %195 = vmatpush.msra.mxu0 0.0
    %196 = vmatpush.msra.mxu0 0.0
    %197 = vmatpush.msra.mxu0 0.0
    %198 = vmatpush.msra.mxu0 0.0
    %199 = vmatpush.msra.mxu0 0.0
    %200 = vmatpush.msra.mxu0 0.0
    %201 = vmatpush.msra.mxu0 %v107
    %202 = vmatmul.f32.gmra.mxu0 %v122
    %v203 = vpop.f32.mrf.mxu0
    %v204 = vadd.f32 %v113, %v203
    %205 = vmatmul.f32.gmra.mxu0 %v125
    %v206 = vpop.f32.mrf.mxu0
    %v207 = vadd.f32 %v113, %v206
    %208 = vmatmul.f32.gmra.mxu0 %v128
    %v209 = vpop.f32.mrf.mxu0
    %v210 = vadd.f32 %v113, %v209
    %211 = vmatmul.f32.gmra.mxu0 %v131
    %v212 = vpop.f32.mrf.mxu0
    %v213 = vadd.f32 %v113, %v212
    %214 = vmatmul.f32.gmra.mxu0 %v134
    %v215 = vpop.f32.mrf.mxu0
    %v216 = vadd.f32 %v113, %v215
    %217 = vmatmul.f32.gmra.mxu0 %v137
    %v218 = vpop.f32.mrf.mxu0
    %v219 = vadd.f32 %v113, %v218
    %220 = vmatmul.f32.gmra.mxu0 %v140
    %v221 = vpop.f32.mrf.mxu0
    %v222 = vadd.f32 %v113, %v221
    %223 = vmatmul.f32.gmra.mxu0 %v143
    %v224 = vpop.f32.mrf.mxu0
    %v225 = vadd.f32 %v113, %v224
    %226 = vdwg.mxu0
    %227 = vmatpush.msra.mxu0 0.0
    %228 = vmatpush.msra.mxu0 0.0
    %229 = vmatpush.msra.mxu0 0.0
    %230 = vmatpush.msra.mxu0 0.0
    %231 = vmatpush.msra.mxu0 0.0
    %232 = vmatpush.msra.mxu0 0.0
    %233 = vmatpush.msra.mxu0 0.0
    %234 = vmatpush.msra.mxu0 0.0
    %235 = vmatpush.msra.mxu0 0.0
    %236 = vmatpush.msra.mxu0 0.0
    %237 = vmatpush.msra.mxu0 0.0
    %238 = vmatpush.msra.mxu0 0.0
    %239 = vmatpush.msra.mxu0 0.0
    %240 = vmatpush.msra.mxu0 0.0
    %241 = vmatpush.msra.mxu0 0.0
    %242 = vmatpush.msra.mxu0 %v108
    %243 = vmatmul.f32.gmra.mxu0 %v122
    %v244 = vpop.f32.mrf.mxu0
    %v245 = vadd.f32 %v114, %v244
    %246 = vmatmul.f32.gmra.mxu0 %v125
    %v247 = vpop.f32.mrf.mxu0
    %v248 = vadd.f32 %v114, %v247
    %249 = vmatmul.f32.gmra.mxu0 %v128
    %v250 = vpop.f32.mrf.mxu0
    %v251 = vadd.f32 %v114, %v250
    %252 = vmatmul.f32.gmra.mxu0 %v131
    %v253 = vpop.f32.mrf.mxu0
    %v254 = vadd.f32 %v114, %v253
    %255 = vmatmul.f32.gmra.mxu0 %v134
    %v256 = vpop.f32.mrf.mxu0
    %v257 = vadd.f32 %v114, %v256
    %258 = vmatmul.f32.gmra.mxu0 %v137
    %v259 = vpop.f32.mrf.mxu0
    %v260 = vadd.f32 %v114, %v259
    %261 = vmatmul.f32.gmra.mxu0 %v140
    %v262 = vpop.f32.mrf.mxu0
    %v263 = vadd.f32 %v114, %v262
    %264 = vmatmul.f32.gmra.mxu0 %v143
    %v265 = vpop.f32.mrf.mxu0
    %v266 = vadd.f32 %v114, %v265
    %267 = vdwg.mxu0
    %268 = vmatpush.msra.mxu0 0.0
    %269 = vmatpush.msra.mxu0 0.0
    %270 = vmatpush.msra.mxu0 0.0
    %271 = vmatpush.msra.mxu0 0.0
    %272 = vmatpush.msra.mxu0 0.0
    %273 = vmatpush.msra.mxu0 0.0
    %274 = vmatpush.msra.mxu0 0.0
    %275 = vmatpush.msra.mxu0 0.0
    %276 = vmatpush.msra.mxu0 0.0
    %277 = vmatpush.msra.mxu0 0.0
    %278 = vmatpush.msra.mxu0 0.0
    %279 = vmatpush.msra.mxu0 0.0
    %280 = vmatpush.msra.mxu0 0.0
    %281 = vmatpush.msra.mxu0 0.0
    %282 = vmatpush.msra.mxu0 0.0
    %283 = vmatpush.msra.mxu0 %v109
    %284 = vmatmul.f32.gmra.mxu0 %v122
    %v285 = vpop.f32.mrf.mxu0
    %v286 = vadd.f32 %v115, %v285
    %287 = vmatmul.f32.gmra.mxu0 %v125
    %v288 = vpop.f32.mrf.mxu0
    %v289 = vadd.f32 %v115, %v288
    %290 = vmatmul.f32.gmra.mxu0 %v128
    %v291 = vpop.f32.mrf.mxu0
    %v292 = vadd.f32 %v115, %v291
    %293 = vmatmul.f32.gmra.mxu0 %v131
    %v294 = vpop.f32.mrf.mxu0
    %v295 = vadd.f32 %v115, %v294
    %296 = vmatmul.f32.gmra.mxu0 %v134
    %v297 = vpop.f32.mrf.mxu0
    %v298 = vadd.f32 %v115, %v297
    %299 = vmatmul.f32.gmra.mxu0 %v137
    %v300 = vpop.f32.mrf.mxu0
    %v301 = vadd.f32 %v115, %v300
    %302 = vmatmul.f32.gmra.mxu0 %v140
    %v303 = vpop.f32.mrf.mxu0
    %v304 = vadd.f32 %v115, %v303
    %305 = vmatmul.f32.gmra.mxu0 %v143
    %v306 = vpop.f32.mrf.mxu0
    %v307 = vadd.f32 %v115, %v306
    %308 = vdwg.mxu0
    %309 = vst [vmem:[#allocation2] sm:$0xff] %v163
    %310 = vst [vmem:[#allocation2 + $0x8] sm:$0xff] %v204
    %311 = vst [vmem:[#allocation2 + $0x10] sm:$0xff] %v245
    %312 = vst [vmem:[#allocation2 + $0x18] sm:$0xff] %v286
    %313 = vst [vmem:[#allocation2 + $0x20] sm:$0xff] %v166
    %314 = vst [vmem:[#allocation2 + $0x28] sm:$0xff] %v207
    %315 = vst [vmem:[#allocation2 + $0x30] sm:$0xff] %v248
    %316 = vst [vmem:[#allocation2 + $0x38] sm:$0xff] %v289
    %317 = vst [vmem:[#allocation2 + $0x40] sm:$0xff] %v169
    %318 = vst [vmem:[#allocation2 + $0x48] sm:$0xff] %v210
    %319 = vst [vmem:[#allocation2 + $0x50] sm:$0xff] %v251
    %320 = vst [vmem:[#allocation2 + $0x58] sm:$0xff] %v292
    %321 = vst [vmem:[#allocation2 + $0x60] sm:$0xff] %v172
    %322 = vst [vmem:[#allocation2 + $0x68] sm:$0xff] %v213
    %323 = vst [vmem:[#allocation2 + $0x70] sm:$0xff] %v254
    %324 = vst [vmem:[#allocation2 + $0x78] sm:$0xff] %v295
    %325 = vst [vmem:[#allocation2 + $0x80] sm:$0xff] %v175
    %326 = vst [vmem:[#allocation2 + $0x88] sm:$0xff] %v216
    %327 = vst [vmem:[#allocation2 + $0x90] sm:$0xff] %v257
    %328 = vst [vmem:[#allocation2 + $0x98] sm:$0xff] %v298
    %329 = vst [vmem:[#allocation2 + $0xa0] sm:$0xff] %v178
    %330 = vst [vmem:[#allocation2 + $0xa8] sm:$0xff] %v219
    %331 = vst [vmem:[#allocation2 + $0xb0] sm:$0xff] %v260
    %332 = vst [vmem:[#allocation2 + $0xb8] sm:$0xff] %v301
    %333 = vst [vmem:[#allocation2 + $0xc0] sm:$0xff] %v181
    %334 = vst [vmem:[#allocation2 + $0xc8] sm:$0xff] %v222
    %335 = vst [vmem:[#allocation2 + $0xd0] sm:$0xff] %v263
    %336 = vst [vmem:[#allocation2 + $0xd8] sm:$0xff] %v304
    %337 = vst [vmem:[#allocation2 + $0xe0] sm:$0xff] %v184
    %338 = vst [vmem:[#allocation2 + $0xe8] sm:$0xff] %v225
    %339 = vst [vmem:[#allocation2 + $0xf0] sm:$0xff] %v266
    %340 = vst [vmem:[#allocation2 + $0xf8] sm:$0xff] %v307
    %v341 = vld [vmem:[#allocation2] sm:$0xff]
    %v342 = vld [vmem:[#allocation2 + $0x8] sm:$0xff]
    %v343 = vld [vmem:[#allocation2 + $0x10] sm:$0xff]
    %v344 = vld [vmem:[#allocation2 + $0x18] sm:$0xff]
    %v345 = vld [vmem:[#allocation3] sm:$0xff]
    %v346 = vld [vmem:[#allocation3 + $0x8] sm:$0xff]
    %v347 = vld [vmem:[#allocation3 + $0x10] sm:$0xff]
    %v348 = vld [vmem:[#allocation3 + $0x18] sm:$0xff]
    %v349 = vld [vmem:[#allocation3 + $0x20] sm:$0xff]
    %v350 = vld [vmem:[#allocation3 + $0x28] sm:$0xff]
    %v351 = vld [vmem:[#allocation3 + $0x30] sm:$0xff]
    %v352 = vld [vmem:[#allocation3 + $0x38] sm:$0xff]
    %v353 = vld [vmem:[#allocation3 + $0x40] sm:$0xff]
    %v354 = vld [vmem:[#allocation3 + $0x48] sm:$0xff]
    %v355 = vld [vmem:[#allocation3 + $0x50] sm:$0xff]
    %v356 = vld [vmem:[#allocation3 + $0x58] sm:$0xff]
    %v357 = vld [vmem:[#allocation3 + $0x60] sm:$0xff]
    %v358 = vld [vmem:[#allocation3 + $0x68] sm:$0xff]
    %v359 = vld [vmem:[#allocation3 + $0x70] sm:$0xff]
    %v360 = vld [vmem:[#allocation3 + $0x78] sm:$0xff]
    %v361 = vld [vmem:[#allocation3 + $0x80] sm:$0xff]
    %v362 = vld [vmem:[#allocation3 + $0x88] sm:$0xff]
    %v363 = vld [vmem:[#allocation3 + $0x90] sm:$0xff]
    %v364 = vld [vmem:[#allocation3 + $0x98] sm:$0xff]
    %v365 = vld [vmem:[#allocation3 + $0xa0] sm:$0xff]
    %v366 = vld [vmem:[#allocation3 + $0xa8] sm:$0xff]
    %v367 = vld [vmem:[#allocation3 + $0xb0] sm:$0xff]
    %v368 = vld [vmem:[#allocation3 + $0xb8] sm:$0xff]
    %v369 = vld [vmem:[#allocation3 + $0xc0] sm:$0xff]
    %v370 = vld [vmem:[#allocation3 + $0xc8] sm:$0xff]
    %v371 = vld [vmem:[#allocation3 + $0xd0] sm:$0xff]
    %v372 = vld [vmem:[#allocation3 + $0xd8] sm:$0xff]
    %v373 = vld [vmem:[#allocation3 + $0xe0] sm:$0xff]
    %v374 = vld [vmem:[#allocation3 + $0xe8] sm:$0xff]
    %v375 = vld [vmem:[#allocation3 + $0xf0] sm:$0xff]
    %v376 = vld [vmem:[#allocation3 + $0xf8] sm:$0xff]
    %v377 = vld [vmem:[#allocation3 + $0x100] sm:$0xff]
    %v378 = vld [vmem:[#allocation3 + $0x108] sm:$0xff]
    %v379 = vld [vmem:[#allocation3 + $0x110] sm:$0xff]
    %v380 = vld [vmem:[#allocation3 + $0x118] sm:$0xff]
    %v381 = vld [vmem:[#allocation3 + $0x120] sm:$0xff]
    %v382 = vld [vmem:[#allocation3 + $0x128] sm:$0xff]
    %v383 = vld [vmem:[#allocation3 + $0x130] sm:$0xff]
    %v384 = vld [vmem:[#allocation3 + $0x138] sm:$0xff]
    %v385 = vld [vmem:[#allocation3 + $0x140] sm:$0xff]
    %v386 = vld [vmem:[#allocation3 + $0x148] sm:$0xff]
    %v387 = vld [vmem:[#allocation3 + $0x150] sm:$0xff]
    %v388 = vld [vmem:[#allocation3 + $0x158] sm:$0xff]
    %v389 = vld [vmem:[#allocation3 + $0x160] sm:$0xff]
    %v390 = vld [vmem:[#allocation3 + $0x168] sm:$0xff]
    %v391 = vld [vmem:[#allocation3 + $0x170] sm:$0xff]
    %v392 = vld [vmem:[#allocation3 + $0x178] sm:$0xff]
    %v393 = vld [vmem:[#allocation3 + $0x180] sm:$0xff]
    %v394 = vld [vmem:[#allocation3 + $0x188] sm:$0xff]
    %v395 = vld [vmem:[#allocation3 + $0x190] sm:$0xff]
    %v396 = vld [vmem:[#allocation3 + $0x198] sm:$0xff]
    %v397 = vld [vmem:[#allocation3 + $0x1a0] sm:$0xff]
    %v398 = vld [vmem:[#allocation3 + $0x1a8] sm:$0xff]
    %v399 = vld [vmem:[#allocation3 + $0x1b0] sm:$0xff]
    %v400 = vld [vmem:[#allocation3 + $0x1b8] sm:$0xff]
    %v401 = vld [vmem:[#allocation3 + $0x1c0] sm:$0xff]
    %v402 = vld [vmem:[#allocation3 + $0x1c8] sm:$0xff]
    %v403 = vld [vmem:[#allocation3 + $0x1d0] sm:$0xff]
    %v404 = vld [vmem:[#allocation3 + $0x1d8] sm:$0xff]
    %v405 = vld [vmem:[#allocation3 + $0x1e0] sm:$0xff]
    %v406 = vld [vmem:[#allocation3 + $0x1e8] sm:$0xff]
    %v407 = vld [vmem:[#allocation3 + $0x1f0] sm:$0xff]
    %v408 = vld [vmem:[#allocation3 + $0x1f8] sm:$0xff]
    %409 = vmatpush.msra.mxu0 %v405
    %410 = vmatpush.msra.mxu0 %v401
    %411 = vmatpush.msra.mxu0 %v397
    %412 = vmatpush.msra.mxu0 %v393
    %413 = vmatpush.msra.mxu0 %v389
    %414 = vmatpush.msra.mxu0 %v385
    %415 = vmatpush.msra.mxu0 %v381
    %416 = vmatpush.msra.mxu0 %v377
    %417 = vmatpush.msra.mxu0 %v373
    %418 = vmatpush.msra.mxu0 %v369
    %419 = vmatpush.msra.mxu0 %v365
    %420 = vmatpush.msra.mxu0 %v361
    %421 = vmatpush.msra.mxu0 %v357
    %422 = vmatpush.msra.mxu0 %v353
    %423 = vmatpush.msra.mxu0 %v349
    %424 = vmatpush.msra.mxu0 %v345
    %425 = vmatmul.f32.gmra.mxu0 0.0
    %v426 = vpop.f32.mrf.mxu0
    %v427 = vadd.f32 0.0, %v426
    %428 = vdwg.mxu0
    %429 = vmatpush.msra.mxu0 %v406
    %430 = vmatpush.msra.mxu0 %v402
    %431 = vmatpush.msra.mxu0 %v398
    %432 = vmatpush.msra.mxu0 %v394
    %433 = vmatpush.msra.mxu0 %v390
    %434 = vmatpush.msra.mxu0 %v386
    %435 = vmatpush.msra.mxu0 %v382
    %436 = vmatpush.msra.mxu0 %v378
    %437 = vmatpush.msra.mxu0 %v374
    %438 = vmatpush.msra.mxu0 %v370
    %439 = vmatpush.msra.mxu0 %v366
    %440 = vmatpush.msra.mxu0 %v362
    %441 = vmatpush.msra.mxu0 %v358
    %442 = vmatpush.msra.mxu0 %v354
    %443 = vmatpush.msra.mxu0 %v350
    %444 = vmatpush.msra.mxu0 %v346
    %445 = vmatmul.f32.gmra.mxu0 0.0
    %v446 = vpop.f32.mrf.mxu0
    %v447 = vadd.f32 0.0, %v446
    %448 = vdwg.mxu0
    %449 = vmatpush.msra.mxu0 %v407
    %450 = vmatpush.msra.mxu0 %v403
    %451 = vmatpush.msra.mxu0 %v399
    %452 = vmatpush.msra.mxu0 %v395
    %453 = vmatpush.msra.mxu0 %v391
    %454 = vmatpush.msra.mxu0 %v387
    %455 = vmatpush.msra.mxu0 %v383
    %456 = vmatpush.msra.mxu0 %v379
    %457 = vmatpush.msra.mxu0 %v375
    %458 = vmatpush.msra.mxu0 %v371
    %459 = vmatpush.msra.mxu0 %v367
    %460 = vmatpush.msra.mxu0 %v363
    %461 = vmatpush.msra.mxu0 %v359
    %462 = vmatpush.msra.mxu0 %v355
    %463 = vmatpush.msra.mxu0 %v351
    %464 = vmatpush.msra.mxu0 %v347
    %465 = vmatmul.f32.gmra.mxu0 0.0
    %v466 = vpop.f32.mrf.mxu0
    %v467 = vadd.f32 0.0, %v466
    %468 = vdwg.mxu0
    %469 = vmatpush.msra.mxu0 %v408
    %470 = vmatpush.msra.mxu0 %v404
    %471 = vmatpush.msra.mxu0 %v400
    %472 = vmatpush.msra.mxu0 %v396
    %473 = vmatpush.msra.mxu0 %v392
    %474 = vmatpush.msra.mxu0 %v388
    %475 = vmatpush.msra.mxu0 %v384
    %476 = vmatpush.msra.mxu0 %v380
    %477 = vmatpush.msra.mxu0 %v376
    %478 = vmatpush.msra.mxu0 %v372
    %479 = vmatpush.msra.mxu0 %v368
    %480 = vmatpush.msra.mxu0 %v364
    %481 = vmatpush.msra.mxu0 %v360
    %482 = vmatpush.msra.mxu0 %v356
    %483 = vmatpush.msra.mxu0 %v352
    %484 = vmatpush.msra.mxu0 %v348
    %485 = vmatmul.f32.gmra.mxu0 0.0
    %v486 = vpop.f32.mrf.mxu0
    %v487 = vadd.f32 0.0, %v486
    %488 = vdwg.mxu0
    %v489 = vadd.f32 %v341, %v427
    %v490 = vadd.f32 %v342, %v447
    %v491 = vadd.f32 %v343, %v467
    %v492 = vadd.f32 %v344, %v487
    %v493 = vxor.u32 %v489, 2147483648
    %v494 = vxor.u32 %v490, 2147483648
    %v495 = vxor.u32 %v491, 2147483648
    %v496 = vmul.f32 %v493, 1.442695
    %v497 = vpow.pop %v496
    %v498 = vmul.f32 %v494, 1.442695
    %v499 = vpow.pop %v498
    %v500 = vmul.f32 %v495, 1.442695
    %v501 = vpow.pop %v500
    %v502 = vadd.f32 %v497, 1.0
    %v503 = vadd.f32 %v499, 1.0
    %v504 = vadd.f32 %v501, 1.0
    %v505 = vrcp.pop %v502
    %v506 = vmul.f32 %v502, %v505
    %v507 = vsub.f32 1.0, %v506
    %v508 = vmul.f32 %v505, %v507
    %v509 = vadd.f32 %v505, %v508
    %vm510 = vweird.f32 %v502
    %vm511 = vweird.f32 %v505
    %vm512 = vmor %vm510, %vm511
    %v513 = vsel %vm512, %v505, %v509
    %v514 = vand.u32 2147483647, %v502
    %vm515 = vcmp.eq.f32.partialorder %v514, 8.507059e+37
    %v516 = vand.u32 %v502, 2147483648
    %v517 = vor.u32 1.1754944e-38, %v516
    %v518 = vsel %vm515, %v517, %v513
    %v519 = vmul.f32 1.0, %v518
    %v520 = vrcp.pop %v503
    %v521 = vmul.f32 %v503, %v520
    %v522 = vsub.f32 1.0, %v521
    %v523 = vmul.f32 %v520, %v522
    %v524 = vadd.f32 %v520, %v523
    %vm525 = vweird.f32 %v503
    %vm526 = vweird.f32 %v520
    %vm527 = vmor %vm525, %vm526
    %v528 = vsel %vm527, %v520, %v524
    %v529 = vand.u32 2147483647, %v503
    %vm530 = vcmp.eq.f32.partialorder %v529, 8.507059e+37
    %v531 = vand.u32 %v503, 2147483648
    %v532 = vor.u32 1.1754944e-38, %v531
    %v533 = vsel %vm530, %v532, %v528
    %v534 = vmul.f32 1.0, %v533
    %v535 = vrcp.pop %v504
    %v536 = vmul.f32 %v504, %v535
    %v537 = vsub.f32 1.0, %v536
    %v538 = vmul.f32 %v535, %v537
    %v539 = vadd.f32 %v535, %v538
    %vm540 = vweird.f32 %v504
    %vm541 = vweird.f32 %v535
    %vm542 = vmor %vm540, %vm541
    %v543 = vsel %vm542, %v535, %v539
    %v544 = vand.u32 2147483647, %v504
    %vm545 = vcmp.eq.f32.partialorder %v544, 8.507059e+37
    %v546 = vand.u32 %v504, 2147483648
    %v547 = vor.u32 1.1754944e-38, %v546
    %v548 = vsel %vm545, %v547, %v543
    %v549 = vmul.f32 1.0, %v548
    %v550 = vtanh.pop %v492
    %v551 = vmul.f32 %v534, 0.0
    %v552 = vmul.f32 %v519, %v550
    %v553 = vadd.f32 %v551, %v552
    %v554 = vtanh.pop %v553
    %v555 = vmul.f32 %v549, %v554
    %v556 = vld [vmem:[#allocation2 + $0x20] sm:$0xff]
    %v557 = vld [vmem:[#allocation2 + $0x28] sm:$0xff]
    %v558 = vld [vmem:[#allocation2 + $0x30] sm:$0xff]
    %v559 = vld [vmem:[#allocation2 + $0x38] sm:$0xff]
    %560 = vmatpush.msra.mxu0 %v405
    %561 = vmatpush.msra.mxu0 %v401
    %562 = vmatpush.msra.mxu0 %v397
    %563 = vmatpush.msra.mxu0 %v393
    %564 = vmatpush.msra.mxu0 %v389
    %565 = vmatpush.msra.mxu0 %v385
    %566 = vmatpush.msra.mxu0 %v381
    %567 = vmatpush.msra.mxu0 %v377
    %568 = vmatpush.msra.mxu0 %v373
    %569 = vmatpush.msra.mxu0 %v369
    %570 = vmatpush.msra.mxu0 %v365
    %571 = vmatpush.msra.mxu0 %v361
    %572 = vmatpush.msra.mxu0 %v357
    %573 = vmatpush.msra.mxu0 %v353
    %574 = vmatpush.msra.mxu0 %v349
    %575 = vmatpush.msra.mxu0 %v345
    %576 = vmatmul.f32.gmra.mxu0 %v555
    %v577 = vpop.f32.mrf.mxu0
    %v578 = vadd.f32 0.0, %v577
    %579 = vdwg.mxu0
    %580 = vmatpush.msra.mxu0 %v406
    %581 = vmatpush.msra.mxu0 %v402
    %582 = vmatpush.msra.mxu0 %v398
    %583 = vmatpush.msra.mxu0 %v394
    %584 = vmatpush.msra.mxu0 %v390
    %585 = vmatpush.msra.mxu0 %v386
    %586 = vmatpush.msra.mxu0 %v382
    %587 = vmatpush.msra.mxu0 %v378
    %588 = vmatpush.msra.mxu0 %v374
    %589 = vmatpush.msra.mxu0 %v370
    %590 = vmatpush.msra.mxu0 %v366
    %591 = vmatpush.msra.mxu0 %v362
    %592 = vmatpush.msra.mxu0 %v358
    %593 = vmatpush.msra.mxu0 %v354
    %594 = vmatpush.msra.mxu0 %v350
    %595 = vmatpush.msra.mxu0 %v346
    %596 = vmatmul.f32.gmra.mxu0 %v555
    %v597 = vpop.f32.mrf.mxu0
    %v598 = vadd.f32 0.0, %v597
    %599 = vdwg.mxu0
    %600 = vmatpush.msra.mxu0 %v407
    %601 = vmatpush.msra.mxu0 %v403
    %602 = vmatpush.msra.mxu0 %v399
    %603 = vmatpush.msra.mxu0 %v395
    %604 = vmatpush.msra.mxu0 %v391
    %605 = vmatpush.msra.mxu0 %v387
    %606 = vmatpush.msra.mxu0 %v383
    %607 = vmatpush.msra.mxu0 %v379
    %608 = vmatpush.msra.mxu0 %v375
    %609 = vmatpush.msra.mxu0 %v371
    %610 = vmatpush.msra.mxu0 %v367
    %611 = vmatpush.msra.mxu0 %v363
    %612 = vmatpush.msra.mxu0 %v359
    %613 = vmatpush.msra.mxu0 %v355
    %614 = vmatpush.msra.mxu0 %v351
    %615 = vmatpush.msra.mxu0 %v347
    %616 = vmatmul.f32.gmra.mxu0 %v555
    %v617 = vpop.f32.mrf.mxu0
    %v618 = vadd.f32 0.0, %v617
    %619 = vdwg.mxu0
    %620 = vmatpush.msra.mxu0 %v408
    %621 = vmatpush.msra.mxu0 %v404
    %622 = vmatpush.msra.mxu0 %v400
    %623 = vmatpush.msra.mxu0 %v396
    %624 = vmatpush.msra.mxu0 %v392
    %625 = vmatpush.msra.mxu0 %v388
    %626 = vmatpush.msra.mxu0 %v384
    %627 = vmatpush.msra.mxu0 %v380
    %628 = vmatpush.msra.mxu0 %v376
    %629 = vmatpush.msra.mxu0 %v372
    %630 = vmatpush.msra.mxu0 %v368
    %631 = vmatpush.msra.mxu0 %v364
    %632 = vmatpush.msra.mxu0 %v360
    %633 = vmatpush.msra.mxu0 %v356
    %634 = vmatpush.msra.mxu0 %v352
    %635 = vmatpush.msra.mxu0 %v348
    %636 = vmatmul.f32.gmra.mxu0 %v555
    %v637 = vpop.f32.mrf.mxu0
    %v638 = vadd.f32 0.0, %v637
    %639 = vdwg.mxu0
    %v640 = vadd.f32 %v556, %v578
    %v641 = vadd.f32 %v557, %v598
    %v642 = vadd.f32 %v558, %v618
    %v643 = vadd.f32 %v559, %v638
    %v644 = vxor.u32 %v640, 2147483648
    %v645 = vxor.u32 %v641, 2147483648
    %v646 = vxor.u32 %v642, 2147483648
    %v647 = vmul.f32 %v644, 1.442695
    %v648 = vpow.pop %v647
    %v649 = vmul.f32 %v645, 1.442695
    %v650 = vpow.pop %v649
    %v651 = vmul.f32 %v646, 1.442695
    %v652 = vpow.pop %v651
    %v653 = vadd.f32 %v648, 1.0
    %v654 = vadd.f32 %v650, 1.0
    %v655 = vadd.f32 %v652, 1.0
    %v656 = vrcp.pop %v653
    %v657 = vmul.f32 %v653, %v656
    %v658 = vsub.f32 1.0, %v657
    %v659 = vmul.f32 %v656, %v658
    %v660 = vadd.f32 %v656, %v659
    %vm661 = vweird.f32 %v653
    %vm662 = vweird.f32 %v656
    %vm663 = vmor %vm661, %vm662
    %v664 = vsel %vm663, %v656, %v660
    %v665 = vand.u32 2147483647, %v653
    %vm666 = vcmp.eq.f32.partialorder %v665, 8.507059e+37
    %v667 = vand.u32 %v653, 2147483648
    %v668 = vor.u32 1.1754944e-38, %v667
    %v669 = vsel %vm666, %v668, %v664
    %v670 = vmul.f32 1.0, %v669
    %v671 = vrcp.pop %v654
    %v672 = vmul.f32 %v654, %v671
    %v673 = vsub.f32 1.0, %v672
    %v674 = vmul.f32 %v671, %v673
    %v675 = vadd.f32 %v671, %v674
    %vm676 = vweird.f32 %v654
    %vm677 = vweird.f32 %v671
    %vm678 = vmor %vm676, %vm677
    %v679 = vsel %vm678, %v671, %v675
    %v680 = vand.u32 2147483647, %v654
    %vm681 = vcmp.eq.f32.partialorder %v680, 8.507059e+37
    %v682 = vand.u32 %v654, 2147483648
    %v683 = vor.u32 1.1754944e-38, %v682
    %v684 = vsel %vm681, %v683, %v679
    %v685 = vmul.f32 1.0, %v684
    %v686 = vrcp.pop %v655
    %v687 = vmul.f32 %v655, %v686
    %v688 = vsub.f32 1.0, %v687
    %v689 = vmul.f32 %v686, %v688
    %v690 = vadd.f32 %v686, %v689
    %vm691 = vweird.f32 %v655
    %vm692 = vweird.f32 %v686
    %vm693 = vmor %vm691, %vm692
    %v694 = vsel %vm693, %v686, %v690
    %v695 = vand.u32 2147483647, %v655
    %vm696 = vcmp.eq.f32.partialorder %v695, 8.507059e+37
    %v697 = vand.u32 %v655, 2147483648
    %v698 = vor.u32 1.1754944e-38, %v697
    %v699 = vsel %vm696, %v698, %v694
    %v700 = vmul.f32 1.0, %v699
    %v701 = vtanh.pop %v643
    %v702 = vmul.f32 %v685, %v553
    %v703 = vmul.f32 %v670, %v701
    %v704 = vadd.f32 %v702, %v703
    %v705 = vtanh.pop %v704
    %v706 = vmul.f32 %v700, %v705
    %v707 = vld [vmem:[#allocation5] sm:$0xff]
    %v708 = vld [vmem:[#allocation5 + $0x8] sm:$0xff]
    %v709 = vld [vmem:[#allocation5 + $0x10] sm:$0xff]
    %v710 = vld [vmem:[#allocation5 + $0x18] sm:$0xff]
    %v711 = vld [vmem:[#allocation5 + $0x20] sm:$0xff]
    %v712 = vld [vmem:[#allocation5 + $0x28] sm:$0xff]
    %v713 = vld [vmem:[#allocation5 + $0x30] sm:$0xff]
    %v714 = vld [vmem:[#allocation5 + $0x38] sm:$0xff]
    %v715 = vld [vmem:[#allocation5 + $0x40] sm:$0xff]
    %v716 = vld [vmem:[#allocation5 + $0x48] sm:$0xff]
    %v717 = vld [vmem:[#allocation5 + $0x50] sm:$0xff]
    %v718 = vld [vmem:[#allocation5 + $0x58] sm:$0xff]
    %v719 = vld [vmem:[#allocation5 + $0x60] sm:$0xff]
    %v720 = vld [vmem:[#allocation5 + $0x68] sm:$0xff]
    %v721 = vld [vmem:[#allocation5 + $0x70] sm:$0xff]
    %v722 = vld [vmem:[#allocation5 + $0x78] sm:$0xff]
    %v723 = vld [vmem:[#allocation5 + $0x80] sm:$0xff]
    %v724 = vld [vmem:[#allocation5 + $0x88] sm:$0xff]
    %v725 = vld [vmem:[#allocation5 + $0x90] sm:$0xff]
    %v726 = vld [vmem:[#allocation5 + $0x98] sm:$0xff]
    %v727 = vld [vmem:[#allocation5 + $0xa0] sm:$0xff]
    %v728 = vld [vmem:[#allocation5 + $0xa8] sm:$0xff]
    %v729 = vld [vmem:[#allocation5 + $0xb0] sm:$0xff]
    %v730 = vld [vmem:[#allocation5 + $0xb8] sm:$0xff]
    %v731 = vld [vmem:[#allocation5 + $0xc0] sm:$0xff]
    %v732 = vld [vmem:[#allocation5 + $0xc8] sm:$0xff]
    %v733 = vld [vmem:[#allocation5 + $0xd0] sm:$0xff]
    %v734 = vld [vmem:[#allocation5 + $0xd8] sm:$0xff]
    %v735 = vld [vmem:[#allocation5 + $0xe0] sm:$0xff]
    %v736 = vld [vmem:[#allocation5 + $0xe8] sm:$0xff]
    %v737 = vld [vmem:[#allocation5 + $0xf0] sm:$0xff]
    %v738 = vld [vmem:[#allocation5 + $0xf8] sm:$0xff]
    %v739 = vld [vmem:[#allocation5 + $0x100] sm:$0xff]
    %v740 = vld [vmem:[#allocation5 + $0x108] sm:$0xff]
    %v741 = vld [vmem:[#allocation5 + $0x110] sm:$0xff]
    %v742 = vld [vmem:[#allocation5 + $0x118] sm:$0xff]
    %v743 = vld [vmem:[#allocation5 + $0x120] sm:$0xff]
    %v744 = vld [vmem:[#allocation5 + $0x128] sm:$0xff]
    %v745 = vld [vmem:[#allocation5 + $0x130] sm:$0xff]
    %v746 = vld [vmem:[#allocation5 + $0x138] sm:$0xff]
    %v747 = vld [vmem:[#allocation5 + $0x140] sm:$0xff]
    %v748 = vld [vmem:[#allocation5 + $0x148] sm:$0xff]
    %v749 = vld [vmem:[#allocation5 + $0x150] sm:$0xff]
    %v750 = vld [vmem:[#allocation5 + $0x158] sm:$0xff]
    %v751 = vld [vmem:[#allocation5 + $0x160] sm:$0xff]
    %v752 = vld [vmem:[#allocation5 + $0x168] sm:$0xff]
    %v753 = vld [vmem:[#allocation5 + $0x170] sm:$0xff]
    %v754 = vld [vmem:[#allocation5 + $0x178] sm:$0xff]
    %v755 = vld [vmem:[#allocation5 + $0x180] sm:$0xff]
    %v756 = vld [vmem:[#allocation5 + $0x188] sm:$0xff]
    %v757 = vld [vmem:[#allocation5 + $0x190] sm:$0xff]
    %v758 = vld [vmem:[#allocation5 + $0x198] sm:$0xff]
    %v759 = vld [vmem:[#allocation5 + $0x1a0] sm:$0xff]
    %v760 = vld [vmem:[#allocation5 + $0x1a8] sm:$0xff]
    %v761 = vld [vmem:[#allocation5 + $0x1b0] sm:$0xff]
    %v762 = vld [vmem:[#allocation5 + $0x1b8] sm:$0xff]
    %v763 = vld [vmem:[#allocation5 + $0x1c0] sm:$0xff]
    %v764 = vld [vmem:[#allocation5 + $0x1c8] sm:$0xff]
    %v765 = vld [vmem:[#allocation5 + $0x1d0] sm:$0xff]
    %v766 = vld [vmem:[#allocation5 + $0x1d8] sm:$0xff]
    %v767 = vld [vmem:[#allocation5 + $0x1e0] sm:$0xff]
    %v768 = vld [vmem:[#allocation5 + $0x1e8] sm:$0xff]
    %v769 = vld [vmem:[#allocation5 + $0x1f0] sm:$0xff]
    %v770 = vld [vmem:[#allocation5 + $0x1f8] sm:$0xff]
    %v771 = vld [vmem:[#allocation5 + $0x200] sm:$0xff]
    %v772 = vld [vmem:[#allocation5 + $0x208] sm:$0xff]
    %v773 = vld [vmem:[#allocation5 + $0x210] sm:$0xff]
    %v774 = vld [vmem:[#allocation5 + $0x218] sm:$0xff]
    %v775 = vld [vmem:[#allocation5 + $0x220] sm:$0xff]
    %v776 = vld [vmem:[#allocation5 + $0x228] sm:$0xff]
    %v777 = vld [vmem:[#allocation5 + $0x230] sm:$0xff]
    %v778 = vld [vmem:[#allocation5 + $0x238] sm:$0xff]
    %v779 = vld [vmem:[#allocation5 + $0x240] sm:$0xff]
    %v780 = vld [vmem:[#allocation5 + $0x248] sm:$0xff]
    %v781 = vld [vmem:[#allocation5 + $0x250] sm:$0xff]
    %v782 = vld [vmem:[#allocation5 + $0x258] sm:$0xff]
    %v783 = vld [vmem:[#allocation5 + $0x260] sm:$0xff]
    %v784 = vld [vmem:[#allocation5 + $0x268] sm:$0xff]
    %v785 = vld [vmem:[#allocation5 + $0x270] sm:$0xff]
    %v786 = vld [vmem:[#allocation5 + $0x278] sm:$0xff]
    %v787 = vld [vmem:[#allocation5 + $0x280] sm:$0xff]
    %v788 = vld [vmem:[#allocation5 + $0x288] sm:$0xff]
    %v789 = vld [vmem:[#allocation5 + $0x290] sm:$0xff]
    %v790 = vld [vmem:[#allocation5 + $0x298] sm:$0xff]
    %v791 = vld [vmem:[#allocation5 + $0x2a0] sm:$0xff]
    %v792 = vld [vmem:[#allocation5 + $0x2a8] sm:$0xff]
    %v793 = vld [vmem:[#allocation5 + $0x2b0] sm:$0xff]
    %v794 = vld [vmem:[#allocation5 + $0x2b8] sm:$0xff]
    %v795 = vld [vmem:[#allocation5 + $0x2c0] sm:$0xff]
    %v796 = vld [vmem:[#allocation5 + $0x2c8] sm:$0xff]
    %v797 = vld [vmem:[#allocation5 + $0x2d0] sm:$0xff]
    %v798 = vld [vmem:[#allocation5 + $0x2d8] sm:$0xff]
    %v799 = vld [vmem:[#allocation5 + $0x2e0] sm:$0xff]
    %v800 = vld [vmem:[#allocation5 + $0x2e8] sm:$0xff]
    %v801 = vld [vmem:[#allocation5 + $0x2f0] sm:$0xff]
    %v802 = vld [vmem:[#allocation5 + $0x2f8] sm:$0xff]
    %v803 = vld [vmem:[#allocation5 + $0x300] sm:$0xff]
    %v804 = vld [vmem:[#allocation5 + $0x308] sm:$0xff]
    %v805 = vld [vmem:[#allocation5 + $0x310] sm:$0xff]
    %v806 = vld [vmem:[#allocation5 + $0x318] sm:$0xff]
    %v807 = vld [vmem:[#allocation5 + $0x320] sm:$0xff]
    %v808 = vld [vmem:[#allocation5 + $0x328] sm:$0xff]
    %v809 = vld [vmem:[#allocation5 + $0x330] sm:$0xff]
    %v810 = vld [vmem:[#allocation5 + $0x338] sm:$0xff]
    %v811 = vld [vmem:[#allocation5 + $0x340] sm:$0xff]
    %v812 = vld [vmem:[#allocation5 + $0x348] sm:$0xff]
    %v813 = vld [vmem:[#allocation5 + $0x350] sm:$0xff]
    %v814 = vld [vmem:[#allocation5 + $0x358] sm:$0xff]
    %v815 = vld [vmem:[#allocation5 + $0x360] sm:$0xff]
    %v816 = vld [vmem:[#allocation5 + $0x368] sm:$0xff]
    %v817 = vld [vmem:[#allocation5 + $0x370] sm:$0xff]
    %v818 = vld [vmem:[#allocation5 + $0x378] sm:$0xff]
    %v819 = vld [vmem:[#allocation5 + $0x380] sm:$0xff]
    %v820 = vld [vmem:[#allocation5 + $0x388] sm:$0xff]
    %v821 = vld [vmem:[#allocation5 + $0x390] sm:$0xff]
    %v822 = vld [vmem:[#allocation5 + $0x398] sm:$0xff]
    %v823 = vld [vmem:[#allocation5 + $0x3a0] sm:$0xff]
    %v824 = vld [vmem:[#allocation5 + $0x3a8] sm:$0xff]
    %v825 = vld [vmem:[#allocation5 + $0x3b0] sm:$0xff]
    %v826 = vld [vmem:[#allocation5 + $0x3b8] sm:$0xff]
    %v827 = vld [vmem:[#allocation5 + $0x3c0] sm:$0xff]
    %v828 = vld [vmem:[#allocation5 + $0x3c8] sm:$0xff]
    %v829 = vld [vmem:[#allocation5 + $0x3d0] sm:$0xff]
    %v830 = vld [vmem:[#allocation5 + $0x3d8] sm:$0xff]
    %v831 = vld [vmem:[#allocation5 + $0x3e0] sm:$0xff]
    %v832 = vld [vmem:[#allocation5 + $0x3e8] sm:$0xff]
    %v833 = vld [vmem:[#allocation5 + $0x3f0] sm:$0xff]
    %v834 = vld [vmem:[#allocation5 + $0x3f8] sm:$0xff]
    %v835 = vld [vmem:[%s5] sm:$0xf]
    %v837 = vperm.slane %v835, 0
    %v838 = vperm.slane %v835, 1
    %v839 = vperm.slane %v835, 2
    %v840 = vperm.slane %v835, 3
    %845 = vmatpush.msra.mxu0 %v767
    %846 = vmatpush.msra.mxu0 %v763
    %847 = vmatpush.msra.mxu0 %v759
    %848 = vmatpush.msra.mxu0 %v755
    %849 = vmatpush.msra.mxu0 %v751
    %850 = vmatpush.msra.mxu0 %v747
    %851 = vmatpush.msra.mxu0 %v743
    %852 = vmatpush.msra.mxu0 %v739
    %853 = vmatpush.msra.mxu0 %v735
    %854 = vmatpush.msra.mxu0 %v731
    %855 = vmatpush.msra.mxu0 %v727
    %856 = vmatpush.msra.mxu0 %v723
    %857 = vmatpush.msra.mxu0 %v719
    %858 = vmatpush.msra.mxu0 %v715
    %859 = vmatpush.msra.mxu0 %v711
    %860 = vmatpush.msra.mxu0 %v707
    %861 = vmatmul.f32.gmra.mxu0 %v555
    %v862 = vpop.f32.mrf.mxu0
    %v863 = vadd.f32 %v837, %v862
    %864 = vdwg.mxu0
    %865 = vmatpush.msra.mxu0 %v831
    %866 = vmatpush.msra.mxu0 %v827
    %867 = vmatpush.msra.mxu0 %v823
    %868 = vmatpush.msra.mxu0 %v819
    %869 = vmatpush.msra.mxu0 %v815
    %870 = vmatpush.msra.mxu0 %v811
    %871 = vmatpush.msra.mxu0 %v807
    %872 = vmatpush.msra.mxu0 %v803
    %873 = vmatpush.msra.mxu0 %v799
    %874 = vmatpush.msra.mxu0 %v795
    %875 = vmatpush.msra.mxu0 %v791
    %876 = vmatpush.msra.mxu0 %v787
    %877 = vmatpush.msra.mxu0 %v783
    %878 = vmatpush.msra.mxu0 %v779
    %879 = vmatpush.msra.mxu0 %v775
    %880 = vmatpush.msra.mxu0 %v771
    %881 = vmatmul.f32.gmra.mxu0 0.0
    %v882 = vpop.f32.mrf.mxu0
    %v883 = vadd.f32 %v863, %v882
    %884 = vdwg.mxu0
    %885 = vmatpush.msra.mxu0 %v768
    %886 = vmatpush.msra.mxu0 %v764
    %887 = vmatpush.msra.mxu0 %v760
    %888 = vmatpush.msra.mxu0 %v756
    %889 = vmatpush.msra.mxu0 %v752
    %890 = vmatpush.msra.mxu0 %v748
    %891 = vmatpush.msra.mxu0 %v744
    %892 = vmatpush.msra.mxu0 %v740
    %893 = vmatpush.msra.mxu0 %v736
    %894 = vmatpush.msra.mxu0 %v732
    %895 = vmatpush.msra.mxu0 %v728
    %896 = vmatpush.msra.mxu0 %v724
    %897 = vmatpush.msra.mxu0 %v720
    %898 = vmatpush.msra.mxu0 %v716
    %899 = vmatpush.msra.mxu0 %v712
    %900 = vmatpush.msra.mxu0 %v708
    %901 = vmatmul.f32.gmra.mxu0 %v555
    %v902 = vpop.f32.mrf.mxu0
    %v903 = vadd.f32 %v838, %v902
    %904 = vdwg.mxu0
    %905 = vmatpush.msra.mxu0 %v832
    %906 = vmatpush.msra.mxu0 %v828
    %907 = vmatpush.msra.mxu0 %v824
    %908 = vmatpush.msra.mxu0 %v820
    %909 = vmatpush.msra.mxu0 %v816
    %910 = vmatpush.msra.mxu0 %v812
    %911 = vmatpush.msra.mxu0 %v808
    %912 = vmatpush.msra.mxu0 %v804
    %913 = vmatpush.msra.mxu0 %v800
    %914 = vmatpush.msra.mxu0 %v796
    %915 = vmatpush.msra.mxu0 %v792
    %916 = vmatpush.msra.mxu0 %v788
    %917 = vmatpush.msra.mxu0 %v784
    %918 = vmatpush.msra.mxu0 %v780
    %919 = vmatpush.msra.mxu0 %v776
    %920 = vmatpush.msra.mxu0 %v772
    %921 = vmatmul.f32.gmra.mxu0 0.0
    %v922 = vpop.f32.mrf.mxu0
    %v923 = vadd.f32 %v903, %v922
    %924 = vdwg.mxu0
    %925 = vmatpush.msra.mxu0 %v769
    %926 = vmatpush.msra.mxu0 %v765
    %927 = vmatpush.msra.mxu0 %v761
    %928 = vmatpush.msra.mxu0 %v757
    %929 = vmatpush.msra.mxu0 %v753
    %930 = vmatpush.msra.mxu0 %v749
    %931 = vmatpush.msra.mxu0 %v745
    %932 = vmatpush.msra.mxu0 %v741
    %933 = vmatpush.msra.mxu0 %v737
    %934 = vmatpush.msra.mxu0 %v733
    %935 = vmatpush.msra.mxu0 %v729
    %936 = vmatpush.msra.mxu0 %v725
    %937 = vmatpush.msra.mxu0 %v721
    %938 = vmatpush.msra.mxu0 %v717
    %939 = vmatpush.msra.mxu0 %v713
    %940 = vmatpush.msra.mxu0 %v709
    %941 = vmatmul.f32.gmra.mxu0 %v555
    %v942 = vpop.f32.mrf.mxu0
    %v943 = vadd.f32 %v839, %v942
    %944 = vdwg.mxu0
    %945 = vmatpush.msra.mxu0 %v833
    %946 = vmatpush.msra.mxu0 %v829
    %947 = vmatpush.msra.mxu0 %v825
    %948 = vmatpush.msra.mxu0 %v821
    %949 = vmatpush.msra.mxu0 %v817
    %950 = vmatpush.msra.mxu0 %v813
    %951 = vmatpush.msra.mxu0 %v809
    %952 = vmatpush.msra.mxu0 %v805
    %953 = vmatpush.msra.mxu0 %v801
    %954 = vmatpush.msra.mxu0 %v797
    %955 = vmatpush.msra.mxu0 %v793
    %956 = vmatpush.msra.mxu0 %v789
    %957 = vmatpush.msra.mxu0 %v785
    %958 = vmatpush.msra.mxu0 %v781
    %959 = vmatpush.msra.mxu0 %v777
    %960 = vmatpush.msra.mxu0 %v773
    %961 = vmatmul.f32.gmra.mxu0 0.0
    %v962 = vpop.f32.mrf.mxu0
    %v963 = vadd.f32 %v943, %v962
    %964 = vdwg.mxu0
    %965 = vmatpush.msra.mxu0 %v770
    %966 = vmatpush.msra.mxu0 %v766
    %967 = vmatpush.msra.mxu0 %v762
    %968 = vmatpush.msra.mxu0 %v758
    %969 = vmatpush.msra.mxu0 %v754
    %970 = vmatpush.msra.mxu0 %v750
    %971 = vmatpush.msra.mxu0 %v746
    %972 = vmatpush.msra.mxu0 %v742
    %973 = vmatpush.msra.mxu0 %v738
    %974 = vmatpush.msra.mxu0 %v734
    %975 = vmatpush.msra.mxu0 %v730
    %976 = vmatpush.msra.mxu0 %v726
    %977 = vmatpush.msra.mxu0 %v722
    %978 = vmatpush.msra.mxu0 %v718
    %979 = vmatpush.msra.mxu0 %v714
    %980 = vmatpush.msra.mxu0 %v710
    %981 = vmatmul.f32.gmra.mxu0 %v555
    %v982 = vpop.f32.mrf.mxu0
    %v983 = vadd.f32 %v840, %v982
    %984 = vdwg.mxu0
    %985 = vmatpush.msra.mxu0 %v834
    %986 = vmatpush.msra.mxu0 %v830
    %987 = vmatpush.msra.mxu0 %v826
    %988 = vmatpush.msra.mxu0 %v822
    %989 = vmatpush.msra.mxu0 %v818
    %990 = vmatpush.msra.mxu0 %v814
    %991 = vmatpush.msra.mxu0 %v810
    %992 = vmatpush.msra.mxu0 %v806
    %993 = vmatpush.msra.mxu0 %v802
    %994 = vmatpush.msra.mxu0 %v798
    %995 = vmatpush.msra.mxu0 %v794
    %996 = vmatpush.msra.mxu0 %v790
    %997 = vmatpush.msra.mxu0 %v786
    %998 = vmatpush.msra.mxu0 %v782
    %999 = vmatpush.msra.mxu0 %v778
    %1000 = vmatpush.msra.mxu0 %v774
    %1001 = vmatmul.f32.gmra.mxu0 0.0
    %v1002 = vpop.f32.mrf.mxu0
    %v1003 = vadd.f32 %v983, %v1002
    %1004 = vdwg.mxu0
    %v1005 = vxor.u32 %v883, 2147483648
    %v1006 = vxor.u32 %v923, 2147483648
    %v1007 = vxor.u32 %v963, 2147483648
    %v1008 = vmul.f32 %v1005, 1.442695
    %v1009 = vpow.pop %v1008
    %v1010 = vmul.f32 %v1006, 1.442695
    %v1011 = vpow.pop %v1010
    %v1012 = vmul.f32 %v1007, 1.442695
    %v1013 = vpow.pop %v1012
    %v1014 = vadd.f32 %v1009, 1.0
    %v1015 = vadd.f32 %v1011, 1.0
    %v1016 = vadd.f32 %v1013, 1.0
    %v1017 = vrcp.pop %v1014
    %v1018 = vmul.f32 %v1014, %v1017
    %v1019 = vsub.f32 1.0, %v1018
    %v1020 = vmul.f32 %v1017, %v1019
    %v1021 = vadd.f32 %v1017, %v1020
    %vm1022 = vweird.f32 %v1014
    %vm1023 = vweird.f32 %v1017
    %vm1024 = vmor %vm1022, %vm1023
    %v1025 = vsel %vm1024, %v1017, %v1021
    %v1026 = vand.u32 2147483647, %v1014
    %vm1027 = vcmp.eq.f32.partialorder %v1026, 8.507059e+37
    %v1028 = vand.u32 %v1014, 2147483648
    %v1029 = vor.u32 1.1754944e-38, %v1028
    %v1030 = vsel %vm1027, %v1029, %v1025
    %v1031 = vmul.f32 1.0, %v1030
    %v1032 = vrcp.pop %v1015
    %v1033 = vmul.f32 %v1015, %v1032
    %v1034 = vsub.f32 1.0, %v1033
    %v1035 = vmul.f32 %v1032, %v1034
    %v1036 = vadd.f32 %v1032, %v1035
    %vm1037 = vweird.f32 %v1015
    %vm1038 = vweird.f32 %v1032
    %vm1039 = vmor %vm1037, %vm1038
    %v1040 = vsel %vm1039, %v1032, %v1036
    %v1041 = vand.u32 2147483647, %v1015
    %vm1042 = vcmp.eq.f32.partialorder %v1041, 8.507059e+37
    %v1043 = vand.u32 %v1015, 2147483648
    %v1044 = vor.u32 1.1754944e-38, %v1043
    %v1045 = vsel %vm1042, %v1044, %v1040
    %v1046 = vmul.f32 1.0, %v1045
    %v1047 = vrcp.pop %v1016
    %v1048 = vmul.f32 %v1016, %v1047
    %v1049 = vsub.f32 1.0, %v1048
    %v1050 = vmul.f32 %v1047, %v1049
    %v1051 = vadd.f32 %v1047, %v1050
    %vm1052 = vweird.f32 %v1016
    %vm1053 = vweird.f32 %v1047
    %vm1054 = vmor %vm1052, %vm1053
    %v1055 = vsel %vm1054, %v1047, %v1051
    %v1056 = vand.u32 2147483647, %v1016
    %vm1057 = vcmp.eq.f32.partialorder %v1056, 8.507059e+37
    %v1058 = vand.u32 %v1016, 2147483648
    %v1059 = vor.u32 1.1754944e-38, %v1058
    %v1060 = vsel %vm1057, %v1059, %v1055
    %v1061 = vmul.f32 1.0, %v1060
    %v1062 = vtanh.pop %v1003
    %v1063 = vmul.f32 %v1046, 0.0
    %v1064 = vmul.f32 %v1031, %v1062
    %v1065 = vadd.f32 %v1063, %v1064
    %v1066 = vtanh.pop %v1065
    %v1067 = vmul.f32 %v1061, %v1066
    %v1068 = vld [vmem:[#allocation2 + $0x40] sm:$0xff]
    %v1069 = vld [vmem:[#allocation2 + $0x48] sm:$0xff]
    %v1070 = vld [vmem:[#allocation2 + $0x50] sm:$0xff]
    %v1071 = vld [vmem:[#allocation2 + $0x58] sm:$0xff]
    %1072 = vmatpush.msra.mxu0 %v405
    %1073 = vmatpush.msra.mxu0 %v401
    %1074 = vmatpush.msra.mxu0 %v397
    %1075 = vmatpush.msra.mxu0 %v393
    %1076 = vmatpush.msra.mxu0 %v389
    %1077 = vmatpush.msra.mxu0 %v385
    %1078 = vmatpush.msra.mxu0 %v381
    %1079 = vmatpush.msra.mxu0 %v377
    %1080 = vmatpush.msra.mxu0 %v373
    %1081 = vmatpush.msra.mxu0 %v369
    %1082 = vmatpush.msra.mxu0 %v365
    %1083 = vmatpush.msra.mxu0 %v361
    %1084 = vmatpush.msra.mxu0 %v357
    %1085 = vmatpush.msra.mxu0 %v353
    %1086 = vmatpush.msra.mxu0 %v349
    %1087 = vmatpush.msra.mxu0 %v345
    %1088 = vmatmul.f32.gmra.mxu0 %v706
    %v1089 = vpop.f32.mrf.mxu0
    %v1090 = vadd.f32 0.0, %v1089
    %1091 = vdwg.mxu0
    %1092 = vmatpush.msra.mxu0 %v406
    %1093 = vmatpush.msra.mxu0 %v402
    %1094 = vmatpush.msra.mxu0 %v398
    %1095 = vmatpush.msra.mxu0 %v394
    %1096 = vmatpush.msra.mxu0 %v390
    %1097 = vmatpush.msra.mxu0 %v386
    %1098 = vmatpush.msra.mxu0 %v382
    %1099 = vmatpush.msra.mxu0 %v378
    %1100 = vmatpush.msra.mxu0 %v374
    %1101 = vmatpush.msra.mxu0 %v370
    %1102 = vmatpush.msra.mxu0 %v366
    %1103 = vmatpush.msra.mxu0 %v362
    %1104 = vmatpush.msra.mxu0 %v358
    %1105 = vmatpush.msra.mxu0 %v354
    %1106 = vmatpush.msra.mxu0 %v350
    %1107 = vmatpush.msra.mxu0 %v346
    %1108 = vmatmul.f32.gmra.mxu0 %v706
    %v1109 = vpop.f32.mrf.mxu0
    %v1110 = vadd.f32 0.0, %v1109
    %1111 = vdwg.mxu0
    %1112 = vmatpush.msra.mxu0 %v407
    %1113 = vmatpush.msra.mxu0 %v403
    %1114 = vmatpush.msra.mxu0 %v399
    %1115 = vmatpush.msra.mxu0 %v395
    %1116 = vmatpush.msra.mxu0 %v391
    %1117 = vmatpush.msra.mxu0 %v387
    %1118 = vmatpush.msra.mxu0 %v383
    %1119 = vmatpush.msra.mxu0 %v379
    %1120 = vmatpush.msra.mxu0 %v375
    %1121 = vmatpush.msra.mxu0 %v371
    %1122 = vmatpush.msra.mxu0 %v367
    %1123 = vmatpush.msra.mxu0 %v363
    %1124 = vmatpush.msra.mxu0 %v359
    %1125 = vmatpush.msra.mxu0 %v355
    %1126 = vmatpush.msra.mxu0 %v351
    %1127 = vmatpush.msra.mxu0 %v347
    %1128 = vmatmul.f32.gmra.mxu0 %v706
    %v1129 = vpop.f32.mrf.mxu0
    %v1130 = vadd.f32 0.0, %v1129
    %1131 = vdwg.mxu0
    %1132 = vmatpush.msra.mxu0 %v408
    %1133 = vmatpush.msra.mxu0 %v404
    %1134 = vmatpush.msra.mxu0 %v400
    %1135 = vmatpush.msra.mxu0 %v396
    %1136 = vmatpush.msra.mxu0 %v392
    %1137 = vmatpush.msra.mxu0 %v388
    %1138 = vmatpush.msra.mxu0 %v384
    %1139 = vmatpush.msra.mxu0 %v380
    %1140 = vmatpush.msra.mxu0 %v376
    %1141 = vmatpush.msra.mxu0 %v372
    %1142 = vmatpush.msra.mxu0 %v368
    %1143 = vmatpush.msra.mxu0 %v364
    %1144 = vmatpush.msra.mxu0 %v360
    %1145 = vmatpush.msra.mxu0 %v356
    %1146 = vmatpush.msra.mxu0 %v352
    %1147 = vmatpush.msra.mxu0 %v348
    %1148 = vmatmul.f32.gmra.mxu0 %v706
    %v1149 = vpop.f32.mrf.mxu0
    %v1150 = vadd.f32 0.0, %v1149
    %1151 = vdwg.mxu0
    %v1152 = vadd.f32 %v1068, %v1090
    %v1153 = vadd.f32 %v1069, %v1110
    %v1154 = vadd.f32 %v1070, %v1130
    %v1155 = vadd.f32 %v1071, %v1150
    %v1156 = vxor.u32 %v1152, 2147483648
    %v1157 = vxor.u32 %v1153, 2147483648
    %v1158 = vxor.u32 %v1154, 2147483648
    %v1159 = vmul.f32 %v1156, 1.442695
    %v1160 = vpow.pop %v1159
    %v1161 = vmul.f32 %v1157, 1.442695
    %v1162 = vpow.pop %v1161
    %v1163 = vmul.f32 %v1158, 1.442695
    %v1164 = vpow.pop %v1163
    %v1165 = vadd.f32 %v1160, 1.0
    %v1166 = vadd.f32 %v1162, 1.0
    %v1167 = vadd.f32 %v1164, 1.0
    %v1168 = vrcp.pop %v1165
    %v1169 = vmul.f32 %v1165, %v1168
    %v1170 = vsub.f32 1.0, %v1169
    %v1171 = vmul.f32 %v1168, %v1170
    %v1172 = vadd.f32 %v1168, %v1171
    %vm1173 = vweird.f32 %v1165
    %vm1174 = vweird.f32 %v1168
    %vm1175 = vmor %vm1173, %vm1174
    %v1176 = vsel %vm1175, %v1168, %v1172
    %v1177 = vand.u32 2147483647, %v1165
    %vm1178 = vcmp.eq.f32.partialorder %v1177, 8.507059e+37
    %v1179 = vand.u32 %v1165, 2147483648
    %v1180 = vor.u32 1.1754944e-38, %v1179
    %v1181 = vsel %vm1178, %v1180, %v1176
    %v1182 = vmul.f32 1.0, %v1181
    %v1183 = vrcp.pop %v1166
    %v1184 = vmul.f32 %v1166, %v1183
    %v1185 = vsub.f32 1.0, %v1184
    %v1186 = vmul.f32 %v1183, %v1185
    %v1187 = vadd.f32 %v1183, %v1186
    %vm1188 = vweird.f32 %v1166
    %vm1189 = vweird.f32 %v1183
    %vm1190 = vmor %vm1188, %vm1189
    %v1191 = vsel %vm1190, %v1183, %v1187
    %v1192 = vand.u32 2147483647, %v1166
    %vm1193 = vcmp.eq.f32.partialorder %v1192, 8.507059e+37
    %v1194 = vand.u32 %v1166, 2147483648
    %v1195 = vor.u32 1.1754944e-38, %v1194
    %v1196 = vsel %vm1193, %v1195, %v1191
    %v1197 = vmul.f32 1.0, %v1196
    %v1198 = vrcp.pop %v1167
    %v1199 = vmul.f32 %v1167, %v1198
    %v1200 = vsub.f32 1.0, %v1199
    %v1201 = vmul.f32 %v1198, %v1200
    %v1202 = vadd.f32 %v1198, %v1201
    %vm1203 = vweird.f32 %v1167
    %vm1204 = vweird.f32 %v1198
    %vm1205 = vmor %vm1203, %vm1204
    %v1206 = vsel %vm1205, %v1198, %v1202
    %v1207 = vand.u32 2147483647, %v1167
    %vm1208 = vcmp.eq.f32.partialorder %v1207, 8.507059e+37
    %v1209 = vand.u32 %v1167, 2147483648
    %v1210 = vor.u32 1.1754944e-38, %v1209
    %v1211 = vsel %vm1208, %v1210, %v1206
    %v1212 = vmul.f32 1.0, %v1211
    %v1213 = vtanh.pop %v1155
    %v1214 = vmul.f32 %v1197, %v704
    %v1215 = vmul.f32 %v1182, %v1213
    %v1216 = vadd.f32 %v1214, %v1215
    %v1217 = vtanh.pop %v1216
    %v1218 = vmul.f32 %v1212, %v1217
    %1219 = vmatpush.msra.mxu0 %v767
    %1220 = vmatpush.msra.mxu0 %v763
    %1221 = vmatpush.msra.mxu0 %v759
    %1222 = vmatpush.msra.mxu0 %v755
    %1223 = vmatpush.msra.mxu0 %v751
    %1224 = vmatpush.msra.mxu0 %v747
    %1225 = vmatpush.msra.mxu0 %v743
    %1226 = vmatpush.msra.mxu0 %v739
    %1227 = vmatpush.msra.mxu0 %v735
    %1228 = vmatpush.msra.mxu0 %v731
    %1229 = vmatpush.msra.mxu0 %v727
    %1230 = vmatpush.msra.mxu0 %v723
    %1231 = vmatpush.msra.mxu0 %v719
    %1232 = vmatpush.msra.mxu0 %v715
    %1233 = vmatpush.msra.mxu0 %v711
    %1234 = vmatpush.msra.mxu0 %v707
    %1235 = vmatmul.f32.gmra.mxu0 %v706
    %v1236 = vpop.f32.mrf.mxu0
    %v1237 = vadd.f32 %v837, %v1236
    %1238 = vdwg.mxu0
    %1239 = vmatpush.msra.mxu0 %v831
    %1240 = vmatpush.msra.mxu0 %v827
    %1241 = vmatpush.msra.mxu0 %v823
    %1242 = vmatpush.msra.mxu0 %v819
    %1243 = vmatpush.msra.mxu0 %v815
    %1244 = vmatpush.msra.mxu0 %v811
    %1245 = vmatpush.msra.mxu0 %v807
    %1246 = vmatpush.msra.mxu0 %v803
    %1247 = vmatpush.msra.mxu0 %v799
    %1248 = vmatpush.msra.mxu0 %v795
    %1249 = vmatpush.msra.mxu0 %v791
    %1250 = vmatpush.msra.mxu0 %v787
    %1251 = vmatpush.msra.mxu0 %v783
    %1252 = vmatpush.msra.mxu0 %v779
    %1253 = vmatpush.msra.mxu0 %v775
    %1254 = vmatpush.msra.mxu0 %v771
    %1255 = vmatmul.f32.gmra.mxu0 %v1067
    %v1256 = vpop.f32.mrf.mxu0
    %v1257 = vadd.f32 %v1237, %v1256
    %1258 = vdwg.mxu0
    %1259 = vmatpush.msra.mxu0 %v768
    %1260 = vmatpush.msra.mxu0 %v764
    %1261 = vmatpush.msra.mxu0 %v760
    %1262 = vmatpush.msra.mxu0 %v756
    %1263 = vmatpush.msra.mxu0 %v752
    %1264 = vmatpush.msra.mxu0 %v748
    %1265 = vmatpush.msra.mxu0 %v744
    %1266 = vmatpush.msra.mxu0 %v740
    %1267 = vmatpush.msra.mxu0 %v736
    %1268 = vmatpush.msra.mxu0 %v732
    %1269 = vmatpush.msra.mxu0 %v728
    %1270 = vmatpush.msra.mxu0 %v724
    %1271 = vmatpush.msra.mxu0 %v720
    %1272 = vmatpush.msra.mxu0 %v716
    %1273 = vmatpush.msra.mxu0 %v712
    %1274 = vmatpush.msra.mxu0 %v708
    %1275 = vmatmul.f32.gmra.mxu0 %v706
    %v1276 = vpop.f32.mrf.mxu0
    %v1277 = vadd.f32 %v838, %v1276
    %1278 = vdwg.mxu0
    %1279 = vmatpush.msra.mxu0 %v832
    %1280 = vmatpush.msra.mxu0 %v828
    %1281 = vmatpush.msra.mxu0 %v824
    %1282 = vmatpush.msra.mxu0 %v820
    %1283 = vmatpush.msra.mxu0 %v816
    %1284 = vmatpush.msra.mxu0 %v812
    %1285 = vmatpush.msra.mxu0 %v808
    %1286 = vmatpush.msra.mxu0 %v804
    %1287 = vmatpush.msra.mxu0 %v800
    %1288 = vmatpush.msra.mxu0 %v796
    %1289 = vmatpush.msra.mxu0 %v792
    %1290 = vmatpush.msra.mxu0 %v788
    %1291 = vmatpush.msra.mxu0 %v784
    %1292 = vmatpush.msra.mxu0 %v780
    %1293 = vmatpush.msra.mxu0 %v776
    %1294 = vmatpush.msra.mxu0 %v772
    %1295 = vmatmul.f32.gmra.mxu0 %v1067
    %v1296 = vpop.f32.mrf.mxu0
    %v1297 = vadd.f32 %v1277, %v1296
    %1298 = vdwg.mxu0
    %1299 = vmatpush.msra.mxu0 %v769
    %1300 = vmatpush.msra.mxu0 %v765
    %1301 = vmatpush.msra.mxu0 %v761
    %1302 = vmatpush.msra.mxu0 %v757
    %1303 = vmatpush.msra.mxu0 %v753
    %1304 = vmatpush.msra.mxu0 %v749
    %1305 = vmatpush.msra.mxu0 %v745
    %1306 = vmatpush.msra.mxu0 %v741
    %1307 = vmatpush.msra.mxu0 %v737
    %1308 = vmatpush.msra.mxu0 %v733
    %1309 = vmatpush.msra.mxu0 %v729
    %1310 = vmatpush.msra.mxu0 %v725
    %1311 = vmatpush.msra.mxu0 %v721
    %1312 = vmatpush.msra.mxu0 %v717
    %1313 = vmatpush.msra.mxu0 %v713
    %1314 = vmatpush.msra.mxu0 %v709
    %1315 = vmatmul.f32.gmra.mxu0 %v706
    %v1316 = vpop.f32.mrf.mxu0
    %v1317 = vadd.f32 %v839, %v1316
    %1318 = vdwg.mxu0
    %1319 = vmatpush.msra.mxu0 %v833
    %1320 = vmatpush.msra.mxu0 %v829
    %1321 = vmatpush.msra.mxu0 %v825
    %1322 = vmatpush.msra.mxu0 %v821
    %1323 = vmatpush.msra.mxu0 %v817
    %1324 = vmatpush.msra.mxu0 %v813
    %1325 = vmatpush.msra.mxu0 %v809
    %1326 = vmatpush.msra.mxu0 %v805
    %1327 = vmatpush.msra.mxu0 %v801
    %1328 = vmatpush.msra.mxu0 %v797
    %1329 = vmatpush.msra.mxu0 %v793
    %1330 = vmatpush.msra.mxu0 %v789
    %1331 = vmatpush.msra.mxu0 %v785
    %1332 = vmatpush.msra.mxu0 %v781
    %1333 = vmatpush.msra.mxu0 %v777
    %1334 = vmatpush.msra.mxu0 %v773
    %1335 = vmatmul.f32.gmra.mxu0 %v1067
    %v1336 = vpop.f32.mrf.mxu0
    %v1337 = vadd.f32 %v1317, %v1336
    %1338 = vdwg.mxu0
    %1339 = vmatpush.msra.mxu0 %v770
    %1340 = vmatpush.msra.mxu0 %v766
    %1341 = vmatpush.msra.mxu0 %v762
    %1342 = vmatpush.msra.mxu0 %v758
    %1343 = vmatpush.msra.mxu0 %v754
    %1344 = vmatpush.msra.mxu0 %v750
    %1345 = vmatpush.msra.mxu0 %v746
    %1346 = vmatpush.msra.mxu0 %v742
    %1347 = vmatpush.msra.mxu0 %v738
    %1348 = vmatpush.msra.mxu0 %v734
    %1349 = vmatpush.msra.mxu0 %v730
    %1350 = vmatpush.msra.mxu0 %v726
    %1351 = vmatpush.msra.mxu0 %v722
    %1352 = vmatpush.msra.mxu0 %v718
    %1353 = vmatpush.msra.mxu0 %v714
    %1354 = vmatpush.msra.mxu0 %v710
    %1355 = vmatmul.f32.gmra.mxu0 %v706
    %v1356 = vpop.f32.mrf.mxu0
    %v1357 = vadd.f32 %v840, %v1356
    %1358 = vdwg.mxu0
    %1359 = vmatpush.msra.mxu0 %v834
    %1360 = vmatpush.msra.mxu0 %v830
    %1361 = vmatpush.msra.mxu0 %v826
    %1362 = vmatpush.msra.mxu0 %v822
    %1363 = vmatpush.msra.mxu0 %v818
    %1364 = vmatpush.msra.mxu0 %v814
    %1365 = vmatpush.msra.mxu0 %v810
    %1366 = vmatpush.msra.mxu0 %v806
    %1367 = vmatpush.msra.mxu0 %v802
    %1368 = vmatpush.msra.mxu0 %v798
    %1369 = vmatpush.msra.mxu0 %v794
    %1370 = vmatpush.msra.mxu0 %v790
    %1371 = vmatpush.msra.mxu0 %v786
    %1372 = vmatpush.msra.mxu0 %v782
    %1373 = vmatpush.msra.mxu0 %v778
    %1374 = vmatpush.msra.mxu0 %v774
    %1375 = vmatmul.f32.gmra.mxu0 %v1067
    %v1376 = vpop.f32.mrf.mxu0
    %v1377 = vadd.f32 %v1357, %v1376
    %1378 = vdwg.mxu0
    %v1379 = vxor.u32 %v1257, 2147483648
    %v1380 = vxor.u32 %v1297, 2147483648
    %v1381 = vxor.u32 %v1337, 2147483648
    %v1382 = vmul.f32 %v1379, 1.442695
    %v1383 = vpow.pop %v1382
    %v1384 = vmul.f32 %v1380, 1.442695
    %v1385 = vpow.pop %v1384
    %v1386 = vmul.f32 %v1381, 1.442695
    %v1387 = vpow.pop %v1386
    %v1388 = vadd.f32 %v1383, 1.0
    %v1389 = vadd.f32 %v1385, 1.0
    %v1390 = vadd.f32 %v1387, 1.0
    %v1391 = vrcp.pop %v1388
    %v1392 = vmul.f32 %v1388, %v1391
    %v1393 = vsub.f32 1.0, %v1392
    %v1394 = vmul.f32 %v1391, %v1393
    %v1395 = vadd.f32 %v1391, %v1394
    %vm1396 = vweird.f32 %v1388
    %vm1397 = vweird.f32 %v1391
    %vm1398 = vmor %vm1396, %vm1397
    %v1399 = vsel %vm1398, %v1391, %v1395
    %v1400 = vand.u32 2147483647, %v1388
    %vm1401 = vcmp.eq.f32.partialorder %v1400, 8.507059e+37
    %v1402 = vand.u32 %v1388, 2147483648
    %v1403 = vor.u32 1.1754944e-38, %v1402
    %v1404 = vsel %vm1401, %v1403, %v1399
    %v1405 = vmul.f32 1.0, %v1404
    %v1406 = vrcp.pop %v1389
    %v1407 = vmul.f32 %v1389, %v1406
    %v1408 = vsub.f32 1.0, %v1407
    %v1409 = vmul.f32 %v1406, %v1408
    %v1410 = vadd.f32 %v1406, %v1409
    %vm1411 = vweird.f32 %v1389
    %vm1412 = vweird.f32 %v1406
    %vm1413 = vmor %vm1411, %vm1412
    %v1414 = vsel %vm1413, %v1406, %v1410
    %v1415 = vand.u32 2147483647, %v1389
    %vm1416 = vcmp.eq.f32.partialorder %v1415, 8.507059e+37
    %v1417 = vand.u32 %v1389, 2147483648
    %v1418 = vor.u32 1.1754944e-38, %v1417
    %v1419 = vsel %vm1416, %v1418, %v1414
    %v1420 = vmul.f32 1.0, %v1419
    %v1421 = vrcp.pop %v1390
    %v1422 = vmul.f32 %v1390, %v1421
    %v1423 = vsub.f32 1.0, %v1422
    %v1424 = vmul.f32 %v1421, %v1423
    %v1425 = vadd.f32 %v1421, %v1424
    %vm1426 = vweird.f32 %v1390
    %vm1427 = vweird.f32 %v1421
    %vm1428 = vmor %vm1426, %vm1427
    %v1429 = vsel %vm1428, %v1421, %v1425
    %v1430 = vand.u32 2147483647, %v1390
    %vm1431 = vcmp.eq.f32.partialorder %v1430, 8.507059e+37
    %v1432 = vand.u32 %v1390, 2147483648
    %v1433 = vor.u32 1.1754944e-38, %v1432
    %v1434 = vsel %vm1431, %v1433, %v1429
    %v1435 = vmul.f32 1.0, %v1434
    %v1436 = vtanh.pop %v1377
    %v1437 = vmul.f32 %v1420, %v1065
    %v1438 = vmul.f32 %v1405, %v1436
    %v1439 = vadd.f32 %v1437, %v1438
    %v1440 = vtanh.pop %v1439
    %v1441 = vmul.f32 %v1435, %v1440
    %v1442 = vld [vmem:[#allocation7] sm:$0xff]
    %v1443 = vld [vmem:[#allocation7 + $0x8] sm:$0xff]
    %v1444 = vld [vmem:[#allocation7 + $0x10] sm:$0xff]
    %v1445 = vld [vmem:[#allocation7 + $0x18] sm:$0xff]
    %v1446 = vld [vmem:[#allocation7 + $0x20] sm:$0xff]
    %v1447 = vld [vmem:[#allocation7 + $0x28] sm:$0xff]
    %v1448 = vld [vmem:[#allocation7 + $0x30] sm:$0xff]
    %v1449 = vld [vmem:[#allocation7 + $0x38] sm:$0xff]
    %v1450 = vld [vmem:[#allocation7 + $0x40] sm:$0xff]
    %v1451 = vld [vmem:[#allocation7 + $0x48] sm:$0xff]
    %v1452 = vld [vmem:[#allocation7 + $0x50] sm:$0xff]
    %v1453 = vld [vmem:[#allocation7 + $0x58] sm:$0xff]
    %v1454 = vld [vmem:[#allocation7 + $0x60] sm:$0xff]
    %v1455 = vld [vmem:[#allocation7 + $0x68] sm:$0xff]
    %v1456 = vld [vmem:[#allocation7 + $0x70] sm:$0xff]
    %v1457 = vld [vmem:[#allocation7 + $0x78] sm:$0xff]
    %v1458 = vld [vmem:[#allocation7 + $0x80] sm:$0xff]
    %v1459 = vld [vmem:[#allocation7 + $0x88] sm:$0xff]
    %v1460 = vld [vmem:[#allocation7 + $0x90] sm:$0xff]
    %v1461 = vld [vmem:[#allocation7 + $0x98] sm:$0xff]
    %v1462 = vld [vmem:[#allocation7 + $0xa0] sm:$0xff]
    %v1463 = vld [vmem:[#allocation7 + $0xa8] sm:$0xff]
    %v1464 = vld [vmem:[#allocation7 + $0xb0] sm:$0xff]
    %v1465 = vld [vmem:[#allocation7 + $0xb8] sm:$0xff]
    %v1466 = vld [vmem:[#allocation7 + $0xc0] sm:$0xff]
    %v1467 = vld [vmem:[#allocation7 + $0xc8] sm:$0xff]
    %v1468 = vld [vmem:[#allocation7 + $0xd0] sm:$0xff]
    %v1469 = vld [vmem:[#allocation7 + $0xd8] sm:$0xff]
    %v1470 = vld [vmem:[#allocation7 + $0xe0] sm:$0xff]
    %v1471 = vld [vmem:[#allocation7 + $0xe8] sm:$0xff]
    %v1472 = vld [vmem:[#allocation7 + $0xf0] sm:$0xff]
    %v1473 = vld [vmem:[#allocation7 + $0xf8] sm:$0xff]
    %v1474 = vld [vmem:[#allocation7 + $0x100] sm:$0xff]
    %v1475 = vld [vmem:[#allocation7 + $0x108] sm:$0xff]
    %v1476 = vld [vmem:[#allocation7 + $0x110] sm:$0xff]
    %v1477 = vld [vmem:[#allocation7 + $0x118] sm:$0xff]
    %v1478 = vld [vmem:[#allocation7 + $0x120] sm:$0xff]
    %v1479 = vld [vmem:[#allocation7 + $0x128] sm:$0xff]
    %v1480 = vld [vmem:[#allocation7 + $0x130] sm:$0xff]
    %v1481 = vld [vmem:[#allocation7 + $0x138] sm:$0xff]
    %v1482 = vld [vmem:[#allocation7 + $0x140] sm:$0xff]
    %v1483 = vld [vmem:[#allocation7 + $0x148] sm:$0xff]
    %v1484 = vld [vmem:[#allocation7 + $0x150] sm:$0xff]
    %v1485 = vld [vmem:[#allocation7 + $0x158] sm:$0xff]
    %v1486 = vld [vmem:[#allocation7 + $0x160] sm:$0xff]
    %v1487 = vld [vmem:[#allocation7 + $0x168] sm:$0xff]
    %v1488 = vld [vmem:[#allocation7 + $0x170] sm:$0xff]
    %v1489 = vld [vmem:[#allocation7 + $0x178] sm:$0xff]
    %v1490 = vld [vmem:[#allocation7 + $0x180] sm:$0xff]
    %v1491 = vld [vmem:[#allocation7 + $0x188] sm:$0xff]
    %v1492 = vld [vmem:[#allocation7 + $0x190] sm:$0xff]
    %v1493 = vld [vmem:[#allocation7 + $0x198] sm:$0xff]
    %v1494 = vld [vmem:[#allocation7 + $0x1a0] sm:$0xff]
    %v1495 = vld [vmem:[#allocation7 + $0x1a8] sm:$0xff]
    %v1496 = vld [vmem:[#allocation7 + $0x1b0] sm:$0xff]
    %v1497 = vld [vmem:[#allocation7 + $0x1b8] sm:$0xff]
    %v1498 = vld [vmem:[#allocation7 + $0x1c0] sm:$0xff]
    %v1499 = vld [vmem:[#allocation7 + $0x1c8] sm:$0xff]
    %v1500 = vld [vmem:[#allocation7 + $0x1d0] sm:$0xff]
    %v1501 = vld [vmem:[#allocation7 + $0x1d8] sm:$0xff]
    %v1502 = vld [vmem:[#allocation7 + $0x1e0] sm:$0xff]
    %v1503 = vld [vmem:[#allocation7 + $0x1e8] sm:$0xff]
    %v1504 = vld [vmem:[#allocation7 + $0x1f0] sm:$0xff]
    %v1505 = vld [vmem:[#allocation7 + $0x1f8] sm:$0xff]
    %v1506 = vld [vmem:[#allocation7 + $0x200] sm:$0xff]
    %v1507 = vld [vmem:[#allocation7 + $0x208] sm:$0xff]
    %v1508 = vld [vmem:[#allocation7 + $0x210] sm:$0xff]
    %v1509 = vld [vmem:[#allocation7 + $0x218] sm:$0xff]
    %v1510 = vld [vmem:[#allocation7 + $0x220] sm:$0xff]
    %v1511 = vld [vmem:[#allocation7 + $0x228] sm:$0xff]
    %v1512 = vld [vmem:[#allocation7 + $0x230] sm:$0xff]
    %v1513 = vld [vmem:[#allocation7 + $0x238] sm:$0xff]
    %v1514 = vld [vmem:[#allocation7 + $0x240] sm:$0xff]
    %v1515 = vld [vmem:[#allocation7 + $0x248] sm:$0xff]
    %v1516 = vld [vmem:[#allocation7 + $0x250] sm:$0xff]
    %v1517 = vld [vmem:[#allocation7 + $0x258] sm:$0xff]
    %v1518 = vld [vmem:[#allocation7 + $0x260] sm:$0xff]
    %v1519 = vld [vmem:[#allocation7 + $0x268] sm:$0xff]
    %v1520 = vld [vmem:[#allocation7 + $0x270] sm:$0xff]
    %v1521 = vld [vmem:[#allocation7 + $0x278] sm:$0xff]
    %v1522 = vld [vmem:[#allocation7 + $0x280] sm:$0xff]
    %v1523 = vld [vmem:[#allocation7 + $0x288] sm:$0xff]
    %v1524 = vld [vmem:[#allocation7 + $0x290] sm:$0xff]
    %v1525 = vld [vmem:[#allocation7 + $0x298] sm:$0xff]
    %v1526 = vld [vmem:[#allocation7 + $0x2a0] sm:$0xff]
    %v1527 = vld [vmem:[#allocation7 + $0x2a8] sm:$0xff]
    %v1528 = vld [vmem:[#allocation7 + $0x2b0] sm:$0xff]
    %v1529 = vld [vmem:[#allocation7 + $0x2b8] sm:$0xff]
    %v1530 = vld [vmem:[#allocation7 + $0x2c0] sm:$0xff]
    %v1531 = vld [vmem:[#allocation7 + $0x2c8] sm:$0xff]
    %v1532 = vld [vmem:[#allocation7 + $0x2d0] sm:$0xff]
    %v1533 = vld [vmem:[#allocation7 + $0x2d8] sm:$0xff]
    %v1534 = vld [vmem:[#allocation7 + $0x2e0] sm:$0xff]
    %v1535 = vld [vmem:[#allocation7 + $0x2e8] sm:$0xff]
    %v1536 = vld [vmem:[#allocation7 + $0x2f0] sm:$0xff]
    %v1537 = vld [vmem:[#allocation7 + $0x2f8] sm:$0xff]
    %v1538 = vld [vmem:[#allocation7 + $0x300] sm:$0xff]
    %v1539 = vld [vmem:[#allocation7 + $0x308] sm:$0xff]
    %v1540 = vld [vmem:[#allocation7 + $0x310] sm:$0xff]
    %v1541 = vld [vmem:[#allocation7 + $0x318] sm:$0xff]
    %v1542 = vld [vmem:[#allocation7 + $0x320] sm:$0xff]
    %v1543 = vld [vmem:[#allocation7 + $0x328] sm:$0xff]
    %v1544 = vld [vmem:[#allocation7 + $0x330] sm:$0xff]
    %v1545 = vld [vmem:[#allocation7 + $0x338] sm:$0xff]
    %v1546 = vld [vmem:[#allocation7 + $0x340] sm:$0xff]
    %v1547 = vld [vmem:[#allocation7 + $0x348] sm:$0xff]
    %v1548 = vld [vmem:[#allocation7 + $0x350] sm:$0xff]
    %v1549 = vld [vmem:[#allocation7 + $0x358] sm:$0xff]
    %v1550 = vld [vmem:[#allocation7 + $0x360] sm:$0xff]
    %v1551 = vld [vmem:[#allocation7 + $0x368] sm:$0xff]
    %v1552 = vld [vmem:[#allocation7 + $0x370] sm:$0xff]
    %v1553 = vld [vmem:[#allocation7 + $0x378] sm:$0xff]
    %v1554 = vld [vmem:[#allocation7 + $0x380] sm:$0xff]
    %v1555 = vld [vmem:[#allocation7 + $0x388] sm:$0xff]
    %v1556 = vld [vmem:[#allocation7 + $0x390] sm:$0xff]
    %v1557 = vld [vmem:[#allocation7 + $0x398] sm:$0xff]
    %v1558 = vld [vmem:[#allocation7 + $0x3a0] sm:$0xff]
    %v1559 = vld [vmem:[#allocation7 + $0x3a8] sm:$0xff]
    %v1560 = vld [vmem:[#allocation7 + $0x3b0] sm:$0xff]
    %v1561 = vld [vmem:[#allocation7 + $0x3b8] sm:$0xff]
    %v1562 = vld [vmem:[#allocation7 + $0x3c0] sm:$0xff]
    %v1563 = vld [vmem:[#allocation7 + $0x3c8] sm:$0xff]
    %v1564 = vld [vmem:[#allocation7 + $0x3d0] sm:$0xff]
    %v1565 = vld [vmem:[#allocation7 + $0x3d8] sm:$0xff]
    %v1566 = vld [vmem:[#allocation7 + $0x3e0] sm:$0xff]
    %v1567 = vld [vmem:[#allocation7 + $0x3e8] sm:$0xff]
    %v1568 = vld [vmem:[#allocation7 + $0x3f0] sm:$0xff]
    %v1569 = vld [vmem:[#allocation7 + $0x3f8] sm:$0xff]
    %v1570 = vld [vmem:[%s7] sm:$0xf]
    %v1572 = vperm.slane %v1570, 0
    %v1573 = vperm.slane %v1570, 1
    %v1574 = vperm.slane %v1570, 2
    %v1575 = vperm.slane %v1570, 3
    %1580 = vmatpush.msra.mxu0 %v1502
    %1581 = vmatpush.msra.mxu0 %v1498
    %1582 = vmatpush.msra.mxu0 %v1494
    %1583 = vmatpush.msra.mxu0 %v1490
    %1584 = vmatpush.msra.mxu0 %v1486
    %1585 = vmatpush.msra.mxu0 %v1482
    %1586 = vmatpush.msra.mxu0 %v1478
    %1587 = vmatpush.msra.mxu0 %v1474
    %1588 = vmatpush.msra.mxu0 %v1470
    %1589 = vmatpush.msra.mxu0 %v1466
    %1590 = vmatpush.msra.mxu0 %v1462
    %1591 = vmatpush.msra.mxu0 %v1458
    %1592 = vmatpush.msra.mxu0 %v1454
    %1593 = vmatpush.msra.mxu0 %v1450
    %1594 = vmatpush.msra.mxu0 %v1446
    %1595 = vmatpush.msra.mxu0 %v1442
    %1596 = vmatmul.f32.gmra.mxu0 %v1067
    %v1597 = vpop.f32.mrf.mxu0
    %v1598 = vadd.f32 %v1572, %v1597
    %1599 = vdwg.mxu0
    %1600 = vmatpush.msra.mxu0 %v1566
    %1601 = vmatpush.msra.mxu0 %v1562
    %1602 = vmatpush.msra.mxu0 %v1558
    %1603 = vmatpush.msra.mxu0 %v1554
    %1604 = vmatpush.msra.mxu0 %v1550
    %1605 = vmatpush.msra.mxu0 %v1546
    %1606 = vmatpush.msra.mxu0 %v1542
    %1607 = vmatpush.msra.mxu0 %v1538
    %1608 = vmatpush.msra.mxu0 %v1534
    %1609 = vmatpush.msra.mxu0 %v1530
    %1610 = vmatpush.msra.mxu0 %v1526
    %1611 = vmatpush.msra.mxu0 %v1522
    %1612 = vmatpush.msra.mxu0 %v1518
    %1613 = vmatpush.msra.mxu0 %v1514
    %1614 = vmatpush.msra.mxu0 %v1510
    %1615 = vmatpush.msra.mxu0 %v1506
    %1616 = vmatmul.f32.gmra.mxu0 0.0
    %v1617 = vpop.f32.mrf.mxu0
    %v1618 = vadd.f32 %v1598, %v1617
    %1619 = vdwg.mxu0
    %1620 = vmatpush.msra.mxu0 %v1503
    %1621 = vmatpush.msra.mxu0 %v1499
    %1622 = vmatpush.msra.mxu0 %v1495
    %1623 = vmatpush.msra.mxu0 %v1491
    %1624 = vmatpush.msra.mxu0 %v1487
    %1625 = vmatpush.msra.mxu0 %v1483
    %1626 = vmatpush.msra.mxu0 %v1479
    %1627 = vmatpush.msra.mxu0 %v1475
    %1628 = vmatpush.msra.mxu0 %v1471
    %1629 = vmatpush.msra.mxu0 %v1467
    %1630 = vmatpush.msra.mxu0 %v1463
    %1631 = vmatpush.msra.mxu0 %v1459
    %1632 = vmatpush.msra.mxu0 %v1455
    %1633 = vmatpush.msra.mxu0 %v1451
    %1634 = vmatpush.msra.mxu0 %v1447
    %1635 = vmatpush.msra.mxu0 %v1443
    %1636 = vmatmul.f32.gmra.mxu0 %v1067
    %v1637 = vpop.f32.mrf.mxu0
    %v1638 = vadd.f32 %v1573, %v1637
    %1639 = vdwg.mxu0
    %1640 = vmatpush.msra.mxu0 %v1567
    %1641 = vmatpush.msra.mxu0 %v1563
    %1642 = vmatpush.msra.mxu0 %v1559
    %1643 = vmatpush.msra.mxu0 %v1555
    %1644 = vmatpush.msra.mxu0 %v1551
    %1645 = vmatpush.msra.mxu0 %v1547
    %1646 = vmatpush.msra.mxu0 %v1543
    %1647 = vmatpush.msra.mxu0 %v1539
    %1648 = vmatpush.msra.mxu0 %v1535
    %1649 = vmatpush.msra.mxu0 %v1531
    %1650 = vmatpush.msra.mxu0 %v1527
    %1651 = vmatpush.msra.mxu0 %v1523
    %1652 = vmatpush.msra.mxu0 %v1519
    %1653 = vmatpush.msra.mxu0 %v1515
    %1654 = vmatpush.msra.mxu0 %v1511
    %1655 = vmatpush.msra.mxu0 %v1507
    %1656 = vmatmul.f32.gmra.mxu0 0.0
    %v1657 = vpop.f32.mrf.mxu0
    %v1658 = vadd.f32 %v1638, %v1657
    %1659 = vdwg.mxu0
    %1660 = vmatpush.msra.mxu0 %v1504
    %1661 = vmatpush.msra.mxu0 %v1500
    %1662 = vmatpush.msra.mxu0 %v1496
    %1663 = vmatpush.msra.mxu0 %v1492
    %1664 = vmatpush.msra.mxu0 %v1488
    %1665 = vmatpush.msra.mxu0 %v1484
    %1666 = vmatpush.msra.mxu0 %v1480
    %1667 = vmatpush.msra.mxu0 %v1476
    %1668 = vmatpush.msra.mxu0 %v1472
    %1669 = vmatpush.msra.mxu0 %v1468
    %1670 = vmatpush.msra.mxu0 %v1464
    %1671 = vmatpush.msra.mxu0 %v1460
    %1672 = vmatpush.msra.mxu0 %v1456
    %1673 = vmatpush.msra.mxu0 %v1452
    %1674 = vmatpush.msra.mxu0 %v1448
    %1675 = vmatpush.msra.mxu0 %v1444
    %1676 = vmatmul.f32.gmra.mxu0 %v1067
    %v1677 = vpop.f32.mrf.mxu0
    %v1678 = vadd.f32 %v1574, %v1677
    %1679 = vdwg.mxu0
    %1680 = vmatpush.msra.mxu0 %v1568
    %1681 = vmatpush.msra.mxu0 %v1564
    %1682 = vmatpush.msra.mxu0 %v1560
    %1683 = vmatpush.msra.mxu0 %v1556
    %1684 = vmatpush.msra.mxu0 %v1552
    %1685 = vmatpush.msra.mxu0 %v1548
    %1686 = vmatpush.msra.mxu0 %v1544
    %1687 = vmatpush.msra.mxu0 %v1540
    %1688 = vmatpush.msra.mxu0 %v1536
    %1689 = vmatpush.msra.mxu0 %v1532
    %1690 = vmatpush.msra.mxu0 %v1528
    %1691 = vmatpush.msra.mxu0 %v1524
    %1692 = vmatpush.msra.mxu0 %v1520
    %1693 = vmatpush.msra.mxu0 %v1516
    %1694 = vmatpush.msra.mxu0 %v1512
    %1695 = vmatpush.msra.mxu0 %v1508
    %1696 = vmatmul.f32.gmra.mxu0 0.0
    %v1697 = vpop.f32.mrf.mxu0
    %v1698 = vadd.f32 %v1678, %v1697
    %1699 = vdwg.mxu0
    %1700 = vmatpush.msra.mxu0 %v1505
    %1701 = vmatpush.msra.mxu0 %v1501
    %1702 = vmatpush.msra.mxu0 %v1497
    %1703 = vmatpush.msra.mxu0 %v1493
    %1704 = vmatpush.msra.mxu0 %v1489
    %1705 = vmatpush.msra.mxu0 %v1485
    %1706 = vmatpush.msra.mxu0 %v1481
    %1707 = vmatpush.msra.mxu0 %v1477
    %1708 = vmatpush.msra.mxu0 %v1473
    %1709 = vmatpush.msra.mxu0 %v1469
    %1710 = vmatpush.msra.mxu0 %v1465
    %1711 = vmatpush.msra.mxu0 %v1461
    %1712 = vmatpush.msra.mxu0 %v1457
    %1713 = vmatpush.msra.mxu0 %v1453
    %1714 = vmatpush.msra.mxu0 %v1449
    %1715 = vmatpush.msra.mxu0 %v1445
    %1716 = vmatmul.f32.gmra.mxu0 %v1067
    %v1717 = vpop.f32.mrf.mxu0
    %v1718 = vadd.f32 %v1575, %v1717
    %1719 = vdwg.mxu0
    %1720 = vmatpush.msra.mxu0 %v1569
    %1721 = vmatpush.msra.mxu0 %v1565
    %1722 = vmatpush.msra.mxu0 %v1561
    %1723 = vmatpush.msra.mxu0 %v1557
    %1724 = vmatpush.msra.mxu0 %v1553
    %1725 = vmatpush.msra.mxu0 %v1549
    %1726 = vmatpush.msra.mxu0 %v1545
    %1727 = vmatpush.msra.mxu0 %v1541
    %1728 = vmatpush.msra.mxu0 %v1537
    %1729 = vmatpush.msra.mxu0 %v1533
    %1730 = vmatpush.msra.mxu0 %v1529
    %1731 = vmatpush.msra.mxu0 %v1525
    %1732 = vmatpush.msra.mxu0 %v1521
    %1733 = vmatpush.msra.mxu0 %v1517
    %1734 = vmatpush.msra.mxu0 %v1513
    %1735 = vmatpush.msra.mxu0 %v1509
    %1736 = vmatmul.f32.gmra.mxu0 0.0
    %v1737 = vpop.f32.mrf.mxu0
    %v1738 = vadd.f32 %v1718, %v1737
    %1739 = vdwg.mxu0
    %v1740 = vxor.u32 %v1618, 2147483648
    %v1741 = vxor.u32 %v1658, 2147483648
    %v1742 = vxor.u32 %v1698, 2147483648
    %v1743 = vmul.f32 %v1740, 1.442695
    %v1744 = vpow.pop %v1743
    %v1745 = vmul.f32 %v1741, 1.442695
    %v1746 = vpow.pop %v1745
    %v1747 = vmul.f32 %v1742, 1.442695
    %v1748 = vpow.pop %v1747
    %v1749 = vadd.f32 %v1744, 1.0
    %v1750 = vadd.f32 %v1746, 1.0
    %v1751 = vadd.f32 %v1748, 1.0
    %v1752 = vrcp.pop %v1749
    %v1753 = vmul.f32 %v1749, %v1752
    %v1754 = vsub.f32 1.0, %v1753
    %v1755 = vmul.f32 %v1752, %v1754
    %v1756 = vadd.f32 %v1752, %v1755
    %vm1757 = vweird.f32 %v1749
    %vm1758 = vweird.f32 %v1752
    %vm1759 = vmor %vm1757, %vm1758
    %v1760 = vsel %vm1759, %v1752, %v1756
    %v1761 = vand.u32 2147483647, %v1749
    %vm1762 = vcmp.eq.f32.partialorder %v1761, 8.507059e+37
    %v1763 = vand.u32 %v1749, 2147483648
    %v1764 = vor.u32 1.1754944e-38, %v1763
    %v1765 = vsel %vm1762, %v1764, %v1760
    %v1766 = vmul.f32 1.0, %v1765
    %v1767 = vrcp.pop %v1750
    %v1768 = vmul.f32 %v1750, %v1767
    %v1769 = vsub.f32 1.0, %v1768
    %v1770 = vmul.f32 %v1767, %v1769
    %v1771 = vadd.f32 %v1767, %v1770
    %vm1772 = vweird.f32 %v1750
    %vm1773 = vweird.f32 %v1767
    %vm1774 = vmor %vm1772, %vm1773
    %v1775 = vsel %vm1774, %v1767, %v1771
    %v1776 = vand.u32 2147483647, %v1750
    %vm1777 = vcmp.eq.f32.partialorder %v1776, 8.507059e+37
    %v1778 = vand.u32 %v1750, 2147483648
    %v1779 = vor.u32 1.1754944e-38, %v1778
    %v1780 = vsel %vm1777, %v1779, %v1775
    %v1781 = vmul.f32 1.0, %v1780
    %v1782 = vrcp.pop %v1751
    %v1783 = vmul.f32 %v1751, %v1782
    %v1784 = vsub.f32 1.0, %v1783
    %v1785 = vmul.f32 %v1782, %v1784
    %v1786 = vadd.f32 %v1782, %v1785
    %vm1787 = vweird.f32 %v1751
    %vm1788 = vweird.f32 %v1782
    %vm1789 = vmor %vm1787, %vm1788
    %v1790 = vsel %vm1789, %v1782, %v1786
    %v1791 = vand.u32 2147483647, %v1751
    %vm1792 = vcmp.eq.f32.partialorder %v1791, 8.507059e+37
    %v1793 = vand.u32 %v1751, 2147483648
    %v1794 = vor.u32 1.1754944e-38, %v1793
    %v1795 = vsel %vm1792, %v1794, %v1790
    %v1796 = vmul.f32 1.0, %v1795
    %v1797 = vtanh.pop %v1738
    %v1798 = vmul.f32 %v1781, 0.0
    %v1799 = vmul.f32 %v1766, %v1797
    %v1800 = vadd.f32 %v1798, %v1799
    %v1801 = vtanh.pop %v1800
    %v1802 = vmul.f32 %v1796, %v1801
    %v1803 = vld [vmem:[#allocation2 + $0x60] sm:$0xff]
    %v1804 = vld [vmem:[#allocation2 + $0x68] sm:$0xff]
    %v1805 = vld [vmem:[#allocation2 + $0x70] sm:$0xff]
    %v1806 = vld [vmem:[#allocation2 + $0x78] sm:$0xff]
    %1807 = vmatpush.msra.mxu0 %v405
    %1808 = vmatpush.msra.mxu0 %v401
    %1809 = vmatpush.msra.mxu0 %v397
    %1810 = vmatpush.msra.mxu0 %v393
    %1811 = vmatpush.msra.mxu0 %v389
    %1812 = vmatpush.msra.mxu0 %v385
    %1813 = vmatpush.msra.mxu0 %v381
    %1814 = vmatpush.msra.mxu0 %v377
    %1815 = vmatpush.msra.mxu0 %v373
    %1816 = vmatpush.msra.mxu0 %v369
    %1817 = vmatpush.msra.mxu0 %v365
    %1818 = vmatpush.msra.mxu0 %v361
    %1819 = vmatpush.msra.mxu0 %v357
    %1820 = vmatpush.msra.mxu0 %v353
    %1821 = vmatpush.msra.mxu0 %v349
    %1822 = vmatpush.msra.mxu0 %v345
    %1823 = vmatmul.f32.gmra.mxu0 %v1218
    %v1824 = vpop.f32.mrf.mxu0
    %v1825 = vadd.f32 0.0, %v1824
    %1826 = vdwg.mxu0
    %1827 = vmatpush.msra.mxu0 %v406
    %1828 = vmatpush.msra.mxu0 %v402
    %1829 = vmatpush.msra.mxu0 %v398
    %1830 = vmatpush.msra.mxu0 %v394
    %1831 = vmatpush.msra.mxu0 %v390
    %1832 = vmatpush.msra.mxu0 %v386
    %1833 = vmatpush.msra.mxu0 %v382
    %1834 = vmatpush.msra.mxu0 %v378
    %1835 = vmatpush.msra.mxu0 %v374
    %1836 = vmatpush.msra.mxu0 %v370
    %1837 = vmatpush.msra.mxu0 %v366
    %1838 = vmatpush.msra.mxu0 %v362
    %1839 = vmatpush.msra.mxu0 %v358
    %1840 = vmatpush.msra.mxu0 %v354
    %1841 = vmatpush.msra.mxu0 %v350
    %1842 = vmatpush.msra.mxu0 %v346
    %1843 = vmatmul.f32.gmra.mxu0 %v1218
    %v1844 = vpop.f32.mrf.mxu0
    %v1845 = vadd.f32 0.0, %v1844
    %1846 = vdwg.mxu0
    %1847 = vmatpush.msra.mxu0 %v407
    %1848 = vmatpush.msra.mxu0 %v403
    %1849 = vmatpush.msra.mxu0 %v399
    %1850 = vmatpush.msra.mxu0 %v395
    %1851 = vmatpush.msra.mxu0 %v391
    %1852 = vmatpush.msra.mxu0 %v387
    %1853 = vmatpush.msra.mxu0 %v383
    %1854 = vmatpush.msra.mxu0 %v379
    %1855 = vmatpush.msra.mxu0 %v375
    %1856 = vmatpush.msra.mxu0 %v371
    %1857 = vmatpush.msra.mxu0 %v367
    %1858 = vmatpush.msra.mxu0 %v363
    %1859 = vmatpush.msra.mxu0 %v359
    %1860 = vmatpush.msra.mxu0 %v355
    %1861 = vmatpush.msra.mxu0 %v351
    %1862 = vmatpush.msra.mxu0 %v347
    %1863 = vmatmul.f32.gmra.mxu0 %v1218
    %v1864 = vpop.f32.mrf.mxu0
    %v1865 = vadd.f32 0.0, %v1864
    %1866 = vdwg.mxu0
    %1867 = vmatpush.msra.mxu0 %v408
    %1868 = vmatpush.msra.mxu0 %v404
    %1869 = vmatpush.msra.mxu0 %v400
    %1870 = vmatpush.msra.mxu0 %v396
    %1871 = vmatpush.msra.mxu0 %v392
    %1872 = vmatpush.msra.mxu0 %v388
    %1873 = vmatpush.msra.mxu0 %v384
    %1874 = vmatpush.msra.mxu0 %v380
    %1875 = vmatpush.msra.mxu0 %v376
    %1876 = vmatpush.msra.mxu0 %v372
    %1877 = vmatpush.msra.mxu0 %v368
    %1878 = vmatpush.msra.mxu0 %v364
    %1879 = vmatpush.msra.mxu0 %v360
    %1880 = vmatpush.msra.mxu0 %v356
    %1881 = vmatpush.msra.mxu0 %v352
    %1882 = vmatpush.msra.mxu0 %v348
    %1883 = vmatmul.f32.gmra.mxu0 %v1218
    %v1884 = vpop.f32.mrf.mxu0
    %v1885 = vadd.f32 0.0, %v1884
    %1886 = vdwg.mxu0
    %v1887 = vadd.f32 %v1803, %v1825
    %v1888 = vadd.f32 %v1804, %v1845
    %v1889 = vadd.f32 %v1805, %v1865
    %v1890 = vadd.f32 %v1806, %v1885
    %v1891 = vxor.u32 %v1887, 2147483648
    %v1892 = vxor.u32 %v1888, 2147483648
    %v1893 = vxor.u32 %v1889, 2147483648
    %v1894 = vmul.f32 %v1891, 1.442695
    %v1895 = vpow.pop %v1894
    %v1896 = vmul.f32 %v1892, 1.442695
    %v1897 = vpow.pop %v1896
    %v1898 = vmul.f32 %v1893, 1.442695
    %v1899 = vpow.pop %v1898
    %v1900 = vadd.f32 %v1895, 1.0
    %v1901 = vadd.f32 %v1897, 1.0
    %v1902 = vadd.f32 %v1899, 1.0
    %v1903 = vrcp.pop %v1900
    %v1904 = vmul.f32 %v1900, %v1903
    %v1905 = vsub.f32 1.0, %v1904
    %v1906 = vmul.f32 %v1903, %v1905
    %v1907 = vadd.f32 %v1903, %v1906
    %vm1908 = vweird.f32 %v1900
    %vm1909 = vweird.f32 %v1903
    %vm1910 = vmor %vm1908, %vm1909
    %v1911 = vsel %vm1910, %v1903, %v1907
    %v1912 = vand.u32 2147483647, %v1900
    %vm1913 = vcmp.eq.f32.partialorder %v1912, 8.507059e+37
    %v1914 = vand.u32 %v1900, 2147483648
    %v1915 = vor.u32 1.1754944e-38, %v1914
    %v1916 = vsel %vm1913, %v1915, %v1911
    %v1917 = vmul.f32 1.0, %v1916
    %v1918 = vrcp.pop %v1901
    %v1919 = vmul.f32 %v1901, %v1918
    %v1920 = vsub.f32 1.0, %v1919
    %v1921 = vmul.f32 %v1918, %v1920
    %v1922 = vadd.f32 %v1918, %v1921
    %vm1923 = vweird.f32 %v1901
    %vm1924 = vweird.f32 %v1918
    %vm1925 = vmor %vm1923, %vm1924
    %v1926 = vsel %vm1925, %v1918, %v1922
    %v1927 = vand.u32 2147483647, %v1901
    %vm1928 = vcmp.eq.f32.partialorder %v1927, 8.507059e+37
    %v1929 = vand.u32 %v1901, 2147483648
    %v1930 = vor.u32 1.1754944e-38, %v1929
    %v1931 = vsel %vm1928, %v1930, %v1926
    %v1932 = vmul.f32 1.0, %v1931
    %v1933 = vrcp.pop %v1902
    %v1934 = vmul.f32 %v1902, %v1933
    %v1935 = vsub.f32 1.0, %v1934
    %v1936 = vmul.f32 %v1933, %v1935
    %v1937 = vadd.f32 %v1933, %v1936
    %vm1938 = vweird.f32 %v1902
    %vm1939 = vweird.f32 %v1933
    %vm1940 = vmor %vm1938, %vm1939
    %v1941 = vsel %vm1940, %v1933, %v1937
    %v1942 = vand.u32 2147483647, %v1902
    %vm1943 = vcmp.eq.f32.partialorder %v1942, 8.507059e+37
    %v1944 = vand.u32 %v1902, 2147483648
    %v1945 = vor.u32 1.1754944e-38, %v1944
    %v1946 = vsel %vm1943, %v1945, %v1941
    %v1947 = vmul.f32 1.0, %v1946
    %v1948 = vtanh.pop %v1890
    %v1949 = vmul.f32 %v1932, %v1216
    %v1950 = vmul.f32 %v1917, %v1948
    %v1951 = vadd.f32 %v1949, %v1950
    %v1952 = vtanh.pop %v1951
    %v1953 = vmul.f32 %v1947, %v1952
    %1954 = vmatpush.msra.mxu0 %v767
    %1955 = vmatpush.msra.mxu0 %v763
    %1956 = vmatpush.msra.mxu0 %v759
    %1957 = vmatpush.msra.mxu0 %v755
    %1958 = vmatpush.msra.mxu0 %v751
    %1959 = vmatpush.msra.mxu0 %v747
    %1960 = vmatpush.msra.mxu0 %v743
    %1961 = vmatpush.msra.mxu0 %v739
    %1962 = vmatpush.msra.mxu0 %v735
    %1963 = vmatpush.msra.mxu0 %v731
    %1964 = vmatpush.msra.mxu0 %v727
    %1965 = vmatpush.msra.mxu0 %v723
    %1966 = vmatpush.msra.mxu0 %v719
    %1967 = vmatpush.msra.mxu0 %v715
    %1968 = vmatpush.msra.mxu0 %v711
    %1969 = vmatpush.msra.mxu0 %v707
    %1970 = vmatmul.f32.gmra.mxu0 %v1218
    %v1971 = vpop.f32.mrf.mxu0
    %v1972 = vadd.f32 %v837, %v1971
    %1973 = vdwg.mxu0
    %1974 = vmatpush.msra.mxu0 %v831
    %1975 = vmatpush.msra.mxu0 %v827
    %1976 = vmatpush.msra.mxu0 %v823
    %1977 = vmatpush.msra.mxu0 %v819
    %1978 = vmatpush.msra.mxu0 %v815
    %1979 = vmatpush.msra.mxu0 %v811
    %1980 = vmatpush.msra.mxu0 %v807
    %1981 = vmatpush.msra.mxu0 %v803
    %1982 = vmatpush.msra.mxu0 %v799
    %1983 = vmatpush.msra.mxu0 %v795
    %1984 = vmatpush.msra.mxu0 %v791
    %1985 = vmatpush.msra.mxu0 %v787
    %1986 = vmatpush.msra.mxu0 %v783
    %1987 = vmatpush.msra.mxu0 %v779
    %1988 = vmatpush.msra.mxu0 %v775
    %1989 = vmatpush.msra.mxu0 %v771
    %1990 = vmatmul.f32.gmra.mxu0 %v1441
    %v1991 = vpop.f32.mrf.mxu0
    %v1992 = vadd.f32 %v1972, %v1991
    %1993 = vdwg.mxu0
    %1994 = vmatpush.msra.mxu0 %v768
    %1995 = vmatpush.msra.mxu0 %v764
    %1996 = vmatpush.msra.mxu0 %v760
    %1997 = vmatpush.msra.mxu0 %v756
    %1998 = vmatpush.msra.mxu0 %v752
    %1999 = vmatpush.msra.mxu0 %v748
    %2000 = vmatpush.msra.mxu0 %v744
    %2001 = vmatpush.msra.mxu0 %v740
    %2002 = vmatpush.msra.mxu0 %v736
    %2003 = vmatpush.msra.mxu0 %v732
    %2004 = vmatpush.msra.mxu0 %v728
    %2005 = vmatpush.msra.mxu0 %v724
    %2006 = vmatpush.msra.mxu0 %v720
    %2007 = vmatpush.msra.mxu0 %v716
    %2008 = vmatpush.msra.mxu0 %v712
    %2009 = vmatpush.msra.mxu0 %v708
    %2010 = vmatmul.f32.gmra.mxu0 %v1218
    %v2011 = vpop.f32.mrf.mxu0
    %v2012 = vadd.f32 %v838, %v2011
    %2013 = vdwg.mxu0
    %2014 = vmatpush.msra.mxu0 %v832
    %2015 = vmatpush.msra.mxu0 %v828
    %2016 = vmatpush.msra.mxu0 %v824
    %2017 = vmatpush.msra.mxu0 %v820
    %2018 = vmatpush.msra.mxu0 %v816
    %2019 = vmatpush.msra.mxu0 %v812
    %2020 = vmatpush.msra.mxu0 %v808
    %2021 = vmatpush.msra.mxu0 %v804
    %2022 = vmatpush.msra.mxu0 %v800
    %2023 = vmatpush.msra.mxu0 %v796
    %2024 = vmatpush.msra.mxu0 %v792
    %2025 = vmatpush.msra.mxu0 %v788
    %2026 = vmatpush.msra.mxu0 %v784
    %2027 = vmatpush.msra.mxu0 %v780
    %2028 = vmatpush.msra.mxu0 %v776
    %2029 = vmatpush.msra.mxu0 %v772
    %2030 = vmatmul.f32.gmra.mxu0 %v1441
    %v2031 = vpop.f32.mrf.mxu0
    %v2032 = vadd.f32 %v2012, %v2031
    %2033 = vdwg.mxu0
    %2034 = vmatpush.msra.mxu0 %v769
    %2035 = vmatpush.msra.mxu0 %v765
    %2036 = vmatpush.msra.mxu0 %v761
    %2037 = vmatpush.msra.mxu0 %v757
    %2038 = vmatpush.msra.mxu0 %v753
    %2039 = vmatpush.msra.mxu0 %v749
    %2040 = vmatpush.msra.mxu0 %v745
    %2041 = vmatpush.msra.mxu0 %v741
    %2042 = vmatpush.msra.mxu0 %v737
    %2043 = vmatpush.msra.mxu0 %v733
    %2044 = vmatpush.msra.mxu0 %v729
    %2045 = vmatpush.msra.mxu0 %v725
    %2046 = vmatpush.msra.mxu0 %v721
    %2047 = vmatpush.msra.mxu0 %v717
    %2048 = vmatpush.msra.mxu0 %v713
    %2049 = vmatpush.msra.mxu0 %v709
    %2050 = vmatmul.f32.gmra.mxu0 %v1218
    %v2051 = vpop.f32.mrf.mxu0
    %v2052 = vadd.f32 %v839, %v2051
    %2053 = vdwg.mxu0
    %2054 = vmatpush.msra.mxu0 %v833
    %2055 = vmatpush.msra.mxu0 %v829
    %2056 = vmatpush.msra.mxu0 %v825
    %2057 = vmatpush.msra.mxu0 %v821
    %2058 = vmatpush.msra.mxu0 %v817
    %2059 = vmatpush.msra.mxu0 %v813
    %2060 = vmatpush.msra.mxu0 %v809
    %2061 = vmatpush.msra.mxu0 %v805
    %2062 = vmatpush.msra.mxu0 %v801
    %2063 = vmatpush.msra.mxu0 %v797
    %2064 = vmatpush.msra.mxu0 %v793
    %2065 = vmatpush.msra.mxu0 %v789
    %2066 = vmatpush.msra.mxu0 %v785
    %2067 = vmatpush.msra.mxu0 %v781
    %2068 = vmatpush.msra.mxu0 %v777
    %2069 = vmatpush.msra.mxu0 %v773
    %2070 = vmatmul.f32.gmra.mxu0 %v1441
    %v2071 = vpop.f32.mrf.mxu0
    %v2072 = vadd.f32 %v2052, %v2071
    %2073 = vdwg.mxu0
    %2074 = vmatpush.msra.mxu0 %v770
    %2075 = vmatpush.msra.mxu0 %v766
    %2076 = vmatpush.msra.mxu0 %v762
    %2077 = vmatpush.msra.mxu0 %v758
    %2078 = vmatpush.msra.mxu0 %v754
    %2079 = vmatpush.msra.mxu0 %v750
    %2080 = vmatpush.msra.mxu0 %v746
    %2081 = vmatpush.msra.mxu0 %v742
    %2082 = vmatpush.msra.mxu0 %v738
    %2083 = vmatpush.msra.mxu0 %v734
    %2084 = vmatpush.msra.mxu0 %v730
    %2085 = vmatpush.msra.mxu0 %v726
    %2086 = vmatpush.msra.mxu0 %v722
    %2087 = vmatpush.msra.mxu0 %v718
    %2088 = vmatpush.msra.mxu0 %v714
    %2089 = vmatpush.msra.mxu0 %v710
    %2090 = vmatmul.f32.gmra.mxu0 %v1218
    %v2091 = vpop.f32.mrf.mxu0
    %v2092 = vadd.f32 %v840, %v2091
    %2093 = vdwg.mxu0
    %2094 = vmatpush.msra.mxu0 %v834
    %2095 = vmatpush.msra.mxu0 %v830
    %2096 = vmatpush.msra.mxu0 %v826
    %2097 = vmatpush.msra.mxu0 %v822
    %2098 = vmatpush.msra.mxu0 %v818
    %2099 = vmatpush.msra.mxu0 %v814
    %2100 = vmatpush.msra.mxu0 %v810
    %2101 = vmatpush.msra.mxu0 %v806
    %2102 = vmatpush.msra.mxu0 %v802
    %2103 = vmatpush.msra.mxu0 %v798
    %2104 = vmatpush.msra.mxu0 %v794
    %2105 = vmatpush.msra.mxu0 %v790
    %2106 = vmatpush.msra.mxu0 %v786
    %2107 = vmatpush.msra.mxu0 %v782
    %2108 = vmatpush.msra.mxu0 %v778
    %2109 = vmatpush.msra.mxu0 %v774
    %2110 = vmatmul.f32.gmra.mxu0 %v1441
    %v2111 = vpop.f32.mrf.mxu0
    %v2112 = vadd.f32 %v2092, %v2111
    %2113 = vdwg.mxu0
    %v2114 = vxor.u32 %v1992, 2147483648
    %v2115 = vxor.u32 %v2032, 2147483648
    %v2116 = vxor.u32 %v2072, 2147483648
    %v2117 = vmul.f32 %v2114, 1.442695
    %v2118 = vpow.pop %v2117
    %v2119 = vmul.f32 %v2115, 1.442695
    %v2120 = vpow.pop %v2119
    %v2121 = vmul.f32 %v2116, 1.442695
    %v2122 = vpow.pop %v2121
    %v2123 = vadd.f32 %v2118, 1.0
    %v2124 = vadd.f32 %v2120, 1.0
    %v2125 = vadd.f32 %v2122, 1.0
    %v2126 = vrcp.pop %v2123
    %v2127 = vmul.f32 %v2123, %v2126
    %v2128 = vsub.f32 1.0, %v2127
    %v2129 = vmul.f32 %v2126, %v2128
    %v2130 = vadd.f32 %v2126, %v2129
    %vm2131 = vweird.f32 %v2123
    %vm2132 = vweird.f32 %v2126
    %vm2133 = vmor %vm2131, %vm2132
    %v2134 = vsel %vm2133, %v2126, %v2130
    %v2135 = vand.u32 2147483647, %v2123
    %vm2136 = vcmp.eq.f32.partialorder %v2135, 8.507059e+37
    %v2137 = vand.u32 %v2123, 2147483648
    %v2138 = vor.u32 1.1754944e-38, %v2137
    %v2139 = vsel %vm2136, %v2138, %v2134
    %v2140 = vmul.f32 1.0, %v2139
    %v2141 = vrcp.pop %v2124
    %v2142 = vmul.f32 %v2124, %v2141
    %v2143 = vsub.f32 1.0, %v2142
    %v2144 = vmul.f32 %v2141, %v2143
    %v2145 = vadd.f32 %v2141, %v2144
    %vm2146 = vweird.f32 %v2124
    %vm2147 = vweird.f32 %v2141
    %vm2148 = vmor %vm2146, %vm2147
    %v2149 = vsel %vm2148, %v2141, %v2145
    %v2150 = vand.u32 2147483647, %v2124
    %vm2151 = vcmp.eq.f32.partialorder %v2150, 8.507059e+37
    %v2152 = vand.u32 %v2124, 2147483648
    %v2153 = vor.u32 1.1754944e-38, %v2152
    %v2154 = vsel %vm2151, %v2153, %v2149
    %v2155 = vmul.f32 1.0, %v2154
    %v2156 = vrcp.pop %v2125
    %v2157 = vmul.f32 %v2125, %v2156
    %v2158 = vsub.f32 1.0, %v2157
    %v2159 = vmul.f32 %v2156, %v2158
    %v2160 = vadd.f32 %v2156, %v2159
    %vm2161 = vweird.f32 %v2125
    %vm2162 = vweird.f32 %v2156
    %vm2163 = vmor %vm2161, %vm2162
    %v2164 = vsel %vm2163, %v2156, %v2160
    %v2165 = vand.u32 2147483647, %v2125
    %vm2166 = vcmp.eq.f32.partialorder %v2165, 8.507059e+37
    %v2167 = vand.u32 %v2125, 2147483648
    %v2168 = vor.u32 1.1754944e-38, %v2167
    %v2169 = vsel %vm2166, %v2168, %v2164
    %v2170 = vmul.f32 1.0, %v2169
    %v2171 = vtanh.pop %v2112
    %v2172 = vmul.f32 %v2155, %v1439
    %v2173 = vmul.f32 %v2140, %v2171
    %v2174 = vadd.f32 %v2172, %v2173
    %v2175 = vtanh.pop %v2174
    %v2176 = vmul.f32 %v2170, %v2175
    %2177 = vmatpush.msra.mxu0 %v1502
    %2178 = vmatpush.msra.mxu0 %v1498
    %2179 = vmatpush.msra.mxu0 %v1494
    %2180 = vmatpush.msra.mxu0 %v1490
    %2181 = vmatpush.msra.mxu0 %v1486
    %2182 = vmatpush.msra.mxu0 %v1482
    %2183 = vmatpush.msra.mxu0 %v1478
    %2184 = vmatpush.msra.mxu0 %v1474
    %2185 = vmatpush.msra.mxu0 %v1470
    %2186 = vmatpush.msra.mxu0 %v1466
    %2187 = vmatpush.msra.mxu0 %v1462
    %2188 = vmatpush.msra.mxu0 %v1458
    %2189 = vmatpush.msra.mxu0 %v1454
    %2190 = vmatpush.msra.mxu0 %v1450
    %2191 = vmatpush.msra.mxu0 %v1446
    %2192 = vmatpush.msra.mxu0 %v1442
    %2193 = vmatmul.f32.gmra.mxu0 %v1441
    %v2194 = vpop.f32.mrf.mxu0
    %v2195 = vadd.f32 %v1572, %v2194
    %2196 = vdwg.mxu0
    %2197 = vmatpush.msra.mxu0 %v1566
    %2198 = vmatpush.msra.mxu0 %v1562
    %2199 = vmatpush.msra.mxu0 %v1558
    %2200 = vmatpush.msra.mxu0 %v1554
    %2201 = vmatpush.msra.mxu0 %v1550
    %2202 = vmatpush.msra.mxu0 %v1546
    %2203 = vmatpush.msra.mxu0 %v1542
    %2204 = vmatpush.msra.mxu0 %v1538
    %2205 = vmatpush.msra.mxu0 %v1534
    %2206 = vmatpush.msra.mxu0 %v1530
    %2207 = vmatpush.msra.mxu0 %v1526
    %2208 = vmatpush.msra.mxu0 %v1522
    %2209 = vmatpush.msra.mxu0 %v1518
    %2210 = vmatpush.msra.mxu0 %v1514
    %2211 = vmatpush.msra.mxu0 %v1510
    %2212 = vmatpush.msra.mxu0 %v1506
    %2213 = vmatmul.f32.gmra.mxu0 %v1802
    %v2214 = vpop.f32.mrf.mxu0
    %v2215 = vadd.f32 %v2195, %v2214
    %2216 = vdwg.mxu0
    %2217 = vmatpush.msra.mxu0 %v1503
    %2218 = vmatpush.msra.mxu0 %v1499
    %2219 = vmatpush.msra.mxu0 %v1495
    %2220 = vmatpush.msra.mxu0 %v1491
    %2221 = vmatpush.msra.mxu0 %v1487
    %2222 = vmatpush.msra.mxu0 %v1483
    %2223 = vmatpush.msra.mxu0 %v1479
    %2224 = vmatpush.msra.mxu0 %v1475
    %2225 = vmatpush.msra.mxu0 %v1471
    %2226 = vmatpush.msra.mxu0 %v1467
    %2227 = vmatpush.msra.mxu0 %v1463
    %2228 = vmatpush.msra.mxu0 %v1459
    %2229 = vmatpush.msra.mxu0 %v1455
    %2230 = vmatpush.msra.mxu0 %v1451
    %2231 = vmatpush.msra.mxu0 %v1447
    %2232 = vmatpush.msra.mxu0 %v1443
    %2233 = vmatmul.f32.gmra.mxu0 %v1441
    %v2234 = vpop.f32.mrf.mxu0
    %v2235 = vadd.f32 %v1573, %v2234
    %2236 = vdwg.mxu0
    %2237 = vmatpush.msra.mxu0 %v1567
    %2238 = vmatpush.msra.mxu0 %v1563
    %2239 = vmatpush.msra.mxu0 %v1559
    %2240 = vmatpush.msra.mxu0 %v1555
    %2241 = vmatpush.msra.mxu0 %v1551
    %2242 = vmatpush.msra.mxu0 %v1547
    %2243 = vmatpush.msra.mxu0 %v1543
    %2244 = vmatpush.msra.mxu0 %v1539
    %2245 = vmatpush.msra.mxu0 %v1535
    %2246 = vmatpush.msra.mxu0 %v1531
    %2247 = vmatpush.msra.mxu0 %v1527
    %2248 = vmatpush.msra.mxu0 %v1523
    %2249 = vmatpush.msra.mxu0 %v1519
    %2250 = vmatpush.msra.mxu0 %v1515
    %2251 = vmatpush.msra.mxu0 %v1511
    %2252 = vmatpush.msra.mxu0 %v1507
    %2253 = vmatmul.f32.gmra.mxu0 %v1802
    %v2254 = vpop.f32.mrf.mxu0
    %v2255 = vadd.f32 %v2235, %v2254
    %2256 = vdwg.mxu0
    %2257 = vmatpush.msra.mxu0 %v1504
    %2258 = vmatpush.msra.mxu0 %v1500
    %2259 = vmatpush.msra.mxu0 %v1496
    %2260 = vmatpush.msra.mxu0 %v1492
    %2261 = vmatpush.msra.mxu0 %v1488
    %2262 = vmatpush.msra.mxu0 %v1484
    %2263 = vmatpush.msra.mxu0 %v1480
    %2264 = vmatpush.msra.mxu0 %v1476
    %2265 = vmatpush.msra.mxu0 %v1472
    %2266 = vmatpush.msra.mxu0 %v1468
    %2267 = vmatpush.msra.mxu0 %v1464
    %2268 = vmatpush.msra.mxu0 %v1460
    %2269 = vmatpush.msra.mxu0 %v1456
    %2270 = vmatpush.msra.mxu0 %v1452
    %2271 = vmatpush.msra.mxu0 %v1448
    %2272 = vmatpush.msra.mxu0 %v1444
    %2273 = vmatmul.f32.gmra.mxu0 %v1441
    %v2274 = vpop.f32.mrf.mxu0
    %v2275 = vadd.f32 %v1574, %v2274
    %2276 = vdwg.mxu0
    %2277 = vmatpush.msra.mxu0 %v1568
    %2278 = vmatpush.msra.mxu0 %v1564
    %2279 = vmatpush.msra.mxu0 %v1560
    %2280 = vmatpush.msra.mxu0 %v1556
    %2281 = vmatpush.msra.mxu0 %v1552
    %2282 = vmatpush.msra.mxu0 %v1548
    %2283 = vmatpush.msra.mxu0 %v1544
    %2284 = vmatpush.msra.mxu0 %v1540
    %2285 = vmatpush.msra.mxu0 %v1536
    %2286 = vmatpush.msra.mxu0 %v1532
    %2287 = vmatpush.msra.mxu0 %v1528
    %2288 = vmatpush.msra.mxu0 %v1524
    %2289 = vmatpush.msra.mxu0 %v1520
    %2290 = vmatpush.msra.mxu0 %v1516
    %2291 = vmatpush.msra.mxu0 %v1512
    %2292 = vmatpush.msra.mxu0 %v1508
    %2293 = vmatmul.f32.gmra.mxu0 %v1802
    %v2294 = vpop.f32.mrf.mxu0
    %v2295 = vadd.f32 %v2275, %v2294
    %2296 = vdwg.mxu0
    %2297 = vmatpush.msra.mxu0 %v1505
    %2298 = vmatpush.msra.mxu0 %v1501
    %2299 = vmatpush.msra.mxu0 %v1497
    %2300 = vmatpush.msra.mxu0 %v1493
    %2301 = vmatpush.msra.mxu0 %v1489
    %2302 = vmatpush.msra.mxu0 %v1485
    %2303 = vmatpush.msra.mxu0 %v1481
    %2304 = vmatpush.msra.mxu0 %v1477
    %2305 = vmatpush.msra.mxu0 %v1473
    %2306 = vmatpush.msra.mxu0 %v1469
    %2307 = vmatpush.msra.mxu0 %v1465
    %2308 = vmatpush.msra.mxu0 %v1461
    %2309 = vmatpush.msra.mxu0 %v1457
    %2310 = vmatpush.msra.mxu0 %v1453
    %2311 = vmatpush.msra.mxu0 %v1449
    %2312 = vmatpush.msra.mxu0 %v1445
    %2313 = vmatmul.f32.gmra.mxu0 %v1441
    %v2314 = vpop.f32.mrf.mxu0
    %v2315 = vadd.f32 %v1575, %v2314
    %2316 = vdwg.mxu0
    %2317 = vmatpush.msra.mxu0 %v1569
    %2318 = vmatpush.msra.mxu0 %v1565
    %2319 = vmatpush.msra.mxu0 %v1561
    %2320 = vmatpush.msra.mxu0 %v1557
    %2321 = vmatpush.msra.mxu0 %v1553
    %2322 = vmatpush.msra.mxu0 %v1549
    %2323 = vmatpush.msra.mxu0 %v1545
    %2324 = vmatpush.msra.mxu0 %v1541
    %2325 = vmatpush.msra.mxu0 %v1537
    %2326 = vmatpush.msra.mxu0 %v1533
    %2327 = vmatpush.msra.mxu0 %v1529
    %2328 = vmatpush.msra.mxu0 %v1525
    %2329 = vmatpush.msra.mxu0 %v1521
    %2330 = vmatpush.msra.mxu0 %v1517
    %2331 = vmatpush.msra.mxu0 %v1513
    %2332 = vmatpush.msra.mxu0 %v1509
    %2333 = vmatmul.f32.gmra.mxu0 %v1802
    %v2334 = vpop.f32.mrf.mxu0
    %v2335 = vadd.f32 %v2315, %v2334
    %2336 = vdwg.mxu0
    %v2337 = vxor.u32 %v2215, 2147483648
    %v2338 = vxor.u32 %v2255, 2147483648
    %v2339 = vxor.u32 %v2295, 2147483648
    %v2340 = vmul.f32 %v2337, 1.442695
    %v2341 = vpow.pop %v2340
    %v2342 = vmul.f32 %v2338, 1.442695
    %v2343 = vpow.pop %v2342
    %v2344 = vmul.f32 %v2339, 1.442695
    %v2345 = vpow.pop %v2344
    %v2346 = vadd.f32 %v2341, 1.0
    %v2347 = vadd.f32 %v2343, 1.0
    %v2348 = vadd.f32 %v2345, 1.0
    %v2349 = vrcp.pop %v2346
    %v2350 = vmul.f32 %v2346, %v2349
    %v2351 = vsub.f32 1.0, %v2350
    %v2352 = vmul.f32 %v2349, %v2351
    %v2353 = vadd.f32 %v2349, %v2352
    %vm2354 = vweird.f32 %v2346
    %vm2355 = vweird.f32 %v2349
    %vm2356 = vmor %vm2354, %vm2355
    %v2357 = vsel %vm2356, %v2349, %v2353
    %v2358 = vand.u32 2147483647, %v2346
    %vm2359 = vcmp.eq.f32.partialorder %v2358, 8.507059e+37
    %v2360 = vand.u32 %v2346, 2147483648
    %v2361 = vor.u32 1.1754944e-38, %v2360
    %v2362 = vsel %vm2359, %v2361, %v2357
    %v2363 = vmul.f32 1.0, %v2362
    %v2364 = vrcp.pop %v2347
    %v2365 = vmul.f32 %v2347, %v2364
    %v2366 = vsub.f32 1.0, %v2365
    %v2367 = vmul.f32 %v2364, %v2366
    %v2368 = vadd.f32 %v2364, %v2367
    %vm2369 = vweird.f32 %v2347
    %vm2370 = vweird.f32 %v2364
    %vm2371 = vmor %vm2369, %vm2370
    %v2372 = vsel %vm2371, %v2364, %v2368
    %v2373 = vand.u32 2147483647, %v2347
    %vm2374 = vcmp.eq.f32.partialorder %v2373, 8.507059e+37
    %v2375 = vand.u32 %v2347, 2147483648
    %v2376 = vor.u32 1.1754944e-38, %v2375
    %v2377 = vsel %vm2374, %v2376, %v2372
    %v2378 = vmul.f32 1.0, %v2377
    %v2379 = vrcp.pop %v2348
    %v2380 = vmul.f32 %v2348, %v2379
    %v2381 = vsub.f32 1.0, %v2380
    %v2382 = vmul.f32 %v2379, %v2381
    %v2383 = vadd.f32 %v2379, %v2382
    %vm2384 = vweird.f32 %v2348
    %vm2385 = vweird.f32 %v2379
    %vm2386 = vmor %vm2384, %vm2385
    %v2387 = vsel %vm2386, %v2379, %v2383
    %v2388 = vand.u32 2147483647, %v2348
    %vm2389 = vcmp.eq.f32.partialorder %v2388, 8.507059e+37
    %v2390 = vand.u32 %v2348, 2147483648
    %v2391 = vor.u32 1.1754944e-38, %v2390
    %v2392 = vsel %vm2389, %v2391, %v2387
    %v2393 = vmul.f32 1.0, %v2392
    %v2394 = vtanh.pop %v2335
    %v2395 = vmul.f32 %v2378, %v1800
    %v2396 = vmul.f32 %v2363, %v2394
    %v2397 = vadd.f32 %v2395, %v2396
    %v2398 = vtanh.pop %v2397
    %v2399 = vmul.f32 %v2393, %v2398
    %v2400 = vld [vmem:[#allocation2 + $0x80] sm:$0xff]
    %v2401 = vld [vmem:[#allocation2 + $0x88] sm:$0xff]
    %v2402 = vld [vmem:[#allocation2 + $0x90] sm:$0xff]
    %v2403 = vld [vmem:[#allocation2 + $0x98] sm:$0xff]
    %2404 = vmatpush.msra.mxu0 %v405
    %2405 = vmatpush.msra.mxu0 %v401
    %2406 = vmatpush.msra.mxu0 %v397
    %2407 = vmatpush.msra.mxu0 %v393
    %2408 = vmatpush.msra.mxu0 %v389
    %2409 = vmatpush.msra.mxu0 %v385
    %2410 = vmatpush.msra.mxu0 %v381
    %2411 = vmatpush.msra.mxu0 %v377
    %2412 = vmatpush.msra.mxu0 %v373
    %2413 = vmatpush.msra.mxu0 %v369
    %2414 = vmatpush.msra.mxu0 %v365
    %2415 = vmatpush.msra.mxu0 %v361
    %2416 = vmatpush.msra.mxu0 %v357
    %2417 = vmatpush.msra.mxu0 %v353
    %2418 = vmatpush.msra.mxu0 %v349
    %2419 = vmatpush.msra.mxu0 %v345
    %2420 = vmatmul.f32.gmra.mxu0 %v1953
    %v2421 = vpop.f32.mrf.mxu0
    %v2422 = vadd.f32 0.0, %v2421
    %2423 = vdwg.mxu0
    %2424 = vmatpush.msra.mxu0 %v406
    %2425 = vmatpush.msra.mxu0 %v402
    %2426 = vmatpush.msra.mxu0 %v398
    %2427 = vmatpush.msra.mxu0 %v394
    %2428 = vmatpush.msra.mxu0 %v390
    %2429 = vmatpush.msra.mxu0 %v386
    %2430 = vmatpush.msra.mxu0 %v382
    %2431 = vmatpush.msra.mxu0 %v378
    %2432 = vmatpush.msra.mxu0 %v374
    %2433 = vmatpush.msra.mxu0 %v370
    %2434 = vmatpush.msra.mxu0 %v366
    %2435 = vmatpush.msra.mxu0 %v362
    %2436 = vmatpush.msra.mxu0 %v358
    %2437 = vmatpush.msra.mxu0 %v354
    %2438 = vmatpush.msra.mxu0 %v350
    %2439 = vmatpush.msra.mxu0 %v346
    %2440 = vmatmul.f32.gmra.mxu0 %v1953
    %v2441 = vpop.f32.mrf.mxu0
    %v2442 = vadd.f32 0.0, %v2441
    %2443 = vdwg.mxu0
    %2444 = vmatpush.msra.mxu0 %v407
    %2445 = vmatpush.msra.mxu0 %v403
    %2446 = vmatpush.msra.mxu0 %v399
    %2447 = vmatpush.msra.mxu0 %v395
    %2448 = vmatpush.msra.mxu0 %v391
    %2449 = vmatpush.msra.mxu0 %v387
    %2450 = vmatpush.msra.mxu0 %v383
    %2451 = vmatpush.msra.mxu0 %v379
    %2452 = vmatpush.msra.mxu0 %v375
    %2453 = vmatpush.msra.mxu0 %v371
    %2454 = vmatpush.msra.mxu0 %v367
    %2455 = vmatpush.msra.mxu0 %v363
    %2456 = vmatpush.msra.mxu0 %v359
    %2457 = vmatpush.msra.mxu0 %v355
    %2458 = vmatpush.msra.mxu0 %v351
    %2459 = vmatpush.msra.mxu0 %v347
    %2460 = vmatmul.f32.gmra.mxu0 %v1953
    %v2461 = vpop.f32.mrf.mxu0
    %v2462 = vadd.f32 0.0, %v2461
    %2463 = vdwg.mxu0
    %2464 = vmatpush.msra.mxu0 %v408
    %2465 = vmatpush.msra.mxu0 %v404
    %2466 = vmatpush.msra.mxu0 %v400
    %2467 = vmatpush.msra.mxu0 %v396
    %2468 = vmatpush.msra.mxu0 %v392
    %2469 = vmatpush.msra.mxu0 %v388
    %2470 = vmatpush.msra.mxu0 %v384
    %2471 = vmatpush.msra.mxu0 %v380
    %2472 = vmatpush.msra.mxu0 %v376
    %2473 = vmatpush.msra.mxu0 %v372
    %2474 = vmatpush.msra.mxu0 %v368
    %2475 = vmatpush.msra.mxu0 %v364
    %2476 = vmatpush.msra.mxu0 %v360
    %2477 = vmatpush.msra.mxu0 %v356
    %2478 = vmatpush.msra.mxu0 %v352
    %2479 = vmatpush.msra.mxu0 %v348
    %2480 = vmatmul.f32.gmra.mxu0 %v1953
    %v2481 = vpop.f32.mrf.mxu0
    %v2482 = vadd.f32 0.0, %v2481
    %2483 = vdwg.mxu0
    %v2484 = vadd.f32 %v2400, %v2422
    %v2485 = vadd.f32 %v2401, %v2442
    %v2486 = vadd.f32 %v2402, %v2462
    %v2487 = vadd.f32 %v2403, %v2482
    %v2488 = vxor.u32 %v2484, 2147483648
    %v2489 = vxor.u32 %v2485, 2147483648
    %v2490 = vxor.u32 %v2486, 2147483648
    %v2491 = vmul.f32 %v2488, 1.442695
    %v2492 = vpow.pop %v2491
    %v2493 = vmul.f32 %v2489, 1.442695
    %v2494 = vpow.pop %v2493
    %v2495 = vmul.f32 %v2490, 1.442695
    %v2496 = vpow.pop %v2495
    %v2497 = vadd.f32 %v2492, 1.0
    %v2498 = vadd.f32 %v2494, 1.0
    %v2499 = vadd.f32 %v2496, 1.0
    %v2500 = vrcp.pop %v2497
    %v2501 = vmul.f32 %v2497, %v2500
    %v2502 = vsub.f32 1.0, %v2501
    %v2503 = vmul.f32 %v2500, %v2502
    %v2504 = vadd.f32 %v2500, %v2503
    %vm2505 = vweird.f32 %v2497
    %vm2506 = vweird.f32 %v2500
    %vm2507 = vmor %vm2505, %vm2506
    %v2508 = vsel %vm2507, %v2500, %v2504
    %v2509 = vand.u32 2147483647, %v2497
    %vm2510 = vcmp.eq.f32.partialorder %v2509, 8.507059e+37
    %v2511 = vand.u32 %v2497, 2147483648
    %v2512 = vor.u32 1.1754944e-38, %v2511
    %v2513 = vsel %vm2510, %v2512, %v2508
    %v2514 = vmul.f32 1.0, %v2513
    %v2515 = vrcp.pop %v2498
    %v2516 = vmul.f32 %v2498, %v2515
    %v2517 = vsub.f32 1.0, %v2516
    %v2518 = vmul.f32 %v2515, %v2517
    %v2519 = vadd.f32 %v2515, %v2518
    %vm2520 = vweird.f32 %v2498
    %vm2521 = vweird.f32 %v2515
    %vm2522 = vmor %vm2520, %vm2521
    %v2523 = vsel %vm2522, %v2515, %v2519
    %v2524 = vand.u32 2147483647, %v2498
    %vm2525 = vcmp.eq.f32.partialorder %v2524, 8.507059e+37
    %v2526 = vand.u32 %v2498, 2147483648
    %v2527 = vor.u32 1.1754944e-38, %v2526
    %v2528 = vsel %vm2525, %v2527, %v2523
    %v2529 = vmul.f32 1.0, %v2528
    %v2530 = vrcp.pop %v2499
    %v2531 = vmul.f32 %v2499, %v2530
    %v2532 = vsub.f32 1.0, %v2531
    %v2533 = vmul.f32 %v2530, %v2532
    %v2534 = vadd.f32 %v2530, %v2533
    %vm2535 = vweird.f32 %v2499
    %vm2536 = vweird.f32 %v2530
    %vm2537 = vmor %vm2535, %vm2536
    %v2538 = vsel %vm2537, %v2530, %v2534
    %v2539 = vand.u32 2147483647, %v2499
    %vm2540 = vcmp.eq.f32.partialorder %v2539, 8.507059e+37
    %v2541 = vand.u32 %v2499, 2147483648
    %v2542 = vor.u32 1.1754944e-38, %v2541
    %v2543 = vsel %vm2540, %v2542, %v2538
    %v2544 = vmul.f32 1.0, %v2543
    %v2545 = vtanh.pop %v2487
    %v2546 = vmul.f32 %v2529, %v1951
    %v2547 = vmul.f32 %v2514, %v2545
    %v2548 = vadd.f32 %v2546, %v2547
    %v2549 = vtanh.pop %v2548
    %v2550 = vmul.f32 %v2544, %v2549
    %2551 = vmatpush.msra.mxu0 %v767
    %2552 = vmatpush.msra.mxu0 %v763
    %2553 = vmatpush.msra.mxu0 %v759
    %2554 = vmatpush.msra.mxu0 %v755
    %2555 = vmatpush.msra.mxu0 %v751
    %2556 = vmatpush.msra.mxu0 %v747
    %2557 = vmatpush.msra.mxu0 %v743
    %2558 = vmatpush.msra.mxu0 %v739
    %2559 = vmatpush.msra.mxu0 %v735
    %2560 = vmatpush.msra.mxu0 %v731
    %2561 = vmatpush.msra.mxu0 %v727
    %2562 = vmatpush.msra.mxu0 %v723
    %2563 = vmatpush.msra.mxu0 %v719
    %2564 = vmatpush.msra.mxu0 %v715
    %2565 = vmatpush.msra.mxu0 %v711
    %2566 = vmatpush.msra.mxu0 %v707
    %2567 = vmatmul.f32.gmra.mxu0 %v1953
    %v2568 = vpop.f32.mrf.mxu0
    %v2569 = vadd.f32 %v837, %v2568
    %2570 = vdwg.mxu0
    %2571 = vmatpush.msra.mxu0 %v831
    %2572 = vmatpush.msra.mxu0 %v827
    %2573 = vmatpush.msra.mxu0 %v823
    %2574 = vmatpush.msra.mxu0 %v819
    %2575 = vmatpush.msra.mxu0 %v815
    %2576 = vmatpush.msra.mxu0 %v811
    %2577 = vmatpush.msra.mxu0 %v807
    %2578 = vmatpush.msra.mxu0 %v803
    %2579 = vmatpush.msra.mxu0 %v799
    %2580 = vmatpush.msra.mxu0 %v795
    %2581 = vmatpush.msra.mxu0 %v791
    %2582 = vmatpush.msra.mxu0 %v787
    %2583 = vmatpush.msra.mxu0 %v783
    %2584 = vmatpush.msra.mxu0 %v779
    %2585 = vmatpush.msra.mxu0 %v775
    %2586 = vmatpush.msra.mxu0 %v771
    %2587 = vmatmul.f32.gmra.mxu0 %v2176
    %v2588 = vpop.f32.mrf.mxu0
    %v2589 = vadd.f32 %v2569, %v2588
    %2590 = vdwg.mxu0
    %2591 = vmatpush.msra.mxu0 %v768
    %2592 = vmatpush.msra.mxu0 %v764
    %2593 = vmatpush.msra.mxu0 %v760
    %2594 = vmatpush.msra.mxu0 %v756
    %2595 = vmatpush.msra.mxu0 %v752
    %2596 = vmatpush.msra.mxu0 %v748
    %2597 = vmatpush.msra.mxu0 %v744
    %2598 = vmatpush.msra.mxu0 %v740
    %2599 = vmatpush.msra.mxu0 %v736
    %2600 = vmatpush.msra.mxu0 %v732
    %2601 = vmatpush.msra.mxu0 %v728
    %2602 = vmatpush.msra.mxu0 %v724
    %2603 = vmatpush.msra.mxu0 %v720
    %2604 = vmatpush.msra.mxu0 %v716
    %2605 = vmatpush.msra.mxu0 %v712
    %2606 = vmatpush.msra.mxu0 %v708
    %2607 = vmatmul.f32.gmra.mxu0 %v1953
    %v2608 = vpop.f32.mrf.mxu0
    %v2609 = vadd.f32 %v838, %v2608
    %2610 = vdwg.mxu0
    %2611 = vmatpush.msra.mxu0 %v832
    %2612 = vmatpush.msra.mxu0 %v828
    %2613 = vmatpush.msra.mxu0 %v824
    %2614 = vmatpush.msra.mxu0 %v820
    %2615 = vmatpush.msra.mxu0 %v816
    %2616 = vmatpush.msra.mxu0 %v812
    %2617 = vmatpush.msra.mxu0 %v808
    %2618 = vmatpush.msra.mxu0 %v804
    %2619 = vmatpush.msra.mxu0 %v800
    %2620 = vmatpush.msra.mxu0 %v796
    %2621 = vmatpush.msra.mxu0 %v792
    %2622 = vmatpush.msra.mxu0 %v788
    %2623 = vmatpush.msra.mxu0 %v784
    %2624 = vmatpush.msra.mxu0 %v780
    %2625 = vmatpush.msra.mxu0 %v776
    %2626 = vmatpush.msra.mxu0 %v772
    %2627 = vmatmul.f32.gmra.mxu0 %v2176
    %v2628 = vpop.f32.mrf.mxu0
    %v2629 = vadd.f32 %v2609, %v2628
    %2630 = vdwg.mxu0
    %2631 = vmatpush.msra.mxu0 %v769
    %2632 = vmatpush.msra.mxu0 %v765
    %2633 = vmatpush.msra.mxu0 %v761
    %2634 = vmatpush.msra.mxu0 %v757
    %2635 = vmatpush.msra.mxu0 %v753
    %2636 = vmatpush.msra.mxu0 %v749
    %2637 = vmatpush.msra.mxu0 %v745
    %2638 = vmatpush.msra.mxu0 %v741
    %2639 = vmatpush.msra.mxu0 %v737
    %2640 = vmatpush.msra.mxu0 %v733
    %2641 = vmatpush.msra.mxu0 %v729
    %2642 = vmatpush.msra.mxu0 %v725
    %2643 = vmatpush.msra.mxu0 %v721
    %2644 = vmatpush.msra.mxu0 %v717
    %2645 = vmatpush.msra.mxu0 %v713
    %2646 = vmatpush.msra.mxu0 %v709
    %2647 = vmatmul.f32.gmra.mxu0 %v1953
    %v2648 = vpop.f32.mrf.mxu0
    %v2649 = vadd.f32 %v839, %v2648
    %2650 = vdwg.mxu0
    %2651 = vmatpush.msra.mxu0 %v833
    %2652 = vmatpush.msra.mxu0 %v829
    %2653 = vmatpush.msra.mxu0 %v825
    %2654 = vmatpush.msra.mxu0 %v821
    %2655 = vmatpush.msra.mxu0 %v817
    %2656 = vmatpush.msra.mxu0 %v813
    %2657 = vmatpush.msra.mxu0 %v809
    %2658 = vmatpush.msra.mxu0 %v805
    %2659 = vmatpush.msra.mxu0 %v801
    %2660 = vmatpush.msra.mxu0 %v797
    %2661 = vmatpush.msra.mxu0 %v793
    %2662 = vmatpush.msra.mxu0 %v789
    %2663 = vmatpush.msra.mxu0 %v785
    %2664 = vmatpush.msra.mxu0 %v781
    %2665 = vmatpush.msra.mxu0 %v777
    %2666 = vmatpush.msra.mxu0 %v773
    %2667 = vmatmul.f32.gmra.mxu0 %v2176
    %v2668 = vpop.f32.mrf.mxu0
    %v2669 = vadd.f32 %v2649, %v2668
    %2670 = vdwg.mxu0
    %2671 = vmatpush.msra.mxu0 %v770
    %2672 = vmatpush.msra.mxu0 %v766
    %2673 = vmatpush.msra.mxu0 %v762
    %2674 = vmatpush.msra.mxu0 %v758
    %2675 = vmatpush.msra.mxu0 %v754
    %2676 = vmatpush.msra.mxu0 %v750
    %2677 = vmatpush.msra.mxu0 %v746
    %2678 = vmatpush.msra.mxu0 %v742
    %2679 = vmatpush.msra.mxu0 %v738
    %2680 = vmatpush.msra.mxu0 %v734
    %2681 = vmatpush.msra.mxu0 %v730
    %2682 = vmatpush.msra.mxu0 %v726
    %2683 = vmatpush.msra.mxu0 %v722
    %2684 = vmatpush.msra.mxu0 %v718
    %2685 = vmatpush.msra.mxu0 %v714
    %2686 = vmatpush.msra.mxu0 %v710
    %2687 = vmatmul.f32.gmra.mxu0 %v1953
    %v2688 = vpop.f32.mrf.mxu0
    %v2689 = vadd.f32 %v840, %v2688
    %2690 = vdwg.mxu0
    %2691 = vmatpush.msra.mxu0 %v834
    %2692 = vmatpush.msra.mxu0 %v830
    %2693 = vmatpush.msra.mxu0 %v826
    %2694 = vmatpush.msra.mxu0 %v822
    %2695 = vmatpush.msra.mxu0 %v818
    %2696 = vmatpush.msra.mxu0 %v814
    %2697 = vmatpush.msra.mxu0 %v810
    %2698 = vmatpush.msra.mxu0 %v806
    %2699 = vmatpush.msra.mxu0 %v802
    %2700 = vmatpush.msra.mxu0 %v798
    %2701 = vmatpush.msra.mxu0 %v794
    %2702 = vmatpush.msra.mxu0 %v790
    %2703 = vmatpush.msra.mxu0 %v786
    %2704 = vmatpush.msra.mxu0 %v782
    %2705 = vmatpush.msra.mxu0 %v778
    %2706 = vmatpush.msra.mxu0 %v774
    %2707 = vmatmul.f32.gmra.mxu0 %v2176
    %v2708 = vpop.f32.mrf.mxu0
    %v2709 = vadd.f32 %v2689, %v2708
    %2710 = vdwg.mxu0
    %v2711 = vxor.u32 %v2589, 2147483648
    %v2712 = vxor.u32 %v2629, 2147483648
    %v2713 = vxor.u32 %v2669, 2147483648
    %v2714 = vmul.f32 %v2711, 1.442695
    %v2715 = vpow.pop %v2714
    %v2716 = vmul.f32 %v2712, 1.442695
    %v2717 = vpow.pop %v2716
    %v2718 = vmul.f32 %v2713, 1.442695
    %v2719 = vpow.pop %v2718
    %v2720 = vadd.f32 %v2715, 1.0
    %v2721 = vadd.f32 %v2717, 1.0
    %v2722 = vadd.f32 %v2719, 1.0
    %v2723 = vrcp.pop %v2720
    %v2724 = vmul.f32 %v2720, %v2723
    %v2725 = vsub.f32 1.0, %v2724
    %v2726 = vmul.f32 %v2723, %v2725
    %v2727 = vadd.f32 %v2723, %v2726
    %vm2728 = vweird.f32 %v2720
    %vm2729 = vweird.f32 %v2723
    %vm2730 = vmor %vm2728, %vm2729
    %v2731 = vsel %vm2730, %v2723, %v2727
    %v2732 = vand.u32 2147483647, %v2720
    %vm2733 = vcmp.eq.f32.partialorder %v2732, 8.507059e+37
    %v2734 = vand.u32 %v2720, 2147483648
    %v2735 = vor.u32 1.1754944e-38, %v2734
    %v2736 = vsel %vm2733, %v2735, %v2731
    %v2737 = vmul.f32 1.0, %v2736
    %v2738 = vrcp.pop %v2721
    %v2739 = vmul.f32 %v2721, %v2738
    %v2740 = vsub.f32 1.0, %v2739
    %v2741 = vmul.f32 %v2738, %v2740
    %v2742 = vadd.f32 %v2738, %v2741
    %vm2743 = vweird.f32 %v2721
    %vm2744 = vweird.f32 %v2738
    %vm2745 = vmor %vm2743, %vm2744
    %v2746 = vsel %vm2745, %v2738, %v2742
    %v2747 = vand.u32 2147483647, %v2721
    %vm2748 = vcmp.eq.f32.partialorder %v2747, 8.507059e+37
    %v2749 = vand.u32 %v2721, 2147483648
    %v2750 = vor.u32 1.1754944e-38, %v2749
    %v2751 = vsel %vm2748, %v2750, %v2746
    %v2752 = vmul.f32 1.0, %v2751
    %v2753 = vrcp.pop %v2722
    %v2754 = vmul.f32 %v2722, %v2753
    %v2755 = vsub.f32 1.0, %v2754
    %v2756 = vmul.f32 %v2753, %v2755
    %v2757 = vadd.f32 %v2753, %v2756
    %vm2758 = vweird.f32 %v2722
    %vm2759 = vweird.f32 %v2753
    %vm2760 = vmor %vm2758, %vm2759
    %v2761 = vsel %vm2760, %v2753, %v2757
    %v2762 = vand.u32 2147483647, %v2722
    %vm2763 = vcmp.eq.f32.partialorder %v2762, 8.507059e+37
    %v2764 = vand.u32 %v2722, 2147483648
    %v2765 = vor.u32 1.1754944e-38, %v2764
    %v2766 = vsel %vm2763, %v2765, %v2761
    %v2767 = vmul.f32 1.0, %v2766
    %v2768 = vtanh.pop %v2709
    %v2769 = vmul.f32 %v2752, %v2174
    %v2770 = vmul.f32 %v2737, %v2768
    %v2771 = vadd.f32 %v2769, %v2770
    %v2772 = vtanh.pop %v2771
    %v2773 = vmul.f32 %v2767, %v2772
    %2774 = vmatpush.msra.mxu0 %v1502
    %2775 = vmatpush.msra.mxu0 %v1498
    %2776 = vmatpush.msra.mxu0 %v1494
    %2777 = vmatpush.msra.mxu0 %v1490
    %2778 = vmatpush.msra.mxu0 %v1486
    %2779 = vmatpush.msra.mxu0 %v1482
    %2780 = vmatpush.msra.mxu0 %v1478
    %2781 = vmatpush.msra.mxu0 %v1474
    %2782 = vmatpush.msra.mxu0 %v1470
    %2783 = vmatpush.msra.mxu0 %v1466
    %2784 = vmatpush.msra.mxu0 %v1462
    %2785 = vmatpush.msra.mxu0 %v1458
    %2786 = vmatpush.msra.mxu0 %v1454
    %2787 = vmatpush.msra.mxu0 %v1450
    %2788 = vmatpush.msra.mxu0 %v1446
    %2789 = vmatpush.msra.mxu0 %v1442
    %2790 = vmatmul.f32.gmra.mxu0 %v2176
    %v2791 = vpop.f32.mrf.mxu0
    %v2792 = vadd.f32 %v1572, %v2791
    %2793 = vdwg.mxu0
    %2794 = vmatpush.msra.mxu0 %v1566
    %2795 = vmatpush.msra.mxu0 %v1562
    %2796 = vmatpush.msra.mxu0 %v1558
    %2797 = vmatpush.msra.mxu0 %v1554
    %2798 = vmatpush.msra.mxu0 %v1550
    %2799 = vmatpush.msra.mxu0 %v1546
    %2800 = vmatpush.msra.mxu0 %v1542
    %2801 = vmatpush.msra.mxu0 %v1538
    %2802 = vmatpush.msra.mxu0 %v1534
    %2803 = vmatpush.msra.mxu0 %v1530
    %2804 = vmatpush.msra.mxu0 %v1526
    %2805 = vmatpush.msra.mxu0 %v1522
    %2806 = vmatpush.msra.mxu0 %v1518
    %2807 = vmatpush.msra.mxu0 %v1514
    %2808 = vmatpush.msra.mxu0 %v1510
    %2809 = vmatpush.msra.mxu0 %v1506
    %2810 = vmatmul.f32.gmra.mxu0 %v2399
    %v2811 = vpop.f32.mrf.mxu0
    %v2812 = vadd.f32 %v2792, %v2811
    %2813 = vdwg.mxu0
    %2814 = vmatpush.msra.mxu0 %v1503
    %2815 = vmatpush.msra.mxu0 %v1499
    %2816 = vmatpush.msra.mxu0 %v1495
    %2817 = vmatpush.msra.mxu0 %v1491
    %2818 = vmatpush.msra.mxu0 %v1487
    %2819 = vmatpush.msra.mxu0 %v1483
    %2820 = vmatpush.msra.mxu0 %v1479
    %2821 = vmatpush.msra.mxu0 %v1475
    %2822 = vmatpush.msra.mxu0 %v1471
    %2823 = vmatpush.msra.mxu0 %v1467
    %2824 = vmatpush.msra.mxu0 %v1463
    %2825 = vmatpush.msra.mxu0 %v1459
    %2826 = vmatpush.msra.mxu0 %v1455
    %2827 = vmatpush.msra.mxu0 %v1451
    %2828 = vmatpush.msra.mxu0 %v1447
    %2829 = vmatpush.msra.mxu0 %v1443
    %2830 = vmatmul.f32.gmra.mxu0 %v2176
    %v2831 = vpop.f32.mrf.mxu0
    %v2832 = vadd.f32 %v1573, %v2831
    %2833 = vdwg.mxu0
    %2834 = vmatpush.msra.mxu0 %v1567
    %2835 = vmatpush.msra.mxu0 %v1563
    %2836 = vmatpush.msra.mxu0 %v1559
    %2837 = vmatpush.msra.mxu0 %v1555
    %2838 = vmatpush.msra.mxu0 %v1551
    %2839 = vmatpush.msra.mxu0 %v1547
    %2840 = vmatpush.msra.mxu0 %v1543
    %2841 = vmatpush.msra.mxu0 %v1539
    %2842 = vmatpush.msra.mxu0 %v1535
    %2843 = vmatpush.msra.mxu0 %v1531
    %2844 = vmatpush.msra.mxu0 %v1527
    %2845 = vmatpush.msra.mxu0 %v1523
    %2846 = vmatpush.msra.mxu0 %v1519
    %2847 = vmatpush.msra.mxu0 %v1515
    %2848 = vmatpush.msra.mxu0 %v1511
    %2849 = vmatpush.msra.mxu0 %v1507
    %2850 = vmatmul.f32.gmra.mxu0 %v2399
    %v2851 = vpop.f32.mrf.mxu0
    %v2852 = vadd.f32 %v2832, %v2851
    %2853 = vdwg.mxu0
    %2854 = vmatpush.msra.mxu0 %v1504
    %2855 = vmatpush.msra.mxu0 %v1500
    %2856 = vmatpush.msra.mxu0 %v1496
    %2857 = vmatpush.msra.mxu0 %v1492
    %2858 = vmatpush.msra.mxu0 %v1488
    %2859 = vmatpush.msra.mxu0 %v1484
    %2860 = vmatpush.msra.mxu0 %v1480
    %2861 = vmatpush.msra.mxu0 %v1476
    %2862 = vmatpush.msra.mxu0 %v1472
    %2863 = vmatpush.msra.mxu0 %v1468
    %2864 = vmatpush.msra.mxu0 %v1464
    %2865 = vmatpush.msra.mxu0 %v1460
    %2866 = vmatpush.msra.mxu0 %v1456
    %2867 = vmatpush.msra.mxu0 %v1452
    %2868 = vmatpush.msra.mxu0 %v1448
    %2869 = vmatpush.msra.mxu0 %v1444
    %2870 = vmatmul.f32.gmra.mxu0 %v2176
    %v2871 = vpop.f32.mrf.mxu0
    %v2872 = vadd.f32 %v1574, %v2871
    %2873 = vdwg.mxu0
    %2874 = vmatpush.msra.mxu0 %v1568
    %2875 = vmatpush.msra.mxu0 %v1564
    %2876 = vmatpush.msra.mxu0 %v1560
    %2877 = vmatpush.msra.mxu0 %v1556
    %2878 = vmatpush.msra.mxu0 %v1552
    %2879 = vmatpush.msra.mxu0 %v1548
    %2880 = vmatpush.msra.mxu0 %v1544
    %2881 = vmatpush.msra.mxu0 %v1540
    %2882 = vmatpush.msra.mxu0 %v1536
    %2883 = vmatpush.msra.mxu0 %v1532
    %2884 = vmatpush.msra.mxu0 %v1528
    %2885 = vmatpush.msra.mxu0 %v1524
    %2886 = vmatpush.msra.mxu0 %v1520
    %2887 = vmatpush.msra.mxu0 %v1516
    %2888 = vmatpush.msra.mxu0 %v1512
    %2889 = vmatpush.msra.mxu0 %v1508
    %2890 = vmatmul.f32.gmra.mxu0 %v2399
    %v2891 = vpop.f32.mrf.mxu0
    %v2892 = vadd.f32 %v2872, %v2891
    %2893 = vdwg.mxu0
    %2894 = vmatpush.msra.mxu0 %v1505
    %2895 = vmatpush.msra.mxu0 %v1501
    %2896 = vmatpush.msra.mxu0 %v1497
    %2897 = vmatpush.msra.mxu0 %v1493
    %2898 = vmatpush.msra.mxu0 %v1489
    %2899 = vmatpush.msra.mxu0 %v1485
    %2900 = vmatpush.msra.mxu0 %v1481
    %2901 = vmatpush.msra.mxu0 %v1477
    %2902 = vmatpush.msra.mxu0 %v1473
    %2903 = vmatpush.msra.mxu0 %v1469
    %2904 = vmatpush.msra.mxu0 %v1465
    %2905 = vmatpush.msra.mxu0 %v1461
    %2906 = vmatpush.msra.mxu0 %v1457
    %2907 = vmatpush.msra.mxu0 %v1453
    %2908 = vmatpush.msra.mxu0 %v1449
    %2909 = vmatpush.msra.mxu0 %v1445
    %2910 = vmatmul.f32.gmra.mxu0 %v2176
    %v2911 = vpop.f32.mrf.mxu0
    %v2912 = vadd.f32 %v1575, %v2911
    %2913 = vdwg.mxu0
    %2914 = vmatpush.msra.mxu0 %v1569
    %2915 = vmatpush.msra.mxu0 %v1565
    %2916 = vmatpush.msra.mxu0 %v1561
    %2917 = vmatpush.msra.mxu0 %v1557
    %2918 = vmatpush.msra.mxu0 %v1553
    %2919 = vmatpush.msra.mxu0 %v1549
    %2920 = vmatpush.msra.mxu0 %v1545
    %2921 = vmatpush.msra.mxu0 %v1541
    %2922 = vmatpush.msra.mxu0 %v1537
    %2923 = vmatpush.msra.mxu0 %v1533
    %2924 = vmatpush.msra.mxu0 %v1529
    %2925 = vmatpush.msra.mxu0 %v1525
    %2926 = vmatpush.msra.mxu0 %v1521
    %2927 = vmatpush.msra.mxu0 %v1517
    %2928 = vmatpush.msra.mxu0 %v1513
    %2929 = vmatpush.msra.mxu0 %v1509
    %2930 = vmatmul.f32.gmra.mxu0 %v2399
    %v2931 = vpop.f32.mrf.mxu0
    %v2932 = vadd.f32 %v2912, %v2931
    %2933 = vdwg.mxu0
    %v2934 = vxor.u32 %v2812, 2147483648
    %v2935 = vxor.u32 %v2852, 2147483648
    %v2936 = vxor.u32 %v2892, 2147483648
    %v2937 = vmul.f32 %v2934, 1.442695
    %v2938 = vpow.pop %v2937
    %v2939 = vmul.f32 %v2935, 1.442695
    %v2940 = vpow.pop %v2939
    %v2941 = vmul.f32 %v2936, 1.442695
    %v2942 = vpow.pop %v2941
    %v2943 = vadd.f32 %v2938, 1.0
    %v2944 = vadd.f32 %v2940, 1.0
    %v2945 = vadd.f32 %v2942, 1.0
    %v2946 = vrcp.pop %v2943
    %v2947 = vmul.f32 %v2943, %v2946
    %v2948 = vsub.f32 1.0, %v2947
    %v2949 = vmul.f32 %v2946, %v2948
    %v2950 = vadd.f32 %v2946, %v2949
    %vm2951 = vweird.f32 %v2943
    %vm2952 = vweird.f32 %v2946
    %vm2953 = vmor %vm2951, %vm2952
    %v2954 = vsel %vm2953, %v2946, %v2950
    %v2955 = vand.u32 2147483647, %v2943
    %vm2956 = vcmp.eq.f32.partialorder %v2955, 8.507059e+37
    %v2957 = vand.u32 %v2943, 2147483648
    %v2958 = vor.u32 1.1754944e-38, %v2957
    %v2959 = vsel %vm2956, %v2958, %v2954
    %v2960 = vmul.f32 1.0, %v2959
    %v2961 = vrcp.pop %v2944
    %v2962 = vmul.f32 %v2944, %v2961
    %v2963 = vsub.f32 1.0, %v2962
    %v2964 = vmul.f32 %v2961, %v2963
    %v2965 = vadd.f32 %v2961, %v2964
    %vm2966 = vweird.f32 %v2944
    %vm2967 = vweird.f32 %v2961
    %vm2968 = vmor %vm2966, %vm2967
    %v2969 = vsel %vm2968, %v2961, %v2965
    %v2970 = vand.u32 2147483647, %v2944
    %vm2971 = vcmp.eq.f32.partialorder %v2970, 8.507059e+37
    %v2972 = vand.u32 %v2944, 2147483648
    %v2973 = vor.u32 1.1754944e-38, %v2972
    %v2974 = vsel %vm2971, %v2973, %v2969
    %v2975 = vmul.f32 1.0, %v2974
    %v2976 = vrcp.pop %v2945
    %v2977 = vmul.f32 %v2945, %v2976
    %v2978 = vsub.f32 1.0, %v2977
    %v2979 = vmul.f32 %v2976, %v2978
    %v2980 = vadd.f32 %v2976, %v2979
    %vm2981 = vweird.f32 %v2945
    %vm2982 = vweird.f32 %v2976
    %vm2983 = vmor %vm2981, %vm2982
    %v2984 = vsel %vm2983, %v2976, %v2980
    %v2985 = vand.u32 2147483647, %v2945
    %vm2986 = vcmp.eq.f32.partialorder %v2985, 8.507059e+37
    %v2987 = vand.u32 %v2945, 2147483648
    %v2988 = vor.u32 1.1754944e-38, %v2987
    %v2989 = vsel %vm2986, %v2988, %v2984
    %v2990 = vmul.f32 1.0, %v2989
    %v2991 = vtanh.pop %v2932
    %v2992 = vmul.f32 %v2975, %v2397
    %v2993 = vmul.f32 %v2960, %v2991
    %v2994 = vadd.f32 %v2992, %v2993
    %v2995 = vtanh.pop %v2994
    %v2996 = vmul.f32 %v2990, %v2995
    %v2997 = vld [vmem:[#allocation2 + $0xa0] sm:$0xff]
    %v2998 = vld [vmem:[#allocation2 + $0xa8] sm:$0xff]
    %v2999 = vld [vmem:[#allocation2 + $0xb0] sm:$0xff]
    %v3000 = vld [vmem:[#allocation2 + $0xb8] sm:$0xff]
    %3001 = vmatpush.msra.mxu0 %v405
    %3002 = vmatpush.msra.mxu0 %v401
    %3003 = vmatpush.msra.mxu0 %v397
    %3004 = vmatpush.msra.mxu0 %v393
    %3005 = vmatpush.msra.mxu0 %v389
    %3006 = vmatpush.msra.mxu0 %v385
    %3007 = vmatpush.msra.mxu0 %v381
    %3008 = vmatpush.msra.mxu0 %v377
    %3009 = vmatpush.msra.mxu0 %v373
    %3010 = vmatpush.msra.mxu0 %v369
    %3011 = vmatpush.msra.mxu0 %v365
    %3012 = vmatpush.msra.mxu0 %v361
    %3013 = vmatpush.msra.mxu0 %v357
    %3014 = vmatpush.msra.mxu0 %v353
    %3015 = vmatpush.msra.mxu0 %v349
    %3016 = vmatpush.msra.mxu0 %v345
    %3017 = vmatmul.f32.gmra.mxu0 %v2550
    %v3018 = vpop.f32.mrf.mxu0
    %v3019 = vadd.f32 0.0, %v3018
    %3020 = vdwg.mxu0
    %3021 = vmatpush.msra.mxu0 %v406
    %3022 = vmatpush.msra.mxu0 %v402
    %3023 = vmatpush.msra.mxu0 %v398
    %3024 = vmatpush.msra.mxu0 %v394
    %3025 = vmatpush.msra.mxu0 %v390
    %3026 = vmatpush.msra.mxu0 %v386
    %3027 = vmatpush.msra.mxu0 %v382
    %3028 = vmatpush.msra.mxu0 %v378
    %3029 = vmatpush.msra.mxu0 %v374
    %3030 = vmatpush.msra.mxu0 %v370
    %3031 = vmatpush.msra.mxu0 %v366
    %3032 = vmatpush.msra.mxu0 %v362
    %3033 = vmatpush.msra.mxu0 %v358
    %3034 = vmatpush.msra.mxu0 %v354
    %3035 = vmatpush.msra.mxu0 %v350
    %3036 = vmatpush.msra.mxu0 %v346
    %3037 = vmatmul.f32.gmra.mxu0 %v2550
    %v3038 = vpop.f32.mrf.mxu0
    %v3039 = vadd.f32 0.0, %v3038
    %3040 = vdwg.mxu0
    %3041 = vmatpush.msra.mxu0 %v407
    %3042 = vmatpush.msra.mxu0 %v403
    %3043 = vmatpush.msra.mxu0 %v399
    %3044 = vmatpush.msra.mxu0 %v395
    %3045 = vmatpush.msra.mxu0 %v391
    %3046 = vmatpush.msra.mxu0 %v387
    %3047 = vmatpush.msra.mxu0 %v383
    %3048 = vmatpush.msra.mxu0 %v379
    %3049 = vmatpush.msra.mxu0 %v375
    %3050 = vmatpush.msra.mxu0 %v371
    %3051 = vmatpush.msra.mxu0 %v367
    %3052 = vmatpush.msra.mxu0 %v363
    %3053 = vmatpush.msra.mxu0 %v359
    %3054 = vmatpush.msra.mxu0 %v355
    %3055 = vmatpush.msra.mxu0 %v351
    %3056 = vmatpush.msra.mxu0 %v347
    %3057 = vmatmul.f32.gmra.mxu0 %v2550
    %v3058 = vpop.f32.mrf.mxu0
    %v3059 = vadd.f32 0.0, %v3058
    %3060 = vdwg.mxu0
    %3061 = vmatpush.msra.mxu0 %v408
    %3062 = vmatpush.msra.mxu0 %v404
    %3063 = vmatpush.msra.mxu0 %v400
    %3064 = vmatpush.msra.mxu0 %v396
    %3065 = vmatpush.msra.mxu0 %v392
    %3066 = vmatpush.msra.mxu0 %v388
    %3067 = vmatpush.msra.mxu0 %v384
    %3068 = vmatpush.msra.mxu0 %v380
    %3069 = vmatpush.msra.mxu0 %v376
    %3070 = vmatpush.msra.mxu0 %v372
    %3071 = vmatpush.msra.mxu0 %v368
    %3072 = vmatpush.msra.mxu0 %v364
    %3073 = vmatpush.msra.mxu0 %v360
    %3074 = vmatpush.msra.mxu0 %v356
    %3075 = vmatpush.msra.mxu0 %v352
    %3076 = vmatpush.msra.mxu0 %v348
    %3077 = vmatmul.f32.gmra.mxu0 %v2550
    %v3078 = vpop.f32.mrf.mxu0
    %v3079 = vadd.f32 0.0, %v3078
    %3080 = vdwg.mxu0
    %v3081 = vadd.f32 %v2997, %v3019
    %v3082 = vadd.f32 %v2998, %v3039
    %v3083 = vadd.f32 %v2999, %v3059
    %v3084 = vadd.f32 %v3000, %v3079
    %v3085 = vxor.u32 %v3081, 2147483648
    %v3086 = vxor.u32 %v3082, 2147483648
    %v3087 = vxor.u32 %v3083, 2147483648
    %v3088 = vmul.f32 %v3085, 1.442695
    %v3089 = vpow.pop %v3088
    %v3090 = vmul.f32 %v3086, 1.442695
    %v3091 = vpow.pop %v3090
    %v3092 = vmul.f32 %v3087, 1.442695
    %v3093 = vpow.pop %v3092
    %v3094 = vadd.f32 %v3089, 1.0
    %v3095 = vadd.f32 %v3091, 1.0
    %v3096 = vadd.f32 %v3093, 1.0
    %v3097 = vrcp.pop %v3094
    %v3098 = vmul.f32 %v3094, %v3097
    %v3099 = vsub.f32 1.0, %v3098
    %v3100 = vmul.f32 %v3097, %v3099
    %v3101 = vadd.f32 %v3097, %v3100
    %vm3102 = vweird.f32 %v3094
    %vm3103 = vweird.f32 %v3097
    %vm3104 = vmor %vm3102, %vm3103
    %v3105 = vsel %vm3104, %v3097, %v3101
    %v3106 = vand.u32 2147483647, %v3094
    %vm3107 = vcmp.eq.f32.partialorder %v3106, 8.507059e+37
    %v3108 = vand.u32 %v3094, 2147483648
    %v3109 = vor.u32 1.1754944e-38, %v3108
    %v3110 = vsel %vm3107, %v3109, %v3105
    %v3111 = vmul.f32 1.0, %v3110
    %v3112 = vrcp.pop %v3095
    %v3113 = vmul.f32 %v3095, %v3112
    %v3114 = vsub.f32 1.0, %v3113
    %v3115 = vmul.f32 %v3112, %v3114
    %v3116 = vadd.f32 %v3112, %v3115
    %vm3117 = vweird.f32 %v3095
    %vm3118 = vweird.f32 %v3112
    %vm3119 = vmor %vm3117, %vm3118
    %v3120 = vsel %vm3119, %v3112, %v3116
    %v3121 = vand.u32 2147483647, %v3095
    %vm3122 = vcmp.eq.f32.partialorder %v3121, 8.507059e+37
    %v3123 = vand.u32 %v3095, 2147483648
    %v3124 = vor.u32 1.1754944e-38, %v3123
    %v3125 = vsel %vm3122, %v3124, %v3120
    %v3126 = vmul.f32 1.0, %v3125
    %v3127 = vrcp.pop %v3096
    %v3128 = vmul.f32 %v3096, %v3127
    %v3129 = vsub.f32 1.0, %v3128
    %v3130 = vmul.f32 %v3127, %v3129
    %v3131 = vadd.f32 %v3127, %v3130
    %vm3132 = vweird.f32 %v3096
    %vm3133 = vweird.f32 %v3127
    %vm3134 = vmor %vm3132, %vm3133
    %v3135 = vsel %vm3134, %v3127, %v3131
    %v3136 = vand.u32 2147483647, %v3096
    %vm3137 = vcmp.eq.f32.partialorder %v3136, 8.507059e+37
    %v3138 = vand.u32 %v3096, 2147483648
    %v3139 = vor.u32 1.1754944e-38, %v3138
    %v3140 = vsel %vm3137, %v3139, %v3135
    %v3141 = vmul.f32 1.0, %v3140
    %v3142 = vtanh.pop %v3084
    %v3143 = vmul.f32 %v3126, %v2548
    %v3144 = vmul.f32 %v3111, %v3142
    %v3145 = vadd.f32 %v3143, %v3144
    %v3146 = vtanh.pop %v3145
    %v3147 = vmul.f32 %v3141, %v3146
    %3148 = vmatpush.msra.mxu0 %v767
    %3149 = vmatpush.msra.mxu0 %v763
    %3150 = vmatpush.msra.mxu0 %v759
    %3151 = vmatpush.msra.mxu0 %v755
    %3152 = vmatpush.msra.mxu0 %v751
    %3153 = vmatpush.msra.mxu0 %v747
    %3154 = vmatpush.msra.mxu0 %v743
    %3155 = vmatpush.msra.mxu0 %v739
    %3156 = vmatpush.msra.mxu0 %v735
    %3157 = vmatpush.msra.mxu0 %v731
    %3158 = vmatpush.msra.mxu0 %v727
    %3159 = vmatpush.msra.mxu0 %v723
    %3160 = vmatpush.msra.mxu0 %v719
    %3161 = vmatpush.msra.mxu0 %v715
    %3162 = vmatpush.msra.mxu0 %v711
    %3163 = vmatpush.msra.mxu0 %v707
    %3164 = vmatmul.f32.gmra.mxu0 %v2550
    %v3165 = vpop.f32.mrf.mxu0
    %v3166 = vadd.f32 %v837, %v3165
    %3167 = vdwg.mxu0
    %3168 = vmatpush.msra.mxu0 %v831
    %3169 = vmatpush.msra.mxu0 %v827
    %3170 = vmatpush.msra.mxu0 %v823
    %3171 = vmatpush.msra.mxu0 %v819
    %3172 = vmatpush.msra.mxu0 %v815
    %3173 = vmatpush.msra.mxu0 %v811
    %3174 = vmatpush.msra.mxu0 %v807
    %3175 = vmatpush.msra.mxu0 %v803
    %3176 = vmatpush.msra.mxu0 %v799
    %3177 = vmatpush.msra.mxu0 %v795
    %3178 = vmatpush.msra.mxu0 %v791
    %3179 = vmatpush.msra.mxu0 %v787
    %3180 = vmatpush.msra.mxu0 %v783
    %3181 = vmatpush.msra.mxu0 %v779
    %3182 = vmatpush.msra.mxu0 %v775
    %3183 = vmatpush.msra.mxu0 %v771
    %3184 = vmatmul.f32.gmra.mxu0 %v2773
    %v3185 = vpop.f32.mrf.mxu0
    %v3186 = vadd.f32 %v3166, %v3185
    %3187 = vdwg.mxu0
    %3188 = vmatpush.msra.mxu0 %v768
    %3189 = vmatpush.msra.mxu0 %v764
    %3190 = vmatpush.msra.mxu0 %v760
    %3191 = vmatpush.msra.mxu0 %v756
    %3192 = vmatpush.msra.mxu0 %v752
    %3193 = vmatpush.msra.mxu0 %v748
    %3194 = vmatpush.msra.mxu0 %v744
    %3195 = vmatpush.msra.mxu0 %v740
    %3196 = vmatpush.msra.mxu0 %v736
    %3197 = vmatpush.msra.mxu0 %v732
    %3198 = vmatpush.msra.mxu0 %v728
    %3199 = vmatpush.msra.mxu0 %v724
    %3200 = vmatpush.msra.mxu0 %v720
    %3201 = vmatpush.msra.mxu0 %v716
    %3202 = vmatpush.msra.mxu0 %v712
    %3203 = vmatpush.msra.mxu0 %v708
    %3204 = vmatmul.f32.gmra.mxu0 %v2550
    %v3205 = vpop.f32.mrf.mxu0
    %v3206 = vadd.f32 %v838, %v3205
    %3207 = vdwg.mxu0
    %3208 = vmatpush.msra.mxu0 %v832
    %3209 = vmatpush.msra.mxu0 %v828
    %3210 = vmatpush.msra.mxu0 %v824
    %3211 = vmatpush.msra.mxu0 %v820
    %3212 = vmatpush.msra.mxu0 %v816
    %3213 = vmatpush.msra.mxu0 %v812
    %3214 = vmatpush.msra.mxu0 %v808
    %3215 = vmatpush.msra.mxu0 %v804
    %3216 = vmatpush.msra.mxu0 %v800
    %3217 = vmatpush.msra.mxu0 %v796
    %3218 = vmatpush.msra.mxu0 %v792
    %3219 = vmatpush.msra.mxu0 %v788
    %3220 = vmatpush.msra.mxu0 %v784
    %3221 = vmatpush.msra.mxu0 %v780
    %3222 = vmatpush.msra.mxu0 %v776
    %3223 = vmatpush.msra.mxu0 %v772
    %3224 = vmatmul.f32.gmra.mxu0 %v2773
    %v3225 = vpop.f32.mrf.mxu0
    %v3226 = vadd.f32 %v3206, %v3225
    %3227 = vdwg.mxu0
    %3228 = vmatpush.msra.mxu0 %v769
    %3229 = vmatpush.msra.mxu0 %v765
    %3230 = vmatpush.msra.mxu0 %v761
    %3231 = vmatpush.msra.mxu0 %v757
    %3232 = vmatpush.msra.mxu0 %v753
    %3233 = vmatpush.msra.mxu0 %v749
    %3234 = vmatpush.msra.mxu0 %v745
    %3235 = vmatpush.msra.mxu0 %v741
    %3236 = vmatpush.msra.mxu0 %v737
    %3237 = vmatpush.msra.mxu0 %v733
    %3238 = vmatpush.msra.mxu0 %v729
    %3239 = vmatpush.msra.mxu0 %v725
    %3240 = vmatpush.msra.mxu0 %v721
    %3241 = vmatpush.msra.mxu0 %v717
    %3242 = vmatpush.msra.mxu0 %v713
    %3243 = vmatpush.msra.mxu0 %v709
    %3244 = vmatmul.f32.gmra.mxu0 %v2550
    %v3245 = vpop.f32.mrf.mxu0
    %v3246 = vadd.f32 %v839, %v3245
    %3247 = vdwg.mxu0
    %3248 = vmatpush.msra.mxu0 %v833
    %3249 = vmatpush.msra.mxu0 %v829
    %3250 = vmatpush.msra.mxu0 %v825
    %3251 = vmatpush.msra.mxu0 %v821
    %3252 = vmatpush.msra.mxu0 %v817
    %3253 = vmatpush.msra.mxu0 %v813
    %3254 = vmatpush.msra.mxu0 %v809
    %3255 = vmatpush.msra.mxu0 %v805
    %3256 = vmatpush.msra.mxu0 %v801
    %3257 = vmatpush.msra.mxu0 %v797
    %3258 = vmatpush.msra.mxu0 %v793
    %3259 = vmatpush.msra.mxu0 %v789
    %3260 = vmatpush.msra.mxu0 %v785
    %3261 = vmatpush.msra.mxu0 %v781
    %3262 = vmatpush.msra.mxu0 %v777
    %3263 = vmatpush.msra.mxu0 %v773
    %3264 = vmatmul.f32.gmra.mxu0 %v2773
    %v3265 = vpop.f32.mrf.mxu0
    %v3266 = vadd.f32 %v3246, %v3265
    %3267 = vdwg.mxu0
    %3268 = vmatpush.msra.mxu0 %v770
    %3269 = vmatpush.msra.mxu0 %v766
    %3270 = vmatpush.msra.mxu0 %v762
    %3271 = vmatpush.msra.mxu0 %v758
    %3272 = vmatpush.msra.mxu0 %v754
    %3273 = vmatpush.msra.mxu0 %v750
    %3274 = vmatpush.msra.mxu0 %v746
    %3275 = vmatpush.msra.mxu0 %v742
    %3276 = vmatpush.msra.mxu0 %v738
    %3277 = vmatpush.msra.mxu0 %v734
    %3278 = vmatpush.msra.mxu0 %v730
    %3279 = vmatpush.msra.mxu0 %v726
    %3280 = vmatpush.msra.mxu0 %v722
    %3281 = vmatpush.msra.mxu0 %v718
    %3282 = vmatpush.msra.mxu0 %v714
    %3283 = vmatpush.msra.mxu0 %v710
    %3284 = vmatmul.f32.gmra.mxu0 %v2550
    %v3285 = vpop.f32.mrf.mxu0
    %v3286 = vadd.f32 %v840, %v3285
    %3287 = vdwg.mxu0
    %3288 = vmatpush.msra.mxu0 %v834
    %3289 = vmatpush.msra.mxu0 %v830
    %3290 = vmatpush.msra.mxu0 %v826
    %3291 = vmatpush.msra.mxu0 %v822
    %3292 = vmatpush.msra.mxu0 %v818
    %3293 = vmatpush.msra.mxu0 %v814
    %3294 = vmatpush.msra.mxu0 %v810
    %3295 = vmatpush.msra.mxu0 %v806
    %3296 = vmatpush.msra.mxu0 %v802
    %3297 = vmatpush.msra.mxu0 %v798
    %3298 = vmatpush.msra.mxu0 %v794
    %3299 = vmatpush.msra.mxu0 %v790
    %3300 = vmatpush.msra.mxu0 %v786
    %3301 = vmatpush.msra.mxu0 %v782
    %3302 = vmatpush.msra.mxu0 %v778
    %3303 = vmatpush.msra.mxu0 %v774
    %3304 = vmatmul.f32.gmra.mxu0 %v2773
    %v3305 = vpop.f32.mrf.mxu0
    %v3306 = vadd.f32 %v3286, %v3305
    %3307 = vdwg.mxu0
    %v3308 = vxor.u32 %v3186, 2147483648
    %v3309 = vxor.u32 %v3226, 2147483648
    %v3310 = vxor.u32 %v3266, 2147483648
    %v3311 = vmul.f32 %v3308, 1.442695
    %v3312 = vpow.pop %v3311
    %v3313 = vmul.f32 %v3309, 1.442695
    %v3314 = vpow.pop %v3313
    %v3315 = vmul.f32 %v3310, 1.442695
    %v3316 = vpow.pop %v3315
    %v3317 = vadd.f32 %v3312, 1.0
    %v3318 = vadd.f32 %v3314, 1.0
    %v3319 = vadd.f32 %v3316, 1.0
    %v3320 = vrcp.pop %v3317
    %v3321 = vmul.f32 %v3317, %v3320
    %v3322 = vsub.f32 1.0, %v3321
    %v3323 = vmul.f32 %v3320, %v3322
    %v3324 = vadd.f32 %v3320, %v3323
    %vm3325 = vweird.f32 %v3317
    %vm3326 = vweird.f32 %v3320
    %vm3327 = vmor %vm3325, %vm3326
    %v3328 = vsel %vm3327, %v3320, %v3324
    %v3329 = vand.u32 2147483647, %v3317
    %vm3330 = vcmp.eq.f32.partialorder %v3329, 8.507059e+37
    %v3331 = vand.u32 %v3317, 2147483648
    %v3332 = vor.u32 1.1754944e-38, %v3331
    %v3333 = vsel %vm3330, %v3332, %v3328
    %v3334 = vmul.f32 1.0, %v3333
    %v3335 = vrcp.pop %v3318
    %v3336 = vmul.f32 %v3318, %v3335
    %v3337 = vsub.f32 1.0, %v3336
    %v3338 = vmul.f32 %v3335, %v3337
    %v3339 = vadd.f32 %v3335, %v3338
    %vm3340 = vweird.f32 %v3318
    %vm3341 = vweird.f32 %v3335
    %vm3342 = vmor %vm3340, %vm3341
    %v3343 = vsel %vm3342, %v3335, %v3339
    %v3344 = vand.u32 2147483647, %v3318
    %vm3345 = vcmp.eq.f32.partialorder %v3344, 8.507059e+37
    %v3346 = vand.u32 %v3318, 2147483648
    %v3347 = vor.u32 1.1754944e-38, %v3346
    %v3348 = vsel %vm3345, %v3347, %v3343
    %v3349 = vmul.f32 1.0, %v3348
    %v3350 = vrcp.pop %v3319
    %v3351 = vmul.f32 %v3319, %v3350
    %v3352 = vsub.f32 1.0, %v3351
    %v3353 = vmul.f32 %v3350, %v3352
    %v3354 = vadd.f32 %v3350, %v3353
    %vm3355 = vweird.f32 %v3319
    %vm3356 = vweird.f32 %v3350
    %vm3357 = vmor %vm3355, %vm3356
    %v3358 = vsel %vm3357, %v3350, %v3354
    %v3359 = vand.u32 2147483647, %v3319
    %vm3360 = vcmp.eq.f32.partialorder %v3359, 8.507059e+37
    %v3361 = vand.u32 %v3319, 2147483648
    %v3362 = vor.u32 1.1754944e-38, %v3361
    %v3363 = vsel %vm3360, %v3362, %v3358
    %v3364 = vmul.f32 1.0, %v3363
    %v3365 = vtanh.pop %v3306
    %v3366 = vmul.f32 %v3349, %v2771
    %v3367 = vmul.f32 %v3334, %v3365
    %v3368 = vadd.f32 %v3366, %v3367
    %v3369 = vtanh.pop %v3368
    %v3370 = vmul.f32 %v3364, %v3369
    %3371 = vmatpush.msra.mxu0 %v1502
    %3372 = vmatpush.msra.mxu0 %v1498
    %3373 = vmatpush.msra.mxu0 %v1494
    %3374 = vmatpush.msra.mxu0 %v1490
    %3375 = vmatpush.msra.mxu0 %v1486
    %3376 = vmatpush.msra.mxu0 %v1482
    %3377 = vmatpush.msra.mxu0 %v1478
    %3378 = vmatpush.msra.mxu0 %v1474
    %3379 = vmatpush.msra.mxu0 %v1470
    %3380 = vmatpush.msra.mxu0 %v1466
    %3381 = vmatpush.msra.mxu0 %v1462
    %3382 = vmatpush.msra.mxu0 %v1458
    %3383 = vmatpush.msra.mxu0 %v1454
    %3384 = vmatpush.msra.mxu0 %v1450
    %3385 = vmatpush.msra.mxu0 %v1446
    %3386 = vmatpush.msra.mxu0 %v1442
    %3387 = vmatmul.f32.gmra.mxu0 %v2773
    %v3388 = vpop.f32.mrf.mxu0
    %v3389 = vadd.f32 %v1572, %v3388
    %3390 = vdwg.mxu0
    %3391 = vmatpush.msra.mxu0 %v1566
    %3392 = vmatpush.msra.mxu0 %v1562
    %3393 = vmatpush.msra.mxu0 %v1558
    %3394 = vmatpush.msra.mxu0 %v1554
    %3395 = vmatpush.msra.mxu0 %v1550
    %3396 = vmatpush.msra.mxu0 %v1546
    %3397 = vmatpush.msra.mxu0 %v1542
    %3398 = vmatpush.msra.mxu0 %v1538
    %3399 = vmatpush.msra.mxu0 %v1534
    %3400 = vmatpush.msra.mxu0 %v1530
    %3401 = vmatpush.msra.mxu0 %v1526
    %3402 = vmatpush.msra.mxu0 %v1522
    %3403 = vmatpush.msra.mxu0 %v1518
    %3404 = vmatpush.msra.mxu0 %v1514
    %3405 = vmatpush.msra.mxu0 %v1510
    %3406 = vmatpush.msra.mxu0 %v1506
    %3407 = vmatmul.f32.gmra.mxu0 %v2996
    %v3408 = vpop.f32.mrf.mxu0
    %v3409 = vadd.f32 %v3389, %v3408
    %3410 = vdwg.mxu0
    %3411 = vmatpush.msra.mxu0 %v1503
    %3412 = vmatpush.msra.mxu0 %v1499
    %3413 = vmatpush.msra.mxu0 %v1495
    %3414 = vmatpush.msra.mxu0 %v1491
    %3415 = vmatpush.msra.mxu0 %v1487
    %3416 = vmatpush.msra.mxu0 %v1483
    %3417 = vmatpush.msra.mxu0 %v1479
    %3418 = vmatpush.msra.mxu0 %v1475
    %3419 = vmatpush.msra.mxu0 %v1471
    %3420 = vmatpush.msra.mxu0 %v1467
    %3421 = vmatpush.msra.mxu0 %v1463
    %3422 = vmatpush.msra.mxu0 %v1459
    %3423 = vmatpush.msra.mxu0 %v1455
    %3424 = vmatpush.msra.mxu0 %v1451
    %3425 = vmatpush.msra.mxu0 %v1447
    %3426 = vmatpush.msra.mxu0 %v1443
    %3427 = vmatmul.f32.gmra.mxu0 %v2773
    %v3428 = vpop.f32.mrf.mxu0
    %v3429 = vadd.f32 %v1573, %v3428
    %3430 = vdwg.mxu0
    %3431 = vmatpush.msra.mxu0 %v1567
    %3432 = vmatpush.msra.mxu0 %v1563
    %3433 = vmatpush.msra.mxu0 %v1559
    %3434 = vmatpush.msra.mxu0 %v1555
    %3435 = vmatpush.msra.mxu0 %v1551
    %3436 = vmatpush.msra.mxu0 %v1547
    %3437 = vmatpush.msra.mxu0 %v1543
    %3438 = vmatpush.msra.mxu0 %v1539
    %3439 = vmatpush.msra.mxu0 %v1535
    %3440 = vmatpush.msra.mxu0 %v1531
    %3441 = vmatpush.msra.mxu0 %v1527
    %3442 = vmatpush.msra.mxu0 %v1523
    %3443 = vmatpush.msra.mxu0 %v1519
    %3444 = vmatpush.msra.mxu0 %v1515
    %3445 = vmatpush.msra.mxu0 %v1511
    %3446 = vmatpush.msra.mxu0 %v1507
    %3447 = vmatmul.f32.gmra.mxu0 %v2996
    %v3448 = vpop.f32.mrf.mxu0
    %v3449 = vadd.f32 %v3429, %v3448
    %3450 = vdwg.mxu0
    %3451 = vmatpush.msra.mxu0 %v1504
    %3452 = vmatpush.msra.mxu0 %v1500
    %3453 = vmatpush.msra.mxu0 %v1496
    %3454 = vmatpush.msra.mxu0 %v1492
    %3455 = vmatpush.msra.mxu0 %v1488
    %3456 = vmatpush.msra.mxu0 %v1484
    %3457 = vmatpush.msra.mxu0 %v1480
    %3458 = vmatpush.msra.mxu0 %v1476
    %3459 = vmatpush.msra.mxu0 %v1472
    %3460 = vmatpush.msra.mxu0 %v1468
    %3461 = vmatpush.msra.mxu0 %v1464
    %3462 = vmatpush.msra.mxu0 %v1460
    %3463 = vmatpush.msra.mxu0 %v1456
    %3464 = vmatpush.msra.mxu0 %v1452
    %3465 = vmatpush.msra.mxu0 %v1448
    %3466 = vmatpush.msra.mxu0 %v1444
    %3467 = vmatmul.f32.gmra.mxu0 %v2773
    %v3468 = vpop.f32.mrf.mxu0
    %v3469 = vadd.f32 %v1574, %v3468
    %3470 = vdwg.mxu0
    %3471 = vmatpush.msra.mxu0 %v1568
    %3472 = vmatpush.msra.mxu0 %v1564
    %3473 = vmatpush.msra.mxu0 %v1560
    %3474 = vmatpush.msra.mxu0 %v1556
    %3475 = vmatpush.msra.mxu0 %v1552
    %3476 = vmatpush.msra.mxu0 %v1548
    %3477 = vmatpush.msra.mxu0 %v1544
    %3478 = vmatpush.msra.mxu0 %v1540
    %3479 = vmatpush.msra.mxu0 %v1536
    %3480 = vmatpush.msra.mxu0 %v1532
    %3481 = vmatpush.msra.mxu0 %v1528
    %3482 = vmatpush.msra.mxu0 %v1524
    %3483 = vmatpush.msra.mxu0 %v1520
    %3484 = vmatpush.msra.mxu0 %v1516
    %3485 = vmatpush.msra.mxu0 %v1512
    %3486 = vmatpush.msra.mxu0 %v1508
    %3487 = vmatmul.f32.gmra.mxu0 %v2996
    %v3488 = vpop.f32.mrf.mxu0
    %v3489 = vadd.f32 %v3469, %v3488
    %3490 = vdwg.mxu0
    %3491 = vmatpush.msra.mxu0 %v1505
    %3492 = vmatpush.msra.mxu0 %v1501
    %3493 = vmatpush.msra.mxu0 %v1497
    %3494 = vmatpush.msra.mxu0 %v1493
    %3495 = vmatpush.msra.mxu0 %v1489
    %3496 = vmatpush.msra.mxu0 %v1485
    %3497 = vmatpush.msra.mxu0 %v1481
    %3498 = vmatpush.msra.mxu0 %v1477
    %3499 = vmatpush.msra.mxu0 %v1473
    %3500 = vmatpush.msra.mxu0 %v1469
    %3501 = vmatpush.msra.mxu0 %v1465
    %3502 = vmatpush.msra.mxu0 %v1461
    %3503 = vmatpush.msra.mxu0 %v1457
    %3504 = vmatpush.msra.mxu0 %v1453
    %3505 = vmatpush.msra.mxu0 %v1449
    %3506 = vmatpush.msra.mxu0 %v1445
    %3507 = vmatmul.f32.gmra.mxu0 %v2773
    %v3508 = vpop.f32.mrf.mxu0
    %v3509 = vadd.f32 %v1575, %v3508
    %3510 = vdwg.mxu0
    %3511 = vmatpush.msra.mxu0 %v1569
    %3512 = vmatpush.msra.mxu0 %v1565
    %3513 = vmatpush.msra.mxu0 %v1561
    %3514 = vmatpush.msra.mxu0 %v1557
    %3515 = vmatpush.msra.mxu0 %v1553
    %3516 = vmatpush.msra.mxu0 %v1549
    %3517 = vmatpush.msra.mxu0 %v1545
    %3518 = vmatpush.msra.mxu0 %v1541
    %3519 = vmatpush.msra.mxu0 %v1537
    %3520 = vmatpush.msra.mxu0 %v1533
    %3521 = vmatpush.msra.mxu0 %v1529
    %3522 = vmatpush.msra.mxu0 %v1525
    %3523 = vmatpush.msra.mxu0 %v1521
    %3524 = vmatpush.msra.mxu0 %v1517
    %3525 = vmatpush.msra.mxu0 %v1513
    %3526 = vmatpush.msra.mxu0 %v1509
    %3527 = vmatmul.f32.gmra.mxu0 %v2996
    %v3528 = vpop.f32.mrf.mxu0
    %v3529 = vadd.f32 %v3509, %v3528
    %3530 = vdwg.mxu0
    %v3531 = vxor.u32 %v3409, 2147483648
    %v3532 = vxor.u32 %v3449, 2147483648
    %v3533 = vxor.u32 %v3489, 2147483648
    %v3534 = vmul.f32 %v3531, 1.442695
    %v3535 = vpow.pop %v3534
    %v3536 = vmul.f32 %v3532, 1.442695
    %v3537 = vpow.pop %v3536
    %v3538 = vmul.f32 %v3533, 1.442695
    %v3539 = vpow.pop %v3538
    %v3540 = vadd.f32 %v3535, 1.0
    %v3541 = vadd.f32 %v3537, 1.0
    %v3542 = vadd.f32 %v3539, 1.0
    %v3543 = vrcp.pop %v3540
    %v3544 = vmul.f32 %v3540, %v3543
    %v3545 = vsub.f32 1.0, %v3544
    %v3546 = vmul.f32 %v3543, %v3545
    %v3547 = vadd.f32 %v3543, %v3546
    %vm3548 = vweird.f32 %v3540
    %vm3549 = vweird.f32 %v3543
    %vm3550 = vmor %vm3548, %vm3549
    %v3551 = vsel %vm3550, %v3543, %v3547
    %v3552 = vand.u32 2147483647, %v3540
    %vm3553 = vcmp.eq.f32.partialorder %v3552, 8.507059e+37
    %v3554 = vand.u32 %v3540, 2147483648
    %v3555 = vor.u32 1.1754944e-38, %v3554
    %v3556 = vsel %vm3553, %v3555, %v3551
    %v3557 = vmul.f32 1.0, %v3556
    %v3558 = vrcp.pop %v3541
    %v3559 = vmul.f32 %v3541, %v3558
    %v3560 = vsub.f32 1.0, %v3559
    %v3561 = vmul.f32 %v3558, %v3560
    %v3562 = vadd.f32 %v3558, %v3561
    %vm3563 = vweird.f32 %v3541
    %vm3564 = vweird.f32 %v3558
    %vm3565 = vmor %vm3563, %vm3564
    %v3566 = vsel %vm3565, %v3558, %v3562
    %v3567 = vand.u32 2147483647, %v3541
    %vm3568 = vcmp.eq.f32.partialorder %v3567, 8.507059e+37
    %v3569 = vand.u32 %v3541, 2147483648
    %v3570 = vor.u32 1.1754944e-38, %v3569
    %v3571 = vsel %vm3568, %v3570, %v3566
    %v3572 = vmul.f32 1.0, %v3571
    %v3573 = vrcp.pop %v3542
    %v3574 = vmul.f32 %v3542, %v3573
    %v3575 = vsub.f32 1.0, %v3574
    %v3576 = vmul.f32 %v3573, %v3575
    %v3577 = vadd.f32 %v3573, %v3576
    %vm3578 = vweird.f32 %v3542
    %vm3579 = vweird.f32 %v3573
    %vm3580 = vmor %vm3578, %vm3579
    %v3581 = vsel %vm3580, %v3573, %v3577
    %v3582 = vand.u32 2147483647, %v3542
    %vm3583 = vcmp.eq.f32.partialorder %v3582, 8.507059e+37
    %v3584 = vand.u32 %v3542, 2147483648
    %v3585 = vor.u32 1.1754944e-38, %v3584
    %v3586 = vsel %vm3583, %v3585, %v3581
    %v3587 = vmul.f32 1.0, %v3586
    %v3588 = vtanh.pop %v3529
    %v3589 = vmul.f32 %v3572, %v2994
    %v3590 = vmul.f32 %v3557, %v3588
    %v3591 = vadd.f32 %v3589, %v3590
    %v3592 = vtanh.pop %v3591
    %v3593 = vmul.f32 %v3587, %v3592
    %v3594 = vld [vmem:[#allocation2 + $0xc0] sm:$0xff]
    %v3595 = vld [vmem:[#allocation2 + $0xc8] sm:$0xff]
    %v3596 = vld [vmem:[#allocation2 + $0xd0] sm:$0xff]
    %v3597 = vld [vmem:[#allocation2 + $0xd8] sm:$0xff]
    %3598 = vmatpush.msra.mxu0 %v405
    %3599 = vmatpush.msra.mxu0 %v401
    %3600 = vmatpush.msra.mxu0 %v397
    %3601 = vmatpush.msra.mxu0 %v393
    %3602 = vmatpush.msra.mxu0 %v389
    %3603 = vmatpush.msra.mxu0 %v385
    %3604 = vmatpush.msra.mxu0 %v381
    %3605 = vmatpush.msra.mxu0 %v377
    %3606 = vmatpush.msra.mxu0 %v373
    %3607 = vmatpush.msra.mxu0 %v369
    %3608 = vmatpush.msra.mxu0 %v365
    %3609 = vmatpush.msra.mxu0 %v361
    %3610 = vmatpush.msra.mxu0 %v357
    %3611 = vmatpush.msra.mxu0 %v353
    %3612 = vmatpush.msra.mxu0 %v349
    %3613 = vmatpush.msra.mxu0 %v345
    %3614 = vmatmul.f32.gmra.mxu0 %v3147
    %v3615 = vpop.f32.mrf.mxu0
    %v3616 = vadd.f32 0.0, %v3615
    %3617 = vdwg.mxu0
    %3618 = vmatpush.msra.mxu0 %v406
    %3619 = vmatpush.msra.mxu0 %v402
    %3620 = vmatpush.msra.mxu0 %v398
    %3621 = vmatpush.msra.mxu0 %v394
    %3622 = vmatpush.msra.mxu0 %v390
    %3623 = vmatpush.msra.mxu0 %v386
    %3624 = vmatpush.msra.mxu0 %v382
    %3625 = vmatpush.msra.mxu0 %v378
    %3626 = vmatpush.msra.mxu0 %v374
    %3627 = vmatpush.msra.mxu0 %v370
    %3628 = vmatpush.msra.mxu0 %v366
    %3629 = vmatpush.msra.mxu0 %v362
    %3630 = vmatpush.msra.mxu0 %v358
    %3631 = vmatpush.msra.mxu0 %v354
    %3632 = vmatpush.msra.mxu0 %v350
    %3633 = vmatpush.msra.mxu0 %v346
    %3634 = vmatmul.f32.gmra.mxu0 %v3147
    %v3635 = vpop.f32.mrf.mxu0
    %v3636 = vadd.f32 0.0, %v3635
    %3637 = vdwg.mxu0
    %3638 = vmatpush.msra.mxu0 %v407
    %3639 = vmatpush.msra.mxu0 %v403
    %3640 = vmatpush.msra.mxu0 %v399
    %3641 = vmatpush.msra.mxu0 %v395
    %3642 = vmatpush.msra.mxu0 %v391
    %3643 = vmatpush.msra.mxu0 %v387
    %3644 = vmatpush.msra.mxu0 %v383
    %3645 = vmatpush.msra.mxu0 %v379
    %3646 = vmatpush.msra.mxu0 %v375
    %3647 = vmatpush.msra.mxu0 %v371
    %3648 = vmatpush.msra.mxu0 %v367
    %3649 = vmatpush.msra.mxu0 %v363
    %3650 = vmatpush.msra.mxu0 %v359
    %3651 = vmatpush.msra.mxu0 %v355
    %3652 = vmatpush.msra.mxu0 %v351
    %3653 = vmatpush.msra.mxu0 %v347
    %3654 = vmatmul.f32.gmra.mxu0 %v3147
    %v3655 = vpop.f32.mrf.mxu0
    %v3656 = vadd.f32 0.0, %v3655
    %3657 = vdwg.mxu0
    %3658 = vmatpush.msra.mxu0 %v408
    %3659 = vmatpush.msra.mxu0 %v404
    %3660 = vmatpush.msra.mxu0 %v400
    %3661 = vmatpush.msra.mxu0 %v396
    %3662 = vmatpush.msra.mxu0 %v392
    %3663 = vmatpush.msra.mxu0 %v388
    %3664 = vmatpush.msra.mxu0 %v384
    %3665 = vmatpush.msra.mxu0 %v380
    %3666 = vmatpush.msra.mxu0 %v376
    %3667 = vmatpush.msra.mxu0 %v372
    %3668 = vmatpush.msra.mxu0 %v368
    %3669 = vmatpush.msra.mxu0 %v364
    %3670 = vmatpush.msra.mxu0 %v360
    %3671 = vmatpush.msra.mxu0 %v356
    %3672 = vmatpush.msra.mxu0 %v352
    %3673 = vmatpush.msra.mxu0 %v348
    %3674 = vmatmul.f32.gmra.mxu0 %v3147
    %v3675 = vpop.f32.mrf.mxu0
    %v3676 = vadd.f32 0.0, %v3675
    %3677 = vdwg.mxu0
    %v3678 = vadd.f32 %v3594, %v3616
    %v3679 = vadd.f32 %v3595, %v3636
    %v3680 = vadd.f32 %v3596, %v3656
    %v3681 = vadd.f32 %v3597, %v3676
    %v3682 = vxor.u32 %v3678, 2147483648
    %v3683 = vxor.u32 %v3679, 2147483648
    %v3684 = vxor.u32 %v3680, 2147483648
    %v3685 = vmul.f32 %v3682, 1.442695
    %v3686 = vpow.pop %v3685
    %v3687 = vmul.f32 %v3683, 1.442695
    %v3688 = vpow.pop %v3687
    %v3689 = vmul.f32 %v3684, 1.442695
    %v3690 = vpow.pop %v3689
    %v3691 = vadd.f32 %v3686, 1.0
    %v3692 = vadd.f32 %v3688, 1.0
    %v3693 = vadd.f32 %v3690, 1.0
    %v3694 = vrcp.pop %v3691
    %v3695 = vmul.f32 %v3691, %v3694
    %v3696 = vsub.f32 1.0, %v3695
    %v3697 = vmul.f32 %v3694, %v3696
    %v3698 = vadd.f32 %v3694, %v3697
    %vm3699 = vweird.f32 %v3691
    %vm3700 = vweird.f32 %v3694
    %vm3701 = vmor %vm3699, %vm3700
    %v3702 = vsel %vm3701, %v3694, %v3698
    %v3703 = vand.u32 2147483647, %v3691
    %vm3704 = vcmp.eq.f32.partialorder %v3703, 8.507059e+37
    %v3705 = vand.u32 %v3691, 2147483648
    %v3706 = vor.u32 1.1754944e-38, %v3705
    %v3707 = vsel %vm3704, %v3706, %v3702
    %v3708 = vmul.f32 1.0, %v3707
    %v3709 = vrcp.pop %v3692
    %v3710 = vmul.f32 %v3692, %v3709
    %v3711 = vsub.f32 1.0, %v3710
    %v3712 = vmul.f32 %v3709, %v3711
    %v3713 = vadd.f32 %v3709, %v3712
    %vm3714 = vweird.f32 %v3692
    %vm3715 = vweird.f32 %v3709
    %vm3716 = vmor %vm3714, %vm3715
    %v3717 = vsel %vm3716, %v3709, %v3713
    %v3718 = vand.u32 2147483647, %v3692
    %vm3719 = vcmp.eq.f32.partialorder %v3718, 8.507059e+37
    %v3720 = vand.u32 %v3692, 2147483648
    %v3721 = vor.u32 1.1754944e-38, %v3720
    %v3722 = vsel %vm3719, %v3721, %v3717
    %v3723 = vmul.f32 1.0, %v3722
    %v3724 = vrcp.pop %v3693
    %v3725 = vmul.f32 %v3693, %v3724
    %v3726 = vsub.f32 1.0, %v3725
    %v3727 = vmul.f32 %v3724, %v3726
    %v3728 = vadd.f32 %v3724, %v3727
    %vm3729 = vweird.f32 %v3693
    %vm3730 = vweird.f32 %v3724
    %vm3731 = vmor %vm3729, %vm3730
    %v3732 = vsel %vm3731, %v3724, %v3728
    %v3733 = vand.u32 2147483647, %v3693
    %vm3734 = vcmp.eq.f32.partialorder %v3733, 8.507059e+37
    %v3735 = vand.u32 %v3693, 2147483648
    %v3736 = vor.u32 1.1754944e-38, %v3735
    %v3737 = vsel %vm3734, %v3736, %v3732
    %v3738 = vmul.f32 1.0, %v3737
    %v3739 = vtanh.pop %v3681
    %v3740 = vmul.f32 %v3723, %v3145
    %v3741 = vmul.f32 %v3708, %v3739
    %v3742 = vadd.f32 %v3740, %v3741
    %v3743 = vtanh.pop %v3742
    %v3744 = vmul.f32 %v3738, %v3743
    %3745 = vmatpush.msra.mxu0 %v767
    %3746 = vmatpush.msra.mxu0 %v763
    %3747 = vmatpush.msra.mxu0 %v759
    %3748 = vmatpush.msra.mxu0 %v755
    %3749 = vmatpush.msra.mxu0 %v751
    %3750 = vmatpush.msra.mxu0 %v747
    %3751 = vmatpush.msra.mxu0 %v743
    %3752 = vmatpush.msra.mxu0 %v739
    %3753 = vmatpush.msra.mxu0 %v735
    %3754 = vmatpush.msra.mxu0 %v731
    %3755 = vmatpush.msra.mxu0 %v727
    %3756 = vmatpush.msra.mxu0 %v723
    %3757 = vmatpush.msra.mxu0 %v719
    %3758 = vmatpush.msra.mxu0 %v715
    %3759 = vmatpush.msra.mxu0 %v711
    %3760 = vmatpush.msra.mxu0 %v707
    %3761 = vmatmul.f32.gmra.mxu0 %v3147
    %v3762 = vpop.f32.mrf.mxu0
    %v3763 = vadd.f32 %v837, %v3762
    %3764 = vdwg.mxu0
    %3765 = vmatpush.msra.mxu0 %v831
    %3766 = vmatpush.msra.mxu0 %v827
    %3767 = vmatpush.msra.mxu0 %v823
    %3768 = vmatpush.msra.mxu0 %v819
    %3769 = vmatpush.msra.mxu0 %v815
    %3770 = vmatpush.msra.mxu0 %v811
    %3771 = vmatpush.msra.mxu0 %v807
    %3772 = vmatpush.msra.mxu0 %v803
    %3773 = vmatpush.msra.mxu0 %v799
    %3774 = vmatpush.msra.mxu0 %v795
    %3775 = vmatpush.msra.mxu0 %v791
    %3776 = vmatpush.msra.mxu0 %v787
    %3777 = vmatpush.msra.mxu0 %v783
    %3778 = vmatpush.msra.mxu0 %v779
    %3779 = vmatpush.msra.mxu0 %v775
    %3780 = vmatpush.msra.mxu0 %v771
    %3781 = vmatmul.f32.gmra.mxu0 %v3370
    %v3782 = vpop.f32.mrf.mxu0
    %v3783 = vadd.f32 %v3763, %v3782
    %3784 = vdwg.mxu0
    %3785 = vmatpush.msra.mxu0 %v768
    %3786 = vmatpush.msra.mxu0 %v764
    %3787 = vmatpush.msra.mxu0 %v760
    %3788 = vmatpush.msra.mxu0 %v756
    %3789 = vmatpush.msra.mxu0 %v752
    %3790 = vmatpush.msra.mxu0 %v748
    %3791 = vmatpush.msra.mxu0 %v744
    %3792 = vmatpush.msra.mxu0 %v740
    %3793 = vmatpush.msra.mxu0 %v736
    %3794 = vmatpush.msra.mxu0 %v732
    %3795 = vmatpush.msra.mxu0 %v728
    %3796 = vmatpush.msra.mxu0 %v724
    %3797 = vmatpush.msra.mxu0 %v720
    %3798 = vmatpush.msra.mxu0 %v716
    %3799 = vmatpush.msra.mxu0 %v712
    %3800 = vmatpush.msra.mxu0 %v708
    %3801 = vmatmul.f32.gmra.mxu0 %v3147
    %v3802 = vpop.f32.mrf.mxu0
    %v3803 = vadd.f32 %v838, %v3802
    %3804 = vdwg.mxu0
    %3805 = vmatpush.msra.mxu0 %v832
    %3806 = vmatpush.msra.mxu0 %v828
    %3807 = vmatpush.msra.mxu0 %v824
    %3808 = vmatpush.msra.mxu0 %v820
    %3809 = vmatpush.msra.mxu0 %v816
    %3810 = vmatpush.msra.mxu0 %v812
    %3811 = vmatpush.msra.mxu0 %v808
    %3812 = vmatpush.msra.mxu0 %v804
    %3813 = vmatpush.msra.mxu0 %v800
    %3814 = vmatpush.msra.mxu0 %v796
    %3815 = vmatpush.msra.mxu0 %v792
    %3816 = vmatpush.msra.mxu0 %v788
    %3817 = vmatpush.msra.mxu0 %v784
    %3818 = vmatpush.msra.mxu0 %v780
    %3819 = vmatpush.msra.mxu0 %v776
    %3820 = vmatpush.msra.mxu0 %v772
    %3821 = vmatmul.f32.gmra.mxu0 %v3370
    %v3822 = vpop.f32.mrf.mxu0
    %v3823 = vadd.f32 %v3803, %v3822
    %3824 = vdwg.mxu0
    %3825 = vmatpush.msra.mxu0 %v769
    %3826 = vmatpush.msra.mxu0 %v765
    %3827 = vmatpush.msra.mxu0 %v761
    %3828 = vmatpush.msra.mxu0 %v757
    %3829 = vmatpush.msra.mxu0 %v753
    %3830 = vmatpush.msra.mxu0 %v749
    %3831 = vmatpush.msra.mxu0 %v745
    %3832 = vmatpush.msra.mxu0 %v741
    %3833 = vmatpush.msra.mxu0 %v737
    %3834 = vmatpush.msra.mxu0 %v733
    %3835 = vmatpush.msra.mxu0 %v729
    %3836 = vmatpush.msra.mxu0 %v725
    %3837 = vmatpush.msra.mxu0 %v721
    %3838 = vmatpush.msra.mxu0 %v717
    %3839 = vmatpush.msra.mxu0 %v713
    %3840 = vmatpush.msra.mxu0 %v709
    %3841 = vmatmul.f32.gmra.mxu0 %v3147
    %v3842 = vpop.f32.mrf.mxu0
    %v3843 = vadd.f32 %v839, %v3842
    %3844 = vdwg.mxu0
    %3845 = vmatpush.msra.mxu0 %v833
    %3846 = vmatpush.msra.mxu0 %v829
    %3847 = vmatpush.msra.mxu0 %v825
    %3848 = vmatpush.msra.mxu0 %v821
    %3849 = vmatpush.msra.mxu0 %v817
    %3850 = vmatpush.msra.mxu0 %v813
    %3851 = vmatpush.msra.mxu0 %v809
    %3852 = vmatpush.msra.mxu0 %v805
    %3853 = vmatpush.msra.mxu0 %v801
    %3854 = vmatpush.msra.mxu0 %v797
    %3855 = vmatpush.msra.mxu0 %v793
    %3856 = vmatpush.msra.mxu0 %v789
    %3857 = vmatpush.msra.mxu0 %v785
    %3858 = vmatpush.msra.mxu0 %v781
    %3859 = vmatpush.msra.mxu0 %v777
    %3860 = vmatpush.msra.mxu0 %v773
    %3861 = vmatmul.f32.gmra.mxu0 %v3370
    %v3862 = vpop.f32.mrf.mxu0
    %v3863 = vadd.f32 %v3843, %v3862
    %3864 = vdwg.mxu0
    %3865 = vmatpush.msra.mxu0 %v770
    %3866 = vmatpush.msra.mxu0 %v766
    %3867 = vmatpush.msra.mxu0 %v762
    %3868 = vmatpush.msra.mxu0 %v758
    %3869 = vmatpush.msra.mxu0 %v754
    %3870 = vmatpush.msra.mxu0 %v750
    %3871 = vmatpush.msra.mxu0 %v746
    %3872 = vmatpush.msra.mxu0 %v742
    %3873 = vmatpush.msra.mxu0 %v738
    %3874 = vmatpush.msra.mxu0 %v734
    %3875 = vmatpush.msra.mxu0 %v730
    %3876 = vmatpush.msra.mxu0 %v726
    %3877 = vmatpush.msra.mxu0 %v722
    %3878 = vmatpush.msra.mxu0 %v718
    %3879 = vmatpush.msra.mxu0 %v714
    %3880 = vmatpush.msra.mxu0 %v710
    %3881 = vmatmul.f32.gmra.mxu0 %v3147
    %v3882 = vpop.f32.mrf.mxu0
    %v3883 = vadd.f32 %v840, %v3882
    %3884 = vdwg.mxu0
    %3885 = vmatpush.msra.mxu0 %v834
    %3886 = vmatpush.msra.mxu0 %v830
    %3887 = vmatpush.msra.mxu0 %v826
    %3888 = vmatpush.msra.mxu0 %v822
    %3889 = vmatpush.msra.mxu0 %v818
    %3890 = vmatpush.msra.mxu0 %v814
    %3891 = vmatpush.msra.mxu0 %v810
    %3892 = vmatpush.msra.mxu0 %v806
    %3893 = vmatpush.msra.mxu0 %v802
    %3894 = vmatpush.msra.mxu0 %v798
    %3895 = vmatpush.msra.mxu0 %v794
    %3896 = vmatpush.msra.mxu0 %v790
    %3897 = vmatpush.msra.mxu0 %v786
    %3898 = vmatpush.msra.mxu0 %v782
    %3899 = vmatpush.msra.mxu0 %v778
    %3900 = vmatpush.msra.mxu0 %v774
    %3901 = vmatmul.f32.gmra.mxu0 %v3370
    %v3902 = vpop.f32.mrf.mxu0
    %v3903 = vadd.f32 %v3883, %v3902
    %3904 = vdwg.mxu0
    %v3905 = vxor.u32 %v3783, 2147483648
    %v3906 = vxor.u32 %v3823, 2147483648
    %v3907 = vxor.u32 %v3863, 2147483648
    %v3908 = vmul.f32 %v3905, 1.442695
    %v3909 = vpow.pop %v3908
    %v3910 = vmul.f32 %v3906, 1.442695
    %v3911 = vpow.pop %v3910
    %v3912 = vmul.f32 %v3907, 1.442695
    %v3913 = vpow.pop %v3912
    %v3914 = vadd.f32 %v3909, 1.0
    %v3915 = vadd.f32 %v3911, 1.0
    %v3916 = vadd.f32 %v3913, 1.0
    %v3917 = vrcp.pop %v3914
    %v3918 = vmul.f32 %v3914, %v3917
    %v3919 = vsub.f32 1.0, %v3918
    %v3920 = vmul.f32 %v3917, %v3919
    %v3921 = vadd.f32 %v3917, %v3920
    %vm3922 = vweird.f32 %v3914
    %vm3923 = vweird.f32 %v3917
    %vm3924 = vmor %vm3922, %vm3923
    %v3925 = vsel %vm3924, %v3917, %v3921
    %v3926 = vand.u32 2147483647, %v3914
    %vm3927 = vcmp.eq.f32.partialorder %v3926, 8.507059e+37
    %v3928 = vand.u32 %v3914, 2147483648
    %v3929 = vor.u32 1.1754944e-38, %v3928
    %v3930 = vsel %vm3927, %v3929, %v3925
    %v3931 = vmul.f32 1.0, %v3930
    %v3932 = vrcp.pop %v3915
    %v3933 = vmul.f32 %v3915, %v3932
    %v3934 = vsub.f32 1.0, %v3933
    %v3935 = vmul.f32 %v3932, %v3934
    %v3936 = vadd.f32 %v3932, %v3935
    %vm3937 = vweird.f32 %v3915
    %vm3938 = vweird.f32 %v3932
    %vm3939 = vmor %vm3937, %vm3938
    %v3940 = vsel %vm3939, %v3932, %v3936
    %v3941 = vand.u32 2147483647, %v3915
    %vm3942 = vcmp.eq.f32.partialorder %v3941, 8.507059e+37
    %v3943 = vand.u32 %v3915, 2147483648
    %v3944 = vor.u32 1.1754944e-38, %v3943
    %v3945 = vsel %vm3942, %v3944, %v3940
    %v3946 = vmul.f32 1.0, %v3945
    %v3947 = vrcp.pop %v3916
    %v3948 = vmul.f32 %v3916, %v3947
    %v3949 = vsub.f32 1.0, %v3948
    %v3950 = vmul.f32 %v3947, %v3949
    %v3951 = vadd.f32 %v3947, %v3950
    %vm3952 = vweird.f32 %v3916
    %vm3953 = vweird.f32 %v3947
    %vm3954 = vmor %vm3952, %vm3953
    %v3955 = vsel %vm3954, %v3947, %v3951
    %v3956 = vand.u32 2147483647, %v3916
    %vm3957 = vcmp.eq.f32.partialorder %v3956, 8.507059e+37
    %v3958 = vand.u32 %v3916, 2147483648
    %v3959 = vor.u32 1.1754944e-38, %v3958
    %v3960 = vsel %vm3957, %v3959, %v3955
    %v3961 = vmul.f32 1.0, %v3960
    %v3962 = vtanh.pop %v3903
    %v3963 = vmul.f32 %v3946, %v3368
    %v3964 = vmul.f32 %v3931, %v3962
    %v3965 = vadd.f32 %v3963, %v3964
    %v3966 = vtanh.pop %v3965
    %v3967 = vmul.f32 %v3961, %v3966
    %3968 = vmatpush.msra.mxu0 %v1502
    %3969 = vmatpush.msra.mxu0 %v1498
    %3970 = vmatpush.msra.mxu0 %v1494
    %3971 = vmatpush.msra.mxu0 %v1490
    %3972 = vmatpush.msra.mxu0 %v1486
    %3973 = vmatpush.msra.mxu0 %v1482
    %3974 = vmatpush.msra.mxu0 %v1478
    %3975 = vmatpush.msra.mxu0 %v1474
    %3976 = vmatpush.msra.mxu0 %v1470
    %3977 = vmatpush.msra.mxu0 %v1466
    %3978 = vmatpush.msra.mxu0 %v1462
    %3979 = vmatpush.msra.mxu0 %v1458
    %3980 = vmatpush.msra.mxu0 %v1454
    %3981 = vmatpush.msra.mxu0 %v1450
    %3982 = vmatpush.msra.mxu0 %v1446
    %3983 = vmatpush.msra.mxu0 %v1442
    %3984 = vmatmul.f32.gmra.mxu0 %v3370
    %v3985 = vpop.f32.mrf.mxu0
    %v3986 = vadd.f32 %v1572, %v3985
    %3987 = vdwg.mxu0
    %3988 = vmatpush.msra.mxu0 %v1566
    %3989 = vmatpush.msra.mxu0 %v1562
    %3990 = vmatpush.msra.mxu0 %v1558
    %3991 = vmatpush.msra.mxu0 %v1554
    %3992 = vmatpush.msra.mxu0 %v1550
    %3993 = vmatpush.msra.mxu0 %v1546
    %3994 = vmatpush.msra.mxu0 %v1542
    %3995 = vmatpush.msra.mxu0 %v1538
    %3996 = vmatpush.msra.mxu0 %v1534
    %3997 = vmatpush.msra.mxu0 %v1530
    %3998 = vmatpush.msra.mxu0 %v1526
    %3999 = vmatpush.msra.mxu0 %v1522
    %4000 = vmatpush.msra.mxu0 %v1518
    %4001 = vmatpush.msra.mxu0 %v1514
    %4002 = vmatpush.msra.mxu0 %v1510
    %4003 = vmatpush.msra.mxu0 %v1506
    %4004 = vmatmul.f32.gmra.mxu0 %v3593
    %v4005 = vpop.f32.mrf.mxu0
    %v4006 = vadd.f32 %v3986, %v4005
    %4007 = vdwg.mxu0
    %4008 = vmatpush.msra.mxu0 %v1503
    %4009 = vmatpush.msra.mxu0 %v1499
    %4010 = vmatpush.msra.mxu0 %v1495
    %4011 = vmatpush.msra.mxu0 %v1491
    %4012 = vmatpush.msra.mxu0 %v1487
    %4013 = vmatpush.msra.mxu0 %v1483
    %4014 = vmatpush.msra.mxu0 %v1479
    %4015 = vmatpush.msra.mxu0 %v1475
    %4016 = vmatpush.msra.mxu0 %v1471
    %4017 = vmatpush.msra.mxu0 %v1467
    %4018 = vmatpush.msra.mxu0 %v1463
    %4019 = vmatpush.msra.mxu0 %v1459
    %4020 = vmatpush.msra.mxu0 %v1455
    %4021 = vmatpush.msra.mxu0 %v1451
    %4022 = vmatpush.msra.mxu0 %v1447
    %4023 = vmatpush.msra.mxu0 %v1443
    %4024 = vmatmul.f32.gmra.mxu0 %v3370
    %v4025 = vpop.f32.mrf.mxu0
    %v4026 = vadd.f32 %v1573, %v4025
    %4027 = vdwg.mxu0
    %4028 = vmatpush.msra.mxu0 %v1567
    %4029 = vmatpush.msra.mxu0 %v1563
    %4030 = vmatpush.msra.mxu0 %v1559
    %4031 = vmatpush.msra.mxu0 %v1555
    %4032 = vmatpush.msra.mxu0 %v1551
    %4033 = vmatpush.msra.mxu0 %v1547
    %4034 = vmatpush.msra.mxu0 %v1543
    %4035 = vmatpush.msra.mxu0 %v1539
    %4036 = vmatpush.msra.mxu0 %v1535
    %4037 = vmatpush.msra.mxu0 %v1531
    %4038 = vmatpush.msra.mxu0 %v1527
    %4039 = vmatpush.msra.mxu0 %v1523
    %4040 = vmatpush.msra.mxu0 %v1519
    %4041 = vmatpush.msra.mxu0 %v1515
    %4042 = vmatpush.msra.mxu0 %v1511
    %4043 = vmatpush.msra.mxu0 %v1507
    %4044 = vmatmul.f32.gmra.mxu0 %v3593
    %v4045 = vpop.f32.mrf.mxu0
    %v4046 = vadd.f32 %v4026, %v4045
    %4047 = vdwg.mxu0
    %4048 = vmatpush.msra.mxu0 %v1504
    %4049 = vmatpush.msra.mxu0 %v1500
    %4050 = vmatpush.msra.mxu0 %v1496
    %4051 = vmatpush.msra.mxu0 %v1492
    %4052 = vmatpush.msra.mxu0 %v1488
    %4053 = vmatpush.msra.mxu0 %v1484
    %4054 = vmatpush.msra.mxu0 %v1480
    %4055 = vmatpush.msra.mxu0 %v1476
    %4056 = vmatpush.msra.mxu0 %v1472
    %4057 = vmatpush.msra.mxu0 %v1468
    %4058 = vmatpush.msra.mxu0 %v1464
    %4059 = vmatpush.msra.mxu0 %v1460
    %4060 = vmatpush.msra.mxu0 %v1456
    %4061 = vmatpush.msra.mxu0 %v1452
    %4062 = vmatpush.msra.mxu0 %v1448
    %4063 = vmatpush.msra.mxu0 %v1444
    %4064 = vmatmul.f32.gmra.mxu0 %v3370
    %v4065 = vpop.f32.mrf.mxu0
    %v4066 = vadd.f32 %v1574, %v4065
    %4067 = vdwg.mxu0
    %4068 = vmatpush.msra.mxu0 %v1568
    %4069 = vmatpush.msra.mxu0 %v1564
    %4070 = vmatpush.msra.mxu0 %v1560
    %4071 = vmatpush.msra.mxu0 %v1556
    %4072 = vmatpush.msra.mxu0 %v1552
    %4073 = vmatpush.msra.mxu0 %v1548
    %4074 = vmatpush.msra.mxu0 %v1544
    %4075 = vmatpush.msra.mxu0 %v1540
    %4076 = vmatpush.msra.mxu0 %v1536
    %4077 = vmatpush.msra.mxu0 %v1532
    %4078 = vmatpush.msra.mxu0 %v1528
    %4079 = vmatpush.msra.mxu0 %v1524
    %4080 = vmatpush.msra.mxu0 %v1520
    %4081 = vmatpush.msra.mxu0 %v1516
    %4082 = vmatpush.msra.mxu0 %v1512
    %4083 = vmatpush.msra.mxu0 %v1508
    %4084 = vmatmul.f32.gmra.mxu0 %v3593
    %v4085 = vpop.f32.mrf.mxu0
    %v4086 = vadd.f32 %v4066, %v4085
    %4087 = vdwg.mxu0
    %4088 = vmatpush.msra.mxu0 %v1505
    %4089 = vmatpush.msra.mxu0 %v1501
    %4090 = vmatpush.msra.mxu0 %v1497
    %4091 = vmatpush.msra.mxu0 %v1493
    %4092 = vmatpush.msra.mxu0 %v1489
    %4093 = vmatpush.msra.mxu0 %v1485
    %4094 = vmatpush.msra.mxu0 %v1481
    %4095 = vmatpush.msra.mxu0 %v1477
    %4096 = vmatpush.msra.mxu0 %v1473
    %4097 = vmatpush.msra.mxu0 %v1469
    %4098 = vmatpush.msra.mxu0 %v1465
    %4099 = vmatpush.msra.mxu0 %v1461
    %4100 = vmatpush.msra.mxu0 %v1457
    %4101 = vmatpush.msra.mxu0 %v1453
    %4102 = vmatpush.msra.mxu0 %v1449
    %4103 = vmatpush.msra.mxu0 %v1445
    %4104 = vmatmul.f32.gmra.mxu0 %v3370
    %v4105 = vpop.f32.mrf.mxu0
    %v4106 = vadd.f32 %v1575, %v4105
    %4107 = vdwg.mxu0
    %4108 = vmatpush.msra.mxu0 %v1569
    %4109 = vmatpush.msra.mxu0 %v1565
    %4110 = vmatpush.msra.mxu0 %v1561
    %4111 = vmatpush.msra.mxu0 %v1557
    %4112 = vmatpush.msra.mxu0 %v1553
    %4113 = vmatpush.msra.mxu0 %v1549
    %4114 = vmatpush.msra.mxu0 %v1545
    %4115 = vmatpush.msra.mxu0 %v1541
    %4116 = vmatpush.msra.mxu0 %v1537
    %4117 = vmatpush.msra.mxu0 %v1533
    %4118 = vmatpush.msra.mxu0 %v1529
    %4119 = vmatpush.msra.mxu0 %v1525
    %4120 = vmatpush.msra.mxu0 %v1521
    %4121 = vmatpush.msra.mxu0 %v1517
    %4122 = vmatpush.msra.mxu0 %v1513
    %4123 = vmatpush.msra.mxu0 %v1509
    %4124 = vmatmul.f32.gmra.mxu0 %v3593
    %v4125 = vpop.f32.mrf.mxu0
    %v4126 = vadd.f32 %v4106, %v4125
    %4127 = vdwg.mxu0
    %v4128 = vxor.u32 %v4006, 2147483648
    %v4129 = vxor.u32 %v4046, 2147483648
    %v4130 = vxor.u32 %v4086, 2147483648
    %v4131 = vmul.f32 %v4128, 1.442695
    %v4132 = vpow.pop %v4131
    %v4133 = vmul.f32 %v4129, 1.442695
    %v4134 = vpow.pop %v4133
    %v4135 = vmul.f32 %v4130, 1.442695
    %v4136 = vpow.pop %v4135
    %v4137 = vadd.f32 %v4132, 1.0
    %v4138 = vadd.f32 %v4134, 1.0
    %v4139 = vadd.f32 %v4136, 1.0
    %v4140 = vrcp.pop %v4137
    %v4141 = vmul.f32 %v4137, %v4140
    %v4142 = vsub.f32 1.0, %v4141
    %v4143 = vmul.f32 %v4140, %v4142
    %v4144 = vadd.f32 %v4140, %v4143
    %vm4145 = vweird.f32 %v4137
    %vm4146 = vweird.f32 %v4140
    %vm4147 = vmor %vm4145, %vm4146
    %v4148 = vsel %vm4147, %v4140, %v4144
    %v4149 = vand.u32 2147483647, %v4137
    %vm4150 = vcmp.eq.f32.partialorder %v4149, 8.507059e+37
    %v4151 = vand.u32 %v4137, 2147483648
    %v4152 = vor.u32 1.1754944e-38, %v4151
    %v4153 = vsel %vm4150, %v4152, %v4148
    %v4154 = vmul.f32 1.0, %v4153
    %v4155 = vrcp.pop %v4138
    %v4156 = vmul.f32 %v4138, %v4155
    %v4157 = vsub.f32 1.0, %v4156
    %v4158 = vmul.f32 %v4155, %v4157
    %v4159 = vadd.f32 %v4155, %v4158
    %vm4160 = vweird.f32 %v4138
    %vm4161 = vweird.f32 %v4155
    %vm4162 = vmor %vm4160, %vm4161
    %v4163 = vsel %vm4162, %v4155, %v4159
    %v4164 = vand.u32 2147483647, %v4138
    %vm4165 = vcmp.eq.f32.partialorder %v4164, 8.507059e+37
    %v4166 = vand.u32 %v4138, 2147483648
    %v4167 = vor.u32 1.1754944e-38, %v4166
    %v4168 = vsel %vm4165, %v4167, %v4163
    %v4169 = vmul.f32 1.0, %v4168
    %v4170 = vrcp.pop %v4139
    %v4171 = vmul.f32 %v4139, %v4170
    %v4172 = vsub.f32 1.0, %v4171
    %v4173 = vmul.f32 %v4170, %v4172
    %v4174 = vadd.f32 %v4170, %v4173
    %vm4175 = vweird.f32 %v4139
    %vm4176 = vweird.f32 %v4170
    %vm4177 = vmor %vm4175, %vm4176
    %v4178 = vsel %vm4177, %v4170, %v4174
    %v4179 = vand.u32 2147483647, %v4139
    %vm4180 = vcmp.eq.f32.partialorder %v4179, 8.507059e+37
    %v4181 = vand.u32 %v4139, 2147483648
    %v4182 = vor.u32 1.1754944e-38, %v4181
    %v4183 = vsel %vm4180, %v4182, %v4178
    %v4184 = vmul.f32 1.0, %v4183
    %v4185 = vtanh.pop %v4126
    %v4186 = vmul.f32 %v4169, %v3591
    %v4187 = vmul.f32 %v4154, %v4185
    %v4188 = vadd.f32 %v4186, %v4187
    %v4189 = vtanh.pop %v4188
    %v4190 = vmul.f32 %v4184, %v4189
    %v4191 = vld [vmem:[#allocation2 + $0xe0] sm:$0xff]
    %v4192 = vld [vmem:[#allocation2 + $0xe8] sm:$0xff]
    %v4193 = vld [vmem:[#allocation2 + $0xf0] sm:$0xff]
    %v4194 = vld [vmem:[#allocation2 + $0xf8] sm:$0xff]
    %4195 = vmatpush.msra.mxu0 %v405
    %4196 = vmatpush.msra.mxu0 %v401
    %4197 = vmatpush.msra.mxu0 %v397
    %4198 = vmatpush.msra.mxu0 %v393
    %4199 = vmatpush.msra.mxu0 %v389
    %4200 = vmatpush.msra.mxu0 %v385
    %4201 = vmatpush.msra.mxu0 %v381
    %4202 = vmatpush.msra.mxu0 %v377
    %4203 = vmatpush.msra.mxu0 %v373
    %4204 = vmatpush.msra.mxu0 %v369
    %4205 = vmatpush.msra.mxu0 %v365
    %4206 = vmatpush.msra.mxu0 %v361
    %4207 = vmatpush.msra.mxu0 %v357
    %4208 = vmatpush.msra.mxu0 %v353
    %4209 = vmatpush.msra.mxu0 %v349
    %4210 = vmatpush.msra.mxu0 %v345
    %4211 = vmatmul.f32.gmra.mxu0 %v3744
    %v4212 = vpop.f32.mrf.mxu0
    %v4213 = vadd.f32 0.0, %v4212
    %4214 = vdwg.mxu0
    %4215 = vmatpush.msra.mxu0 %v406
    %4216 = vmatpush.msra.mxu0 %v402
    %4217 = vmatpush.msra.mxu0 %v398
    %4218 = vmatpush.msra.mxu0 %v394
    %4219 = vmatpush.msra.mxu0 %v390
    %4220 = vmatpush.msra.mxu0 %v386
    %4221 = vmatpush.msra.mxu0 %v382
    %4222 = vmatpush.msra.mxu0 %v378
    %4223 = vmatpush.msra.mxu0 %v374
    %4224 = vmatpush.msra.mxu0 %v370
    %4225 = vmatpush.msra.mxu0 %v366
    %4226 = vmatpush.msra.mxu0 %v362
    %4227 = vmatpush.msra.mxu0 %v358
    %4228 = vmatpush.msra.mxu0 %v354
    %4229 = vmatpush.msra.mxu0 %v350
    %4230 = vmatpush.msra.mxu0 %v346
    %4231 = vmatmul.f32.gmra.mxu0 %v3744
    %v4232 = vpop.f32.mrf.mxu0
    %v4233 = vadd.f32 0.0, %v4232
    %4234 = vdwg.mxu0
    %4235 = vmatpush.msra.mxu0 %v407
    %4236 = vmatpush.msra.mxu0 %v403
    %4237 = vmatpush.msra.mxu0 %v399
    %4238 = vmatpush.msra.mxu0 %v395
    %4239 = vmatpush.msra.mxu0 %v391
    %4240 = vmatpush.msra.mxu0 %v387
    %4241 = vmatpush.msra.mxu0 %v383
    %4242 = vmatpush.msra.mxu0 %v379
    %4243 = vmatpush.msra.mxu0 %v375
    %4244 = vmatpush.msra.mxu0 %v371
    %4245 = vmatpush.msra.mxu0 %v367
    %4246 = vmatpush.msra.mxu0 %v363
    %4247 = vmatpush.msra.mxu0 %v359
    %4248 = vmatpush.msra.mxu0 %v355
    %4249 = vmatpush.msra.mxu0 %v351
    %4250 = vmatpush.msra.mxu0 %v347
    %4251 = vmatmul.f32.gmra.mxu0 %v3744
    %v4252 = vpop.f32.mrf.mxu0
    %v4253 = vadd.f32 0.0, %v4252
    %4254 = vdwg.mxu0
    %4255 = vmatpush.msra.mxu0 %v408
    %4256 = vmatpush.msra.mxu0 %v404
    %4257 = vmatpush.msra.mxu0 %v400
    %4258 = vmatpush.msra.mxu0 %v396
    %4259 = vmatpush.msra.mxu0 %v392
    %4260 = vmatpush.msra.mxu0 %v388
    %4261 = vmatpush.msra.mxu0 %v384
    %4262 = vmatpush.msra.mxu0 %v380
    %4263 = vmatpush.msra.mxu0 %v376
    %4264 = vmatpush.msra.mxu0 %v372
    %4265 = vmatpush.msra.mxu0 %v368
    %4266 = vmatpush.msra.mxu0 %v364
    %4267 = vmatpush.msra.mxu0 %v360
    %4268 = vmatpush.msra.mxu0 %v356
    %4269 = vmatpush.msra.mxu0 %v352
    %4270 = vmatpush.msra.mxu0 %v348
    %4271 = vmatmul.f32.gmra.mxu0 %v3744
    %v4272 = vpop.f32.mrf.mxu0
    %v4273 = vadd.f32 0.0, %v4272
    %4274 = vdwg.mxu0
    %v4275 = vadd.f32 %v4191, %v4213
    %v4276 = vadd.f32 %v4192, %v4233
    %v4277 = vadd.f32 %v4193, %v4253
    %v4278 = vadd.f32 %v4194, %v4273
    %v4279 = vxor.u32 %v4275, 2147483648
    %v4280 = vxor.u32 %v4276, 2147483648
    %v4281 = vxor.u32 %v4277, 2147483648
    %v4282 = vmul.f32 %v4279, 1.442695
    %v4283 = vpow.pop %v4282
    %v4284 = vmul.f32 %v4280, 1.442695
    %v4285 = vpow.pop %v4284
    %v4286 = vmul.f32 %v4281, 1.442695
    %v4287 = vpow.pop %v4286
    %v4288 = vadd.f32 %v4283, 1.0
    %v4289 = vadd.f32 %v4285, 1.0
    %v4290 = vadd.f32 %v4287, 1.0
    %v4291 = vrcp.pop %v4288
    %v4292 = vmul.f32 %v4288, %v4291
    %v4293 = vsub.f32 1.0, %v4292
    %v4294 = vmul.f32 %v4291, %v4293
    %v4295 = vadd.f32 %v4291, %v4294
    %vm4296 = vweird.f32 %v4288
    %vm4297 = vweird.f32 %v4291
    %vm4298 = vmor %vm4296, %vm4297
    %v4299 = vsel %vm4298, %v4291, %v4295
    %v4300 = vand.u32 2147483647, %v4288
    %vm4301 = vcmp.eq.f32.partialorder %v4300, 8.507059e+37
    %v4302 = vand.u32 %v4288, 2147483648
    %v4303 = vor.u32 1.1754944e-38, %v4302
    %v4304 = vsel %vm4301, %v4303, %v4299
    %v4305 = vmul.f32 1.0, %v4304
    %v4306 = vrcp.pop %v4289
    %v4307 = vmul.f32 %v4289, %v4306
    %v4308 = vsub.f32 1.0, %v4307
    %v4309 = vmul.f32 %v4306, %v4308
    %v4310 = vadd.f32 %v4306, %v4309
    %vm4311 = vweird.f32 %v4289
    %vm4312 = vweird.f32 %v4306
    %vm4313 = vmor %vm4311, %vm4312
    %v4314 = vsel %vm4313, %v4306, %v4310
    %v4315 = vand.u32 2147483647, %v4289
    %vm4316 = vcmp.eq.f32.partialorder %v4315, 8.507059e+37
    %v4317 = vand.u32 %v4289, 2147483648
    %v4318 = vor.u32 1.1754944e-38, %v4317
    %v4319 = vsel %vm4316, %v4318, %v4314
    %v4320 = vmul.f32 1.0, %v4319
    %v4321 = vrcp.pop %v4290
    %v4322 = vmul.f32 %v4290, %v4321
    %v4323 = vsub.f32 1.0, %v4322
    %v4324 = vmul.f32 %v4321, %v4323
    %v4325 = vadd.f32 %v4321, %v4324
    %vm4326 = vweird.f32 %v4290
    %vm4327 = vweird.f32 %v4321
    %vm4328 = vmor %vm4326, %vm4327
    %v4329 = vsel %vm4328, %v4321, %v4325
    %v4330 = vand.u32 2147483647, %v4290
    %vm4331 = vcmp.eq.f32.partialorder %v4330, 8.507059e+37
    %v4332 = vand.u32 %v4290, 2147483648
    %v4333 = vor.u32 1.1754944e-38, %v4332
    %v4334 = vsel %vm4331, %v4333, %v4329
    %v4335 = vmul.f32 1.0, %v4334
    %v4336 = vtanh.pop %v4278
    %v4337 = vmul.f32 %v4320, %v3742
    %v4338 = vmul.f32 %v4305, %v4336
    %v4339 = vadd.f32 %v4337, %v4338
    %v4340 = vtanh.pop %v4339
    %v4341 = vmul.f32 %v4335, %v4340
    %4342 = vmatpush.msra.mxu0 %v767
    %4343 = vmatpush.msra.mxu0 %v763
    %4344 = vmatpush.msra.mxu0 %v759
    %4345 = vmatpush.msra.mxu0 %v755
    %4346 = vmatpush.msra.mxu0 %v751
    %4347 = vmatpush.msra.mxu0 %v747
    %4348 = vmatpush.msra.mxu0 %v743
    %4349 = vmatpush.msra.mxu0 %v739
    %4350 = vmatpush.msra.mxu0 %v735
    %4351 = vmatpush.msra.mxu0 %v731
    %4352 = vmatpush.msra.mxu0 %v727
    %4353 = vmatpush.msra.mxu0 %v723
    %4354 = vmatpush.msra.mxu0 %v719
    %4355 = vmatpush.msra.mxu0 %v715
    %4356 = vmatpush.msra.mxu0 %v711
    %4357 = vmatpush.msra.mxu0 %v707
    %4358 = vmatmul.f32.gmra.mxu0 %v3744
    %v4359 = vpop.f32.mrf.mxu0
    %v4360 = vadd.f32 %v837, %v4359
    %4361 = vdwg.mxu0
    %4362 = vmatpush.msra.mxu0 %v831
    %4363 = vmatpush.msra.mxu0 %v827
    %4364 = vmatpush.msra.mxu0 %v823
    %4365 = vmatpush.msra.mxu0 %v819
    %4366 = vmatpush.msra.mxu0 %v815
    %4367 = vmatpush.msra.mxu0 %v811
    %4368 = vmatpush.msra.mxu0 %v807
    %4369 = vmatpush.msra.mxu0 %v803
    %4370 = vmatpush.msra.mxu0 %v799
    %4371 = vmatpush.msra.mxu0 %v795
    %4372 = vmatpush.msra.mxu0 %v791
    %4373 = vmatpush.msra.mxu0 %v787
    %4374 = vmatpush.msra.mxu0 %v783
    %4375 = vmatpush.msra.mxu0 %v779
    %4376 = vmatpush.msra.mxu0 %v775
    %4377 = vmatpush.msra.mxu0 %v771
    %4378 = vmatmul.f32.gmra.mxu0 %v3967
    %v4379 = vpop.f32.mrf.mxu0
    %v4380 = vadd.f32 %v4360, %v4379
    %4381 = vdwg.mxu0
    %4382 = vmatpush.msra.mxu0 %v768
    %4383 = vmatpush.msra.mxu0 %v764
    %4384 = vmatpush.msra.mxu0 %v760
    %4385 = vmatpush.msra.mxu0 %v756
    %4386 = vmatpush.msra.mxu0 %v752
    %4387 = vmatpush.msra.mxu0 %v748
    %4388 = vmatpush.msra.mxu0 %v744
    %4389 = vmatpush.msra.mxu0 %v740
    %4390 = vmatpush.msra.mxu0 %v736
    %4391 = vmatpush.msra.mxu0 %v732
    %4392 = vmatpush.msra.mxu0 %v728
    %4393 = vmatpush.msra.mxu0 %v724
    %4394 = vmatpush.msra.mxu0 %v720
    %4395 = vmatpush.msra.mxu0 %v716
    %4396 = vmatpush.msra.mxu0 %v712
    %4397 = vmatpush.msra.mxu0 %v708
    %4398 = vmatmul.f32.gmra.mxu0 %v3744
    %v4399 = vpop.f32.mrf.mxu0
    %v4400 = vadd.f32 %v838, %v4399
    %4401 = vdwg.mxu0
    %4402 = vmatpush.msra.mxu0 %v832
    %4403 = vmatpush.msra.mxu0 %v828
    %4404 = vmatpush.msra.mxu0 %v824
    %4405 = vmatpush.msra.mxu0 %v820
    %4406 = vmatpush.msra.mxu0 %v816
    %4407 = vmatpush.msra.mxu0 %v812
    %4408 = vmatpush.msra.mxu0 %v808
    %4409 = vmatpush.msra.mxu0 %v804
    %4410 = vmatpush.msra.mxu0 %v800
    %4411 = vmatpush.msra.mxu0 %v796
    %4412 = vmatpush.msra.mxu0 %v792
    %4413 = vmatpush.msra.mxu0 %v788
    %4414 = vmatpush.msra.mxu0 %v784
    %4415 = vmatpush.msra.mxu0 %v780
    %4416 = vmatpush.msra.mxu0 %v776
    %4417 = vmatpush.msra.mxu0 %v772
    %4418 = vmatmul.f32.gmra.mxu0 %v3967
    %v4419 = vpop.f32.mrf.mxu0
    %v4420 = vadd.f32 %v4400, %v4419
    %4421 = vdwg.mxu0
    %4422 = vmatpush.msra.mxu0 %v769
    %4423 = vmatpush.msra.mxu0 %v765
    %4424 = vmatpush.msra.mxu0 %v761
    %4425 = vmatpush.msra.mxu0 %v757
    %4426 = vmatpush.msra.mxu0 %v753
    %4427 = vmatpush.msra.mxu0 %v749
    %4428 = vmatpush.msra.mxu0 %v745
    %4429 = vmatpush.msra.mxu0 %v741
    %4430 = vmatpush.msra.mxu0 %v737
    %4431 = vmatpush.msra.mxu0 %v733
    %4432 = vmatpush.msra.mxu0 %v729
    %4433 = vmatpush.msra.mxu0 %v725
    %4434 = vmatpush.msra.mxu0 %v721
    %4435 = vmatpush.msra.mxu0 %v717
    %4436 = vmatpush.msra.mxu0 %v713
    %4437 = vmatpush.msra.mxu0 %v709
    %4438 = vmatmul.f32.gmra.mxu0 %v3744
    %v4439 = vpop.f32.mrf.mxu0
    %v4440 = vadd.f32 %v839, %v4439
    %4441 = vdwg.mxu0
    %4442 = vmatpush.msra.mxu0 %v833
    %4443 = vmatpush.msra.mxu0 %v829
    %4444 = vmatpush.msra.mxu0 %v825
    %4445 = vmatpush.msra.mxu0 %v821
    %4446 = vmatpush.msra.mxu0 %v817
    %4447 = vmatpush.msra.mxu0 %v813
    %4448 = vmatpush.msra.mxu0 %v809
    %4449 = vmatpush.msra.mxu0 %v805
    %4450 = vmatpush.msra.mxu0 %v801
    %4451 = vmatpush.msra.mxu0 %v797
    %4452 = vmatpush.msra.mxu0 %v793
    %4453 = vmatpush.msra.mxu0 %v789
    %4454 = vmatpush.msra.mxu0 %v785
    %4455 = vmatpush.msra.mxu0 %v781
    %4456 = vmatpush.msra.mxu0 %v777
    %4457 = vmatpush.msra.mxu0 %v773
    %4458 = vmatmul.f32.gmra.mxu0 %v3967
    %v4459 = vpop.f32.mrf.mxu0
    %v4460 = vadd.f32 %v4440, %v4459
    %4461 = vdwg.mxu0
    %4462 = vmatpush.msra.mxu0 %v770
    %4463 = vmatpush.msra.mxu0 %v766
    %4464 = vmatpush.msra.mxu0 %v762
    %4465 = vmatpush.msra.mxu0 %v758
    %4466 = vmatpush.msra.mxu0 %v754
    %4467 = vmatpush.msra.mxu0 %v750
    %4468 = vmatpush.msra.mxu0 %v746
    %4469 = vmatpush.msra.mxu0 %v742
    %4470 = vmatpush.msra.mxu0 %v738
    %4471 = vmatpush.msra.mxu0 %v734
    %4472 = vmatpush.msra.mxu0 %v730
    %4473 = vmatpush.msra.mxu0 %v726
    %4474 = vmatpush.msra.mxu0 %v722
    %4475 = vmatpush.msra.mxu0 %v718
    %4476 = vmatpush.msra.mxu0 %v714
    %4477 = vmatpush.msra.mxu0 %v710
    %4478 = vmatmul.f32.gmra.mxu0 %v3744
    %v4479 = vpop.f32.mrf.mxu0
    %v4480 = vadd.f32 %v840, %v4479
    %4481 = vdwg.mxu0
    %4482 = vmatpush.msra.mxu0 %v834
    %4483 = vmatpush.msra.mxu0 %v830
    %4484 = vmatpush.msra.mxu0 %v826
    %4485 = vmatpush.msra.mxu0 %v822
    %4486 = vmatpush.msra.mxu0 %v818
    %4487 = vmatpush.msra.mxu0 %v814
    %4488 = vmatpush.msra.mxu0 %v810
    %4489 = vmatpush.msra.mxu0 %v806
    %4490 = vmatpush.msra.mxu0 %v802
    %4491 = vmatpush.msra.mxu0 %v798
    %4492 = vmatpush.msra.mxu0 %v794
    %4493 = vmatpush.msra.mxu0 %v790
    %4494 = vmatpush.msra.mxu0 %v786
    %4495 = vmatpush.msra.mxu0 %v782
    %4496 = vmatpush.msra.mxu0 %v778
    %4497 = vmatpush.msra.mxu0 %v774
    %4498 = vmatmul.f32.gmra.mxu0 %v3967
    %v4499 = vpop.f32.mrf.mxu0
    %v4500 = vadd.f32 %v4480, %v4499
    %4501 = vdwg.mxu0
    %v4502 = vxor.u32 %v4380, 2147483648
    %v4503 = vxor.u32 %v4420, 2147483648
    %v4504 = vxor.u32 %v4460, 2147483648
    %v4505 = vmul.f32 %v4502, 1.442695
    %v4506 = vpow.pop %v4505
    %v4507 = vmul.f32 %v4503, 1.442695
    %v4508 = vpow.pop %v4507
    %v4509 = vmul.f32 %v4504, 1.442695
    %v4510 = vpow.pop %v4509
    %v4511 = vadd.f32 %v4506, 1.0
    %v4512 = vadd.f32 %v4508, 1.0
    %v4513 = vadd.f32 %v4510, 1.0
    %v4514 = vrcp.pop %v4511
    %v4515 = vmul.f32 %v4511, %v4514
    %v4516 = vsub.f32 1.0, %v4515
    %v4517 = vmul.f32 %v4514, %v4516
    %v4518 = vadd.f32 %v4514, %v4517
    %vm4519 = vweird.f32 %v4511
    %vm4520 = vweird.f32 %v4514
    %vm4521 = vmor %vm4519, %vm4520
    %v4522 = vsel %vm4521, %v4514, %v4518
    %v4523 = vand.u32 2147483647, %v4511
    %vm4524 = vcmp.eq.f32.partialorder %v4523, 8.507059e+37
    %v4525 = vand.u32 %v4511, 2147483648
    %v4526 = vor.u32 1.1754944e-38, %v4525
    %v4527 = vsel %vm4524, %v4526, %v4522
    %v4528 = vmul.f32 1.0, %v4527
    %v4529 = vrcp.pop %v4512
    %v4530 = vmul.f32 %v4512, %v4529
    %v4531 = vsub.f32 1.0, %v4530
    %v4532 = vmul.f32 %v4529, %v4531
    %v4533 = vadd.f32 %v4529, %v4532
    %vm4534 = vweird.f32 %v4512
    %vm4535 = vweird.f32 %v4529
    %vm4536 = vmor %vm4534, %vm4535
    %v4537 = vsel %vm4536, %v4529, %v4533
    %v4538 = vand.u32 2147483647, %v4512
    %vm4539 = vcmp.eq.f32.partialorder %v4538, 8.507059e+37
    %v4540 = vand.u32 %v4512, 2147483648
    %v4541 = vor.u32 1.1754944e-38, %v4540
    %v4542 = vsel %vm4539, %v4541, %v4537
    %v4543 = vmul.f32 1.0, %v4542
    %v4544 = vrcp.pop %v4513
    %v4545 = vmul.f32 %v4513, %v4544
    %v4546 = vsub.f32 1.0, %v4545
    %v4547 = vmul.f32 %v4544, %v4546
    %v4548 = vadd.f32 %v4544, %v4547
    %vm4549 = vweird.f32 %v4513
    %vm4550 = vweird.f32 %v4544
    %vm4551 = vmor %vm4549, %vm4550
    %v4552 = vsel %vm4551, %v4544, %v4548
    %v4553 = vand.u32 2147483647, %v4513
    %vm4554 = vcmp.eq.f32.partialorder %v4553, 8.507059e+37
    %v4555 = vand.u32 %v4513, 2147483648
    %v4556 = vor.u32 1.1754944e-38, %v4555
    %v4557 = vsel %vm4554, %v4556, %v4552
    %v4558 = vmul.f32 1.0, %v4557
    %v4559 = vtanh.pop %v4500
    %v4560 = vmul.f32 %v4543, %v3965
    %v4561 = vmul.f32 %v4528, %v4559
    %v4562 = vadd.f32 %v4560, %v4561
    %v4563 = vtanh.pop %v4562
    %v4564 = vmul.f32 %v4558, %v4563
    %4565 = vmatpush.msra.mxu0 %v1502
    %4566 = vmatpush.msra.mxu0 %v1498
    %4567 = vmatpush.msra.mxu0 %v1494
    %4568 = vmatpush.msra.mxu0 %v1490
    %4569 = vmatpush.msra.mxu0 %v1486
    %4570 = vmatpush.msra.mxu0 %v1482
    %4571 = vmatpush.msra.mxu0 %v1478
    %4572 = vmatpush.msra.mxu0 %v1474
    %4573 = vmatpush.msra.mxu0 %v1470
    %4574 = vmatpush.msra.mxu0 %v1466
    %4575 = vmatpush.msra.mxu0 %v1462
    %4576 = vmatpush.msra.mxu0 %v1458
    %4577 = vmatpush.msra.mxu0 %v1454
    %4578 = vmatpush.msra.mxu0 %v1450
    %4579 = vmatpush.msra.mxu0 %v1446
    %4580 = vmatpush.msra.mxu0 %v1442
    %4581 = vmatmul.f32.gmra.mxu0 %v3967
    %v4582 = vpop.f32.mrf.mxu0
    %v4583 = vadd.f32 %v1572, %v4582
    %4584 = vdwg.mxu0
    %4585 = vmatpush.msra.mxu0 %v1566
    %4586 = vmatpush.msra.mxu0 %v1562
    %4587 = vmatpush.msra.mxu0 %v1558
    %4588 = vmatpush.msra.mxu0 %v1554
    %4589 = vmatpush.msra.mxu0 %v1550
    %4590 = vmatpush.msra.mxu0 %v1546
    %4591 = vmatpush.msra.mxu0 %v1542
    %4592 = vmatpush.msra.mxu0 %v1538
    %4593 = vmatpush.msra.mxu0 %v1534
    %4594 = vmatpush.msra.mxu0 %v1530
    %4595 = vmatpush.msra.mxu0 %v1526
    %4596 = vmatpush.msra.mxu0 %v1522
    %4597 = vmatpush.msra.mxu0 %v1518
    %4598 = vmatpush.msra.mxu0 %v1514
    %4599 = vmatpush.msra.mxu0 %v1510
    %4600 = vmatpush.msra.mxu0 %v1506
    %4601 = vmatmul.f32.gmra.mxu0 %v4190
    %v4602 = vpop.f32.mrf.mxu0
    %v4603 = vadd.f32 %v4583, %v4602
    %4604 = vdwg.mxu0
    %4605 = vmatpush.msra.mxu0 %v1503
    %4606 = vmatpush.msra.mxu0 %v1499
    %4607 = vmatpush.msra.mxu0 %v1495
    %4608 = vmatpush.msra.mxu0 %v1491
    %4609 = vmatpush.msra.mxu0 %v1487
    %4610 = vmatpush.msra.mxu0 %v1483
    %4611 = vmatpush.msra.mxu0 %v1479
    %4612 = vmatpush.msra.mxu0 %v1475
    %4613 = vmatpush.msra.mxu0 %v1471
    %4614 = vmatpush.msra.mxu0 %v1467
    %4615 = vmatpush.msra.mxu0 %v1463
    %4616 = vmatpush.msra.mxu0 %v1459
    %4617 = vmatpush.msra.mxu0 %v1455
    %4618 = vmatpush.msra.mxu0 %v1451
    %4619 = vmatpush.msra.mxu0 %v1447
    %4620 = vmatpush.msra.mxu0 %v1443
    %4621 = vmatmul.f32.gmra.mxu0 %v3967
    %v4622 = vpop.f32.mrf.mxu0
    %v4623 = vadd.f32 %v1573, %v4622
    %4624 = vdwg.mxu0
    %4625 = vmatpush.msra.mxu0 %v1567
    %4626 = vmatpush.msra.mxu0 %v1563
    %4627 = vmatpush.msra.mxu0 %v1559
    %4628 = vmatpush.msra.mxu0 %v1555
    %4629 = vmatpush.msra.mxu0 %v1551
    %4630 = vmatpush.msra.mxu0 %v1547
    %4631 = vmatpush.msra.mxu0 %v1543
    %4632 = vmatpush.msra.mxu0 %v1539
    %4633 = vmatpush.msra.mxu0 %v1535
    %4634 = vmatpush.msra.mxu0 %v1531
    %4635 = vmatpush.msra.mxu0 %v1527
    %4636 = vmatpush.msra.mxu0 %v1523
    %4637 = vmatpush.msra.mxu0 %v1519
    %4638 = vmatpush.msra.mxu0 %v1515
    %4639 = vmatpush.msra.mxu0 %v1511
    %4640 = vmatpush.msra.mxu0 %v1507
    %4641 = vmatmul.f32.gmra.mxu0 %v4190
    %v4642 = vpop.f32.mrf.mxu0
    %v4643 = vadd.f32 %v4623, %v4642
    %4644 = vdwg.mxu0
    %4645 = vmatpush.msra.mxu0 %v1504
    %4646 = vmatpush.msra.mxu0 %v1500
    %4647 = vmatpush.msra.mxu0 %v1496
    %4648 = vmatpush.msra.mxu0 %v1492
    %4649 = vmatpush.msra.mxu0 %v1488
    %4650 = vmatpush.msra.mxu0 %v1484
    %4651 = vmatpush.msra.mxu0 %v1480
    %4652 = vmatpush.msra.mxu0 %v1476
    %4653 = vmatpush.msra.mxu0 %v1472
    %4654 = vmatpush.msra.mxu0 %v1468
    %4655 = vmatpush.msra.mxu0 %v1464
    %4656 = vmatpush.msra.mxu0 %v1460
    %4657 = vmatpush.msra.mxu0 %v1456
    %4658 = vmatpush.msra.mxu0 %v1452
    %4659 = vmatpush.msra.mxu0 %v1448
    %4660 = vmatpush.msra.mxu0 %v1444
    %4661 = vmatmul.f32.gmra.mxu0 %v3967
    %v4662 = vpop.f32.mrf.mxu0
    %v4663 = vadd.f32 %v1574, %v4662
    %4664 = vdwg.mxu0
    %4665 = vmatpush.msra.mxu0 %v1568
    %4666 = vmatpush.msra.mxu0 %v1564
    %4667 = vmatpush.msra.mxu0 %v1560
    %4668 = vmatpush.msra.mxu0 %v1556
    %4669 = vmatpush.msra.mxu0 %v1552
    %4670 = vmatpush.msra.mxu0 %v1548
    %4671 = vmatpush.msra.mxu0 %v1544
    %4672 = vmatpush.msra.mxu0 %v1540
    %4673 = vmatpush.msra.mxu0 %v1536
    %4674 = vmatpush.msra.mxu0 %v1532
    %4675 = vmatpush.msra.mxu0 %v1528
    %4676 = vmatpush.msra.mxu0 %v1524
    %4677 = vmatpush.msra.mxu0 %v1520
    %4678 = vmatpush.msra.mxu0 %v1516
    %4679 = vmatpush.msra.mxu0 %v1512
    %4680 = vmatpush.msra.mxu0 %v1508
    %4681 = vmatmul.f32.gmra.mxu0 %v4190
    %v4682 = vpop.f32.mrf.mxu0
    %v4683 = vadd.f32 %v4663, %v4682
    %4684 = vdwg.mxu0
    %4685 = vmatpush.msra.mxu0 %v1505
    %4686 = vmatpush.msra.mxu0 %v1501
    %4687 = vmatpush.msra.mxu0 %v1497
    %4688 = vmatpush.msra.mxu0 %v1493
    %4689 = vmatpush.msra.mxu0 %v1489
    %4690 = vmatpush.msra.mxu0 %v1485
    %4691 = vmatpush.msra.mxu0 %v1481
    %4692 = vmatpush.msra.mxu0 %v1477
    %4693 = vmatpush.msra.mxu0 %v1473
    %4694 = vmatpush.msra.mxu0 %v1469
    %4695 = vmatpush.msra.mxu0 %v1465
    %4696 = vmatpush.msra.mxu0 %v1461
    %4697 = vmatpush.msra.mxu0 %v1457
    %4698 = vmatpush.msra.mxu0 %v1453
    %4699 = vmatpush.msra.mxu0 %v1449
    %4700 = vmatpush.msra.mxu0 %v1445
    %4701 = vmatmul.f32.gmra.mxu0 %v3967
    %v4702 = vpop.f32.mrf.mxu0
    %v4703 = vadd.f32 %v1575, %v4702
    %4704 = vdwg.mxu0
    %4705 = vmatpush.msra.mxu0 %v1569
    %4706 = vmatpush.msra.mxu0 %v1565
    %4707 = vmatpush.msra.mxu0 %v1561
    %4708 = vmatpush.msra.mxu0 %v1557
    %4709 = vmatpush.msra.mxu0 %v1553
    %4710 = vmatpush.msra.mxu0 %v1549
    %4711 = vmatpush.msra.mxu0 %v1545
    %4712 = vmatpush.msra.mxu0 %v1541
    %4713 = vmatpush.msra.mxu0 %v1537
    %4714 = vmatpush.msra.mxu0 %v1533
    %4715 = vmatpush.msra.mxu0 %v1529
    %4716 = vmatpush.msra.mxu0 %v1525
    %4717 = vmatpush.msra.mxu0 %v1521
    %4718 = vmatpush.msra.mxu0 %v1517
    %4719 = vmatpush.msra.mxu0 %v1513
    %4720 = vmatpush.msra.mxu0 %v1509
    %4721 = vmatmul.f32.gmra.mxu0 %v4190
    %v4722 = vpop.f32.mrf.mxu0
    %v4723 = vadd.f32 %v4703, %v4722
    %4724 = vdwg.mxu0
    %v4725 = vxor.u32 %v4603, 2147483648
    %v4726 = vxor.u32 %v4643, 2147483648
    %v4727 = vxor.u32 %v4683, 2147483648
    %v4728 = vmul.f32 %v4725, 1.442695
    %v4729 = vpow.pop %v4728
    %v4730 = vmul.f32 %v4726, 1.442695
    %v4731 = vpow.pop %v4730
    %v4732 = vmul.f32 %v4727, 1.442695
    %v4733 = vpow.pop %v4732
    %v4734 = vadd.f32 %v4729, 1.0
    %v4735 = vadd.f32 %v4731, 1.0
    %v4736 = vadd.f32 %v4733, 1.0
    %v4737 = vrcp.pop %v4734
    %v4738 = vmul.f32 %v4734, %v4737
    %v4739 = vsub.f32 1.0, %v4738
    %v4740 = vmul.f32 %v4737, %v4739
    %v4741 = vadd.f32 %v4737, %v4740
    %vm4742 = vweird.f32 %v4734
    %vm4743 = vweird.f32 %v4737
    %vm4744 = vmor %vm4742, %vm4743
    %v4745 = vsel %vm4744, %v4737, %v4741
    %v4746 = vand.u32 2147483647, %v4734
    %vm4747 = vcmp.eq.f32.partialorder %v4746, 8.507059e+37
    %v4748 = vand.u32 %v4734, 2147483648
    %v4749 = vor.u32 1.1754944e-38, %v4748
    %v4750 = vsel %vm4747, %v4749, %v4745
    %v4751 = vmul.f32 1.0, %v4750
    %v4752 = vrcp.pop %v4735
    %v4753 = vmul.f32 %v4735, %v4752
    %v4754 = vsub.f32 1.0, %v4753
    %v4755 = vmul.f32 %v4752, %v4754
    %v4756 = vadd.f32 %v4752, %v4755
    %vm4757 = vweird.f32 %v4735
    %vm4758 = vweird.f32 %v4752
    %vm4759 = vmor %vm4757, %vm4758
    %v4760 = vsel %vm4759, %v4752, %v4756
    %v4761 = vand.u32 2147483647, %v4735
    %vm4762 = vcmp.eq.f32.partialorder %v4761, 8.507059e+37
    %v4763 = vand.u32 %v4735, 2147483648
    %v4764 = vor.u32 1.1754944e-38, %v4763
    %v4765 = vsel %vm4762, %v4764, %v4760
    %v4766 = vmul.f32 1.0, %v4765
    %v4767 = vrcp.pop %v4736
    %v4768 = vmul.f32 %v4736, %v4767
    %v4769 = vsub.f32 1.0, %v4768
    %v4770 = vmul.f32 %v4767, %v4769
    %v4771 = vadd.f32 %v4767, %v4770
    %vm4772 = vweird.f32 %v4736
    %vm4773 = vweird.f32 %v4767
    %vm4774 = vmor %vm4772, %vm4773
    %v4775 = vsel %vm4774, %v4767, %v4771
    %v4776 = vand.u32 2147483647, %v4736
    %vm4777 = vcmp.eq.f32.partialorder %v4776, 8.507059e+37
    %v4778 = vand.u32 %v4736, 2147483648
    %v4779 = vor.u32 1.1754944e-38, %v4778
    %v4780 = vsel %vm4777, %v4779, %v4775
    %v4781 = vmul.f32 1.0, %v4780
    %v4782 = vtanh.pop %v4723
    %v4783 = vmul.f32 %v4766, %v4188
    %v4784 = vmul.f32 %v4751, %v4782
    %v4785 = vadd.f32 %v4783, %v4784
    %v4786 = vtanh.pop %v4785
    %v4787 = vmul.f32 %v4781, %v4786
    %4788 = vmatpush.msra.mxu0 %v767
    %4789 = vmatpush.msra.mxu0 %v763
    %4790 = vmatpush.msra.mxu0 %v759
    %4791 = vmatpush.msra.mxu0 %v755
    %4792 = vmatpush.msra.mxu0 %v751
    %4793 = vmatpush.msra.mxu0 %v747
    %4794 = vmatpush.msra.mxu0 %v743
    %4795 = vmatpush.msra.mxu0 %v739
    %4796 = vmatpush.msra.mxu0 %v735
    %4797 = vmatpush.msra.mxu0 %v731
    %4798 = vmatpush.msra.mxu0 %v727
    %4799 = vmatpush.msra.mxu0 %v723
    %4800 = vmatpush.msra.mxu0 %v719
    %4801 = vmatpush.msra.mxu0 %v715
    %4802 = vmatpush.msra.mxu0 %v711
    %4803 = vmatpush.msra.mxu0 %v707
    %4804 = vmatmul.f32.gmra.mxu0 %v4341
    %v4805 = vpop.f32.mrf.mxu0
    %v4806 = vadd.f32 %v837, %v4805
    %4807 = vdwg.mxu0
    %4808 = vmatpush.msra.mxu0 %v831
    %4809 = vmatpush.msra.mxu0 %v827
    %4810 = vmatpush.msra.mxu0 %v823
    %4811 = vmatpush.msra.mxu0 %v819
    %4812 = vmatpush.msra.mxu0 %v815
    %4813 = vmatpush.msra.mxu0 %v811
    %4814 = vmatpush.msra.mxu0 %v807
    %4815 = vmatpush.msra.mxu0 %v803
    %4816 = vmatpush.msra.mxu0 %v799
    %4817 = vmatpush.msra.mxu0 %v795
    %4818 = vmatpush.msra.mxu0 %v791
    %4819 = vmatpush.msra.mxu0 %v787
    %4820 = vmatpush.msra.mxu0 %v783
    %4821 = vmatpush.msra.mxu0 %v779
    %4822 = vmatpush.msra.mxu0 %v775
    %4823 = vmatpush.msra.mxu0 %v771
    %4824 = vmatmul.f32.gmra.mxu0 %v4564
    %v4825 = vpop.f32.mrf.mxu0
    %v4826 = vadd.f32 %v4806, %v4825
    %4827 = vdwg.mxu0
    %4828 = vmatpush.msra.mxu0 %v768
    %4829 = vmatpush.msra.mxu0 %v764
    %4830 = vmatpush.msra.mxu0 %v760
    %4831 = vmatpush.msra.mxu0 %v756
    %4832 = vmatpush.msra.mxu0 %v752
    %4833 = vmatpush.msra.mxu0 %v748
    %4834 = vmatpush.msra.mxu0 %v744
    %4835 = vmatpush.msra.mxu0 %v740
    %4836 = vmatpush.msra.mxu0 %v736
    %4837 = vmatpush.msra.mxu0 %v732
    %4838 = vmatpush.msra.mxu0 %v728
    %4839 = vmatpush.msra.mxu0 %v724
    %4840 = vmatpush.msra.mxu0 %v720
    %4841 = vmatpush.msra.mxu0 %v716
    %4842 = vmatpush.msra.mxu0 %v712
    %4843 = vmatpush.msra.mxu0 %v708
    %4844 = vmatmul.f32.gmra.mxu0 %v4341
    %v4845 = vpop.f32.mrf.mxu0
    %v4846 = vadd.f32 %v838, %v4845
    %4847 = vdwg.mxu0
    %4848 = vmatpush.msra.mxu0 %v832
    %4849 = vmatpush.msra.mxu0 %v828
    %4850 = vmatpush.msra.mxu0 %v824
    %4851 = vmatpush.msra.mxu0 %v820
    %4852 = vmatpush.msra.mxu0 %v816
    %4853 = vmatpush.msra.mxu0 %v812
    %4854 = vmatpush.msra.mxu0 %v808
    %4855 = vmatpush.msra.mxu0 %v804
    %4856 = vmatpush.msra.mxu0 %v800
    %4857 = vmatpush.msra.mxu0 %v796
    %4858 = vmatpush.msra.mxu0 %v792
    %4859 = vmatpush.msra.mxu0 %v788
    %4860 = vmatpush.msra.mxu0 %v784
    %4861 = vmatpush.msra.mxu0 %v780
    %4862 = vmatpush.msra.mxu0 %v776
    %4863 = vmatpush.msra.mxu0 %v772
    %4864 = vmatmul.f32.gmra.mxu0 %v4564
    %v4865 = vpop.f32.mrf.mxu0
    %v4866 = vadd.f32 %v4846, %v4865
    %4867 = vdwg.mxu0
    %4868 = vmatpush.msra.mxu0 %v769
    %4869 = vmatpush.msra.mxu0 %v765
    %4870 = vmatpush.msra.mxu0 %v761
    %4871 = vmatpush.msra.mxu0 %v757
    %4872 = vmatpush.msra.mxu0 %v753
    %4873 = vmatpush.msra.mxu0 %v749
    %4874 = vmatpush.msra.mxu0 %v745
    %4875 = vmatpush.msra.mxu0 %v741
    %4876 = vmatpush.msra.mxu0 %v737
    %4877 = vmatpush.msra.mxu0 %v733
    %4878 = vmatpush.msra.mxu0 %v729
    %4879 = vmatpush.msra.mxu0 %v725
    %4880 = vmatpush.msra.mxu0 %v721
    %4881 = vmatpush.msra.mxu0 %v717
    %4882 = vmatpush.msra.mxu0 %v713
    %4883 = vmatpush.msra.mxu0 %v709
    %4884 = vmatmul.f32.gmra.mxu0 %v4341
    %v4885 = vpop.f32.mrf.mxu0
    %v4886 = vadd.f32 %v839, %v4885
    %4887 = vdwg.mxu0
    %4888 = vmatpush.msra.mxu0 %v833
    %4889 = vmatpush.msra.mxu0 %v829
    %4890 = vmatpush.msra.mxu0 %v825
    %4891 = vmatpush.msra.mxu0 %v821
    %4892 = vmatpush.msra.mxu0 %v817
    %4893 = vmatpush.msra.mxu0 %v813
    %4894 = vmatpush.msra.mxu0 %v809
    %4895 = vmatpush.msra.mxu0 %v805
    %4896 = vmatpush.msra.mxu0 %v801
    %4897 = vmatpush.msra.mxu0 %v797
    %4898 = vmatpush.msra.mxu0 %v793
    %4899 = vmatpush.msra.mxu0 %v789
    %4900 = vmatpush.msra.mxu0 %v785
    %4901 = vmatpush.msra.mxu0 %v781
    %4902 = vmatpush.msra.mxu0 %v777
    %4903 = vmatpush.msra.mxu0 %v773
    %4904 = vmatmul.f32.gmra.mxu0 %v4564
    %v4905 = vpop.f32.mrf.mxu0
    %v4906 = vadd.f32 %v4886, %v4905
    %4907 = vdwg.mxu0
    %4908 = vmatpush.msra.mxu0 %v770
    %4909 = vmatpush.msra.mxu0 %v766
    %4910 = vmatpush.msra.mxu0 %v762
    %4911 = vmatpush.msra.mxu0 %v758
    %4912 = vmatpush.msra.mxu0 %v754
    %4913 = vmatpush.msra.mxu0 %v750
    %4914 = vmatpush.msra.mxu0 %v746
    %4915 = vmatpush.msra.mxu0 %v742
    %4916 = vmatpush.msra.mxu0 %v738
    %4917 = vmatpush.msra.mxu0 %v734
    %4918 = vmatpush.msra.mxu0 %v730
    %4919 = vmatpush.msra.mxu0 %v726
    %4920 = vmatpush.msra.mxu0 %v722
    %4921 = vmatpush.msra.mxu0 %v718
    %4922 = vmatpush.msra.mxu0 %v714
    %4923 = vmatpush.msra.mxu0 %v710
    %4924 = vmatmul.f32.gmra.mxu0 %v4341
    %v4925 = vpop.f32.mrf.mxu0
    %v4926 = vadd.f32 %v840, %v4925
    %4927 = vdwg.mxu0
    %4928 = vmatpush.msra.mxu0 %v834
    %4929 = vmatpush.msra.mxu0 %v830
    %4930 = vmatpush.msra.mxu0 %v826
    %4931 = vmatpush.msra.mxu0 %v822
    %4932 = vmatpush.msra.mxu0 %v818
    %4933 = vmatpush.msra.mxu0 %v814
    %4934 = vmatpush.msra.mxu0 %v810
    %4935 = vmatpush.msra.mxu0 %v806
    %4936 = vmatpush.msra.mxu0 %v802
    %4937 = vmatpush.msra.mxu0 %v798
    %4938 = vmatpush.msra.mxu0 %v794
    %4939 = vmatpush.msra.mxu0 %v790
    %4940 = vmatpush.msra.mxu0 %v786
    %4941 = vmatpush.msra.mxu0 %v782
    %4942 = vmatpush.msra.mxu0 %v778
    %4943 = vmatpush.msra.mxu0 %v774
    %4944 = vmatmul.f32.gmra.mxu0 %v4564
    %v4945 = vpop.f32.mrf.mxu0
    %v4946 = vadd.f32 %v4926, %v4945
    %4947 = vdwg.mxu0
    %v4948 = vxor.u32 %v4826, 2147483648
    %v4949 = vxor.u32 %v4866, 2147483648
    %v4950 = vxor.u32 %v4906, 2147483648
    %v4951 = vmul.f32 %v4948, 1.442695
    %v4952 = vpow.pop %v4951
    %v4953 = vmul.f32 %v4949, 1.442695
    %v4954 = vpow.pop %v4953
    %v4955 = vmul.f32 %v4950, 1.442695
    %v4956 = vpow.pop %v4955
    %v4957 = vadd.f32 %v4952, 1.0
    %v4958 = vadd.f32 %v4954, 1.0
    %v4959 = vadd.f32 %v4956, 1.0
    %v4960 = vrcp.pop %v4957
    %v4961 = vmul.f32 %v4957, %v4960
    %v4962 = vsub.f32 1.0, %v4961
    %v4963 = vmul.f32 %v4960, %v4962
    %v4964 = vadd.f32 %v4960, %v4963
    %vm4965 = vweird.f32 %v4957
    %vm4966 = vweird.f32 %v4960
    %vm4967 = vmor %vm4965, %vm4966
    %v4968 = vsel %vm4967, %v4960, %v4964
    %v4969 = vand.u32 2147483647, %v4957
    %vm4970 = vcmp.eq.f32.partialorder %v4969, 8.507059e+37
    %v4971 = vand.u32 %v4957, 2147483648
    %v4972 = vor.u32 1.1754944e-38, %v4971
    %v4973 = vsel %vm4970, %v4972, %v4968
    %v4974 = vmul.f32 1.0, %v4973
    %v4975 = vrcp.pop %v4958
    %v4976 = vmul.f32 %v4958, %v4975
    %v4977 = vsub.f32 1.0, %v4976
    %v4978 = vmul.f32 %v4975, %v4977
    %v4979 = vadd.f32 %v4975, %v4978
    %vm4980 = vweird.f32 %v4958
    %vm4981 = vweird.f32 %v4975
    %vm4982 = vmor %vm4980, %vm4981
    %v4983 = vsel %vm4982, %v4975, %v4979
    %v4984 = vand.u32 2147483647, %v4958
    %vm4985 = vcmp.eq.f32.partialorder %v4984, 8.507059e+37
    %v4986 = vand.u32 %v4958, 2147483648
    %v4987 = vor.u32 1.1754944e-38, %v4986
    %v4988 = vsel %vm4985, %v4987, %v4983
    %v4989 = vmul.f32 1.0, %v4988
    %v4990 = vrcp.pop %v4959
    %v4991 = vmul.f32 %v4959, %v4990
    %v4992 = vsub.f32 1.0, %v4991
    %v4993 = vmul.f32 %v4990, %v4992
    %v4994 = vadd.f32 %v4990, %v4993
    %vm4995 = vweird.f32 %v4959
    %vm4996 = vweird.f32 %v4990
    %vm4997 = vmor %vm4995, %vm4996
    %v4998 = vsel %vm4997, %v4990, %v4994
    %v4999 = vand.u32 2147483647, %v4959
    %vm5000 = vcmp.eq.f32.partialorder %v4999, 8.507059e+37
    %v5001 = vand.u32 %v4959, 2147483648
    %v5002 = vor.u32 1.1754944e-38, %v5001
    %v5003 = vsel %vm5000, %v5002, %v4998
    %v5004 = vmul.f32 1.0, %v5003
    %v5005 = vtanh.pop %v4946
    %v5006 = vmul.f32 %v4989, %v4562
    %v5007 = vmul.f32 %v4974, %v5005
    %v5008 = vadd.f32 %v5006, %v5007
    %v5009 = vtanh.pop %v5008
    %v5010 = vmul.f32 %v5004, %v5009
    %5011 = vmatpush.msra.mxu0 %v1502
    %5012 = vmatpush.msra.mxu0 %v1498
    %5013 = vmatpush.msra.mxu0 %v1494
    %5014 = vmatpush.msra.mxu0 %v1490
    %5015 = vmatpush.msra.mxu0 %v1486
    %5016 = vmatpush.msra.mxu0 %v1482
    %5017 = vmatpush.msra.mxu0 %v1478
    %5018 = vmatpush.msra.mxu0 %v1474
    %5019 = vmatpush.msra.mxu0 %v1470
    %5020 = vmatpush.msra.mxu0 %v1466
    %5021 = vmatpush.msra.mxu0 %v1462
    %5022 = vmatpush.msra.mxu0 %v1458
    %5023 = vmatpush.msra.mxu0 %v1454
    %5024 = vmatpush.msra.mxu0 %v1450
    %5025 = vmatpush.msra.mxu0 %v1446
    %5026 = vmatpush.msra.mxu0 %v1442
    %5027 = vmatmul.f32.gmra.mxu0 %v4564
    %v5028 = vpop.f32.mrf.mxu0
    %v5029 = vadd.f32 %v1572, %v5028
    %5030 = vdwg.mxu0
    %5031 = vmatpush.msra.mxu0 %v1566
    %5032 = vmatpush.msra.mxu0 %v1562
    %5033 = vmatpush.msra.mxu0 %v1558
    %5034 = vmatpush.msra.mxu0 %v1554
    %5035 = vmatpush.msra.mxu0 %v1550
    %5036 = vmatpush.msra.mxu0 %v1546
    %5037 = vmatpush.msra.mxu0 %v1542
    %5038 = vmatpush.msra.mxu0 %v1538
    %5039 = vmatpush.msra.mxu0 %v1534
    %5040 = vmatpush.msra.mxu0 %v1530
    %5041 = vmatpush.msra.mxu0 %v1526
    %5042 = vmatpush.msra.mxu0 %v1522
    %5043 = vmatpush.msra.mxu0 %v1518
    %5044 = vmatpush.msra.mxu0 %v1514
    %5045 = vmatpush.msra.mxu0 %v1510
    %5046 = vmatpush.msra.mxu0 %v1506
    %5047 = vmatmul.f32.gmra.mxu0 %v4787
    %v5048 = vpop.f32.mrf.mxu0
    %v5049 = vadd.f32 %v5029, %v5048
    %5050 = vdwg.mxu0
    %5051 = vmatpush.msra.mxu0 %v1503
    %5052 = vmatpush.msra.mxu0 %v1499
    %5053 = vmatpush.msra.mxu0 %v1495
    %5054 = vmatpush.msra.mxu0 %v1491
    %5055 = vmatpush.msra.mxu0 %v1487
    %5056 = vmatpush.msra.mxu0 %v1483
    %5057 = vmatpush.msra.mxu0 %v1479
    %5058 = vmatpush.msra.mxu0 %v1475
    %5059 = vmatpush.msra.mxu0 %v1471
    %5060 = vmatpush.msra.mxu0 %v1467
    %5061 = vmatpush.msra.mxu0 %v1463
    %5062 = vmatpush.msra.mxu0 %v1459
    %5063 = vmatpush.msra.mxu0 %v1455
    %5064 = vmatpush.msra.mxu0 %v1451
    %5065 = vmatpush.msra.mxu0 %v1447
    %5066 = vmatpush.msra.mxu0 %v1443
    %5067 = vmatmul.f32.gmra.mxu0 %v4564
    %v5068 = vpop.f32.mrf.mxu0
    %v5069 = vadd.f32 %v1573, %v5068
    %5070 = vdwg.mxu0
    %5071 = vmatpush.msra.mxu0 %v1567
    %5072 = vmatpush.msra.mxu0 %v1563
    %5073 = vmatpush.msra.mxu0 %v1559
    %5074 = vmatpush.msra.mxu0 %v1555
    %5075 = vmatpush.msra.mxu0 %v1551
    %5076 = vmatpush.msra.mxu0 %v1547
    %5077 = vmatpush.msra.mxu0 %v1543
    %5078 = vmatpush.msra.mxu0 %v1539
    %5079 = vmatpush.msra.mxu0 %v1535
    %5080 = vmatpush.msra.mxu0 %v1531
    %5081 = vmatpush.msra.mxu0 %v1527
    %5082 = vmatpush.msra.mxu0 %v1523
    %5083 = vmatpush.msra.mxu0 %v1519
    %5084 = vmatpush.msra.mxu0 %v1515
    %5085 = vmatpush.msra.mxu0 %v1511
    %5086 = vmatpush.msra.mxu0 %v1507
    %5087 = vmatmul.f32.gmra.mxu0 %v4787
    %v5088 = vpop.f32.mrf.mxu0
    %v5089 = vadd.f32 %v5069, %v5088
    %5090 = vdwg.mxu0
    %5091 = vmatpush.msra.mxu0 %v1504
    %5092 = vmatpush.msra.mxu0 %v1500
    %5093 = vmatpush.msra.mxu0 %v1496
    %5094 = vmatpush.msra.mxu0 %v1492
    %5095 = vmatpush.msra.mxu0 %v1488
    %5096 = vmatpush.msra.mxu0 %v1484
    %5097 = vmatpush.msra.mxu0 %v1480
    %5098 = vmatpush.msra.mxu0 %v1476
    %5099 = vmatpush.msra.mxu0 %v1472
    %5100 = vmatpush.msra.mxu0 %v1468
    %5101 = vmatpush.msra.mxu0 %v1464
    %5102 = vmatpush.msra.mxu0 %v1460
    %5103 = vmatpush.msra.mxu0 %v1456
    %5104 = vmatpush.msra.mxu0 %v1452
    %5105 = vmatpush.msra.mxu0 %v1448
    %5106 = vmatpush.msra.mxu0 %v1444
    %5107 = vmatmul.f32.gmra.mxu0 %v4564
    %v5108 = vpop.f32.mrf.mxu0
    %v5109 = vadd.f32 %v1574, %v5108
    %5110 = vdwg.mxu0
    %5111 = vmatpush.msra.mxu0 %v1568
    %5112 = vmatpush.msra.mxu0 %v1564
    %5113 = vmatpush.msra.mxu0 %v1560
    %5114 = vmatpush.msra.mxu0 %v1556
    %5115 = vmatpush.msra.mxu0 %v1552
    %5116 = vmatpush.msra.mxu0 %v1548
    %5117 = vmatpush.msra.mxu0 %v1544
    %5118 = vmatpush.msra.mxu0 %v1540
    %5119 = vmatpush.msra.mxu0 %v1536
    %5120 = vmatpush.msra.mxu0 %v1532
    %5121 = vmatpush.msra.mxu0 %v1528
    %5122 = vmatpush.msra.mxu0 %v1524
    %5123 = vmatpush.msra.mxu0 %v1520
    %5124 = vmatpush.msra.mxu0 %v1516
    %5125 = vmatpush.msra.mxu0 %v1512
    %5126 = vmatpush.msra.mxu0 %v1508
    %5127 = vmatmul.f32.gmra.mxu0 %v4787
    %v5128 = vpop.f32.mrf.mxu0
    %v5129 = vadd.f32 %v5109, %v5128
    %5130 = vdwg.mxu0
    %5131 = vmatpush.msra.mxu0 %v1505
    %5132 = vmatpush.msra.mxu0 %v1501
    %5133 = vmatpush.msra.mxu0 %v1497
    %5134 = vmatpush.msra.mxu0 %v1493
    %5135 = vmatpush.msra.mxu0 %v1489
    %5136 = vmatpush.msra.mxu0 %v1485
    %5137 = vmatpush.msra.mxu0 %v1481
    %5138 = vmatpush.msra.mxu0 %v1477
    %5139 = vmatpush.msra.mxu0 %v1473
    %5140 = vmatpush.msra.mxu0 %v1469
    %5141 = vmatpush.msra.mxu0 %v1465
    %5142 = vmatpush.msra.mxu0 %v1461
    %5143 = vmatpush.msra.mxu0 %v1457
    %5144 = vmatpush.msra.mxu0 %v1453
    %5145 = vmatpush.msra.mxu0 %v1449
    %5146 = vmatpush.msra.mxu0 %v1445
    %5147 = vmatmul.f32.gmra.mxu0 %v4564
    %v5148 = vpop.f32.mrf.mxu0
    %v5149 = vadd.f32 %v1575, %v5148
    %5150 = vdwg.mxu0
    %5151 = vmatpush.msra.mxu0 %v1569
    %5152 = vmatpush.msra.mxu0 %v1565
    %5153 = vmatpush.msra.mxu0 %v1561
    %5154 = vmatpush.msra.mxu0 %v1557
    %5155 = vmatpush.msra.mxu0 %v1553
    %5156 = vmatpush.msra.mxu0 %v1549
    %5157 = vmatpush.msra.mxu0 %v1545
    %5158 = vmatpush.msra.mxu0 %v1541
    %5159 = vmatpush.msra.mxu0 %v1537
    %5160 = vmatpush.msra.mxu0 %v1533
    %5161 = vmatpush.msra.mxu0 %v1529
    %5162 = vmatpush.msra.mxu0 %v1525
    %5163 = vmatpush.msra.mxu0 %v1521
    %5164 = vmatpush.msra.mxu0 %v1517
    %5165 = vmatpush.msra.mxu0 %v1513
    %5166 = vmatpush.msra.mxu0 %v1509
    %5167 = vmatmul.f32.gmra.mxu0 %v4787
    %v5168 = vpop.f32.mrf.mxu0
    %v5169 = vadd.f32 %v5149, %v5168
    %5170 = vdwg.mxu0
    %v5171 = vxor.u32 %v5049, 2147483648
    %v5172 = vxor.u32 %v5089, 2147483648
    %v5173 = vxor.u32 %v5129, 2147483648
    %v5174 = vmul.f32 %v5171, 1.442695
    %v5175 = vpow.pop %v5174
    %v5176 = vmul.f32 %v5172, 1.442695
    %v5177 = vpow.pop %v5176
    %v5178 = vmul.f32 %v5173, 1.442695
    %v5179 = vpow.pop %v5178
    %v5180 = vadd.f32 %v5175, 1.0
    %v5181 = vadd.f32 %v5177, 1.0
    %v5182 = vadd.f32 %v5179, 1.0
    %v5183 = vrcp.pop %v5180
    %v5184 = vmul.f32 %v5180, %v5183
    %v5185 = vsub.f32 1.0, %v5184
    %v5186 = vmul.f32 %v5183, %v5185
    %v5187 = vadd.f32 %v5183, %v5186
    %vm5188 = vweird.f32 %v5180
    %vm5189 = vweird.f32 %v5183
    %vm5190 = vmor %vm5188, %vm5189
    %v5191 = vsel %vm5190, %v5183, %v5187
    %v5192 = vand.u32 2147483647, %v5180
    %vm5193 = vcmp.eq.f32.partialorder %v5192, 8.507059e+37
    %v5194 = vand.u32 %v5180, 2147483648
    %v5195 = vor.u32 1.1754944e-38, %v5194
    %v5196 = vsel %vm5193, %v5195, %v5191
    %v5197 = vmul.f32 1.0, %v5196
    %v5198 = vrcp.pop %v5181
    %v5199 = vmul.f32 %v5181, %v5198
    %v5200 = vsub.f32 1.0, %v5199
    %v5201 = vmul.f32 %v5198, %v5200
    %v5202 = vadd.f32 %v5198, %v5201
    %vm5203 = vweird.f32 %v5181
    %vm5204 = vweird.f32 %v5198
    %vm5205 = vmor %vm5203, %vm5204
    %v5206 = vsel %vm5205, %v5198, %v5202
    %v5207 = vand.u32 2147483647, %v5181
    %vm5208 = vcmp.eq.f32.partialorder %v5207, 8.507059e+37
    %v5209 = vand.u32 %v5181, 2147483648
    %v5210 = vor.u32 1.1754944e-38, %v5209
    %v5211 = vsel %vm5208, %v5210, %v5206
    %v5212 = vmul.f32 1.0, %v5211
    %v5213 = vrcp.pop %v5182
    %v5214 = vmul.f32 %v5182, %v5213
    %v5215 = vsub.f32 1.0, %v5214
    %v5216 = vmul.f32 %v5213, %v5215
    %v5217 = vadd.f32 %v5213, %v5216
    %vm5218 = vweird.f32 %v5182
    %vm5219 = vweird.f32 %v5213
    %vm5220 = vmor %vm5218, %vm5219
    %v5221 = vsel %vm5220, %v5213, %v5217
    %v5222 = vand.u32 2147483647, %v5182
    %vm5223 = vcmp.eq.f32.partialorder %v5222, 8.507059e+37
    %v5224 = vand.u32 %v5182, 2147483648
    %v5225 = vor.u32 1.1754944e-38, %v5224
    %v5226 = vsel %vm5223, %v5225, %v5221
    %v5227 = vmul.f32 1.0, %v5226
    %v5228 = vtanh.pop %v5169
    %v5229 = vmul.f32 %v5212, %v4785
    %v5230 = vmul.f32 %v5197, %v5228
    %v5231 = vadd.f32 %v5229, %v5230
    %v5232 = vtanh.pop %v5231
    %v5233 = vmul.f32 %v5227, %v5232
    %5234 = vmatpush.msra.mxu0 %v1502
    %5235 = vmatpush.msra.mxu0 %v1498
    %5236 = vmatpush.msra.mxu0 %v1494
    %5237 = vmatpush.msra.mxu0 %v1490
    %5238 = vmatpush.msra.mxu0 %v1486
    %5239 = vmatpush.msra.mxu0 %v1482
    %5240 = vmatpush.msra.mxu0 %v1478
    %5241 = vmatpush.msra.mxu0 %v1474
    %5242 = vmatpush.msra.mxu0 %v1470
    %5243 = vmatpush.msra.mxu0 %v1466
    %5244 = vmatpush.msra.mxu0 %v1462
    %5245 = vmatpush.msra.mxu0 %v1458
    %5246 = vmatpush.msra.mxu0 %v1454
    %5247 = vmatpush.msra.mxu0 %v1450
    %5248 = vmatpush.msra.mxu0 %v1446
    %5249 = vmatpush.msra.mxu0 %v1442
    %5250 = vmatmul.f32.gmra.mxu0 %v5010
    %v5251 = vpop.f32.mrf.mxu0
    %v5252 = vadd.f32 %v1572, %v5251
    %5253 = vdwg.mxu0
    %5254 = vmatpush.msra.mxu0 %v1566
    %5255 = vmatpush.msra.mxu0 %v1562
    %5256 = vmatpush.msra.mxu0 %v1558
    %5257 = vmatpush.msra.mxu0 %v1554
    %5258 = vmatpush.msra.mxu0 %v1550
    %5259 = vmatpush.msra.mxu0 %v1546
    %5260 = vmatpush.msra.mxu0 %v1542
    %5261 = vmatpush.msra.mxu0 %v1538
    %5262 = vmatpush.msra.mxu0 %v1534
    %5263 = vmatpush.msra.mxu0 %v1530
    %5264 = vmatpush.msra.mxu0 %v1526
    %5265 = vmatpush.msra.mxu0 %v1522
    %5266 = vmatpush.msra.mxu0 %v1518
    %5267 = vmatpush.msra.mxu0 %v1514
    %5268 = vmatpush.msra.mxu0 %v1510
    %5269 = vmatpush.msra.mxu0 %v1506
    %5270 = vmatmul.f32.gmra.mxu0 %v5233
    %v5271 = vpop.f32.mrf.mxu0
    %v5272 = vadd.f32 %v5252, %v5271
    %5273 = vdwg.mxu0
    %5274 = vmatpush.msra.mxu0 %v1503
    %5275 = vmatpush.msra.mxu0 %v1499
    %5276 = vmatpush.msra.mxu0 %v1495
    %5277 = vmatpush.msra.mxu0 %v1491
    %5278 = vmatpush.msra.mxu0 %v1487
    %5279 = vmatpush.msra.mxu0 %v1483
    %5280 = vmatpush.msra.mxu0 %v1479
    %5281 = vmatpush.msra.mxu0 %v1475
    %5282 = vmatpush.msra.mxu0 %v1471
    %5283 = vmatpush.msra.mxu0 %v1467
    %5284 = vmatpush.msra.mxu0 %v1463
    %5285 = vmatpush.msra.mxu0 %v1459
    %5286 = vmatpush.msra.mxu0 %v1455
    %5287 = vmatpush.msra.mxu0 %v1451
    %5288 = vmatpush.msra.mxu0 %v1447
    %5289 = vmatpush.msra.mxu0 %v1443
    %5290 = vmatmul.f32.gmra.mxu0 %v5010
    %v5291 = vpop.f32.mrf.mxu0
    %v5292 = vadd.f32 %v1573, %v5291
    %5293 = vdwg.mxu0
    %5294 = vmatpush.msra.mxu0 %v1567
    %5295 = vmatpush.msra.mxu0 %v1563
    %5296 = vmatpush.msra.mxu0 %v1559
    %5297 = vmatpush.msra.mxu0 %v1555
    %5298 = vmatpush.msra.mxu0 %v1551
    %5299 = vmatpush.msra.mxu0 %v1547
    %5300 = vmatpush.msra.mxu0 %v1543
    %5301 = vmatpush.msra.mxu0 %v1539
    %5302 = vmatpush.msra.mxu0 %v1535
    %5303 = vmatpush.msra.mxu0 %v1531
    %5304 = vmatpush.msra.mxu0 %v1527
    %5305 = vmatpush.msra.mxu0 %v1523
    %5306 = vmatpush.msra.mxu0 %v1519
    %5307 = vmatpush.msra.mxu0 %v1515
    %5308 = vmatpush.msra.mxu0 %v1511
    %5309 = vmatpush.msra.mxu0 %v1507
    %5310 = vmatmul.f32.gmra.mxu0 %v5233
    %v5311 = vpop.f32.mrf.mxu0
    %v5312 = vadd.f32 %v5292, %v5311
    %5313 = vdwg.mxu0
    %5314 = vmatpush.msra.mxu0 %v1504
    %5315 = vmatpush.msra.mxu0 %v1500
    %5316 = vmatpush.msra.mxu0 %v1496
    %5317 = vmatpush.msra.mxu0 %v1492
    %5318 = vmatpush.msra.mxu0 %v1488
    %5319 = vmatpush.msra.mxu0 %v1484
    %5320 = vmatpush.msra.mxu0 %v1480
    %5321 = vmatpush.msra.mxu0 %v1476
    %5322 = vmatpush.msra.mxu0 %v1472
    %5323 = vmatpush.msra.mxu0 %v1468
    %5324 = vmatpush.msra.mxu0 %v1464
    %5325 = vmatpush.msra.mxu0 %v1460
    %5326 = vmatpush.msra.mxu0 %v1456
    %5327 = vmatpush.msra.mxu0 %v1452
    %5328 = vmatpush.msra.mxu0 %v1448
    %5329 = vmatpush.msra.mxu0 %v1444
    %5330 = vmatmul.f32.gmra.mxu0 %v5010
    %v5331 = vpop.f32.mrf.mxu0
    %v5332 = vadd.f32 %v1574, %v5331
    %5333 = vdwg.mxu0
    %5334 = vmatpush.msra.mxu0 %v1568
    %5335 = vmatpush.msra.mxu0 %v1564
    %5336 = vmatpush.msra.mxu0 %v1560
    %5337 = vmatpush.msra.mxu0 %v1556
    %5338 = vmatpush.msra.mxu0 %v1552
    %5339 = vmatpush.msra.mxu0 %v1548
    %5340 = vmatpush.msra.mxu0 %v1544
    %5341 = vmatpush.msra.mxu0 %v1540
    %5342 = vmatpush.msra.mxu0 %v1536
    %5343 = vmatpush.msra.mxu0 %v1532
    %5344 = vmatpush.msra.mxu0 %v1528
    %5345 = vmatpush.msra.mxu0 %v1524
    %5346 = vmatpush.msra.mxu0 %v1520
    %5347 = vmatpush.msra.mxu0 %v1516
    %5348 = vmatpush.msra.mxu0 %v1512
    %5349 = vmatpush.msra.mxu0 %v1508
    %5350 = vmatmul.f32.gmra.mxu0 %v5233
    %v5351 = vpop.f32.mrf.mxu0
    %v5352 = vadd.f32 %v5332, %v5351
    %5353 = vdwg.mxu0
    %5354 = vmatpush.msra.mxu0 %v1505
    %5355 = vmatpush.msra.mxu0 %v1501
    %5356 = vmatpush.msra.mxu0 %v1497
    %5357 = vmatpush.msra.mxu0 %v1493
    %5358 = vmatpush.msra.mxu0 %v1489
    %5359 = vmatpush.msra.mxu0 %v1485
    %5360 = vmatpush.msra.mxu0 %v1481
    %5361 = vmatpush.msra.mxu0 %v1477
    %5362 = vmatpush.msra.mxu0 %v1473
    %5363 = vmatpush.msra.mxu0 %v1469
    %5364 = vmatpush.msra.mxu0 %v1465
    %5365 = vmatpush.msra.mxu0 %v1461
    %5366 = vmatpush.msra.mxu0 %v1457
    %5367 = vmatpush.msra.mxu0 %v1453
    %5368 = vmatpush.msra.mxu0 %v1449
    %5369 = vmatpush.msra.mxu0 %v1445
    %5370 = vmatmul.f32.gmra.mxu0 %v5010
    %v5371 = vpop.f32.mrf.mxu0
    %v5372 = vadd.f32 %v1575, %v5371
    %5373 = vdwg.mxu0
    %5374 = vmatpush.msra.mxu0 %v1569
    %5375 = vmatpush.msra.mxu0 %v1565
    %5376 = vmatpush.msra.mxu0 %v1561
    %5377 = vmatpush.msra.mxu0 %v1557
    %5378 = vmatpush.msra.mxu0 %v1553
    %5379 = vmatpush.msra.mxu0 %v1549
    %5380 = vmatpush.msra.mxu0 %v1545
    %5381 = vmatpush.msra.mxu0 %v1541
    %5382 = vmatpush.msra.mxu0 %v1537
    %5383 = vmatpush.msra.mxu0 %v1533
    %5384 = vmatpush.msra.mxu0 %v1529
    %5385 = vmatpush.msra.mxu0 %v1525
    %5386 = vmatpush.msra.mxu0 %v1521
    %5387 = vmatpush.msra.mxu0 %v1517
    %5388 = vmatpush.msra.mxu0 %v1513
    %5389 = vmatpush.msra.mxu0 %v1509
    %5390 = vmatmul.f32.gmra.mxu0 %v5233
    %v5391 = vpop.f32.mrf.mxu0
    %v5392 = vadd.f32 %v5372, %v5391
    %5393 = vdwg.mxu0
    %v5394 = vxor.u32 %v5272, 2147483648
    %v5395 = vxor.u32 %v5312, 2147483648
    %v5396 = vxor.u32 %v5352, 2147483648
    %v5397 = vmul.f32 %v5394, 1.442695
    %v5398 = vpow.pop %v5397
    %v5399 = vmul.f32 %v5395, 1.442695
    %v5400 = vpow.pop %v5399
    %v5401 = vmul.f32 %v5396, 1.442695
    %v5402 = vpow.pop %v5401
    %v5403 = vadd.f32 %v5398, 1.0
    %v5404 = vadd.f32 %v5400, 1.0
    %v5405 = vadd.f32 %v5402, 1.0
    %v5406 = vrcp.pop %v5403
    %v5407 = vmul.f32 %v5403, %v5406
    %v5408 = vsub.f32 1.0, %v5407
    %v5409 = vmul.f32 %v5406, %v5408
    %v5410 = vadd.f32 %v5406, %v5409
    %vm5411 = vweird.f32 %v5403
    %vm5412 = vweird.f32 %v5406
    %vm5413 = vmor %vm5411, %vm5412
    %v5414 = vsel %vm5413, %v5406, %v5410
    %v5415 = vand.u32 2147483647, %v5403
    %vm5416 = vcmp.eq.f32.partialorder %v5415, 8.507059e+37
    %v5417 = vand.u32 %v5403, 2147483648
    %v5418 = vor.u32 1.1754944e-38, %v5417
    %v5419 = vsel %vm5416, %v5418, %v5414
    %v5420 = vmul.f32 1.0, %v5419
    %v5421 = vrcp.pop %v5404
    %v5422 = vmul.f32 %v5404, %v5421
    %v5423 = vsub.f32 1.0, %v5422
    %v5424 = vmul.f32 %v5421, %v5423
    %v5425 = vadd.f32 %v5421, %v5424
    %vm5426 = vweird.f32 %v5404
    %vm5427 = vweird.f32 %v5421
    %vm5428 = vmor %vm5426, %vm5427
    %v5429 = vsel %vm5428, %v5421, %v5425
    %v5430 = vand.u32 2147483647, %v5404
    %vm5431 = vcmp.eq.f32.partialorder %v5430, 8.507059e+37
    %v5432 = vand.u32 %v5404, 2147483648
    %v5433 = vor.u32 1.1754944e-38, %v5432
    %v5434 = vsel %vm5431, %v5433, %v5429
    %v5435 = vmul.f32 1.0, %v5434
    %v5436 = vrcp.pop %v5405
    %v5437 = vmul.f32 %v5405, %v5436
    %v5438 = vsub.f32 1.0, %v5437
    %v5439 = vmul.f32 %v5436, %v5438
    %v5440 = vadd.f32 %v5436, %v5439
    %vm5441 = vweird.f32 %v5405
    %vm5442 = vweird.f32 %v5436
    %vm5443 = vmor %vm5441, %vm5442
    %v5444 = vsel %vm5443, %v5436, %v5440
    %v5445 = vand.u32 2147483647, %v5405
    %vm5446 = vcmp.eq.f32.partialorder %v5445, 8.507059e+37
    %v5447 = vand.u32 %v5405, 2147483648
    %v5448 = vor.u32 1.1754944e-38, %v5447
    %v5449 = vsel %vm5446, %v5448, %v5444
    %v5450 = vmul.f32 1.0, %v5449
    %v5451 = vtanh.pop %v5392
    %v5452 = vmul.f32 %v5435, %v5231
    %v5453 = vmul.f32 %v5420, %v5451
    %v5454 = vadd.f32 %v5452, %v5453
    %v5455 = vtanh.pop %v5454
    %v5456 = vmul.f32 %v5450, %v5455
    %v5457 = vmax.f32 %v5456, 0.0
    %v5458 = vld [vmem:[#allocation8] sm:$0xff]
    %v5459 = vld [vmem:[#allocation8 + $0x8] sm:$0xff]
    %v5460 = vld [vmem:[#allocation8 + $0x10] sm:$0xff]
    %v5461 = vld [vmem:[#allocation8 + $0x18] sm:$0xff]
    %v5462 = vld [vmem:[#allocation8 + $0x20] sm:$0xff]
    %v5463 = vld [vmem:[#allocation8 + $0x28] sm:$0xff]
    %v5464 = vld [vmem:[#allocation8 + $0x30] sm:$0xff]
    %v5465 = vld [vmem:[#allocation8 + $0x38] sm:$0xff]
    %v5466 = vld [vmem:[#allocation8 + $0x40] sm:$0xff]
    %v5467 = vld [vmem:[#allocation8 + $0x48] sm:$0xff]
    %v5468 = vld [vmem:[#allocation8 + $0x50] sm:$0xff]
    %v5469 = vld [vmem:[#allocation8 + $0x58] sm:$0xff]
    %v5470 = vld [vmem:[#allocation8 + $0x60] sm:$0xff]
    %v5471 = vld [vmem:[#allocation8 + $0x68] sm:$0xff]
    %v5472 = vld [vmem:[#allocation8 + $0x70] sm:$0xff]
    %v5473 = vld [vmem:[#allocation8 + $0x78] sm:$0xff]
    %v5474 = vld [vmem:[%s9] sm:$0x1]
    %v5476 = vperm.slane %v5474, 0
    %5478 = vmatpush.msra.mxu0 %v5473
    %5479 = vmatpush.msra.mxu0 %v5472
    %5480 = vmatpush.msra.mxu0 %v5471
    %5481 = vmatpush.msra.mxu0 %v5470
    %5482 = vmatpush.msra.mxu0 %v5469
    %5483 = vmatpush.msra.mxu0 %v5468
    %5484 = vmatpush.msra.mxu0 %v5467
    %5485 = vmatpush.msra.mxu0 %v5466
    %5486 = vmatpush.msra.mxu0 %v5465
    %5487 = vmatpush.msra.mxu0 %v5464
    %5488 = vmatpush.msra.mxu0 %v5463
    %5489 = vmatpush.msra.mxu0 %v5462
    %5490 = vmatpush.msra.mxu0 %v5461
    %5491 = vmatpush.msra.mxu0 %v5460
    %5492 = vmatpush.msra.mxu0 %v5459
    %5493 = vmatpush.msra.mxu0 %v5458
    %5494 = vmatmul.f32.gmra.mxu0 %v5457
    %v5495 = vpop.f32.mrf.mxu0
    %v5496 = vadd.f32 %v5476, %v5495
    %5497 = vdwg.mxu0
    %5498 = vst [vmem:[%s10] sm:$0xff] %v5496
    // Predicated region
    $region58: #{lstm_model_forward.1} parent=1 // pred_check
      _
    $region59: #{lstm_model_forward.1} parent=1 // pred_check_branch
      %5500 = sbr.rel (0) target = $region61
    $region60: #{lstm_model_forward.1} parent=1 // pred_region
      _
    $region61: #{lstm_model_forward.1} parent=1 // pred_fallthru
      _
    // Predicated region
    $region62: #{lstm_model_forward.1} parent=1 // pred_check
      _
    $region63: #{lstm_model_forward.1} parent=1 // pred_check_branch
      %5502 = sbr.rel (0) target = $region65
    $region64: #{lstm_model_forward.1} parent=1 // pred_region
      _
    $region65: #{lstm_model_forward.1} parent=1 // pred_fallthru
      _
    %5503 = vsyncpa [#allocation4], 1
    %5504 = vsyncpa [#allocation6], 1
    %5505 = vsyncpa [#allocation9], 1

</llo_original>
